<compile_context>
chip_gen: v5e
topology: v5e:2x2
jax: 0.10.0
libtpu: 0.0.40
codegen_flags: <defaults>
</compile_context>

<pallas_src>
import functools

import jax
import jax.numpy as jnp
from jax.experimental import pallas as pl
from jax.experimental.pallas import tpu as pltpu


# ----------------------------------------------------------------------------
# Fused kernel: num_layers LSTM layers + BatchNorm1d(seq_length) epilogue.
# ----------------------------------------------------------------------------
def _fused_lstm_bn_kernel(num_layers, b_real, eps, *refs):
    # refs: x, h0, c0, gamma, beta, (w_ih, w_hh, b) * L, out, h_n, c_n, y_scratch
    x_ref, h0_ref, c0_ref, gamma_ref, beta_ref = refs[:5]
    layer_refs = refs[5:5 + 3 * num_layers]
    out_ref, hN_ref, cN_ref, y_sc = refs[5 + 3 * num_layers:]

    Bp, T, Fin = x_ref.shape          # batch padded to the f32 sublane tile (multiple of 8)
    H = h0_ref.shape[-1]
    G = 4 * H

    for l in range(num_layers):
        w_ih = layer_refs[3 * l][...]        # (In_l, 4H)
        w_hh = layer_refs[3 * l + 1][...]    # (H, 4H)
        bias = layer_refs[3 * l + 2][...]    # (1, 4H) = b_ih + b_hh

        # Input projection for ALL timesteps with one big matmul (better MXU shape,
        # and leaves exactly one matmul per recurrent step below).
        if l == 0:
            x2 = x_ref[...].astype(jnp.float32).reshape(Bp * T, Fin)
            pre = jnp.dot(x2, w_ih, preferred_element_type=jnp.float32) + bias
            pre = pre.reshape(Bp, T, G)                      # batch-major rows
            pre_of = lambda t: pre[:, t, :]                  # noqa: E731
        else:
            seq = y_sc[...].reshape(T * Bp, H)               # previous layer's outputs
            pre = jnp.dot(seq, w_ih, preferred_element_type=jnp.float32) + bias
            pre = pre.reshape(T, Bp, G)                      # time-major rows
            pre_of = lambda t: pre[t]                        # noqa: E731

        h = h0_ref[l].astype(jnp.float32)                    # (Bp, H)
        c = c0_ref[l].astype(jnp.float32)
        for t in range(T):                                   # fully unrolled, static T
            gates = pre_of(t) + jnp.dot(h, w_hh, preferred_element_type=jnp.float32)
            # PyTorch gate order: i, f, g, o
            i_g = jax.nn.sigmoid(gates[:, 0:H])
            f_g = jax.nn.sigmoid(gates[:, H:2 * H])
            g_g = jnp.tanh(gates[:, 2 * H:3 * H])
            o_g = jax.nn.sigmoid(gates[:, 3 * H:4 * H])
            c = f_g * c + i_g * g_g
            h = o_g * jnp.tanh(c)
            y_sc[t] = h                                      # overwrite-in-place is safe:
                                                             # prev layer's value already consumed
        # Final states written once per layer (real batch rows only).
        hN_ref[l] = h[:b_real, :].astype(hN_ref.dtype)
        cN_ref[l] = c[:b_real, :].astype(cN_ref.dtype)

    # Fused BatchNorm1d(seq_length): channels = time steps, stats over (real batch, hidden).
    inv_n = 1.0 / float(b_real * H)
    for t in range(T):
        y_t = y_sc[t]                                        # (Bp, H) f32
        y_real = y_t[:b_real, :]
        mean = jnp.sum(y_real) * inv_n
        var = jnp.sum((y_real - mean) ** 2) * inv_n          # biased var, PyTorch train mode
        y_hat = (y_real - mean) * jax.lax.rsqrt(var + eps)
        out_ref[:, t, :] = (gamma_ref[t] * y_hat + beta_ref[t]).astype(out_ref.dtype)


# ----------------------------------------------------------------------------
# Jitted wrapper: pad batch, flatten params, single pallas_call.
# ----------------------------------------------------------------------------
@jax.jit
def _forward_impl(params, x, h0, c0):
    B, T, Fin = x.shape
    layers = params["layers"]
    L = len(layers)
    H = layers[0][1].shape[0]                     # w_hh_t is (H, 4H)

    Bp = ((B + 7) // 8) * 8                       # pad batch to f32 sublane tile
    if Bp != B:
        x = jnp.pad(x, ((0, Bp - B), (0, 0), (0, 0)))
        h0 = jnp.pad(h0, ((0, 0), (0, Bp - B), (0, 0)))
        c0 = jnp.pad(c0, ((0, 0), (0, Bp - B), (0, 0)))

    flat_layer_params = []
    for (w_ih_t, w_hh_t, b2) in layers:
        flat_layer_params += [w_ih_t, w_hh_t, b2]

    vmem = pl.BlockSpec(memory_space=pltpu.MemorySpace.VMEM)
    smem = pl.BlockSpec(memory_space=pltpu.MemorySpace.SMEM)

    out_shapes = (jax.ShapeDtypeStruct((B, T, H), x.dtype),   # lstm_out (batch-first)
                  jax.ShapeDtypeStruct((L, B, H), x.dtype),   # h_n
                  jax.ShapeDtypeStruct((L, B, H), x.dtype))   # c_n

    lstm_out, h_n, c_n = pl.pallas_call(
        functools.partial(_fused_lstm_bn_kernel, L, B, 1e-5),
        out_shape=out_shapes,
        in_specs=[vmem, vmem, vmem, smem, smem] + [vmem] * (3 * L),
        out_specs=(vmem, vmem, vmem),
        scratch_shapes=[pltpu.VMEM((T, Bp, H), jnp.float32)],
    )(x, h0, c0, params["gamma"], params["beta"], *flat_layer_params)

    return lstm_out, (h_n, c_n)


def nnwork_forward(params, x, hidden_cell=None):
    """x: (B, T, input_fnum); hidden_cell: optional ((L, B, H), (L, B, H))."""
    L = len(params["layers"])
    B = x.shape[0]
    H = params["layers"][0][1].shape[0]
    if hidden_cell is None:
        hidden_cell = (jnp.zeros((L, B, H), x.dtype),
                       jnp.zeros((L, B, H), x.dtype))
    h0, c0 = hidden_cell
    return _forward_impl(params, x, h0, c0)


# ----------------------------------------------------------------------------
# Parameter init (deterministic, PyTorch-default-style U(-1/sqrt(H), 1/sqrt(H)))
# ----------------------------------------------------------------------------
def init_params(key, input_fnum, seq_length, hidden_size, num_layers):
    layers = []
    bound = 1.0 / float(hidden_size) ** 0.5
    for l in range(num_layers):
        in_dim = input_fnum if l == 0 else hidden_size
        key, k1, k2, k3, k4 = jax.random.split(key, 5)
        w_ih = jax.random.uniform(k1, (4 * hidden_size, in_dim), jnp.float32, -bound, bound)
        w_hh = jax.random.uniform(k2, (4 * hidden_size, hidden_size), jnp.float32, -bound, bound)
        b_ih = jax.random.uniform(k3, (4 * hidden_size,), jnp.float32, -bound, bound)
        b_hh = jax.random.uniform(k4, (4 * hidden_size,), jnp.float32, -bound, bound)
        # Pre-transpose weights and fold the two biases (plain-JAX glue, done once).
        layers.append((w_ih.T, w_hh.T, (b_ih + b_hh).reshape(1, -1)))
    gamma = jnp.ones((seq_length,), jnp.float32)    # nn.BatchNorm1d default weight
    beta = jnp.zeros((seq_length,), jnp.float32)    # nn.BatchNorm1d default bias
    return {"layers": layers, "gamma": gamma, "beta": beta}


# ----------------------------------------------------------------------------
# Pure-JAX reference (for correctness check only).
# ----------------------------------------------------------------------------
def _reference_forward(params, x, h0, c0):
    B, T, _ = x.shape
    y = x
    hs, cs = [], []
    for li, (w_ih_t, w_hh_t, b2) in enumerate(params["layers"]):
        H = w_hh_t.shape[0]
        h, c = h0[li], c0[li]
        outs = []
        for t in range(T):
            g = y[:, t, :] @ w_ih_t + h @ w_hh_t + b2
            i = jax.nn.sigmoid(g[:, :H])
            f = jax.nn.sigmoid(g[:, H:2 * H])
            gg = jnp.tanh(g[:, 2 * H:3 * H])
            o = jax.nn.sigmoid(g[:, 3 * H:])
            c = f * c + i * gg
            h = o * jnp.tanh(c)
            outs.append(h)
        y = jnp.stack(outs, axis=1)
        hs.append(h)
        cs.append(c)
    mean = jnp.mean(y, axis=(0, 2), keepdims=True)
    var = jnp.mean((y - mean) ** 2, axis=(0, 2), keepdims=True)
    yhat = (y - mean) * jax.lax.rsqrt(var + 1e-5)
    out = params["gamma"].reshape(1, T, 1) * yhat + params["beta"].reshape(1, T, 1)
    return out, (jnp.stack(hs, 0), jnp.stack(cs, 0))


if __name__ == "__main__":
    batch_size = 4          # deliberately < 8 to exercise the padded-batch / masked-BN path
    seq_length = 8
    input_fnum = 4
    hidden_size = 32
    num_layers = 4

    key = jax.random.PRNGKey(0)
    key, kx = jax.random.split(key)
    x = jax.random.normal(kx, (batch_size, seq_length, input_fnum), jnp.float32)

    params = init_params(key, input_fnum, seq_length, hidden_size, num_layers)

    lstm_out, (h_n, c_n) = nnwork_forward(params, x, hidden_cell=None)
    jax.block_until_ready((lstm_out, h_n, c_n))

    assert lstm_out.shape == (batch_size, seq_length, hidden_size)
    assert h_n.shape == (num_layers, batch_size, hidden_size)
    assert c_n.shape == (num_layers, batch_size, hidden_size)

    # Numerical check vs pure-JAX reference (training-mode BN semantics).
    ref_out, (ref_h, ref_c) = _reference_forward(
        params, x,
        jnp.zeros((num_layers, batch_size, hidden_size), jnp.float32),
        jnp.zeros((num_layers, batch_size, hidden_size), jnp.float32))
    assert float(jnp.max(jnp.abs(lstm_out - ref_out))) < 2e-3
    assert float(jnp.max(jnp.abs(h_n - ref_h))) < 2e-3
    assert float(jnp.max(jnp.abs(c_n - ref_c))) < 2e-3

    print("KERNEL_OK")
</pallas_src>

<mosaic_0001>
module attributes {stable_mosaic.version = 11 : i64} {
  func.func @_fused_lstm_bn_kernel(%arg0: memref<8x8x4xf32, #tpu.memory_space<vmem>>, %arg1: memref<4x8x32xf32, #tpu.memory_space<vmem>>, %arg2: memref<4x8x32xf32, #tpu.memory_space<vmem>>, %arg3: memref<8xf32, #tpu.memory_space<smem>>, %arg4: memref<8xf32, #tpu.memory_space<smem>>, %arg5: memref<4x128xf32, #tpu.memory_space<vmem>>, %arg6: memref<32x128xf32, #tpu.memory_space<vmem>>, %arg7: memref<1x128xf32, #tpu.memory_space<vmem>>, %arg8: memref<32x128xf32, #tpu.memory_space<vmem>>, %arg9: memref<32x128xf32, #tpu.memory_space<vmem>>, %arg10: memref<1x128xf32, #tpu.memory_space<vmem>>, %arg11: memref<32x128xf32, #tpu.memory_space<vmem>>, %arg12: memref<32x128xf32, #tpu.memory_space<vmem>>, %arg13: memref<1x128xf32, #tpu.memory_space<vmem>>, %arg14: memref<32x128xf32, #tpu.memory_space<vmem>>, %arg15: memref<32x128xf32, #tpu.memory_space<vmem>>, %arg16: memref<1x128xf32, #tpu.memory_space<vmem>>, %arg17: memref<4x8x32xf32, #tpu.memory_space<vmem>>, %arg18: memref<4x4x32xf32, #tpu.memory_space<vmem>>, %arg19: memref<4x4x32xf32, #tpu.memory_space<vmem>>, %arg20: memref<8x8x32xf32, #tpu.memory_space<vmem>>) attributes {dimension_semantics = [], scalar_prefetch = 0 : i64, scratch_operands = 1 : i64, tpu.core_type = #tpu.core_type<tc>} {
    %c0 = arith.constant 0 : index
    %c0_0 = arith.constant 0 : index
    %0 = vector.load %arg5[%c0, %c0_0] : memref<4x128xf32, #tpu.memory_space<vmem>>, vector<4x128xf32>
    %c0_1 = arith.constant 0 : index
    %c0_2 = arith.constant 0 : index
    %1 = vector.load %arg6[%c0_1, %c0_2] : memref<32x128xf32, #tpu.memory_space<vmem>>, vector<32x128xf32>
    %c0_3 = arith.constant 0 : index
    %c0_4 = arith.constant 0 : index
    %2 = vector.load %arg7[%c0_3, %c0_4] : memref<1x128xf32, #tpu.memory_space<vmem>>, vector<1x128xf32>
    %c0_5 = arith.constant 0 : index
    %c0_6 = arith.constant 0 : index
    %c0_7 = arith.constant 0 : index
    %3 = vector.load %arg0[%c0_5, %c0_6, %c0_7] : memref<8x8x4xf32, #tpu.memory_space<vmem>>, vector<8x8x4xf32>
    %4 = vector.shape_cast %3 : vector<8x8x4xf32> to vector<64x4xf32>
    %cst = arith.constant dense<0.000000e+00> : vector<64x128xf32>
    %5 = tpu.matmul %4, %0, %cst {dimension_numbers = #tpu.dot_dimension_numbers<[1], [0], [0], [1], [0, 0, 1, 1], [], []>} : vector<64x4xf32>, vector<4x128xf32>, vector<64x128xf32> -> vector<64x128xf32>
    %6 = vector.broadcast %2 : vector<1x128xf32> to vector<64x128xf32>
    %7 = arith.addf %5, %6 : vector<64x128xf32>
    %8 = vector.shape_cast %7 : vector<64x128xf32> to vector<8x8x128xf32>
    %c0_8 = arith.constant 0 : index
    %c0_9 = arith.constant 0 : index
    %c0_10 = arith.constant 0 : index
    %9 = vector.load %arg1[%c0_8, %c0_9, %c0_10] : memref<4x8x32xf32, #tpu.memory_space<vmem>>, vector<1x8x32xf32>
    %10 = vector.shape_cast %9 : vector<1x8x32xf32> to vector<8x32xf32>
    %c0_11 = arith.constant 0 : index
    %c0_12 = arith.constant 0 : index
    %c0_13 = arith.constant 0 : index
    %11 = vector.load %arg2[%c0_11, %c0_12, %c0_13] : memref<4x8x32xf32, #tpu.memory_space<vmem>>, vector<1x8x32xf32>
    %12 = vector.shape_cast %11 : vector<1x8x32xf32> to vector<8x32xf32>
    %13 = vector.extract_strided_slice %8 {offsets = [0, 0, 0], sizes = [8, 1, 128], strides = [1, 1, 1]} : vector<8x8x128xf32> to vector<8x1x128xf32>
    %14 = vector.shape_cast %13 : vector<8x1x128xf32> to vector<8x128xf32>
    %cst_14 = arith.constant dense<0.000000e+00> : vector<8x128xf32>
    %15 = tpu.matmul %10, %1, %cst_14 {dimension_numbers = #tpu.dot_dimension_numbers<[1], [0], [0], [1], [0, 0, 1, 1], [], []>} : vector<8x32xf32>, vector<32x128xf32>, vector<8x128xf32> -> vector<8x128xf32>
    %16 = arith.addf %14, %15 : vector<8x128xf32>
    %17 = vector.extract_strided_slice %16 {offsets = [0, 0], sizes = [8, 32], strides = [1, 1]} : vector<8x128xf32> to vector<8x32xf32>
    %18 = arith.negf %17 : vector<8x32xf32>
    %19 = math.exp %18 : vector<8x32xf32>
    %cst_15 = arith.constant 1.000000e+00 : f32
    %20 = vector.broadcast %cst_15 : f32 to vector<8x32xf32>
    %21 = arith.addf %20, %19 : vector<8x32xf32>
    %22 = arith.divf %20, %21 : vector<8x32xf32>
    %23 = vector.extract_strided_slice %16 {offsets = [0, 32], sizes = [8, 32], strides = [1, 1]} : vector<8x128xf32> to vector<8x32xf32>
    %24 = arith.negf %23 : vector<8x32xf32>
    %25 = math.exp %24 : vector<8x32xf32>
    %cst_16 = arith.constant 1.000000e+00 : f32
    %26 = vector.broadcast %cst_16 : f32 to vector<8x32xf32>
    %27 = arith.addf %26, %25 : vector<8x32xf32>
    %28 = arith.divf %26, %27 : vector<8x32xf32>
    %29 = vector.extract_strided_slice %16 {offsets = [0, 64], sizes = [8, 32], strides = [1, 1]} : vector<8x128xf32> to vector<8x32xf32>
    %30 = math.tanh %29 : vector<8x32xf32>
    %31 = vector.extract_strided_slice %16 {offsets = [0, 96], sizes = [8, 32], strides = [1, 1]} : vector<8x128xf32> to vector<8x32xf32>
    %32 = arith.negf %31 : vector<8x32xf32>
    %33 = math.exp %32 : vector<8x32xf32>
    %cst_17 = arith.constant 1.000000e+00 : f32
    %34 = vector.broadcast %cst_17 : f32 to vector<8x32xf32>
    %35 = arith.addf %34, %33 : vector<8x32xf32>
    %36 = arith.divf %34, %35 : vector<8x32xf32>
    %37 = arith.mulf %28, %12 : vector<8x32xf32>
    %38 = arith.mulf %22, %30 : vector<8x32xf32>
    %39 = arith.addf %37, %38 : vector<8x32xf32>
    %40 = math.tanh %39 : vector<8x32xf32>
    %41 = arith.mulf %36, %40 : vector<8x32xf32>
    %c0_18 = arith.constant 0 : index
    %c0_19 = arith.constant 0 : index
    %c0_20 = arith.constant 0 : index
    %42 = vector.load %arg20[%c0_18, %c0_19, %c0_20] : memref<8x8x32xf32, #tpu.memory_space<vmem>>, vector<1x8x32xf32>
    %43 = vector.shape_cast %42 : vector<1x8x32xf32> to vector<8x32xf32>
    %44 = vector.shape_cast %41 : vector<8x32xf32> to vector<1x8x32xf32>
    tpu.vector_store %arg20[%c0_18, %c0_19, %c0_20], %44 {strides = array<i32>} : memref<8x8x32xf32, #tpu.memory_space<vmem>>, vector<1x8x32xf32>,
    %45 = vector.extract_strided_slice %8 {offsets = [0, 1, 0], sizes = [8, 1, 128], strides = [1, 1, 1]} : vector<8x8x128xf32> to vector<8x1x128xf32>
    %46 = vector.shape_cast %45 : vector<8x1x128xf32> to vector<8x128xf32>
    %cst_21 = arith.constant dense<0.000000e+00> : vector<8x128xf32>
    %47 = tpu.matmul %41, %1, %cst_21 {dimension_numbers = #tpu.dot_dimension_numbers<[1], [0], [0], [1], [0, 0, 1, 1], [], []>} : vector<8x32xf32>, vector<32x128xf32>, vector<8x128xf32> -> vector<8x128xf32>
    %48 = arith.addf %46, %47 : vector<8x128xf32>
    %49 = vector.extract_strided_slice %48 {offsets = [0, 0], sizes = [8, 32], strides = [1, 1]} : vector<8x128xf32> to vector<8x32xf32>
    %50 = arith.negf %49 : vector<8x32xf32>
    %51 = math.exp %50 : vector<8x32xf32>
    %cst_22 = arith.constant 1.000000e+00 : f32
    %52 = vector.broadcast %cst_22 : f32 to vector<8x32xf32>
    %53 = arith.addf %52, %51 : vector<8x32xf32>
    %54 = arith.divf %52, %53 : vector<8x32xf32>
    %55 = vector.extract_strided_slice %48 {offsets = [0, 32], sizes = [8, 32], strides = [1, 1]} : vector<8x128xf32> to vector<8x32xf32>
    %56 = arith.negf %55 : vector<8x32xf32>
    %57 = math.exp %56 : vector<8x32xf32>
    %cst_23 = arith.constant 1.000000e+00 : f32
    %58 = vector.broadcast %cst_23 : f32 to vector<8x32xf32>
    %59 = arith.addf %58, %57 : vector<8x32xf32>
    %60 = arith.divf %58, %59 : vector<8x32xf32>
    %61 = vector.extract_strided_slice %48 {offsets = [0, 64], sizes = [8, 32], strides = [1, 1]} : vector<8x128xf32> to vector<8x32xf32>
    %62 = math.tanh %61 : vector<8x32xf32>
    %63 = vector.extract_strided_slice %48 {offsets = [0, 96], sizes = [8, 32], strides = [1, 1]} : vector<8x128xf32> to vector<8x32xf32>
    %64 = arith.negf %63 : vector<8x32xf32>
    %65 = math.exp %64 : vector<8x32xf32>
    %cst_24 = arith.constant 1.000000e+00 : f32
    %66 = vector.broadcast %cst_24 : f32 to vector<8x32xf32>
    %67 = arith.addf %66, %65 : vector<8x32xf32>
    %68 = arith.divf %66, %67 : vector<8x32xf32>
    %69 = arith.mulf %60, %39 : vector<8x32xf32>
    %70 = arith.mulf %54, %62 : vector<8x32xf32>
    %71 = arith.addf %69, %70 : vector<8x32xf32>
    %72 = math.tanh %71 : vector<8x32xf32>
    %73 = arith.mulf %68, %72 : vector<8x32xf32>
    %c1 = arith.constant 1 : index
    %c0_25 = arith.constant 0 : index
    %c0_26 = arith.constant 0 : index
    %74 = vector.load %arg20[%c1, %c0_25, %c0_26] : memref<8x8x32xf32, #tpu.memory_space<vmem>>, vector<1x8x32xf32>
    %75 = vector.shape_cast %74 : vector<1x8x32xf32> to vector<8x32xf32>
    %76 = vector.shape_cast %73 : vector<8x32xf32> to vector<1x8x32xf32>
    tpu.vector_store %arg20[%c1, %c0_25, %c0_26], %76 {strides = array<i32>} : memref<8x8x32xf32, #tpu.memory_space<vmem>>, vector<1x8x32xf32>,
    %77 = vector.extract_strided_slice %8 {offsets = [0, 2, 0], sizes = [8, 1, 128], strides = [1, 1, 1]} : vector<8x8x128xf32> to vector<8x1x128xf32>
    %78 = vector.shape_cast %77 : vector<8x1x128xf32> to vector<8x128xf32>
    %cst_27 = arith.constant dense<0.000000e+00> : vector<8x128xf32>
    %79 = tpu.matmul %73, %1, %cst_27 {dimension_numbers = #tpu.dot_dimension_numbers<[1], [0], [0], [1], [0, 0, 1, 1], [], []>} : vector<8x32xf32>, vector<32x128xf32>, vector<8x128xf32> -> vector<8x128xf32>
    %80 = arith.addf %78, %79 : vector<8x128xf32>
    %81 = vector.extract_strided_slice %80 {offsets = [0, 0], sizes = [8, 32], strides = [1, 1]} : vector<8x128xf32> to vector<8x32xf32>
    %82 = arith.negf %81 : vector<8x32xf32>
    %83 = math.exp %82 : vector<8x32xf32>
    %cst_28 = arith.constant 1.000000e+00 : f32
    %84 = vector.broadcast %cst_28 : f32 to vector<8x32xf32>
    %85 = arith.addf %84, %83 : vector<8x32xf32>
    %86 = arith.divf %84, %85 : vector<8x32xf32>
    %87 = vector.extract_strided_slice %80 {offsets = [0, 32], sizes = [8, 32], strides = [1, 1]} : vector<8x128xf32> to vector<8x32xf32>
    %88 = arith.negf %87 : vector<8x32xf32>
    %89 = math.exp %88 : vector<8x32xf32>
    %cst_29 = arith.constant 1.000000e+00 : f32
    %90 = vector.broadcast %cst_29 : f32 to vector<8x32xf32>
    %91 = arith.addf %90, %89 : vector<8x32xf32>
    %92 = arith.divf %90, %91 : vector<8x32xf32>
    %93 = vector.extract_strided_slice %80 {offsets = [0, 64], sizes = [8, 32], strides = [1, 1]} : vector<8x128xf32> to vector<8x32xf32>
    %94 = math.tanh %93 : vector<8x32xf32>
    %95 = vector.extract_strided_slice %80 {offsets = [0, 96], sizes = [8, 32], strides = [1, 1]} : vector<8x128xf32> to vector<8x32xf32>
    %96 = arith.negf %95 : vector<8x32xf32>
    %97 = math.exp %96 : vector<8x32xf32>
    %cst_30 = arith.constant 1.000000e+00 : f32
    %98 = vector.broadcast %cst_30 : f32 to vector<8x32xf32>
    %99 = arith.addf %98, %97 : vector<8x32xf32>
    %100 = arith.divf %98, %99 : vector<8x32xf32>
    %101 = arith.mulf %92, %71 : vector<8x32xf32>
    %102 = arith.mulf %86, %94 : vector<8x32xf32>
    %103 = arith.addf %101, %102 : vector<8x32xf32>
    %104 = math.tanh %103 : vector<8x32xf32>
    %105 = arith.mulf %100, %104 : vector<8x32xf32>
    %c2 = arith.constant 2 : index
    %c0_31 = arith.constant 0 : index
    %c0_32 = arith.constant 0 : index
    %106 = vector.load %arg20[%c2, %c0_31, %c0_32] : memref<8x8x32xf32, #tpu.memory_space<vmem>>, vector<1x8x32xf32>
    %107 = vector.shape_cast %106 : vector<1x8x32xf32> to vector<8x32xf32>
    %108 = vector.shape_cast %105 : vector<8x32xf32> to vector<1x8x32xf32>
    tpu.vector_store %arg20[%c2, %c0_31, %c0_32], %108 {strides = array<i32>} : memref<8x8x32xf32, #tpu.memory_space<vmem>>, vector<1x8x32xf32>,
    %109 = vector.extract_strided_slice %8 {offsets = [0, 3, 0], sizes = [8, 1, 128], strides = [1, 1, 1]} : vector<8x8x128xf32> to vector<8x1x128xf32>
    %110 = vector.shape_cast %109 : vector<8x1x128xf32> to vector<8x128xf32>
    %cst_33 = arith.constant dense<0.000000e+00> : vector<8x128xf32>
    %111 = tpu.matmul %105, %1, %cst_33 {dimension_numbers = #tpu.dot_dimension_numbers<[1], [0], [0], [1], [0, 0, 1, 1], [], []>} : vector<8x32xf32>, vector<32x128xf32>, vector<8x128xf32> -> vector<8x128xf32>
    %112 = arith.addf %110, %111 : vector<8x128xf32>
    %113 = vector.extract_strided_slice %112 {offsets = [0, 0], sizes = [8, 32], strides = [1, 1]} : vector<8x128xf32> to vector<8x32xf32>
    %114 = arith.negf %113 : vector<8x32xf32>
    %115 = math.exp %114 : vector<8x32xf32>
    %cst_34 = arith.constant 1.000000e+00 : f32
    %116 = vector.broadcast %cst_34 : f32 to vector<8x32xf32>
    %117 = arith.addf %116, %115 : vector<8x32xf32>
    %118 = arith.divf %116, %117 : vector<8x32xf32>
    %119 = vector.extract_strided_slice %112 {offsets = [0, 32], sizes = [8, 32], strides = [1, 1]} : vector<8x128xf32> to vector<8x32xf32>
    %120 = arith.negf %119 : vector<8x32xf32>
    %121 = math.exp %120 : vector<8x32xf32>
    %cst_35 = arith.constant 1.000000e+00 : f32
    %122 = vector.broadcast %cst_35 : f32 to vector<8x32xf32>
    %123 = arith.addf %122, %121 : vector<8x32xf32>
    %124 = arith.divf %122, %123 : vector<8x32xf32>
    %125 = vector.extract_strided_slice %112 {offsets = [0, 64], sizes = [8, 32], strides = [1, 1]} : vector<8x128xf32> to vector<8x32xf32>
    %126 = math.tanh %125 : vector<8x32xf32>
    %127 = vector.extract_strided_slice %112 {offsets = [0, 96], sizes = [8, 32], strides = [1, 1]} : vector<8x128xf32> to vector<8x32xf32>
    %128 = arith.negf %127 : vector<8x32xf32>
    %129 = math.exp %128 : vector<8x32xf32>
    %cst_36 = arith.constant 1.000000e+00 : f32
    %130 = vector.broadcast %cst_36 : f32 to vector<8x32xf32>
    %131 = arith.addf %130, %129 : vector<8x32xf32>
    %132 = arith.divf %130, %131 : vector<8x32xf32>
    %133 = arith.mulf %124, %103 : vector<8x32xf32>
    %134 = arith.mulf %118, %126 : vector<8x32xf32>
    %135 = arith.addf %133, %134 : vector<8x32xf32>
    %136 = math.tanh %135 : vector<8x32xf32>
    %137 = arith.mulf %132, %136 : vector<8x32xf32>
    %c3 = arith.constant 3 : index
    %c0_37 = arith.constant 0 : index
    %c0_38 = arith.constant 0 : index
    %138 = vector.load %arg20[%c3, %c0_37, %c0_38] : memref<8x8x32xf32, #tpu.memory_space<vmem>>, vector<1x8x32xf32>
    %139 = vector.shape_cast %138 : vector<1x8x32xf32> to vector<8x32xf32>
    %140 = vector.shape_cast %137 : vector<8x32xf32> to vector<1x8x32xf32>
    tpu.vector_store %arg20[%c3, %c0_37, %c0_38], %140 {strides = array<i32>} : memref<8x8x32xf32, #tpu.memory_space<vmem>>, vector<1x8x32xf32>,
    %141 = vector.extract_strided_slice %8 {offsets = [0, 4, 0], sizes = [8, 1, 128], strides = [1, 1, 1]} : vector<8x8x128xf32> to vector<8x1x128xf32>
    %142 = vector.shape_cast %141 : vector<8x1x128xf32> to vector<8x128xf32>
    %cst_39 = arith.constant dense<0.000000e+00> : vector<8x128xf32>
    %143 = tpu.matmul %137, %1, %cst_39 {dimension_numbers = #tpu.dot_dimension_numbers<[1], [0], [0], [1], [0, 0, 1, 1], [], []>} : vector<8x32xf32>, vector<32x128xf32>, vector<8x128xf32> -> vector<8x128xf32>
    %144 = arith.addf %142, %143 : vector<8x128xf32>
    %145 = vector.extract_strided_slice %144 {offsets = [0, 0], sizes = [8, 32], strides = [1, 1]} : vector<8x128xf32> to vector<8x32xf32>
    %146 = arith.negf %145 : vector<8x32xf32>
    %147 = math.exp %146 : vector<8x32xf32>
    %cst_40 = arith.constant 1.000000e+00 : f32
    %148 = vector.broadcast %cst_40 : f32 to vector<8x32xf32>
    %149 = arith.addf %148, %147 : vector<8x32xf32>
    %150 = arith.divf %148, %149 : vector<8x32xf32>
    %151 = vector.extract_strided_slice %144 {offsets = [0, 32], sizes = [8, 32], strides = [1, 1]} : vector<8x128xf32> to vector<8x32xf32>
    %152 = arith.negf %151 : vector<8x32xf32>
    %153 = math.exp %152 : vector<8x32xf32>
    %cst_41 = arith.constant 1.000000e+00 : f32
    %154 = vector.broadcast %cst_41 : f32 to vector<8x32xf32>
    %155 = arith.addf %154, %153 : vector<8x32xf32>
    %156 = arith.divf %154, %155 : vector<8x32xf32>
    %157 = vector.extract_strided_slice %144 {offsets = [0, 64], sizes = [8, 32], strides = [1, 1]} : vector<8x128xf32> to vector<8x32xf32>
    %158 = math.tanh %157 : vector<8x32xf32>
    %159 = vector.extract_strided_slice %144 {offsets = [0, 96], sizes = [8, 32], strides = [1, 1]} : vector<8x128xf32> to vector<8x32xf32>
    %160 = arith.negf %159 : vector<8x32xf32>
    %161 = math.exp %160 : vector<8x32xf32>
    %cst_42 = arith.constant 1.000000e+00 : f32
    %162 = vector.broadcast %cst_42 : f32 to vector<8x32xf32>
    %163 = arith.addf %162, %161 : vector<8x32xf32>
    %164 = arith.divf %162, %163 : vector<8x32xf32>
    %165 = arith.mulf %156, %135 : vector<8x32xf32>
    %166 = arith.mulf %150, %158 : vector<8x32xf32>
    %167 = arith.addf %165, %166 : vector<8x32xf32>
    %168 = math.tanh %167 : vector<8x32xf32>
    %169 = arith.mulf %164, %168 : vector<8x32xf32>
    %c4 = arith.constant 4 : index
    %c0_43 = arith.constant 0 : index
    %c0_44 = arith.constant 0 : index
    %170 = vector.load %arg20[%c4, %c0_43, %c0_44] : memref<8x8x32xf32, #tpu.memory_space<vmem>>, vector<1x8x32xf32>
    %171 = vector.shape_cast %170 : vector<1x8x32xf32> to vector<8x32xf32>
    %172 = vector.shape_cast %169 : vector<8x32xf32> to vector<1x8x32xf32>
    tpu.vector_store %arg20[%c4, %c0_43, %c0_44], %172 {strides = array<i32>} : memref<8x8x32xf32, #tpu.memory_space<vmem>>, vector<1x8x32xf32>,
    %173 = vector.extract_strided_slice %8 {offsets = [0, 5, 0], sizes = [8, 1, 128], strides = [1, 1, 1]} : vector<8x8x128xf32> to vector<8x1x128xf32>
    %174 = vector.shape_cast %173 : vector<8x1x128xf32> to vector<8x128xf32>
    %cst_45 = arith.constant dense<0.000000e+00> : vector<8x128xf32>
    %175 = tpu.matmul %169, %1, %cst_45 {dimension_numbers = #tpu.dot_dimension_numbers<[1], [0], [0], [1], [0, 0, 1, 1], [], []>} : vector<8x32xf32>, vector<32x128xf32>, vector<8x128xf32> -> vector<8x128xf32>
    %176 = arith.addf %174, %175 : vector<8x128xf32>
    %177 = vector.extract_strided_slice %176 {offsets = [0, 0], sizes = [8, 32], strides = [1, 1]} : vector<8x128xf32> to vector<8x32xf32>
    %178 = arith.negf %177 : vector<8x32xf32>
    %179 = math.exp %178 : vector<8x32xf32>
    %cst_46 = arith.constant 1.000000e+00 : f32
    %180 = vector.broadcast %cst_46 : f32 to vector<8x32xf32>
    %181 = arith.addf %180, %179 : vector<8x32xf32>
    %182 = arith.divf %180, %181 : vector<8x32xf32>
    %183 = vector.extract_strided_slice %176 {offsets = [0, 32], sizes = [8, 32], strides = [1, 1]} : vector<8x128xf32> to vector<8x32xf32>
    %184 = arith.negf %183 : vector<8x32xf32>
    %185 = math.exp %184 : vector<8x32xf32>
    %cst_47 = arith.constant 1.000000e+00 : f32
    %186 = vector.broadcast %cst_47 : f32 to vector<8x32xf32>
    %187 = arith.addf %186, %185 : vector<8x32xf32>
    %188 = arith.divf %186, %187 : vector<8x32xf32>
    %189 = vector.extract_strided_slice %176 {offsets = [0, 64], sizes = [8, 32], strides = [1, 1]} : vector<8x128xf32> to vector<8x32xf32>
    %190 = math.tanh %189 : vector<8x32xf32>
    %191 = vector.extract_strided_slice %176 {offsets = [0, 96], sizes = [8, 32], strides = [1, 1]} : vector<8x128xf32> to vector<8x32xf32>
    %192 = arith.negf %191 : vector<8x32xf32>
    %193 = math.exp %192 : vector<8x32xf32>
    %cst_48 = arith.constant 1.000000e+00 : f32
    %194 = vector.broadcast %cst_48 : f32 to vector<8x32xf32>
    %195 = arith.addf %194, %193 : vector<8x32xf32>
    %196 = arith.divf %194, %195 : vector<8x32xf32>
    %197 = arith.mulf %188, %167 : vector<8x32xf32>
    %198 = arith.mulf %182, %190 : vector<8x32xf32>
    %199 = arith.addf %197, %198 : vector<8x32xf32>
    %200 = math.tanh %199 : vector<8x32xf32>
    %201 = arith.mulf %196, %200 : vector<8x32xf32>
    %c5 = arith.constant 5 : index
    %c0_49 = arith.constant 0 : index
    %c0_50 = arith.constant 0 : index
    %202 = vector.load %arg20[%c5, %c0_49, %c0_50] : memref<8x8x32xf32, #tpu.memory_space<vmem>>, vector<1x8x32xf32>
    %203 = vector.shape_cast %202 : vector<1x8x32xf32> to vector<8x32xf32>
    %204 = vector.shape_cast %201 : vector<8x32xf32> to vector<1x8x32xf32>
    tpu.vector_store %arg20[%c5, %c0_49, %c0_50], %204 {strides = array<i32>} : memref<8x8x32xf32, #tpu.memory_space<vmem>>, vector<1x8x32xf32>,
    %205 = vector.extract_strided_slice %8 {offsets = [0, 6, 0], sizes = [8, 1, 128], strides = [1, 1, 1]} : vector<8x8x128xf32> to vector<8x1x128xf32>
    %206 = vector.shape_cast %205 : vector<8x1x128xf32> to vector<8x128xf32>
    %cst_51 = arith.constant dense<0.000000e+00> : vector<8x128xf32>
    %207 = tpu.matmul %201, %1, %cst_51 {dimension_numbers = #tpu.dot_dimension_numbers<[1], [0], [0], [1], [0, 0, 1, 1], [], []>} : vector<8x32xf32>, vector<32x128xf32>, vector<8x128xf32> -> vector<8x128xf32>
    %208 = arith.addf %206, %207 : vector<8x128xf32>
    %209 = vector.extract_strided_slice %208 {offsets = [0, 0], sizes = [8, 32], strides = [1, 1]} : vector<8x128xf32> to vector<8x32xf32>
    %210 = arith.negf %209 : vector<8x32xf32>
    %211 = math.exp %210 : vector<8x32xf32>
    %cst_52 = arith.constant 1.000000e+00 : f32
    %212 = vector.broadcast %cst_52 : f32 to vector<8x32xf32>
    %213 = arith.addf %212, %211 : vector<8x32xf32>
    %214 = arith.divf %212, %213 : vector<8x32xf32>
    %215 = vector.extract_strided_slice %208 {offsets = [0, 32], sizes = [8, 32], strides = [1, 1]} : vector<8x128xf32> to vector<8x32xf32>
    %216 = arith.negf %215 : vector<8x32xf32>
    %217 = math.exp %216 : vector<8x32xf32>
    %cst_53 = arith.constant 1.000000e+00 : f32
    %218 = vector.broadcast %cst_53 : f32 to vector<8x32xf32>
    %219 = arith.addf %218, %217 : vector<8x32xf32>
    %220 = arith.divf %218, %219 : vector<8x32xf32>
    %221 = vector.extract_strided_slice %208 {offsets = [0, 64], sizes = [8, 32], strides = [1, 1]} : vector<8x128xf32> to vector<8x32xf32>
    %222 = math.tanh %221 : vector<8x32xf32>
    %223 = vector.extract_strided_slice %208 {offsets = [0, 96], sizes = [8, 32], strides = [1, 1]} : vector<8x128xf32> to vector<8x32xf32>
    %224 = arith.negf %223 : vector<8x32xf32>
    %225 = math.exp %224 : vector<8x32xf32>
    %cst_54 = arith.constant 1.000000e+00 : f32
    %226 = vector.broadcast %cst_54 : f32 to vector<8x32xf32>
    %227 = arith.addf %226, %225 : vector<8x32xf32>
    %228 = arith.divf %226, %227 : vector<8x32xf32>
    %229 = arith.mulf %220, %199 : vector<8x32xf32>
    %230 = arith.mulf %214, %222 : vector<8x32xf32>
    %231 = arith.addf %229, %230 : vector<8x32xf32>
    %232 = math.tanh %231 : vector<8x32xf32>
    %233 = arith.mulf %228, %232 : vector<8x32xf32>
    %c6 = arith.constant 6 : index
    %c0_55 = arith.constant 0 : index
    %c0_56 = arith.constant 0 : index
    %234 = vector.load %arg20[%c6, %c0_55, %c0_56] : memref<8x8x32xf32, #tpu.memory_space<vmem>>, vector<1x8x32xf32>
    %235 = vector.shape_cast %234 : vector<1x8x32xf32> to vector<8x32xf32>
    %236 = vector.shape_cast %233 : vector<8x32xf32> to vector<1x8x32xf32>
    tpu.vector_store %arg20[%c6, %c0_55, %c0_56], %236 {strides = array<i32>} : memref<8x8x32xf32, #tpu.memory_space<vmem>>, vector<1x8x32xf32>,
    %237 = vector.extract_strided_slice %8 {offsets = [0, 7, 0], sizes = [8, 1, 128], strides = [1, 1, 1]} : vector<8x8x128xf32> to vector<8x1x128xf32>
    %238 = vector.shape_cast %237 : vector<8x1x128xf32> to vector<8x128xf32>
    %cst_57 = arith.constant dense<0.000000e+00> : vector<8x128xf32>
    %239 = tpu.matmul %233, %1, %cst_57 {dimension_numbers = #tpu.dot_dimension_numbers<[1], [0], [0], [1], [0, 0, 1, 1], [], []>} : vector<8x32xf32>, vector<32x128xf32>, vector<8x128xf32> -> vector<8x128xf32>
    %240 = arith.addf %238, %239 : vector<8x128xf32>
    %241 = vector.extract_strided_slice %240 {offsets = [0, 0], sizes = [8, 32], strides = [1, 1]} : vector<8x128xf32> to vector<8x32xf32>
    %242 = arith.negf %241 : vector<8x32xf32>
    %243 = math.exp %242 : vector<8x32xf32>
    %cst_58 = arith.constant 1.000000e+00 : f32
    %244 = vector.broadcast %cst_58 : f32 to vector<8x32xf32>
    %245 = arith.addf %244, %243 : vector<8x32xf32>
    %246 = arith.divf %244, %245 : vector<8x32xf32>
    %247 = vector.extract_strided_slice %240 {offsets = [0, 32], sizes = [8, 32], strides = [1, 1]} : vector<8x128xf32> to vector<8x32xf32>
    %248 = arith.negf %247 : vector<8x32xf32>
    %249 = math.exp %248 : vector<8x32xf32>
    %cst_59 = arith.constant 1.000000e+00 : f32
    %250 = vector.broadcast %cst_59 : f32 to vector<8x32xf32>
    %251 = arith.addf %250, %249 : vector<8x32xf32>
    %252 = arith.divf %250, %251 : vector<8x32xf32>
    %253 = vector.extract_strided_slice %240 {offsets = [0, 64], sizes = [8, 32], strides = [1, 1]} : vector<8x128xf32> to vector<8x32xf32>
    %254 = math.tanh %253 : vector<8x32xf32>
    %255 = vector.extract_strided_slice %240 {offsets = [0, 96], sizes = [8, 32], strides = [1, 1]} : vector<8x128xf32> to vector<8x32xf32>
    %256 = arith.negf %255 : vector<8x32xf32>
    %257 = math.exp %256 : vector<8x32xf32>
    %cst_60 = arith.constant 1.000000e+00 : f32
    %258 = vector.broadcast %cst_60 : f32 to vector<8x32xf32>
    %259 = arith.addf %258, %257 : vector<8x32xf32>
    %260 = arith.divf %258, %259 : vector<8x32xf32>
    %261 = arith.mulf %252, %231 : vector<8x32xf32>
    %262 = arith.mulf %246, %254 : vector<8x32xf32>
    %263 = arith.addf %261, %262 : vector<8x32xf32>
    %264 = math.tanh %263 : vector<8x32xf32>
    %265 = arith.mulf %260, %264 : vector<8x32xf32>
    %c7 = arith.constant 7 : index
    %c0_61 = arith.constant 0 : index
    %c0_62 = arith.constant 0 : index
    %266 = vector.load %arg20[%c7, %c0_61, %c0_62] : memref<8x8x32xf32, #tpu.memory_space<vmem>>, vector<1x8x32xf32>
    %267 = vector.shape_cast %266 : vector<1x8x32xf32> to vector<8x32xf32>
    %268 = vector.shape_cast %265 : vector<8x32xf32> to vector<1x8x32xf32>
    tpu.vector_store %arg20[%c7, %c0_61, %c0_62], %268 {strides = array<i32>} : memref<8x8x32xf32, #tpu.memory_space<vmem>>, vector<1x8x32xf32>,
    %269 = vector.extract_strided_slice %265 {offsets = [0, 0], sizes = [4, 32], strides = [1, 1]} : vector<8x32xf32> to vector<4x32xf32>
    %c0_63 = arith.constant 0 : index
    %c0_64 = arith.constant 0 : index
    %c0_65 = arith.constant 0 : index
    %270 = vector.load %arg18[%c0_63, %c0_64, %c0_65] : memref<4x4x32xf32, #tpu.memory_space<vmem>>, vector<1x4x32xf32>
    %271 = vector.shape_cast %270 : vector<1x4x32xf32> to vector<4x32xf32>
    %272 = vector.shape_cast %269 : vector<4x32xf32> to vector<1x4x32xf32>
    tpu.vector_store %arg18[%c0_63, %c0_64, %c0_65], %272 {strides = array<i32>} : memref<4x4x32xf32, #tpu.memory_space<vmem>>, vector<1x4x32xf32>,
    %273 = vector.extract_strided_slice %263 {offsets = [0, 0], sizes = [4, 32], strides = [1, 1]} : vector<8x32xf32> to vector<4x32xf32>
    %c0_66 = arith.constant 0 : index
    %c0_67 = arith.constant 0 : index
    %c0_68 = arith.constant 0 : index
    %274 = vector.load %arg19[%c0_66, %c0_67, %c0_68] : memref<4x4x32xf32, #tpu.memory_space<vmem>>, vector<1x4x32xf32>
    %275 = vector.shape_cast %274 : vector<1x4x32xf32> to vector<4x32xf32>
    %276 = vector.shape_cast %273 : vector<4x32xf32> to vector<1x4x32xf32>
    tpu.vector_store %arg19[%c0_66, %c0_67, %c0_68], %276 {strides = array<i32>} : memref<4x4x32xf32, #tpu.memory_space<vmem>>, vector<1x4x32xf32>,
    %c0_69 = arith.constant 0 : index
    %c0_70 = arith.constant 0 : index
    %277 = vector.load %arg8[%c0_69, %c0_70] : memref<32x128xf32, #tpu.memory_space<vmem>>, vector<32x128xf32>
    %c0_71 = arith.constant 0 : index
    %c0_72 = arith.constant 0 : index
    %278 = vector.load %arg9[%c0_71, %c0_72] : memref<32x128xf32, #tpu.memory_space<vmem>>, vector<32x128xf32>
    %c0_73 = arith.constant 0 : index
    %c0_74 = arith.constant 0 : index
    %279 = vector.load %arg10[%c0_73, %c0_74] : memref<1x128xf32, #tpu.memory_space<vmem>>, vector<1x128xf32>
    %c0_75 = arith.constant 0 : index
    %c0_76 = arith.constant 0 : index
    %c0_77 = arith.constant 0 : index
    %280 = vector.load %arg20[%c0_75, %c0_76, %c0_77] : memref<8x8x32xf32, #tpu.memory_space<vmem>>, vector<8x8x32xf32>
    %281 = vector.shape_cast %280 : vector<8x8x32xf32> to vector<64x32xf32>
    %cst_78 = arith.constant dense<0.000000e+00> : vector<64x128xf32>
    %282 = tpu.matmul %281, %277, %cst_78 {dimension_numbers = #tpu.dot_dimension_numbers<[1], [0], [0], [1], [0, 0, 1, 1], [], []>} : vector<64x32xf32>, vector<32x128xf32>, vector<64x128xf32> -> vector<64x128xf32>
    %283 = vector.broadcast %279 : vector<1x128xf32> to vector<64x128xf32>
    %284 = arith.addf %282, %283 : vector<64x128xf32>
    %285 = vector.shape_cast %284 : vector<64x128xf32> to vector<8x8x128xf32>
    %c1_79 = arith.constant 1 : index
    %c0_80 = arith.constant 0 : index
    %c0_81 = arith.constant 0 : index
    %286 = vector.load %arg1[%c1_79, %c0_80, %c0_81] : memref<4x8x32xf32, #tpu.memory_space<vmem>>, vector<1x8x32xf32>
    %287 = vector.shape_cast %286 : vector<1x8x32xf32> to vector<8x32xf32>
    %c1_82 = arith.constant 1 : index
    %c0_83 = arith.constant 0 : index
    %c0_84 = arith.constant 0 : index
    %288 = vector.load %arg2[%c1_82, %c0_83, %c0_84] : memref<4x8x32xf32, #tpu.memory_space<vmem>>, vector<1x8x32xf32>
    %289 = vector.shape_cast %288 : vector<1x8x32xf32> to vector<8x32xf32>
    %290 = vector.extract_strided_slice %285 {offsets = [0, 0, 0], sizes = [1, 8, 128], strides = [1, 1, 1]} : vector<8x8x128xf32> to vector<1x8x128xf32>
    %291 = vector.shape_cast %290 : vector<1x8x128xf32> to vector<8x128xf32>
    %cst_85 = arith.constant dense<0.000000e+00> : vector<8x128xf32>
    %292 = tpu.matmul %287, %278, %cst_85 {dimension_numbers = #tpu.dot_dimension_numbers<[1], [0], [0], [1], [0, 0, 1, 1], [], []>} : vector<8x32xf32>, vector<32x128xf32>, vector<8x128xf32> -> vector<8x128xf32>
    %293 = arith.addf %291, %292 : vector<8x128xf32>
    %294 = vector.extract_strided_slice %293 {offsets = [0, 0], sizes = [8, 32], strides = [1, 1]} : vector<8x128xf32> to vector<8x32xf32>
    %295 = arith.negf %294 : vector<8x32xf32>
    %296 = math.exp %295 : vector<8x32xf32>
    %cst_86 = arith.constant 1.000000e+00 : f32
    %297 = vector.broadcast %cst_86 : f32 to vector<8x32xf32>
    %298 = arith.addf %297, %296 : vector<8x32xf32>
    %299 = arith.divf %297, %298 : vector<8x32xf32>
    %300 = vector.extract_strided_slice %293 {offsets = [0, 32], sizes = [8, 32], strides = [1, 1]} : vector<8x128xf32> to vector<8x32xf32>
    %301 = arith.negf %300 : vector<8x32xf32>
    %302 = math.exp %301 : vector<8x32xf32>
    %cst_87 = arith.constant 1.000000e+00 : f32
    %303 = vector.broadcast %cst_87 : f32 to vector<8x32xf32>
    %304 = arith.addf %303, %302 : vector<8x32xf32>
    %305 = arith.divf %303, %304 : vector<8x32xf32>
    %306 = vector.extract_strided_slice %293 {offsets = [0, 64], sizes = [8, 32], strides = [1, 1]} : vector<8x128xf32> to vector<8x32xf32>
    %307 = math.tanh %306 : vector<8x32xf32>
    %308 = vector.extract_strided_slice %293 {offsets = [0, 96], sizes = [8, 32], strides = [1, 1]} : vector<8x128xf32> to vector<8x32xf32>
    %309 = arith.negf %308 : vector<8x32xf32>
    %310 = math.exp %309 : vector<8x32xf32>
    %cst_88 = arith.constant 1.000000e+00 : f32
    %311 = vector.broadcast %cst_88 : f32 to vector<8x32xf32>
    %312 = arith.addf %311, %310 : vector<8x32xf32>
    %313 = arith.divf %311, %312 : vector<8x32xf32>
    %314 = arith.mulf %305, %289 : vector<8x32xf32>
    %315 = arith.mulf %299, %307 : vector<8x32xf32>
    %316 = arith.addf %314, %315 : vector<8x32xf32>
    %317 = math.tanh %316 : vector<8x32xf32>
    %318 = arith.mulf %313, %317 : vector<8x32xf32>
    %c0_89 = arith.constant 0 : index
    %c0_90 = arith.constant 0 : index
    %c0_91 = arith.constant 0 : index
    %319 = vector.load %arg20[%c0_89, %c0_90, %c0_91] : memref<8x8x32xf32, #tpu.memory_space<vmem>>, vector<1x8x32xf32>
    %320 = vector.shape_cast %319 : vector<1x8x32xf32> to vector<8x32xf32>
    %321 = vector.shape_cast %318 : vector<8x32xf32> to vector<1x8x32xf32>
    tpu.vector_store %arg20[%c0_89, %c0_90, %c0_91], %321 {strides = array<i32>} : memref<8x8x32xf32, #tpu.memory_space<vmem>>, vector<1x8x32xf32>,
    %322 = vector.extract_strided_slice %285 {offsets = [1, 0, 0], sizes = [1, 8, 128], strides = [1, 1, 1]} : vector<8x8x128xf32> to vector<1x8x128xf32>
    %323 = vector.shape_cast %322 : vector<1x8x128xf32> to vector<8x128xf32>
    %cst_92 = arith.constant dense<0.000000e+00> : vector<8x128xf32>
    %324 = tpu.matmul %318, %278, %cst_92 {dimension_numbers = #tpu.dot_dimension_numbers<[1], [0], [0], [1], [0, 0, 1, 1], [], []>} : vector<8x32xf32>, vector<32x128xf32>, vector<8x128xf32> -> vector<8x128xf32>
    %325 = arith.addf %323, %324 : vector<8x128xf32>
    %326 = vector.extract_strided_slice %325 {offsets = [0, 0], sizes = [8, 32], strides = [1, 1]} : vector<8x128xf32> to vector<8x32xf32>
    %327 = arith.negf %326 : vector<8x32xf32>
    %328 = math.exp %327 : vector<8x32xf32>
    %cst_93 = arith.constant 1.000000e+00 : f32
    %329 = vector.broadcast %cst_93 : f32 to vector<8x32xf32>
    %330 = arith.addf %329, %328 : vector<8x32xf32>
    %331 = arith.divf %329, %330 : vector<8x32xf32>
    %332 = vector.extract_strided_slice %325 {offsets = [0, 32], sizes = [8, 32], strides = [1, 1]} : vector<8x128xf32> to vector<8x32xf32>
    %333 = arith.negf %332 : vector<8x32xf32>
    %334 = math.exp %333 : vector<8x32xf32>
    %cst_94 = arith.constant 1.000000e+00 : f32
    %335 = vector.broadcast %cst_94 : f32 to vector<8x32xf32>
    %336 = arith.addf %335, %334 : vector<8x32xf32>
    %337 = arith.divf %335, %336 : vector<8x32xf32>
    %338 = vector.extract_strided_slice %325 {offsets = [0, 64], sizes = [8, 32], strides = [1, 1]} : vector<8x128xf32> to vector<8x32xf32>
    %339 = math.tanh %338 : vector<8x32xf32>
    %340 = vector.extract_strided_slice %325 {offsets = [0, 96], sizes = [8, 32], strides = [1, 1]} : vector<8x128xf32> to vector<8x32xf32>
    %341 = arith.negf %340 : vector<8x32xf32>
    %342 = math.exp %341 : vector<8x32xf32>
    %cst_95 = arith.constant 1.000000e+00 : f32
    %343 = vector.broadcast %cst_95 : f32 to vector<8x32xf32>
    %344 = arith.addf %343, %342 : vector<8x32xf32>
    %345 = arith.divf %343, %344 : vector<8x32xf32>
    %346 = arith.mulf %337, %316 : vector<8x32xf32>
    %347 = arith.mulf %331, %339 : vector<8x32xf32>
    %348 = arith.addf %346, %347 : vector<8x32xf32>
    %349 = math.tanh %348 : vector<8x32xf32>
    %350 = arith.mulf %345, %349 : vector<8x32xf32>
    %c1_96 = arith.constant 1 : index
    %c0_97 = arith.constant 0 : index
    %c0_98 = arith.constant 0 : index
    %351 = vector.load %arg20[%c1_96, %c0_97, %c0_98] : memref<8x8x32xf32, #tpu.memory_space<vmem>>, vector<1x8x32xf32>
    %352 = vector.shape_cast %351 : vector<1x8x32xf32> to vector<8x32xf32>
    %353 = vector.shape_cast %350 : vector<8x32xf32> to vector<1x8x32xf32>
    tpu.vector_store %arg20[%c1_96, %c0_97, %c0_98], %353 {strides = array<i32>} : memref<8x8x32xf32, #tpu.memory_space<vmem>>, vector<1x8x32xf32>,
    %354 = vector.extract_strided_slice %285 {offsets = [2, 0, 0], sizes = [1, 8, 128], strides = [1, 1, 1]} : vector<8x8x128xf32> to vector<1x8x128xf32>
    %355 = vector.shape_cast %354 : vector<1x8x128xf32> to vector<8x128xf32>
    %cst_99 = arith.constant dense<0.000000e+00> : vector<8x128xf32>
    %356 = tpu.matmul %350, %278, %cst_99 {dimension_numbers = #tpu.dot_dimension_numbers<[1], [0], [0], [1], [0, 0, 1, 1], [], []>} : vector<8x32xf32>, vector<32x128xf32>, vector<8x128xf32> -> vector<8x128xf32>
    %357 = arith.addf %355, %356 : vector<8x128xf32>
    %358 = vector.extract_strided_slice %357 {offsets = [0, 0], sizes = [8, 32], strides = [1, 1]} : vector<8x128xf32> to vector<8x32xf32>
    %359 = arith.negf %358 : vector<8x32xf32>
    %360 = math.exp %359 : vector<8x32xf32>
    %cst_100 = arith.constant 1.000000e+00 : f32
    %361 = vector.broadcast %cst_100 : f32 to vector<8x32xf32>
    %362 = arith.addf %361, %360 : vector<8x32xf32>
    %363 = arith.divf %361, %362 : vector<8x32xf32>
    %364 = vector.extract_strided_slice %357 {offsets = [0, 32], sizes = [8, 32], strides = [1, 1]} : vector<8x128xf32> to vector<8x32xf32>
    %365 = arith.negf %364 : vector<8x32xf32>
    %366 = math.exp %365 : vector<8x32xf32>
    %cst_101 = arith.constant 1.000000e+00 : f32
    %367 = vector.broadcast %cst_101 : f32 to vector<8x32xf32>
    %368 = arith.addf %367, %366 : vector<8x32xf32>
    %369 = arith.divf %367, %368 : vector<8x32xf32>
    %370 = vector.extract_strided_slice %357 {offsets = [0, 64], sizes = [8, 32], strides = [1, 1]} : vector<8x128xf32> to vector<8x32xf32>
    %371 = math.tanh %370 : vector<8x32xf32>
    %372 = vector.extract_strided_slice %357 {offsets = [0, 96], sizes = [8, 32], strides = [1, 1]} : vector<8x128xf32> to vector<8x32xf32>
    %373 = arith.negf %372 : vector<8x32xf32>
    %374 = math.exp %373 : vector<8x32xf32>
    %cst_102 = arith.constant 1.000000e+00 : f32
    %375 = vector.broadcast %cst_102 : f32 to vector<8x32xf32>
    %376 = arith.addf %375, %374 : vector<8x32xf32>
    %377 = arith.divf %375, %376 : vector<8x32xf32>
    %378 = arith.mulf %369, %348 : vector<8x32xf32>
    %379 = arith.mulf %363, %371 : vector<8x32xf32>
    %380 = arith.addf %378, %379 : vector<8x32xf32>
    %381 = math.tanh %380 : vector<8x32xf32>
    %382 = arith.mulf %377, %381 : vector<8x32xf32>
    %c2_103 = arith.constant 2 : index
    %c0_104 = arith.constant 0 : index
    %c0_105 = arith.constant 0 : index
    %383 = vector.load %arg20[%c2_103, %c0_104, %c0_105] : memref<8x8x32xf32, #tpu.memory_space<vmem>>, vector<1x8x32xf32>
    %384 = vector.shape_cast %383 : vector<1x8x32xf32> to vector<8x32xf32>
    %385 = vector.shape_cast %382 : vector<8x32xf32> to vector<1x8x32xf32>
    tpu.vector_store %arg20[%c2_103, %c0_104, %c0_105], %385 {strides = array<i32>} : memref<8x8x32xf32, #tpu.memory_space<vmem>>, vector<1x8x32xf32>,
    %386 = vector.extract_strided_slice %285 {offsets = [3, 0, 0], sizes = [1, 8, 128], strides = [1, 1, 1]} : vector<8x8x128xf32> to vector<1x8x128xf32>
    %387 = vector.shape_cast %386 : vector<1x8x128xf32> to vector<8x128xf32>
    %cst_106 = arith.constant dense<0.000000e+00> : vector<8x128xf32>
    %388 = tpu.matmul %382, %278, %cst_106 {dimension_numbers = #tpu.dot_dimension_numbers<[1], [0], [0], [1], [0, 0, 1, 1], [], []>} : vector<8x32xf32>, vector<32x128xf32>, vector<8x128xf32> -> vector<8x128xf32>
    %389 = arith.addf %387, %388 : vector<8x128xf32>
    %390 = vector.extract_strided_slice %389 {offsets = [0, 0], sizes = [8, 32], strides = [1, 1]} : vector<8x128xf32> to vector<8x32xf32>
    %391 = arith.negf %390 : vector<8x32xf32>
    %392 = math.exp %391 : vector<8x32xf32>
    %cst_107 = arith.constant 1.000000e+00 : f32
    %393 = vector.broadcast %cst_107 : f32 to vector<8x32xf32>
    %394 = arith.addf %393, %392 : vector<8x32xf32>
    %395 = arith.divf %393, %394 : vector<8x32xf32>
    %396 = vector.extract_strided_slice %389 {offsets = [0, 32], sizes = [8, 32], strides = [1, 1]} : vector<8x128xf32> to vector<8x32xf32>
    %397 = arith.negf %396 : vector<8x32xf32>
    %398 = math.exp %397 : vector<8x32xf32>
    %cst_108 = arith.constant 1.000000e+00 : f32
    %399 = vector.broadcast %cst_108 : f32 to vector<8x32xf32>
    %400 = arith.addf %399, %398 : vector<8x32xf32>
    %401 = arith.divf %399, %400 : vector<8x32xf32>
    %402 = vector.extract_strided_slice %389 {offsets = [0, 64], sizes = [8, 32], strides = [1, 1]} : vector<8x128xf32> to vector<8x32xf32>
    %403 = math.tanh %402 : vector<8x32xf32>
    %404 = vector.extract_strided_slice %389 {offsets = [0, 96], sizes = [8, 32], strides = [1, 1]} : vector<8x128xf32> to vector<8x32xf32>
    %405 = arith.negf %404 : vector<8x32xf32>
    %406 = math.exp %405 : vector<8x32xf32>
    %cst_109 = arith.constant 1.000000e+00 : f32
    %407 = vector.broadcast %cst_109 : f32 to vector<8x32xf32>
    %408 = arith.addf %407, %406 : vector<8x32xf32>
    %409 = arith.divf %407, %408 : vector<8x32xf32>
    %410 = arith.mulf %401, %380 : vector<8x32xf32>
    %411 = arith.mulf %395, %403 : vector<8x32xf32>
    %412 = arith.addf %410, %411 : vector<8x32xf32>
    %413 = math.tanh %412 : vector<8x32xf32>
    %414 = arith.mulf %409, %413 : vector<8x32xf32>
    %c3_110 = arith.constant 3 : index
    %c0_111 = arith.constant 0 : index
    %c0_112 = arith.constant 0 : index
    %415 = vector.load %arg20[%c3_110, %c0_111, %c0_112] : memref<8x8x32xf32, #tpu.memory_space<vmem>>, vector<1x8x32xf32>
    %416 = vector.shape_cast %415 : vector<1x8x32xf32> to vector<8x32xf32>
    %417 = vector.shape_cast %414 : vector<8x32xf32> to vector<1x8x32xf32>
    tpu.vector_store %arg20[%c3_110, %c0_111, %c0_112], %417 {strides = array<i32>} : memref<8x8x32xf32, #tpu.memory_space<vmem>>, vector<1x8x32xf32>,
    %418 = vector.extract_strided_slice %285 {offsets = [4, 0, 0], sizes = [1, 8, 128], strides = [1, 1, 1]} : vector<8x8x128xf32> to vector<1x8x128xf32>
    %419 = vector.shape_cast %418 : vector<1x8x128xf32> to vector<8x128xf32>
    %cst_113 = arith.constant dense<0.000000e+00> : vector<8x128xf32>
    %420 = tpu.matmul %414, %278, %cst_113 {dimension_numbers = #tpu.dot_dimension_numbers<[1], [0], [0], [1], [0, 0, 1, 1], [], []>} : vector<8x32xf32>, vector<32x128xf32>, vector<8x128xf32> -> vector<8x128xf32>
    %421 = arith.addf %419, %420 : vector<8x128xf32>
    %422 = vector.extract_strided_slice %421 {offsets = [0, 0], sizes = [8, 32], strides = [1, 1]} : vector<8x128xf32> to vector<8x32xf32>
    %423 = arith.negf %422 : vector<8x32xf32>
    %424 = math.exp %423 : vector<8x32xf32>
    %cst_114 = arith.constant 1.000000e+00 : f32
    %425 = vector.broadcast %cst_114 : f32 to vector<8x32xf32>
    %426 = arith.addf %425, %424 : vector<8x32xf32>
    %427 = arith.divf %425, %426 : vector<8x32xf32>
    %428 = vector.extract_strided_slice %421 {offsets = [0, 32], sizes = [8, 32], strides = [1, 1]} : vector<8x128xf32> to vector<8x32xf32>
    %429 = arith.negf %428 : vector<8x32xf32>
    %430 = math.exp %429 : vector<8x32xf32>
    %cst_115 = arith.constant 1.000000e+00 : f32
    %431 = vector.broadcast %cst_115 : f32 to vector<8x32xf32>
    %432 = arith.addf %431, %430 : vector<8x32xf32>
    %433 = arith.divf %431, %432 : vector<8x32xf32>
    %434 = vector.extract_strided_slice %421 {offsets = [0, 64], sizes = [8, 32], strides = [1, 1]} : vector<8x128xf32> to vector<8x32xf32>
    %435 = math.tanh %434 : vector<8x32xf32>
    %436 = vector.extract_strided_slice %421 {offsets = [0, 96], sizes = [8, 32], strides = [1, 1]} : vector<8x128xf32> to vector<8x32xf32>
    %437 = arith.negf %436 : vector<8x32xf32>
    %438 = math.exp %437 : vector<8x32xf32>
    %cst_116 = arith.constant 1.000000e+00 : f32
    %439 = vector.broadcast %cst_116 : f32 to vector<8x32xf32>
    %440 = arith.addf %439, %438 : vector<8x32xf32>
    %441 = arith.divf %439, %440 : vector<8x32xf32>
    %442 = arith.mulf %433, %412 : vector<8x32xf32>
    %443 = arith.mulf %427, %435 : vector<8x32xf32>
    %444 = arith.addf %442, %443 : vector<8x32xf32>
    %445 = math.tanh %444 : vector<8x32xf32>
    %446 = arith.mulf %441, %445 : vector<8x32xf32>
    %c4_117 = arith.constant 4 : index
    %c0_118 = arith.constant 0 : index
    %c0_119 = arith.constant 0 : index
    %447 = vector.load %arg20[%c4_117, %c0_118, %c0_119] : memref<8x8x32xf32, #tpu.memory_space<vmem>>, vector<1x8x32xf32>
    %448 = vector.shape_cast %447 : vector<1x8x32xf32> to vector<8x32xf32>
    %449 = vector.shape_cast %446 : vector<8x32xf32> to vector<1x8x32xf32>
    tpu.vector_store %arg20[%c4_117, %c0_118, %c0_119], %449 {strides = array<i32>} : memref<8x8x32xf32, #tpu.memory_space<vmem>>, vector<1x8x32xf32>,
    %450 = vector.extract_strided_slice %285 {offsets = [5, 0, 0], sizes = [1, 8, 128], strides = [1, 1, 1]} : vector<8x8x128xf32> to vector<1x8x128xf32>
    %451 = vector.shape_cast %450 : vector<1x8x128xf32> to vector<8x128xf32>
    %cst_120 = arith.constant dense<0.000000e+00> : vector<8x128xf32>
    %452 = tpu.matmul %446, %278, %cst_120 {dimension_numbers = #tpu.dot_dimension_numbers<[1], [0], [0], [1], [0, 0, 1, 1], [], []>} : vector<8x32xf32>, vector<32x128xf32>, vector<8x128xf32> -> vector<8x128xf32>
    %453 = arith.addf %451, %452 : vector<8x128xf32>
    %454 = vector.extract_strided_slice %453 {offsets = [0, 0], sizes = [8, 32], strides = [1, 1]} : vector<8x128xf32> to vector<8x32xf32>
    %455 = arith.negf %454 : vector<8x32xf32>
    %456 = math.exp %455 : vector<8x32xf32>
    %cst_121 = arith.constant 1.000000e+00 : f32
    %457 = vector.broadcast %cst_121 : f32 to vector<8x32xf32>
    %458 = arith.addf %457, %456 : vector<8x32xf32>
    %459 = arith.divf %457, %458 : vector<8x32xf32>
    %460 = vector.extract_strided_slice %453 {offsets = [0, 32], sizes = [8, 32], strides = [1, 1]} : vector<8x128xf32> to vector<8x32xf32>
    %461 = arith.negf %460 : vector<8x32xf32>
    %462 = math.exp %461 : vector<8x32xf32>
    %cst_122 = arith.constant 1.000000e+00 : f32
    %463 = vector.broadcast %cst_122 : f32 to vector<8x32xf32>
    %464 = arith.addf %463, %462 : vector<8x32xf32>
    %465 = arith.divf %463, %464 : vector<8x32xf32>
    %466 = vector.extract_strided_slice %453 {offsets = [0, 64], sizes = [8, 32], strides = [1, 1]} : vector<8x128xf32> to vector<8x32xf32>
    %467 = math.tanh %466 : vector<8x32xf32>
    %468 = vector.extract_strided_slice %453 {offsets = [0, 96], sizes = [8, 32], strides = [1, 1]} : vector<8x128xf32> to vector<8x32xf32>
    %469 = arith.negf %468 : vector<8x32xf32>
    %470 = math.exp %469 : vector<8x32xf32>
    %cst_123 = arith.constant 1.000000e+00 : f32
    %471 = vector.broadcast %cst_123 : f32 to vector<8x32xf32>
    %472 = arith.addf %471, %470 : vector<8x32xf32>
    %473 = arith.divf %471, %472 : vector<8x32xf32>
    %474 = arith.mulf %465, %444 : vector<8x32xf32>
    %475 = arith.mulf %459, %467 : vector<8x32xf32>
    %476 = arith.addf %474, %475 : vector<8x32xf32>
    %477 = math.tanh %476 : vector<8x32xf32>
    %478 = arith.mulf %473, %477 : vector<8x32xf32>
    %c5_124 = arith.constant 5 : index
    %c0_125 = arith.constant 0 : index
    %c0_126 = arith.constant 0 : index
    %479 = vector.load %arg20[%c5_124, %c0_125, %c0_126] : memref<8x8x32xf32, #tpu.memory_space<vmem>>, vector<1x8x32xf32>
    %480 = vector.shape_cast %479 : vector<1x8x32xf32> to vector<8x32xf32>
    %481 = vector.shape_cast %478 : vector<8x32xf32> to vector<1x8x32xf32>
    tpu.vector_store %arg20[%c5_124, %c0_125, %c0_126], %481 {strides = array<i32>} : memref<8x8x32xf32, #tpu.memory_space<vmem>>, vector<1x8x32xf32>,
    %482 = vector.extract_strided_slice %285 {offsets = [6, 0, 0], sizes = [1, 8, 128], strides = [1, 1, 1]} : vector<8x8x128xf32> to vector<1x8x128xf32>
    %483 = vector.shape_cast %482 : vector<1x8x128xf32> to vector<8x128xf32>
    %cst_127 = arith.constant dense<0.000000e+00> : vector<8x128xf32>
    %484 = tpu.matmul %478, %278, %cst_127 {dimension_numbers = #tpu.dot_dimension_numbers<[1], [0], [0], [1], [0, 0, 1, 1], [], []>} : vector<8x32xf32>, vector<32x128xf32>, vector<8x128xf32> -> vector<8x128xf32>
    %485 = arith.addf %483, %484 : vector<8x128xf32>
    %486 = vector.extract_strided_slice %485 {offsets = [0, 0], sizes = [8, 32], strides = [1, 1]} : vector<8x128xf32> to vector<8x32xf32>
    %487 = arith.negf %486 : vector<8x32xf32>
    %488 = math.exp %487 : vector<8x32xf32>
    %cst_128 = arith.constant 1.000000e+00 : f32
    %489 = vector.broadcast %cst_128 : f32 to vector<8x32xf32>
    %490 = arith.addf %489, %488 : vector<8x32xf32>
    %491 = arith.divf %489, %490 : vector<8x32xf32>
    %492 = vector.extract_strided_slice %485 {offsets = [0, 32], sizes = [8, 32], strides = [1, 1]} : vector<8x128xf32> to vector<8x32xf32>
    %493 = arith.negf %492 : vector<8x32xf32>
    %494 = math.exp %493 : vector<8x32xf32>
    %cst_129 = arith.constant 1.000000e+00 : f32
    %495 = vector.broadcast %cst_129 : f32 to vector<8x32xf32>
    %496 = arith.addf %495, %494 : vector<8x32xf32>
    %497 = arith.divf %495, %496 : vector<8x32xf32>
    %498 = vector.extract_strided_slice %485 {offsets = [0, 64], sizes = [8, 32], strides = [1, 1]} : vector<8x128xf32> to vector<8x32xf32>
    %499 = math.tanh %498 : vector<8x32xf32>
    %500 = vector.extract_strided_slice %485 {offsets = [0, 96], sizes = [8, 32], strides = [1, 1]} : vector<8x128xf32> to vector<8x32xf32>
    %501 = arith.negf %500 : vector<8x32xf32>
    %502 = math.exp %501 : vector<8x32xf32>
    %cst_130 = arith.constant 1.000000e+00 : f32
    %503 = vector.broadcast %cst_130 : f32 to vector<8x32xf32>
    %504 = arith.addf %503, %502 : vector<8x32xf32>
    %505 = arith.divf %503, %504 : vector<8x32xf32>
    %506 = arith.mulf %497, %476 : vector<8x32xf32>
    %507 = arith.mulf %491, %499 : vector<8x32xf32>
    %508 = arith.addf %506, %507 : vector<8x32xf32>
    %509 = math.tanh %508 : vector<8x32xf32>
    %510 = arith.mulf %505, %509 : vector<8x32xf32>
    %c6_131 = arith.constant 6 : index
    %c0_132 = arith.constant 0 : index
    %c0_133 = arith.constant 0 : index
    %511 = vector.load %arg20[%c6_131, %c0_132, %c0_133] : memref<8x8x32xf32, #tpu.memory_space<vmem>>, vector<1x8x32xf32>
    %512 = vector.shape_cast %511 : vector<1x8x32xf32> to vector<8x32xf32>
    %513 = vector.shape_cast %510 : vector<8x32xf32> to vector<1x8x32xf32>
    tpu.vector_store %arg20[%c6_131, %c0_132, %c0_133], %513 {strides = array<i32>} : memref<8x8x32xf32, #tpu.memory_space<vmem>>, vector<1x8x32xf32>,
    %514 = vector.extract_strided_slice %285 {offsets = [7, 0, 0], sizes = [1, 8, 128], strides = [1, 1, 1]} : vector<8x8x128xf32> to vector<1x8x128xf32>
    %515 = vector.shape_cast %514 : vector<1x8x128xf32> to vector<8x128xf32>
    %cst_134 = arith.constant dense<0.000000e+00> : vector<8x128xf32>
    %516 = tpu.matmul %510, %278, %cst_134 {dimension_numbers = #tpu.dot_dimension_numbers<[1], [0], [0], [1], [0, 0, 1, 1], [], []>} : vector<8x32xf32>, vector<32x128xf32>, vector<8x128xf32> -> vector<8x128xf32>
    %517 = arith.addf %515, %516 : vector<8x128xf32>
    %518 = vector.extract_strided_slice %517 {offsets = [0, 0], sizes = [8, 32], strides = [1, 1]} : vector<8x128xf32> to vector<8x32xf32>
    %519 = arith.negf %518 : vector<8x32xf32>
    %520 = math.exp %519 : vector<8x32xf32>
    %cst_135 = arith.constant 1.000000e+00 : f32
    %521 = vector.broadcast %cst_135 : f32 to vector<8x32xf32>
    %522 = arith.addf %521, %520 : vector<8x32xf32>
    %523 = arith.divf %521, %522 : vector<8x32xf32>
    %524 = vector.extract_strided_slice %517 {offsets = [0, 32], sizes = [8, 32], strides = [1, 1]} : vector<8x128xf32> to vector<8x32xf32>
    %525 = arith.negf %524 : vector<8x32xf32>
    %526 = math.exp %525 : vector<8x32xf32>
    %cst_136 = arith.constant 1.000000e+00 : f32
    %527 = vector.broadcast %cst_136 : f32 to vector<8x32xf32>
    %528 = arith.addf %527, %526 : vector<8x32xf32>
    %529 = arith.divf %527, %528 : vector<8x32xf32>
    %530 = vector.extract_strided_slice %517 {offsets = [0, 64], sizes = [8, 32], strides = [1, 1]} : vector<8x128xf32> to vector<8x32xf32>
    %531 = math.tanh %530 : vector<8x32xf32>
    %532 = vector.extract_strided_slice %517 {offsets = [0, 96], sizes = [8, 32], strides = [1, 1]} : vector<8x128xf32> to vector<8x32xf32>
    %533 = arith.negf %532 : vector<8x32xf32>
    %534 = math.exp %533 : vector<8x32xf32>
    %cst_137 = arith.constant 1.000000e+00 : f32
    %535 = vector.broadcast %cst_137 : f32 to vector<8x32xf32>
    %536 = arith.addf %535, %534 : vector<8x32xf32>
    %537 = arith.divf %535, %536 : vector<8x32xf32>
    %538 = arith.mulf %529, %508 : vector<8x32xf32>
    %539 = arith.mulf %523, %531 : vector<8x32xf32>
    %540 = arith.addf %538, %539 : vector<8x32xf32>
    %541 = math.tanh %540 : vector<8x32xf32>
    %542 = arith.mulf %537, %541 : vector<8x32xf32>
    %c7_138 = arith.constant 7 : index
    %c0_139 = arith.constant 0 : index
    %c0_140 = arith.constant 0 : index
    %543 = vector.load %arg20[%c7_138, %c0_139, %c0_140] : memref<8x8x32xf32, #tpu.memory_space<vmem>>, vector<1x8x32xf32>
    %544 = vector.shape_cast %543 : vector<1x8x32xf32> to vector<8x32xf32>
    %545 = vector.shape_cast %542 : vector<8x32xf32> to vector<1x8x32xf32>
    tpu.vector_store %arg20[%c7_138, %c0_139, %c0_140], %545 {strides = array<i32>} : memref<8x8x32xf32, #tpu.memory_space<vmem>>, vector<1x8x32xf32>,
    %546 = vector.extract_strided_slice %542 {offsets = [0, 0], sizes = [4, 32], strides = [1, 1]} : vector<8x32xf32> to vector<4x32xf32>
    %c1_141 = arith.constant 1 : index
    %c0_142 = arith.constant 0 : index
    %c0_143 = arith.constant 0 : index
    %547 = vector.load %arg18[%c1_141, %c0_142, %c0_143] : memref<4x4x32xf32, #tpu.memory_space<vmem>>, vector<1x4x32xf32>
    %548 = vector.shape_cast %547 : vector<1x4x32xf32> to vector<4x32xf32>
    %549 = vector.shape_cast %546 : vector<4x32xf32> to vector<1x4x32xf32>
    tpu.vector_store %arg18[%c1_141, %c0_142, %c0_143], %549 {strides = array<i32>} : memref<4x4x32xf32, #tpu.memory_space<vmem>>, vector<1x4x32xf32>,
    %550 = vector.extract_strided_slice %540 {offsets = [0, 0], sizes = [4, 32], strides = [1, 1]} : vector<8x32xf32> to vector<4x32xf32>
    %c1_144 = arith.constant 1 : index
    %c0_145 = arith.constant 0 : index
    %c0_146 = arith.constant 0 : index
    %551 = vector.load %arg19[%c1_144, %c0_145, %c0_146] : memref<4x4x32xf32, #tpu.memory_space<vmem>>, vector<1x4x32xf32>
    %552 = vector.shape_cast %551 : vector<1x4x32xf32> to vector<4x32xf32>
    %553 = vector.shape_cast %550 : vector<4x32xf32> to vector<1x4x32xf32>
    tpu.vector_store %arg19[%c1_144, %c0_145, %c0_146], %553 {strides = array<i32>} : memref<4x4x32xf32, #tpu.memory_space<vmem>>, vector<1x4x32xf32>,
    %c0_147 = arith.constant 0 : index
    %c0_148 = arith.constant 0 : index
    %554 = vector.load %arg11[%c0_147, %c0_148] : memref<32x128xf32, #tpu.memory_space<vmem>>, vector<32x128xf32>
    %c0_149 = arith.constant 0 : index
    %c0_150 = arith.constant 0 : index
    %555 = vector.load %arg12[%c0_149, %c0_150] : memref<32x128xf32, #tpu.memory_space<vmem>>, vector<32x128xf32>
    %c0_151 = arith.constant 0 : index
    %c0_152 = arith.constant 0 : index
    %556 = vector.load %arg13[%c0_151, %c0_152] : memref<1x128xf32, #tpu.memory_space<vmem>>, vector<1x128xf32>
    %c0_153 = arith.constant 0 : index
    %c0_154 = arith.constant 0 : index
    %c0_155 = arith.constant 0 : index
    %557 = vector.load %arg20[%c0_153, %c0_154, %c0_155] : memref<8x8x32xf32, #tpu.memory_space<vmem>>, vector<8x8x32xf32>
    %558 = vector.shape_cast %557 : vector<8x8x32xf32> to vector<64x32xf32>
    %cst_156 = arith.constant dense<0.000000e+00> : vector<64x128xf32>
    %559 = tpu.matmul %558, %554, %cst_156 {dimension_numbers = #tpu.dot_dimension_numbers<[1], [0], [0], [1], [0, 0, 1, 1], [], []>} : vector<64x32xf32>, vector<32x128xf32>, vector<64x128xf32> -> vector<64x128xf32>
    %560 = vector.broadcast %556 : vector<1x128xf32> to vector<64x128xf32>
    %561 = arith.addf %559, %560 : vector<64x128xf32>
    %562 = vector.shape_cast %561 : vector<64x128xf32> to vector<8x8x128xf32>
    %c2_157 = arith.constant 2 : index
    %c0_158 = arith.constant 0 : index
    %c0_159 = arith.constant 0 : index
    %563 = vector.load %arg1[%c2_157, %c0_158, %c0_159] : memref<4x8x32xf32, #tpu.memory_space<vmem>>, vector<1x8x32xf32>
    %564 = vector.shape_cast %563 : vector<1x8x32xf32> to vector<8x32xf32>
    %c2_160 = arith.constant 2 : index
    %c0_161 = arith.constant 0 : index
    %c0_162 = arith.constant 0 : index
    %565 = vector.load %arg2[%c2_160, %c0_161, %c0_162] : memref<4x8x32xf32, #tpu.memory_space<vmem>>, vector<1x8x32xf32>
    %566 = vector.shape_cast %565 : vector<1x8x32xf32> to vector<8x32xf32>
    %567 = vector.extract_strided_slice %562 {offsets = [0, 0, 0], sizes = [1, 8, 128], strides = [1, 1, 1]} : vector<8x8x128xf32> to vector<1x8x128xf32>
    %568 = vector.shape_cast %567 : vector<1x8x128xf32> to vector<8x128xf32>
    %cst_163 = arith.constant dense<0.000000e+00> : vector<8x128xf32>
    %569 = tpu.matmul %564, %555, %cst_163 {dimension_numbers = #tpu.dot_dimension_numbers<[1], [0], [0], [1], [0, 0, 1, 1], [], []>} : vector<8x32xf32>, vector<32x128xf32>, vector<8x128xf32> -> vector<8x128xf32>
    %570 = arith.addf %568, %569 : vector<8x128xf32>
    %571 = vector.extract_strided_slice %570 {offsets = [0, 0], sizes = [8, 32], strides = [1, 1]} : vector<8x128xf32> to vector<8x32xf32>
    %572 = arith.negf %571 : vector<8x32xf32>
    %573 = math.exp %572 : vector<8x32xf32>
    %cst_164 = arith.constant 1.000000e+00 : f32
    %574 = vector.broadcast %cst_164 : f32 to vector<8x32xf32>
    %575 = arith.addf %574, %573 : vector<8x32xf32>
    %576 = arith.divf %574, %575 : vector<8x32xf32>
    %577 = vector.extract_strided_slice %570 {offsets = [0, 32], sizes = [8, 32], strides = [1, 1]} : vector<8x128xf32> to vector<8x32xf32>
    %578 = arith.negf %577 : vector<8x32xf32>
    %579 = math.exp %578 : vector<8x32xf32>
    %cst_165 = arith.constant 1.000000e+00 : f32
    %580 = vector.broadcast %cst_165 : f32 to vector<8x32xf32>
    %581 = arith.addf %580, %579 : vector<8x32xf32>
    %582 = arith.divf %580, %581 : vector<8x32xf32>
    %583 = vector.extract_strided_slice %570 {offsets = [0, 64], sizes = [8, 32], strides = [1, 1]} : vector<8x128xf32> to vector<8x32xf32>
    %584 = math.tanh %583 : vector<8x32xf32>
    %585 = vector.extract_strided_slice %570 {offsets = [0, 96], sizes = [8, 32], strides = [1, 1]} : vector<8x128xf32> to vector<8x32xf32>
    %586 = arith.negf %585 : vector<8x32xf32>
    %587 = math.exp %586 : vector<8x32xf32>
    %cst_166 = arith.constant 1.000000e+00 : f32
    %588 = vector.broadcast %cst_166 : f32 to vector<8x32xf32>
    %589 = arith.addf %588, %587 : vector<8x32xf32>
    %590 = arith.divf %588, %589 : vector<8x32xf32>
    %591 = arith.mulf %582, %566 : vector<8x32xf32>
    %592 = arith.mulf %576, %584 : vector<8x32xf32>
    %593 = arith.addf %591, %592 : vector<8x32xf32>
    %594 = math.tanh %593 : vector<8x32xf32>
    %595 = arith.mulf %590, %594 : vector<8x32xf32>
    %c0_167 = arith.constant 0 : index
    %c0_168 = arith.constant 0 : index
    %c0_169 = arith.constant 0 : index
    %596 = vector.load %arg20[%c0_167, %c0_168, %c0_169] : memref<8x8x32xf32, #tpu.memory_space<vmem>>, vector<1x8x32xf32>
    %597 = vector.shape_cast %596 : vector<1x8x32xf32> to vector<8x32xf32>
    %598 = vector.shape_cast %595 : vector<8x32xf32> to vector<1x8x32xf32>
    tpu.vector_store %arg20[%c0_167, %c0_168, %c0_169], %598 {strides = array<i32>} : memref<8x8x32xf32, #tpu.memory_space<vmem>>, vector<1x8x32xf32>,
    %599 = vector.extract_strided_slice %562 {offsets = [1, 0, 0], sizes = [1, 8, 128], strides = [1, 1, 1]} : vector<8x8x128xf32> to vector<1x8x128xf32>
    %600 = vector.shape_cast %599 : vector<1x8x128xf32> to vector<8x128xf32>
    %cst_170 = arith.constant dense<0.000000e+00> : vector<8x128xf32>
    %601 = tpu.matmul %595, %555, %cst_170 {dimension_numbers = #tpu.dot_dimension_numbers<[1], [0], [0], [1], [0, 0, 1, 1], [], []>} : vector<8x32xf32>, vector<32x128xf32>, vector<8x128xf32> -> vector<8x128xf32>
    %602 = arith.addf %600, %601 : vector<8x128xf32>
    %603 = vector.extract_strided_slice %602 {offsets = [0, 0], sizes = [8, 32], strides = [1, 1]} : vector<8x128xf32> to vector<8x32xf32>
    %604 = arith.negf %603 : vector<8x32xf32>
    %605 = math.exp %604 : vector<8x32xf32>
    %cst_171 = arith.constant 1.000000e+00 : f32
    %606 = vector.broadcast %cst_171 : f32 to vector<8x32xf32>
    %607 = arith.addf %606, %605 : vector<8x32xf32>
    %608 = arith.divf %606, %607 : vector<8x32xf32>
    %609 = vector.extract_strided_slice %602 {offsets = [0, 32], sizes = [8, 32], strides = [1, 1]} : vector<8x128xf32> to vector<8x32xf32>
    %610 = arith.negf %609 : vector<8x32xf32>
    %611 = math.exp %610 : vector<8x32xf32>
    %cst_172 = arith.constant 1.000000e+00 : f32
    %612 = vector.broadcast %cst_172 : f32 to vector<8x32xf32>
    %613 = arith.addf %612, %611 : vector<8x32xf32>
    %614 = arith.divf %612, %613 : vector<8x32xf32>
    %615 = vector.extract_strided_slice %602 {offsets = [0, 64], sizes = [8, 32], strides = [1, 1]} : vector<8x128xf32> to vector<8x32xf32>
    %616 = math.tanh %615 : vector<8x32xf32>
    %617 = vector.extract_strided_slice %602 {offsets = [0, 96], sizes = [8, 32], strides = [1, 1]} : vector<8x128xf32> to vector<8x32xf32>
    %618 = arith.negf %617 : vector<8x32xf32>
    %619 = math.exp %618 : vector<8x32xf32>
    %cst_173 = arith.constant 1.000000e+00 : f32
    %620 = vector.broadcast %cst_173 : f32 to vector<8x32xf32>
    %621 = arith.addf %620, %619 : vector<8x32xf32>
    %622 = arith.divf %620, %621 : vector<8x32xf32>
    %623 = arith.mulf %614, %593 : vector<8x32xf32>
    %624 = arith.mulf %608, %616 : vector<8x32xf32>
    %625 = arith.addf %623, %624 : vector<8x32xf32>
    %626 = math.tanh %625 : vector<8x32xf32>
    %627 = arith.mulf %622, %626 : vector<8x32xf32>
    %c1_174 = arith.constant 1 : index
    %c0_175 = arith.constant 0 : index
    %c0_176 = arith.constant 0 : index
    %628 = vector.load %arg20[%c1_174, %c0_175, %c0_176] : memref<8x8x32xf32, #tpu.memory_space<vmem>>, vector<1x8x32xf32>
    %629 = vector.shape_cast %628 : vector<1x8x32xf32> to vector<8x32xf32>
    %630 = vector.shape_cast %627 : vector<8x32xf32> to vector<1x8x32xf32>
    tpu.vector_store %arg20[%c1_174, %c0_175, %c0_176], %630 {strides = array<i32>} : memref<8x8x32xf32, #tpu.memory_space<vmem>>, vector<1x8x32xf32>,
    %631 = vector.extract_strided_slice %562 {offsets = [2, 0, 0], sizes = [1, 8, 128], strides = [1, 1, 1]} : vector<8x8x128xf32> to vector<1x8x128xf32>
    %632 = vector.shape_cast %631 : vector<1x8x128xf32> to vector<8x128xf32>
    %cst_177 = arith.constant dense<0.000000e+00> : vector<8x128xf32>
    %633 = tpu.matmul %627, %555, %cst_177 {dimension_numbers = #tpu.dot_dimension_numbers<[1], [0], [0], [1], [0, 0, 1, 1], [], []>} : vector<8x32xf32>, vector<32x128xf32>, vector<8x128xf32> -> vector<8x128xf32>
    %634 = arith.addf %632, %633 : vector<8x128xf32>
    %635 = vector.extract_strided_slice %634 {offsets = [0, 0], sizes = [8, 32], strides = [1, 1]} : vector<8x128xf32> to vector<8x32xf32>
    %636 = arith.negf %635 : vector<8x32xf32>
    %637 = math.exp %636 : vector<8x32xf32>
    %cst_178 = arith.constant 1.000000e+00 : f32
    %638 = vector.broadcast %cst_178 : f32 to vector<8x32xf32>
    %639 = arith.addf %638, %637 : vector<8x32xf32>
    %640 = arith.divf %638, %639 : vector<8x32xf32>
    %641 = vector.extract_strided_slice %634 {offsets = [0, 32], sizes = [8, 32], strides = [1, 1]} : vector<8x128xf32> to vector<8x32xf32>
    %642 = arith.negf %641 : vector<8x32xf32>
    %643 = math.exp %642 : vector<8x32xf32>
    %cst_179 = arith.constant 1.000000e+00 : f32
    %644 = vector.broadcast %cst_179 : f32 to vector<8x32xf32>
    %645 = arith.addf %644, %643 : vector<8x32xf32>
    %646 = arith.divf %644, %645 : vector<8x32xf32>
    %647 = vector.extract_strided_slice %634 {offsets = [0, 64], sizes = [8, 32], strides = [1, 1]} : vector<8x128xf32> to vector<8x32xf32>
    %648 = math.tanh %647 : vector<8x32xf32>
    %649 = vector.extract_strided_slice %634 {offsets = [0, 96], sizes = [8, 32], strides = [1, 1]} : vector<8x128xf32> to vector<8x32xf32>
    %650 = arith.negf %649 : vector<8x32xf32>
    %651 = math.exp %650 : vector<8x32xf32>
    %cst_180 = arith.constant 1.000000e+00 : f32
    %652 = vector.broadcast %cst_180 : f32 to vector<8x32xf32>
    %653 = arith.addf %652, %651 : vector<8x32xf32>
    %654 = arith.divf %652, %653 : vector<8x32xf32>
    %655 = arith.mulf %646, %625 : vector<8x32xf32>
    %656 = arith.mulf %640, %648 : vector<8x32xf32>
    %657 = arith.addf %655, %656 : vector<8x32xf32>
    %658 = math.tanh %657 : vector<8x32xf32>
    %659 = arith.mulf %654, %658 : vector<8x32xf32>
    %c2_181 = arith.constant 2 : index
    %c0_182 = arith.constant 0 : index
    %c0_183 = arith.constant 0 : index
    %660 = vector.load %arg20[%c2_181, %c0_182, %c0_183] : memref<8x8x32xf32, #tpu.memory_space<vmem>>, vector<1x8x32xf32>
    %661 = vector.shape_cast %660 : vector<1x8x32xf32> to vector<8x32xf32>
    %662 = vector.shape_cast %659 : vector<8x32xf32> to vector<1x8x32xf32>
    tpu.vector_store %arg20[%c2_181, %c0_182, %c0_183], %662 {strides = array<i32>} : memref<8x8x32xf32, #tpu.memory_space<vmem>>, vector<1x8x32xf32>,
    %663 = vector.extract_strided_slice %562 {offsets = [3, 0, 0], sizes = [1, 8, 128], strides = [1, 1, 1]} : vector<8x8x128xf32> to vector<1x8x128xf32>
    %664 = vector.shape_cast %663 : vector<1x8x128xf32> to vector<8x128xf32>
    %cst_184 = arith.constant dense<0.000000e+00> : vector<8x128xf32>
    %665 = tpu.matmul %659, %555, %cst_184 {dimension_numbers = #tpu.dot_dimension_numbers<[1], [0], [0], [1], [0, 0, 1, 1], [], []>} : vector<8x32xf32>, vector<32x128xf32>, vector<8x128xf32> -> vector<8x128xf32>
    %666 = arith.addf %664, %665 : vector<8x128xf32>
    %667 = vector.extract_strided_slice %666 {offsets = [0, 0], sizes = [8, 32], strides = [1, 1]} : vector<8x128xf32> to vector<8x32xf32>
    %668 = arith.negf %667 : vector<8x32xf32>
    %669 = math.exp %668 : vector<8x32xf32>
    %cst_185 = arith.constant 1.000000e+00 : f32
    %670 = vector.broadcast %cst_185 : f32 to vector<8x32xf32>
    %671 = arith.addf %670, %669 : vector<8x32xf32>
    %672 = arith.divf %670, %671 : vector<8x32xf32>
    %673 = vector.extract_strided_slice %666 {offsets = [0, 32], sizes = [8, 32], strides = [1, 1]} : vector<8x128xf32> to vector<8x32xf32>
    %674 = arith.negf %673 : vector<8x32xf32>
    %675 = math.exp %674 : vector<8x32xf32>
    %cst_186 = arith.constant 1.000000e+00 : f32
    %676 = vector.broadcast %cst_186 : f32 to vector<8x32xf32>
    %677 = arith.addf %676, %675 : vector<8x32xf32>
    %678 = arith.divf %676, %677 : vector<8x32xf32>
    %679 = vector.extract_strided_slice %666 {offsets = [0, 64], sizes = [8, 32], strides = [1, 1]} : vector<8x128xf32> to vector<8x32xf32>
    %680 = math.tanh %679 : vector<8x32xf32>
    %681 = vector.extract_strided_slice %666 {offsets = [0, 96], sizes = [8, 32], strides = [1, 1]} : vector<8x128xf32> to vector<8x32xf32>
    %682 = arith.negf %681 : vector<8x32xf32>
    %683 = math.exp %682 : vector<8x32xf32>
    %cst_187 = arith.constant 1.000000e+00 : f32
    %684 = vector.broadcast %cst_187 : f32 to vector<8x32xf32>
    %685 = arith.addf %684, %683 : vector<8x32xf32>
    %686 = arith.divf %684, %685 : vector<8x32xf32>
    %687 = arith.mulf %678, %657 : vector<8x32xf32>
    %688 = arith.mulf %672, %680 : vector<8x32xf32>
    %689 = arith.addf %687, %688 : vector<8x32xf32>
    %690 = math.tanh %689 : vector<8x32xf32>
    %691 = arith.mulf %686, %690 : vector<8x32xf32>
    %c3_188 = arith.constant 3 : index
    %c0_189 = arith.constant 0 : index
    %c0_190 = arith.constant 0 : index
    %692 = vector.load %arg20[%c3_188, %c0_189, %c0_190] : memref<8x8x32xf32, #tpu.memory_space<vmem>>, vector<1x8x32xf32>
    %693 = vector.shape_cast %692 : vector<1x8x32xf32> to vector<8x32xf32>
    %694 = vector.shape_cast %691 : vector<8x32xf32> to vector<1x8x32xf32>
    tpu.vector_store %arg20[%c3_188, %c0_189, %c0_190], %694 {strides = array<i32>} : memref<8x8x32xf32, #tpu.memory_space<vmem>>, vector<1x8x32xf32>,
    %695 = vector.extract_strided_slice %562 {offsets = [4, 0, 0], sizes = [1, 8, 128], strides = [1, 1, 1]} : vector<8x8x128xf32> to vector<1x8x128xf32>
    %696 = vector.shape_cast %695 : vector<1x8x128xf32> to vector<8x128xf32>
    %cst_191 = arith.constant dense<0.000000e+00> : vector<8x128xf32>
    %697 = tpu.matmul %691, %555, %cst_191 {dimension_numbers = #tpu.dot_dimension_numbers<[1], [0], [0], [1], [0, 0, 1, 1], [], []>} : vector<8x32xf32>, vector<32x128xf32>, vector<8x128xf32> -> vector<8x128xf32>
    %698 = arith.addf %696, %697 : vector<8x128xf32>
    %699 = vector.extract_strided_slice %698 {offsets = [0, 0], sizes = [8, 32], strides = [1, 1]} : vector<8x128xf32> to vector<8x32xf32>
    %700 = arith.negf %699 : vector<8x32xf32>
    %701 = math.exp %700 : vector<8x32xf32>
    %cst_192 = arith.constant 1.000000e+00 : f32
    %702 = vector.broadcast %cst_192 : f32 to vector<8x32xf32>
    %703 = arith.addf %702, %701 : vector<8x32xf32>
    %704 = arith.divf %702, %703 : vector<8x32xf32>
    %705 = vector.extract_strided_slice %698 {offsets = [0, 32], sizes = [8, 32], strides = [1, 1]} : vector<8x128xf32> to vector<8x32xf32>
    %706 = arith.negf %705 : vector<8x32xf32>
    %707 = math.exp %706 : vector<8x32xf32>
    %cst_193 = arith.constant 1.000000e+00 : f32
    %708 = vector.broadcast %cst_193 : f32 to vector<8x32xf32>
    %709 = arith.addf %708, %707 : vector<8x32xf32>
    %710 = arith.divf %708, %709 : vector<8x32xf32>
    %711 = vector.extract_strided_slice %698 {offsets = [0, 64], sizes = [8, 32], strides = [1, 1]} : vector<8x128xf32> to vector<8x32xf32>
    %712 = math.tanh %711 : vector<8x32xf32>
    %713 = vector.extract_strided_slice %698 {offsets = [0, 96], sizes = [8, 32], strides = [1, 1]} : vector<8x128xf32> to vector<8x32xf32>
    %714 = arith.negf %713 : vector<8x32xf32>
    %715 = math.exp %714 : vector<8x32xf32>
    %cst_194 = arith.constant 1.000000e+00 : f32
    %716 = vector.broadcast %cst_194 : f32 to vector<8x32xf32>
    %717 = arith.addf %716, %715 : vector<8x32xf32>
    %718 = arith.divf %716, %717 : vector<8x32xf32>
    %719 = arith.mulf %710, %689 : vector<8x32xf32>
    %720 = arith.mulf %704, %712 : vector<8x32xf32>
    %721 = arith.addf %719, %720 : vector<8x32xf32>
    %722 = math.tanh %721 : vector<8x32xf32>
    %723 = arith.mulf %718, %722 : vector<8x32xf32>
    %c4_195 = arith.constant 4 : index
    %c0_196 = arith.constant 0 : index
    %c0_197 = arith.constant 0 : index
    %724 = vector.load %arg20[%c4_195, %c0_196, %c0_197] : memref<8x8x32xf32, #tpu.memory_space<vmem>>, vector<1x8x32xf32>
    %725 = vector.shape_cast %724 : vector<1x8x32xf32> to vector<8x32xf32>
    %726 = vector.shape_cast %723 : vector<8x32xf32> to vector<1x8x32xf32>
    tpu.vector_store %arg20[%c4_195, %c0_196, %c0_197], %726 {strides = array<i32>} : memref<8x8x32xf32, #tpu.memory_space<vmem>>, vector<1x8x32xf32>,
    %727 = vector.extract_strided_slice %562 {offsets = [5, 0, 0], sizes = [1, 8, 128], strides = [1, 1, 1]} : vector<8x8x128xf32> to vector<1x8x128xf32>
    %728 = vector.shape_cast %727 : vector<1x8x128xf32> to vector<8x128xf32>
    %cst_198 = arith.constant dense<0.000000e+00> : vector<8x128xf32>
    %729 = tpu.matmul %723, %555, %cst_198 {dimension_numbers = #tpu.dot_dimension_numbers<[1], [0], [0], [1], [0, 0, 1, 1], [], []>} : vector<8x32xf32>, vector<32x128xf32>, vector<8x128xf32> -> vector<8x128xf32>
    %730 = arith.addf %728, %729 : vector<8x128xf32>
    %731 = vector.extract_strided_slice %730 {offsets = [0, 0], sizes = [8, 32], strides = [1, 1]} : vector<8x128xf32> to vector<8x32xf32>
    %732 = arith.negf %731 : vector<8x32xf32>
    %733 = math.exp %732 : vector<8x32xf32>
    %cst_199 = arith.constant 1.000000e+00 : f32
    %734 = vector.broadcast %cst_199 : f32 to vector<8x32xf32>
    %735 = arith.addf %734, %733 : vector<8x32xf32>
    %736 = arith.divf %734, %735 : vector<8x32xf32>
    %737 = vector.extract_strided_slice %730 {offsets = [0, 32], sizes = [8, 32], strides = [1, 1]} : vector<8x128xf32> to vector<8x32xf32>
    %738 = arith.negf %737 : vector<8x32xf32>
    %739 = math.exp %738 : vector<8x32xf32>
    %cst_200 = arith.constant 1.000000e+00 : f32
    %740 = vector.broadcast %cst_200 : f32 to vector<8x32xf32>
    %741 = arith.addf %740, %739 : vector<8x32xf32>
    %742 = arith.divf %740, %741 : vector<8x32xf32>
    %743 = vector.extract_strided_slice %730 {offsets = [0, 64], sizes = [8, 32], strides = [1, 1]} : vector<8x128xf32> to vector<8x32xf32>
    %744 = math.tanh %743 : vector<8x32xf32>
    %745 = vector.extract_strided_slice %730 {offsets = [0, 96], sizes = [8, 32], strides = [1, 1]} : vector<8x128xf32> to vector<8x32xf32>
    %746 = arith.negf %745 : vector<8x32xf32>
    %747 = math.exp %746 : vector<8x32xf32>
    %cst_201 = arith.constant 1.000000e+00 : f32
    %748 = vector.broadcast %cst_201 : f32 to vector<8x32xf32>
    %749 = arith.addf %748, %747 : vector<8x32xf32>
    %750 = arith.divf %748, %749 : vector<8x32xf32>
    %751 = arith.mulf %742, %721 : vector<8x32xf32>
    %752 = arith.mulf %736, %744 : vector<8x32xf32>
    %753 = arith.addf %751, %752 : vector<8x32xf32>
    %754 = math.tanh %753 : vector<8x32xf32>
    %755 = arith.mulf %750, %754 : vector<8x32xf32>
    %c5_202 = arith.constant 5 : index
    %c0_203 = arith.constant 0 : index
    %c0_204 = arith.constant 0 : index
    %756 = vector.load %arg20[%c5_202, %c0_203, %c0_204] : memref<8x8x32xf32, #tpu.memory_space<vmem>>, vector<1x8x32xf32>
    %757 = vector.shape_cast %756 : vector<1x8x32xf32> to vector<8x32xf32>
    %758 = vector.shape_cast %755 : vector<8x32xf32> to vector<1x8x32xf32>
    tpu.vector_store %arg20[%c5_202, %c0_203, %c0_204], %758 {strides = array<i32>} : memref<8x8x32xf32, #tpu.memory_space<vmem>>, vector<1x8x32xf32>,
    %759 = vector.extract_strided_slice %562 {offsets = [6, 0, 0], sizes = [1, 8, 128], strides = [1, 1, 1]} : vector<8x8x128xf32> to vector<1x8x128xf32>
    %760 = vector.shape_cast %759 : vector<1x8x128xf32> to vector<8x128xf32>
    %cst_205 = arith.constant dense<0.000000e+00> : vector<8x128xf32>
    %761 = tpu.matmul %755, %555, %cst_205 {dimension_numbers = #tpu.dot_dimension_numbers<[1], [0], [0], [1], [0, 0, 1, 1], [], []>} : vector<8x32xf32>, vector<32x128xf32>, vector<8x128xf32> -> vector<8x128xf32>
    %762 = arith.addf %760, %761 : vector<8x128xf32>
    %763 = vector.extract_strided_slice %762 {offsets = [0, 0], sizes = [8, 32], strides = [1, 1]} : vector<8x128xf32> to vector<8x32xf32>
    %764 = arith.negf %763 : vector<8x32xf32>
    %765 = math.exp %764 : vector<8x32xf32>
    %cst_206 = arith.constant 1.000000e+00 : f32
    %766 = vector.broadcast %cst_206 : f32 to vector<8x32xf32>
    %767 = arith.addf %766, %765 : vector<8x32xf32>
    %768 = arith.divf %766, %767 : vector<8x32xf32>
    %769 = vector.extract_strided_slice %762 {offsets = [0, 32], sizes = [8, 32], strides = [1, 1]} : vector<8x128xf32> to vector<8x32xf32>
    %770 = arith.negf %769 : vector<8x32xf32>
    %771 = math.exp %770 : vector<8x32xf32>
    %cst_207 = arith.constant 1.000000e+00 : f32
    %772 = vector.broadcast %cst_207 : f32 to vector<8x32xf32>
    %773 = arith.addf %772, %771 : vector<8x32xf32>
    %774 = arith.divf %772, %773 : vector<8x32xf32>
    %775 = vector.extract_strided_slice %762 {offsets = [0, 64], sizes = [8, 32], strides = [1, 1]} : vector<8x128xf32> to vector<8x32xf32>
    %776 = math.tanh %775 : vector<8x32xf32>
    %777 = vector.extract_strided_slice %762 {offsets = [0, 96], sizes = [8, 32], strides = [1, 1]} : vector<8x128xf32> to vector<8x32xf32>
    %778 = arith.negf %777 : vector<8x32xf32>
    %779 = math.exp %778 : vector<8x32xf32>
    %cst_208 = arith.constant 1.000000e+00 : f32
    %780 = vector.broadcast %cst_208 : f32 to vector<8x32xf32>
    %781 = arith.addf %780, %779 : vector<8x32xf32>
    %782 = arith.divf %780, %781 : vector<8x32xf32>
    %783 = arith.mulf %774, %753 : vector<8x32xf32>
    %784 = arith.mulf %768, %776 : vector<8x32xf32>
    %785 = arith.addf %783, %784 : vector<8x32xf32>
    %786 = math.tanh %785 : vector<8x32xf32>
    %787 = arith.mulf %782, %786 : vector<8x32xf32>
    %c6_209 = arith.constant 6 : index
    %c0_210 = arith.constant 0 : index
    %c0_211 = arith.constant 0 : index
    %788 = vector.load %arg20[%c6_209, %c0_210, %c0_211] : memref<8x8x32xf32, #tpu.memory_space<vmem>>, vector<1x8x32xf32>
    %789 = vector.shape_cast %788 : vector<1x8x32xf32> to vector<8x32xf32>
    %790 = vector.shape_cast %787 : vector<8x32xf32> to vector<1x8x32xf32>
    tpu.vector_store %arg20[%c6_209, %c0_210, %c0_211], %790 {strides = array<i32>} : memref<8x8x32xf32, #tpu.memory_space<vmem>>, vector<1x8x32xf32>,
    %791 = vector.extract_strided_slice %562 {offsets = [7, 0, 0], sizes = [1, 8, 128], strides = [1, 1, 1]} : vector<8x8x128xf32> to vector<1x8x128xf32>
    %792 = vector.shape_cast %791 : vector<1x8x128xf32> to vector<8x128xf32>
    %cst_212 = arith.constant dense<0.000000e+00> : vector<8x128xf32>
    %793 = tpu.matmul %787, %555, %cst_212 {dimension_numbers = #tpu.dot_dimension_numbers<[1], [0], [0], [1], [0, 0, 1, 1], [], []>} : vector<8x32xf32>, vector<32x128xf32>, vector<8x128xf32> -> vector<8x128xf32>
    %794 = arith.addf %792, %793 : vector<8x128xf32>
    %795 = vector.extract_strided_slice %794 {offsets = [0, 0], sizes = [8, 32], strides = [1, 1]} : vector<8x128xf32> to vector<8x32xf32>
    %796 = arith.negf %795 : vector<8x32xf32>
    %797 = math.exp %796 : vector<8x32xf32>
    %cst_213 = arith.constant 1.000000e+00 : f32
    %798 = vector.broadcast %cst_213 : f32 to vector<8x32xf32>
    %799 = arith.addf %798, %797 : vector<8x32xf32>
    %800 = arith.divf %798, %799 : vector<8x32xf32>
    %801 = vector.extract_strided_slice %794 {offsets = [0, 32], sizes = [8, 32], strides = [1, 1]} : vector<8x128xf32> to vector<8x32xf32>
    %802 = arith.negf %801 : vector<8x32xf32>
    %803 = math.exp %802 : vector<8x32xf32>
    %cst_214 = arith.constant 1.000000e+00 : f32
    %804 = vector.broadcast %cst_214 : f32 to vector<8x32xf32>
    %805 = arith.addf %804, %803 : vector<8x32xf32>
    %806 = arith.divf %804, %805 : vector<8x32xf32>
    %807 = vector.extract_strided_slice %794 {offsets = [0, 64], sizes = [8, 32], strides = [1, 1]} : vector<8x128xf32> to vector<8x32xf32>
    %808 = math.tanh %807 : vector<8x32xf32>
    %809 = vector.extract_strided_slice %794 {offsets = [0, 96], sizes = [8, 32], strides = [1, 1]} : vector<8x128xf32> to vector<8x32xf32>
    %810 = arith.negf %809 : vector<8x32xf32>
    %811 = math.exp %810 : vector<8x32xf32>
    %cst_215 = arith.constant 1.000000e+00 : f32
    %812 = vector.broadcast %cst_215 : f32 to vector<8x32xf32>
    %813 = arith.addf %812, %811 : vector<8x32xf32>
    %814 = arith.divf %812, %813 : vector<8x32xf32>
    %815 = arith.mulf %806, %785 : vector<8x32xf32>
    %816 = arith.mulf %800, %808 : vector<8x32xf32>
    %817 = arith.addf %815, %816 : vector<8x32xf32>
    %818 = math.tanh %817 : vector<8x32xf32>
    %819 = arith.mulf %814, %818 : vector<8x32xf32>
    %c7_216 = arith.constant 7 : index
    %c0_217 = arith.constant 0 : index
    %c0_218 = arith.constant 0 : index
    %820 = vector.load %arg20[%c7_216, %c0_217, %c0_218] : memref<8x8x32xf32, #tpu.memory_space<vmem>>, vector<1x8x32xf32>
    %821 = vector.shape_cast %820 : vector<1x8x32xf32> to vector<8x32xf32>
    %822 = vector.shape_cast %819 : vector<8x32xf32> to vector<1x8x32xf32>
    tpu.vector_store %arg20[%c7_216, %c0_217, %c0_218], %822 {strides = array<i32>} : memref<8x8x32xf32, #tpu.memory_space<vmem>>, vector<1x8x32xf32>,
    %823 = vector.extract_strided_slice %819 {offsets = [0, 0], sizes = [4, 32], strides = [1, 1]} : vector<8x32xf32> to vector<4x32xf32>
    %c2_219 = arith.constant 2 : index
    %c0_220 = arith.constant 0 : index
    %c0_221 = arith.constant 0 : index
    %824 = vector.load %arg18[%c2_219, %c0_220, %c0_221] : memref<4x4x32xf32, #tpu.memory_space<vmem>>, vector<1x4x32xf32>
    %825 = vector.shape_cast %824 : vector<1x4x32xf32> to vector<4x32xf32>
    %826 = vector.shape_cast %823 : vector<4x32xf32> to vector<1x4x32xf32>
    tpu.vector_store %arg18[%c2_219, %c0_220, %c0_221], %826 {strides = array<i32>} : memref<4x4x32xf32, #tpu.memory_space<vmem>>, vector<1x4x32xf32>,
    %827 = vector.extract_strided_slice %817 {offsets = [0, 0], sizes = [4, 32], strides = [1, 1]} : vector<8x32xf32> to vector<4x32xf32>
    %c2_222 = arith.constant 2 : index
    %c0_223 = arith.constant 0 : index
    %c0_224 = arith.constant 0 : index
    %828 = vector.load %arg19[%c2_222, %c0_223, %c0_224] : memref<4x4x32xf32, #tpu.memory_space<vmem>>, vector<1x4x32xf32>
    %829 = vector.shape_cast %828 : vector<1x4x32xf32> to vector<4x32xf32>
    %830 = vector.shape_cast %827 : vector<4x32xf32> to vector<1x4x32xf32>
    tpu.vector_store %arg19[%c2_222, %c0_223, %c0_224], %830 {strides = array<i32>} : memref<4x4x32xf32, #tpu.memory_space<vmem>>, vector<1x4x32xf32>,
    %c0_225 = arith.constant 0 : index
    %c0_226 = arith.constant 0 : index
    %831 = vector.load %arg14[%c0_225, %c0_226] : memref<32x128xf32, #tpu.memory_space<vmem>>, vector<32x128xf32>
    %c0_227 = arith.constant 0 : index
    %c0_228 = arith.constant 0 : index
    %832 = vector.load %arg15[%c0_227, %c0_228] : memref<32x128xf32, #tpu.memory_space<vmem>>, vector<32x128xf32>
    %c0_229 = arith.constant 0 : index
    %c0_230 = arith.constant 0 : index
    %833 = vector.load %arg16[%c0_229, %c0_230] : memref<1x128xf32, #tpu.memory_space<vmem>>, vector<1x128xf32>
    %c0_231 = arith.constant 0 : index
    %c0_232 = arith.constant 0 : index
    %c0_233 = arith.constant 0 : index
    %834 = vector.load %arg20[%c0_231, %c0_232, %c0_233] : memref<8x8x32xf32, #tpu.memory_space<vmem>>, vector<8x8x32xf32>
    %835 = vector.shape_cast %834 : vector<8x8x32xf32> to vector<64x32xf32>
    %cst_234 = arith.constant dense<0.000000e+00> : vector<64x128xf32>
    %836 = tpu.matmul %835, %831, %cst_234 {dimension_numbers = #tpu.dot_dimension_numbers<[1], [0], [0], [1], [0, 0, 1, 1], [], []>} : vector<64x32xf32>, vector<32x128xf32>, vector<64x128xf32> -> vector<64x128xf32>
    %837 = vector.broadcast %833 : vector<1x128xf32> to vector<64x128xf32>
    %838 = arith.addf %836, %837 : vector<64x128xf32>
    %839 = vector.shape_cast %838 : vector<64x128xf32> to vector<8x8x128xf32>
    %c3_235 = arith.constant 3 : index
    %c0_236 = arith.constant 0 : index
    %c0_237 = arith.constant 0 : index
    %840 = vector.load %arg1[%c3_235, %c0_236, %c0_237] : memref<4x8x32xf32, #tpu.memory_space<vmem>>, vector<1x8x32xf32>
    %841 = vector.shape_cast %840 : vector<1x8x32xf32> to vector<8x32xf32>
    %c3_238 = arith.constant 3 : index
    %c0_239 = arith.constant 0 : index
    %c0_240 = arith.constant 0 : index
    %842 = vector.load %arg2[%c3_238, %c0_239, %c0_240] : memref<4x8x32xf32, #tpu.memory_space<vmem>>, vector<1x8x32xf32>
    %843 = vector.shape_cast %842 : vector<1x8x32xf32> to vector<8x32xf32>
    %844 = vector.extract_strided_slice %839 {offsets = [0, 0, 0], sizes = [1, 8, 128], strides = [1, 1, 1]} : vector<8x8x128xf32> to vector<1x8x128xf32>
    %845 = vector.shape_cast %844 : vector<1x8x128xf32> to vector<8x128xf32>
    %cst_241 = arith.constant dense<0.000000e+00> : vector<8x128xf32>
    %846 = tpu.matmul %841, %832, %cst_241 {dimension_numbers = #tpu.dot_dimension_numbers<[1], [0], [0], [1], [0, 0, 1, 1], [], []>} : vector<8x32xf32>, vector<32x128xf32>, vector<8x128xf32> -> vector<8x128xf32>
    %847 = arith.addf %845, %846 : vector<8x128xf32>
    %848 = vector.extract_strided_slice %847 {offsets = [0, 0], sizes = [8, 32], strides = [1, 1]} : vector<8x128xf32> to vector<8x32xf32>
    %849 = arith.negf %848 : vector<8x32xf32>
    %850 = math.exp %849 : vector<8x32xf32>
    %cst_242 = arith.constant 1.000000e+00 : f32
    %851 = vector.broadcast %cst_242 : f32 to vector<8x32xf32>
    %852 = arith.addf %851, %850 : vector<8x32xf32>
    %853 = arith.divf %851, %852 : vector<8x32xf32>
    %854 = vector.extract_strided_slice %847 {offsets = [0, 32], sizes = [8, 32], strides = [1, 1]} : vector<8x128xf32> to vector<8x32xf32>
    %855 = arith.negf %854 : vector<8x32xf32>
    %856 = math.exp %855 : vector<8x32xf32>
    %cst_243 = arith.constant 1.000000e+00 : f32
    %857 = vector.broadcast %cst_243 : f32 to vector<8x32xf32>
    %858 = arith.addf %857, %856 : vector<8x32xf32>
    %859 = arith.divf %857, %858 : vector<8x32xf32>
    %860 = vector.extract_strided_slice %847 {offsets = [0, 64], sizes = [8, 32], strides = [1, 1]} : vector<8x128xf32> to vector<8x32xf32>
    %861 = math.tanh %860 : vector<8x32xf32>
    %862 = vector.extract_strided_slice %847 {offsets = [0, 96], sizes = [8, 32], strides = [1, 1]} : vector<8x128xf32> to vector<8x32xf32>
    %863 = arith.negf %862 : vector<8x32xf32>
    %864 = math.exp %863 : vector<8x32xf32>
    %cst_244 = arith.constant 1.000000e+00 : f32
    %865 = vector.broadcast %cst_244 : f32 to vector<8x32xf32>
    %866 = arith.addf %865, %864 : vector<8x32xf32>
    %867 = arith.divf %865, %866 : vector<8x32xf32>
    %868 = arith.mulf %859, %843 : vector<8x32xf32>
    %869 = arith.mulf %853, %861 : vector<8x32xf32>
    %870 = arith.addf %868, %869 : vector<8x32xf32>
    %871 = math.tanh %870 : vector<8x32xf32>
    %872 = arith.mulf %867, %871 : vector<8x32xf32>
    %c0_245 = arith.constant 0 : index
    %c0_246 = arith.constant 0 : index
    %c0_247 = arith.constant 0 : index
    %873 = vector.load %arg20[%c0_245, %c0_246, %c0_247] : memref<8x8x32xf32, #tpu.memory_space<vmem>>, vector<1x8x32xf32>
    %874 = vector.shape_cast %873 : vector<1x8x32xf32> to vector<8x32xf32>
    %875 = vector.shape_cast %872 : vector<8x32xf32> to vector<1x8x32xf32>
    tpu.vector_store %arg20[%c0_245, %c0_246, %c0_247], %875 {strides = array<i32>} : memref<8x8x32xf32, #tpu.memory_space<vmem>>, vector<1x8x32xf32>,
    %876 = vector.extract_strided_slice %839 {offsets = [1, 0, 0], sizes = [1, 8, 128], strides = [1, 1, 1]} : vector<8x8x128xf32> to vector<1x8x128xf32>
    %877 = vector.shape_cast %876 : vector<1x8x128xf32> to vector<8x128xf32>
    %cst_248 = arith.constant dense<0.000000e+00> : vector<8x128xf32>
    %878 = tpu.matmul %872, %832, %cst_248 {dimension_numbers = #tpu.dot_dimension_numbers<[1], [0], [0], [1], [0, 0, 1, 1], [], []>} : vector<8x32xf32>, vector<32x128xf32>, vector<8x128xf32> -> vector<8x128xf32>
    %879 = arith.addf %877, %878 : vector<8x128xf32>
    %880 = vector.extract_strided_slice %879 {offsets = [0, 0], sizes = [8, 32], strides = [1, 1]} : vector<8x128xf32> to vector<8x32xf32>
    %881 = arith.negf %880 : vector<8x32xf32>
    %882 = math.exp %881 : vector<8x32xf32>
    %cst_249 = arith.constant 1.000000e+00 : f32
    %883 = vector.broadcast %cst_249 : f32 to vector<8x32xf32>
    %884 = arith.addf %883, %882 : vector<8x32xf32>
    %885 = arith.divf %883, %884 : vector<8x32xf32>
    %886 = vector.extract_strided_slice %879 {offsets = [0, 32], sizes = [8, 32], strides = [1, 1]} : vector<8x128xf32> to vector<8x32xf32>
    %887 = arith.negf %886 : vector<8x32xf32>
    %888 = math.exp %887 : vector<8x32xf32>
    %cst_250 = arith.constant 1.000000e+00 : f32
    %889 = vector.broadcast %cst_250 : f32 to vector<8x32xf32>
    %890 = arith.addf %889, %888 : vector<8x32xf32>
    %891 = arith.divf %889, %890 : vector<8x32xf32>
    %892 = vector.extract_strided_slice %879 {offsets = [0, 64], sizes = [8, 32], strides = [1, 1]} : vector<8x128xf32> to vector<8x32xf32>
    %893 = math.tanh %892 : vector<8x32xf32>
    %894 = vector.extract_strided_slice %879 {offsets = [0, 96], sizes = [8, 32], strides = [1, 1]} : vector<8x128xf32> to vector<8x32xf32>
    %895 = arith.negf %894 : vector<8x32xf32>
    %896 = math.exp %895 : vector<8x32xf32>
    %cst_251 = arith.constant 1.000000e+00 : f32
    %897 = vector.broadcast %cst_251 : f32 to vector<8x32xf32>
    %898 = arith.addf %897, %896 : vector<8x32xf32>
    %899 = arith.divf %897, %898 : vector<8x32xf32>
    %900 = arith.mulf %891, %870 : vector<8x32xf32>
    %901 = arith.mulf %885, %893 : vector<8x32xf32>
    %902 = arith.addf %900, %901 : vector<8x32xf32>
    %903 = math.tanh %902 : vector<8x32xf32>
    %904 = arith.mulf %899, %903 : vector<8x32xf32>
    %c1_252 = arith.constant 1 : index
    %c0_253 = arith.constant 0 : index
    %c0_254 = arith.constant 0 : index
    %905 = vector.load %arg20[%c1_252, %c0_253, %c0_254] : memref<8x8x32xf32, #tpu.memory_space<vmem>>, vector<1x8x32xf32>
    %906 = vector.shape_cast %905 : vector<1x8x32xf32> to vector<8x32xf32>
    %907 = vector.shape_cast %904 : vector<8x32xf32> to vector<1x8x32xf32>
    tpu.vector_store %arg20[%c1_252, %c0_253, %c0_254], %907 {strides = array<i32>} : memref<8x8x32xf32, #tpu.memory_space<vmem>>, vector<1x8x32xf32>,
    %908 = vector.extract_strided_slice %839 {offsets = [2, 0, 0], sizes = [1, 8, 128], strides = [1, 1, 1]} : vector<8x8x128xf32> to vector<1x8x128xf32>
    %909 = vector.shape_cast %908 : vector<1x8x128xf32> to vector<8x128xf32>
    %cst_255 = arith.constant dense<0.000000e+00> : vector<8x128xf32>
    %910 = tpu.matmul %904, %832, %cst_255 {dimension_numbers = #tpu.dot_dimension_numbers<[1], [0], [0], [1], [0, 0, 1, 1], [], []>} : vector<8x32xf32>, vector<32x128xf32>, vector<8x128xf32> -> vector<8x128xf32>
    %911 = arith.addf %909, %910 : vector<8x128xf32>
    %912 = vector.extract_strided_slice %911 {offsets = [0, 0], sizes = [8, 32], strides = [1, 1]} : vector<8x128xf32> to vector<8x32xf32>
    %913 = arith.negf %912 : vector<8x32xf32>
    %914 = math.exp %913 : vector<8x32xf32>
    %cst_256 = arith.constant 1.000000e+00 : f32
    %915 = vector.broadcast %cst_256 : f32 to vector<8x32xf32>
    %916 = arith.addf %915, %914 : vector<8x32xf32>
    %917 = arith.divf %915, %916 : vector<8x32xf32>
    %918 = vector.extract_strided_slice %911 {offsets = [0, 32], sizes = [8, 32], strides = [1, 1]} : vector<8x128xf32> to vector<8x32xf32>
    %919 = arith.negf %918 : vector<8x32xf32>
    %920 = math.exp %919 : vector<8x32xf32>
    %cst_257 = arith.constant 1.000000e+00 : f32
    %921 = vector.broadcast %cst_257 : f32 to vector<8x32xf32>
    %922 = arith.addf %921, %920 : vector<8x32xf32>
    %923 = arith.divf %921, %922 : vector<8x32xf32>
    %924 = vector.extract_strided_slice %911 {offsets = [0, 64], sizes = [8, 32], strides = [1, 1]} : vector<8x128xf32> to vector<8x32xf32>
    %925 = math.tanh %924 : vector<8x32xf32>
    %926 = vector.extract_strided_slice %911 {offsets = [0, 96], sizes = [8, 32], strides = [1, 1]} : vector<8x128xf32> to vector<8x32xf32>
    %927 = arith.negf %926 : vector<8x32xf32>
    %928 = math.exp %927 : vector<8x32xf32>
    %cst_258 = arith.constant 1.000000e+00 : f32
    %929 = vector.broadcast %cst_258 : f32 to vector<8x32xf32>
    %930 = arith.addf %929, %928 : vector<8x32xf32>
    %931 = arith.divf %929, %930 : vector<8x32xf32>
    %932 = arith.mulf %923, %902 : vector<8x32xf32>
    %933 = arith.mulf %917, %925 : vector<8x32xf32>
    %934 = arith.addf %932, %933 : vector<8x32xf32>
    %935 = math.tanh %934 : vector<8x32xf32>
    %936 = arith.mulf %931, %935 : vector<8x32xf32>
    %c2_259 = arith.constant 2 : index
    %c0_260 = arith.constant 0 : index
    %c0_261 = arith.constant 0 : index
    %937 = vector.load %arg20[%c2_259, %c0_260, %c0_261] : memref<8x8x32xf32, #tpu.memory_space<vmem>>, vector<1x8x32xf32>
    %938 = vector.shape_cast %937 : vector<1x8x32xf32> to vector<8x32xf32>
    %939 = vector.shape_cast %936 : vector<8x32xf32> to vector<1x8x32xf32>
    tpu.vector_store %arg20[%c2_259, %c0_260, %c0_261], %939 {strides = array<i32>} : memref<8x8x32xf32, #tpu.memory_space<vmem>>, vector<1x8x32xf32>,
    %940 = vector.extract_strided_slice %839 {offsets = [3, 0, 0], sizes = [1, 8, 128], strides = [1, 1, 1]} : vector<8x8x128xf32> to vector<1x8x128xf32>
    %941 = vector.shape_cast %940 : vector<1x8x128xf32> to vector<8x128xf32>
    %cst_262 = arith.constant dense<0.000000e+00> : vector<8x128xf32>
    %942 = tpu.matmul %936, %832, %cst_262 {dimension_numbers = #tpu.dot_dimension_numbers<[1], [0], [0], [1], [0, 0, 1, 1], [], []>} : vector<8x32xf32>, vector<32x128xf32>, vector<8x128xf32> -> vector<8x128xf32>
    %943 = arith.addf %941, %942 : vector<8x128xf32>
    %944 = vector.extract_strided_slice %943 {offsets = [0, 0], sizes = [8, 32], strides = [1, 1]} : vector<8x128xf32> to vector<8x32xf32>
    %945 = arith.negf %944 : vector<8x32xf32>
    %946 = math.exp %945 : vector<8x32xf32>
    %cst_263 = arith.constant 1.000000e+00 : f32
    %947 = vector.broadcast %cst_263 : f32 to vector<8x32xf32>
    %948 = arith.addf %947, %946 : vector<8x32xf32>
    %949 = arith.divf %947, %948 : vector<8x32xf32>
    %950 = vector.extract_strided_slice %943 {offsets = [0, 32], sizes = [8, 32], strides = [1, 1]} : vector<8x128xf32> to vector<8x32xf32>
    %951 = arith.negf %950 : vector<8x32xf32>
    %952 = math.exp %951 : vector<8x32xf32>
    %cst_264 = arith.constant 1.000000e+00 : f32
    %953 = vector.broadcast %cst_264 : f32 to vector<8x32xf32>
    %954 = arith.addf %953, %952 : vector<8x32xf32>
    %955 = arith.divf %953, %954 : vector<8x32xf32>
    %956 = vector.extract_strided_slice %943 {offsets = [0, 64], sizes = [8, 32], strides = [1, 1]} : vector<8x128xf32> to vector<8x32xf32>
    %957 = math.tanh %956 : vector<8x32xf32>
    %958 = vector.extract_strided_slice %943 {offsets = [0, 96], sizes = [8, 32], strides = [1, 1]} : vector<8x128xf32> to vector<8x32xf32>
    %959 = arith.negf %958 : vector<8x32xf32>
    %960 = math.exp %959 : vector<8x32xf32>
    %cst_265 = arith.constant 1.000000e+00 : f32
    %961 = vector.broadcast %cst_265 : f32 to vector<8x32xf32>
    %962 = arith.addf %961, %960 : vector<8x32xf32>
    %963 = arith.divf %961, %962 : vector<8x32xf32>
    %964 = arith.mulf %955, %934 : vector<8x32xf32>
    %965 = arith.mulf %949, %957 : vector<8x32xf32>
    %966 = arith.addf %964, %965 : vector<8x32xf32>
    %967 = math.tanh %966 : vector<8x32xf32>
    %968 = arith.mulf %963, %967 : vector<8x32xf32>
    %c3_266 = arith.constant 3 : index
    %c0_267 = arith.constant 0 : index
    %c0_268 = arith.constant 0 : index
    %969 = vector.load %arg20[%c3_266, %c0_267, %c0_268] : memref<8x8x32xf32, #tpu.memory_space<vmem>>, vector<1x8x32xf32>
    %970 = vector.shape_cast %969 : vector<1x8x32xf32> to vector<8x32xf32>
    %971 = vector.shape_cast %968 : vector<8x32xf32> to vector<1x8x32xf32>
    tpu.vector_store %arg20[%c3_266, %c0_267, %c0_268], %971 {strides = array<i32>} : memref<8x8x32xf32, #tpu.memory_space<vmem>>, vector<1x8x32xf32>,
    %972 = vector.extract_strided_slice %839 {offsets = [4, 0, 0], sizes = [1, 8, 128], strides = [1, 1, 1]} : vector<8x8x128xf32> to vector<1x8x128xf32>
    %973 = vector.shape_cast %972 : vector<1x8x128xf32> to vector<8x128xf32>
    %cst_269 = arith.constant dense<0.000000e+00> : vector<8x128xf32>
    %974 = tpu.matmul %968, %832, %cst_269 {dimension_numbers = #tpu.dot_dimension_numbers<[1], [0], [0], [1], [0, 0, 1, 1], [], []>} : vector<8x32xf32>, vector<32x128xf32>, vector<8x128xf32> -> vector<8x128xf32>
    %975 = arith.addf %973, %974 : vector<8x128xf32>
    %976 = vector.extract_strided_slice %975 {offsets = [0, 0], sizes = [8, 32], strides = [1, 1]} : vector<8x128xf32> to vector<8x32xf32>
    %977 = arith.negf %976 : vector<8x32xf32>
    %978 = math.exp %977 : vector<8x32xf32>
    %cst_270 = arith.constant 1.000000e+00 : f32
    %979 = vector.broadcast %cst_270 : f32 to vector<8x32xf32>
    %980 = arith.addf %979, %978 : vector<8x32xf32>
    %981 = arith.divf %979, %980 : vector<8x32xf32>
    %982 = vector.extract_strided_slice %975 {offsets = [0, 32], sizes = [8, 32], strides = [1, 1]} : vector<8x128xf32> to vector<8x32xf32>
    %983 = arith.negf %982 : vector<8x32xf32>
    %984 = math.exp %983 : vector<8x32xf32>
    %cst_271 = arith.constant 1.000000e+00 : f32
    %985 = vector.broadcast %cst_271 : f32 to vector<8x32xf32>
    %986 = arith.addf %985, %984 : vector<8x32xf32>
    %987 = arith.divf %985, %986 : vector<8x32xf32>
    %988 = vector.extract_strided_slice %975 {offsets = [0, 64], sizes = [8, 32], strides = [1, 1]} : vector<8x128xf32> to vector<8x32xf32>
    %989 = math.tanh %988 : vector<8x32xf32>
    %990 = vector.extract_strided_slice %975 {offsets = [0, 96], sizes = [8, 32], strides = [1, 1]} : vector<8x128xf32> to vector<8x32xf32>
    %991 = arith.negf %990 : vector<8x32xf32>
    %992 = math.exp %991 : vector<8x32xf32>
    %cst_272 = arith.constant 1.000000e+00 : f32
    %993 = vector.broadcast %cst_272 : f32 to vector<8x32xf32>
    %994 = arith.addf %993, %992 : vector<8x32xf32>
    %995 = arith.divf %993, %994 : vector<8x32xf32>
    %996 = arith.mulf %987, %966 : vector<8x32xf32>
    %997 = arith.mulf %981, %989 : vector<8x32xf32>
    %998 = arith.addf %996, %997 : vector<8x32xf32>
    %999 = math.tanh %998 : vector<8x32xf32>
    %1000 = arith.mulf %995, %999 : vector<8x32xf32>
    %c4_273 = arith.constant 4 : index
    %c0_274 = arith.constant 0 : index
    %c0_275 = arith.constant 0 : index
    %1001 = vector.load %arg20[%c4_273, %c0_274, %c0_275] : memref<8x8x32xf32, #tpu.memory_space<vmem>>, vector<1x8x32xf32>
    %1002 = vector.shape_cast %1001 : vector<1x8x32xf32> to vector<8x32xf32>
    %1003 = vector.shape_cast %1000 : vector<8x32xf32> to vector<1x8x32xf32>
    tpu.vector_store %arg20[%c4_273, %c0_274, %c0_275], %1003 {strides = array<i32>} : memref<8x8x32xf32, #tpu.memory_space<vmem>>, vector<1x8x32xf32>,
    %1004 = vector.extract_strided_slice %839 {offsets = [5, 0, 0], sizes = [1, 8, 128], strides = [1, 1, 1]} : vector<8x8x128xf32> to vector<1x8x128xf32>
    %1005 = vector.shape_cast %1004 : vector<1x8x128xf32> to vector<8x128xf32>
    %cst_276 = arith.constant dense<0.000000e+00> : vector<8x128xf32>
    %1006 = tpu.matmul %1000, %832, %cst_276 {dimension_numbers = #tpu.dot_dimension_numbers<[1], [0], [0], [1], [0, 0, 1, 1], [], []>} : vector<8x32xf32>, vector<32x128xf32>, vector<8x128xf32> -> vector<8x128xf32>
    %1007 = arith.addf %1005, %1006 : vector<8x128xf32>
    %1008 = vector.extract_strided_slice %1007 {offsets = [0, 0], sizes = [8, 32], strides = [1, 1]} : vector<8x128xf32> to vector<8x32xf32>
    %1009 = arith.negf %1008 : vector<8x32xf32>
    %1010 = math.exp %1009 : vector<8x32xf32>
    %cst_277 = arith.constant 1.000000e+00 : f32
    %1011 = vector.broadcast %cst_277 : f32 to vector<8x32xf32>
    %1012 = arith.addf %1011, %1010 : vector<8x32xf32>
    %1013 = arith.divf %1011, %1012 : vector<8x32xf32>
    %1014 = vector.extract_strided_slice %1007 {offsets = [0, 32], sizes = [8, 32], strides = [1, 1]} : vector<8x128xf32> to vector<8x32xf32>
    %1015 = arith.negf %1014 : vector<8x32xf32>
    %1016 = math.exp %1015 : vector<8x32xf32>
    %cst_278 = arith.constant 1.000000e+00 : f32
    %1017 = vector.broadcast %cst_278 : f32 to vector<8x32xf32>
    %1018 = arith.addf %1017, %1016 : vector<8x32xf32>
    %1019 = arith.divf %1017, %1018 : vector<8x32xf32>
    %1020 = vector.extract_strided_slice %1007 {offsets = [0, 64], sizes = [8, 32], strides = [1, 1]} : vector<8x128xf32> to vector<8x32xf32>
    %1021 = math.tanh %1020 : vector<8x32xf32>
    %1022 = vector.extract_strided_slice %1007 {offsets = [0, 96], sizes = [8, 32], strides = [1, 1]} : vector<8x128xf32> to vector<8x32xf32>
    %1023 = arith.negf %1022 : vector<8x32xf32>
    %1024 = math.exp %1023 : vector<8x32xf32>
    %cst_279 = arith.constant 1.000000e+00 : f32
    %1025 = vector.broadcast %cst_279 : f32 to vector<8x32xf32>
    %1026 = arith.addf %1025, %1024 : vector<8x32xf32>
    %1027 = arith.divf %1025, %1026 : vector<8x32xf32>
    %1028 = arith.mulf %1019, %998 : vector<8x32xf32>
    %1029 = arith.mulf %1013, %1021 : vector<8x32xf32>
    %1030 = arith.addf %1028, %1029 : vector<8x32xf32>
    %1031 = math.tanh %1030 : vector<8x32xf32>
    %1032 = arith.mulf %1027, %1031 : vector<8x32xf32>
    %c5_280 = arith.constant 5 : index
    %c0_281 = arith.constant 0 : index
    %c0_282 = arith.constant 0 : index
    %1033 = vector.load %arg20[%c5_280, %c0_281, %c0_282] : memref<8x8x32xf32, #tpu.memory_space<vmem>>, vector<1x8x32xf32>
    %1034 = vector.shape_cast %1033 : vector<1x8x32xf32> to vector<8x32xf32>
    %1035 = vector.shape_cast %1032 : vector<8x32xf32> to vector<1x8x32xf32>
    tpu.vector_store %arg20[%c5_280, %c0_281, %c0_282], %1035 {strides = array<i32>} : memref<8x8x32xf32, #tpu.memory_space<vmem>>, vector<1x8x32xf32>,
    %1036 = vector.extract_strided_slice %839 {offsets = [6, 0, 0], sizes = [1, 8, 128], strides = [1, 1, 1]} : vector<8x8x128xf32> to vector<1x8x128xf32>
    %1037 = vector.shape_cast %1036 : vector<1x8x128xf32> to vector<8x128xf32>
    %cst_283 = arith.constant dense<0.000000e+00> : vector<8x128xf32>
    %1038 = tpu.matmul %1032, %832, %cst_283 {dimension_numbers = #tpu.dot_dimension_numbers<[1], [0], [0], [1], [0, 0, 1, 1], [], []>} : vector<8x32xf32>, vector<32x128xf32>, vector<8x128xf32> -> vector<8x128xf32>
    %1039 = arith.addf %1037, %1038 : vector<8x128xf32>
    %1040 = vector.extract_strided_slice %1039 {offsets = [0, 0], sizes = [8, 32], strides = [1, 1]} : vector<8x128xf32> to vector<8x32xf32>
    %1041 = arith.negf %1040 : vector<8x32xf32>
    %1042 = math.exp %1041 : vector<8x32xf32>
    %cst_284 = arith.constant 1.000000e+00 : f32
    %1043 = vector.broadcast %cst_284 : f32 to vector<8x32xf32>
    %1044 = arith.addf %1043, %1042 : vector<8x32xf32>
    %1045 = arith.divf %1043, %1044 : vector<8x32xf32>
    %1046 = vector.extract_strided_slice %1039 {offsets = [0, 32], sizes = [8, 32], strides = [1, 1]} : vector<8x128xf32> to vector<8x32xf32>
    %1047 = arith.negf %1046 : vector<8x32xf32>
    %1048 = math.exp %1047 : vector<8x32xf32>
    %cst_285 = arith.constant 1.000000e+00 : f32
    %1049 = vector.broadcast %cst_285 : f32 to vector<8x32xf32>
    %1050 = arith.addf %1049, %1048 : vector<8x32xf32>
    %1051 = arith.divf %1049, %1050 : vector<8x32xf32>
    %1052 = vector.extract_strided_slice %1039 {offsets = [0, 64], sizes = [8, 32], strides = [1, 1]} : vector<8x128xf32> to vector<8x32xf32>
    %1053 = math.tanh %1052 : vector<8x32xf32>
    %1054 = vector.extract_strided_slice %1039 {offsets = [0, 96], sizes = [8, 32], strides = [1, 1]} : vector<8x128xf32> to vector<8x32xf32>
    %1055 = arith.negf %1054 : vector<8x32xf32>
    %1056 = math.exp %1055 : vector<8x32xf32>
    %cst_286 = arith.constant 1.000000e+00 : f32
    %1057 = vector.broadcast %cst_286 : f32 to vector<8x32xf32>
    %1058 = arith.addf %1057, %1056 : vector<8x32xf32>
    %1059 = arith.divf %1057, %1058 : vector<8x32xf32>
    %1060 = arith.mulf %1051, %1030 : vector<8x32xf32>
    %1061 = arith.mulf %1045, %1053 : vector<8x32xf32>
    %1062 = arith.addf %1060, %1061 : vector<8x32xf32>
    %1063 = math.tanh %1062 : vector<8x32xf32>
    %1064 = arith.mulf %1059, %1063 : vector<8x32xf32>
    %c6_287 = arith.constant 6 : index
    %c0_288 = arith.constant 0 : index
    %c0_289 = arith.constant 0 : index
    %1065 = vector.load %arg20[%c6_287, %c0_288, %c0_289] : memref<8x8x32xf32, #tpu.memory_space<vmem>>, vector<1x8x32xf32>
    %1066 = vector.shape_cast %1065 : vector<1x8x32xf32> to vector<8x32xf32>
    %1067 = vector.shape_cast %1064 : vector<8x32xf32> to vector<1x8x32xf32>
    tpu.vector_store %arg20[%c6_287, %c0_288, %c0_289], %1067 {strides = array<i32>} : memref<8x8x32xf32, #tpu.memory_space<vmem>>, vector<1x8x32xf32>,
    %1068 = vector.extract_strided_slice %839 {offsets = [7, 0, 0], sizes = [1, 8, 128], strides = [1, 1, 1]} : vector<8x8x128xf32> to vector<1x8x128xf32>
    %1069 = vector.shape_cast %1068 : vector<1x8x128xf32> to vector<8x128xf32>
    %cst_290 = arith.constant dense<0.000000e+00> : vector<8x128xf32>
    %1070 = tpu.matmul %1064, %832, %cst_290 {dimension_numbers = #tpu.dot_dimension_numbers<[1], [0], [0], [1], [0, 0, 1, 1], [], []>} : vector<8x32xf32>, vector<32x128xf32>, vector<8x128xf32> -> vector<8x128xf32>
    %1071 = arith.addf %1069, %1070 : vector<8x128xf32>
    %1072 = vector.extract_strided_slice %1071 {offsets = [0, 0], sizes = [8, 32], strides = [1, 1]} : vector<8x128xf32> to vector<8x32xf32>
    %1073 = arith.negf %1072 : vector<8x32xf32>
    %1074 = math.exp %1073 : vector<8x32xf32>
    %cst_291 = arith.constant 1.000000e+00 : f32
    %1075 = vector.broadcast %cst_291 : f32 to vector<8x32xf32>
    %1076 = arith.addf %1075, %1074 : vector<8x32xf32>
    %1077 = arith.divf %1075, %1076 : vector<8x32xf32>
    %1078 = vector.extract_strided_slice %1071 {offsets = [0, 32], sizes = [8, 32], strides = [1, 1]} : vector<8x128xf32> to vector<8x32xf32>
    %1079 = arith.negf %1078 : vector<8x32xf32>
    %1080 = math.exp %1079 : vector<8x32xf32>
    %cst_292 = arith.constant 1.000000e+00 : f32
    %1081 = vector.broadcast %cst_292 : f32 to vector<8x32xf32>
    %1082 = arith.addf %1081, %1080 : vector<8x32xf32>
    %1083 = arith.divf %1081, %1082 : vector<8x32xf32>
    %1084 = vector.extract_strided_slice %1071 {offsets = [0, 64], sizes = [8, 32], strides = [1, 1]} : vector<8x128xf32> to vector<8x32xf32>
    %1085 = math.tanh %1084 : vector<8x32xf32>
    %1086 = vector.extract_strided_slice %1071 {offsets = [0, 96], sizes = [8, 32], strides = [1, 1]} : vector<8x128xf32> to vector<8x32xf32>
    %1087 = arith.negf %1086 : vector<8x32xf32>
    %1088 = math.exp %1087 : vector<8x32xf32>
    %cst_293 = arith.constant 1.000000e+00 : f32
    %1089 = vector.broadcast %cst_293 : f32 to vector<8x32xf32>
    %1090 = arith.addf %1089, %1088 : vector<8x32xf32>
    %1091 = arith.divf %1089, %1090 : vector<8x32xf32>
    %1092 = arith.mulf %1083, %1062 : vector<8x32xf32>
    %1093 = arith.mulf %1077, %1085 : vector<8x32xf32>
    %1094 = arith.addf %1092, %1093 : vector<8x32xf32>
    %1095 = math.tanh %1094 : vector<8x32xf32>
    %1096 = arith.mulf %1091, %1095 : vector<8x32xf32>
    %c7_294 = arith.constant 7 : index
    %c0_295 = arith.constant 0 : index
    %c0_296 = arith.constant 0 : index
    %1097 = vector.load %arg20[%c7_294, %c0_295, %c0_296] : memref<8x8x32xf32, #tpu.memory_space<vmem>>, vector<1x8x32xf32>
    %1098 = vector.shape_cast %1097 : vector<1x8x32xf32> to vector<8x32xf32>
    %1099 = vector.shape_cast %1096 : vector<8x32xf32> to vector<1x8x32xf32>
    tpu.vector_store %arg20[%c7_294, %c0_295, %c0_296], %1099 {strides = array<i32>} : memref<8x8x32xf32, #tpu.memory_space<vmem>>, vector<1x8x32xf32>,
    %1100 = vector.extract_strided_slice %1096 {offsets = [0, 0], sizes = [4, 32], strides = [1, 1]} : vector<8x32xf32> to vector<4x32xf32>
    %c3_297 = arith.constant 3 : index
    %c0_298 = arith.constant 0 : index
    %c0_299 = arith.constant 0 : index
    %1101 = vector.load %arg18[%c3_297, %c0_298, %c0_299] : memref<4x4x32xf32, #tpu.memory_space<vmem>>, vector<1x4x32xf32>
    %1102 = vector.shape_cast %1101 : vector<1x4x32xf32> to vector<4x32xf32>
    %1103 = vector.shape_cast %1100 : vector<4x32xf32> to vector<1x4x32xf32>
    tpu.vector_store %arg18[%c3_297, %c0_298, %c0_299], %1103 {strides = array<i32>} : memref<4x4x32xf32, #tpu.memory_space<vmem>>, vector<1x4x32xf32>,
    %1104 = vector.extract_strided_slice %1094 {offsets = [0, 0], sizes = [4, 32], strides = [1, 1]} : vector<8x32xf32> to vector<4x32xf32>
    %c3_300 = arith.constant 3 : index
    %c0_301 = arith.constant 0 : index
    %c0_302 = arith.constant 0 : index
    %1105 = vector.load %arg19[%c3_300, %c0_301, %c0_302] : memref<4x4x32xf32, #tpu.memory_space<vmem>>, vector<1x4x32xf32>
    %1106 = vector.shape_cast %1105 : vector<1x4x32xf32> to vector<4x32xf32>
    %1107 = vector.shape_cast %1104 : vector<4x32xf32> to vector<1x4x32xf32>
    tpu.vector_store %arg19[%c3_300, %c0_301, %c0_302], %1107 {strides = array<i32>} : memref<4x4x32xf32, #tpu.memory_space<vmem>>, vector<1x4x32xf32>,
    %c0_303 = arith.constant 0 : index
    %c0_304 = arith.constant 0 : index
    %c0_305 = arith.constant 0 : index
    %1108 = vector.load %arg20[%c0_303, %c0_304, %c0_305] : memref<8x8x32xf32, #tpu.memory_space<vmem>>, vector<1x8x32xf32>
    %1109 = vector.shape_cast %1108 : vector<1x8x32xf32> to vector<8x32xf32>
    %1110 = vector.extract_strided_slice %1109 {offsets = [0, 0], sizes = [4, 32], strides = [1, 1]} : vector<8x32xf32> to vector<4x32xf32>
    %1111 = vector.shape_cast %1110 : vector<4x32xf32> to vector<1x4x32xf32>
    %cst_306 = arith.constant dense<0.000000e+00> : vector<1xf32>
    %1112 = vector.multi_reduction <add>, %1111, %cst_306 [1, 2] : vector<1x4x32xf32> to vector<1xf32>
    %1113 = vector.shape_cast %1112 : vector<1xf32> to vector<1x1x1xf32>
    %1114 = vector.extract %1113[0, 0, 0] : f32 from vector<1x1x1xf32>
    %cst_307 = arith.constant 7.812500e-03 : f32
    %1115 = arith.mulf %1114, %cst_307 : f32
    %1116 = vector.broadcast %1115 : f32 to vector<4x32xf32>
    %1117 = arith.subf %1110, %1116 : vector<4x32xf32>
    %1118 = arith.mulf %1117, %1117 : vector<4x32xf32>
    %1119 = vector.shape_cast %1118 : vector<4x32xf32> to vector<1x4x32xf32>
    %cst_308 = arith.constant dense<0.000000e+00> : vector<1xf32>
    %1120 = vector.multi_reduction <add>, %1119, %cst_308 [1, 2] : vector<1x4x32xf32> to vector<1xf32>
    %1121 = vector.shape_cast %1120 : vector<1xf32> to vector<1x1x1xf32>
    %1122 = vector.extract %1121[0, 0, 0] : f32 from vector<1x1x1xf32>
    %cst_309 = arith.constant 7.812500e-03 : f32
    %1123 = arith.mulf %1122, %cst_309 : f32
    %1124 = vector.broadcast %1115 : f32 to vector<4x32xf32>
    %1125 = arith.subf %1110, %1124 : vector<4x32xf32>
    %cst_310 = arith.constant 9.99999974E-6 : f32
    %1126 = arith.addf %1123, %cst_310 : f32
    %1127 = math.rsqrt %1126 : f32
    %1128 = vector.broadcast %1127 : f32 to vector<4x32xf32>
    %1129 = arith.mulf %1125, %1128 : vector<4x32xf32>
    %c0_311 = arith.constant 0 : index
    %1130 = memref.load %arg3[%c0_311] : memref<8xf32, #tpu.memory_space<smem>>
    %1131 = vector.broadcast %1130 : f32 to vector<4x32xf32>
    %1132 = arith.mulf %1131, %1129 : vector<4x32xf32>
    %c0_312 = arith.constant 0 : index
    %1133 = memref.load %arg4[%c0_312] : memref<8xf32, #tpu.memory_space<smem>>
    %1134 = vector.broadcast %1133 : f32 to vector<4x32xf32>
    %1135 = arith.addf %1132, %1134 : vector<4x32xf32>
    %c0_313 = arith.constant 0 : index
    %c0_314 = arith.constant 0 : index
    %c0_315 = arith.constant 0 : index
    %1136 = vector.load %arg17[%c0_313, %c0_314, %c0_315] : memref<4x8x32xf32, #tpu.memory_space<vmem>>, vector<4x1x32xf32>
    %1137 = vector.shape_cast %1136 : vector<4x1x32xf32> to vector<4x32xf32>
    %1138 = vector.shape_cast %1135 : vector<4x32xf32> to vector<4x1x32xf32>
    tpu.vector_store %arg17[%c0_313, %c0_314, %c0_315], %1138 {strides = array<i32>} : memref<4x8x32xf32, #tpu.memory_space<vmem>>, vector<4x1x32xf32>,
    %c1_316 = arith.constant 1 : index
    %c0_317 = arith.constant 0 : index
    %c0_318 = arith.constant 0 : index
    %1139 = vector.load %arg20[%c1_316, %c0_317, %c0_318] : memref<8x8x32xf32, #tpu.memory_space<vmem>>, vector<1x8x32xf32>
    %1140 = vector.shape_cast %1139 : vector<1x8x32xf32> to vector<8x32xf32>
    %1141 = vector.extract_strided_slice %1140 {offsets = [0, 0], sizes = [4, 32], strides = [1, 1]} : vector<8x32xf32> to vector<4x32xf32>
    %1142 = vector.shape_cast %1141 : vector<4x32xf32> to vector<1x4x32xf32>
    %cst_319 = arith.constant dense<0.000000e+00> : vector<1xf32>
    %1143 = vector.multi_reduction <add>, %1142, %cst_319 [1, 2] : vector<1x4x32xf32> to vector<1xf32>
    %1144 = vector.shape_cast %1143 : vector<1xf32> to vector<1x1x1xf32>
    %1145 = vector.extract %1144[0, 0, 0] : f32 from vector<1x1x1xf32>
    %cst_320 = arith.constant 7.812500e-03 : f32
    %1146 = arith.mulf %1145, %cst_320 : f32
    %1147 = vector.broadcast %1146 : f32 to vector<4x32xf32>
    %1148 = arith.subf %1141, %1147 : vector<4x32xf32>
    %1149 = arith.mulf %1148, %1148 : vector<4x32xf32>
    %1150 = vector.shape_cast %1149 : vector<4x32xf32> to vector<1x4x32xf32>
    %cst_321 = arith.constant dense<0.000000e+00> : vector<1xf32>
    %1151 = vector.multi_reduction <add>, %1150, %cst_321 [1, 2] : vector<1x4x32xf32> to vector<1xf32>
    %1152 = vector.shape_cast %1151 : vector<1xf32> to vector<1x1x1xf32>
    %1153 = vector.extract %1152[0, 0, 0] : f32 from vector<1x1x1xf32>
    %cst_322 = arith.constant 7.812500e-03 : f32
    %1154 = arith.mulf %1153, %cst_322 : f32
    %1155 = vector.broadcast %1146 : f32 to vector<4x32xf32>
    %1156 = arith.subf %1141, %1155 : vector<4x32xf32>
    %cst_323 = arith.constant 9.99999974E-6 : f32
    %1157 = arith.addf %1154, %cst_323 : f32
    %1158 = math.rsqrt %1157 : f32
    %1159 = vector.broadcast %1158 : f32 to vector<4x32xf32>
    %1160 = arith.mulf %1156, %1159 : vector<4x32xf32>
    %c1_324 = arith.constant 1 : index
    %1161 = memref.load %arg3[%c1_324] : memref<8xf32, #tpu.memory_space<smem>>
    %1162 = vector.broadcast %1161 : f32 to vector<4x32xf32>
    %1163 = arith.mulf %1162, %1160 : vector<4x32xf32>
    %c1_325 = arith.constant 1 : index
    %1164 = memref.load %arg4[%c1_325] : memref<8xf32, #tpu.memory_space<smem>>
    %1165 = vector.broadcast %1164 : f32 to vector<4x32xf32>
    %1166 = arith.addf %1163, %1165 : vector<4x32xf32>
    %c0_326 = arith.constant 0 : index
    %c1_327 = arith.constant 1 : index
    %c0_328 = arith.constant 0 : index
    %1167 = vector.load %arg17[%c0_326, %c1_327, %c0_328] : memref<4x8x32xf32, #tpu.memory_space<vmem>>, vector<4x1x32xf32>
    %1168 = vector.shape_cast %1167 : vector<4x1x32xf32> to vector<4x32xf32>
    %1169 = vector.shape_cast %1166 : vector<4x32xf32> to vector<4x1x32xf32>
    tpu.vector_store %arg17[%c0_326, %c1_327, %c0_328], %1169 {strides = array<i32>} : memref<4x8x32xf32, #tpu.memory_space<vmem>>, vector<4x1x32xf32>,
    %c2_329 = arith.constant 2 : index
    %c0_330 = arith.constant 0 : index
    %c0_331 = arith.constant 0 : index
    %1170 = vector.load %arg20[%c2_329, %c0_330, %c0_331] : memref<8x8x32xf32, #tpu.memory_space<vmem>>, vector<1x8x32xf32>
    %1171 = vector.shape_cast %1170 : vector<1x8x32xf32> to vector<8x32xf32>
    %1172 = vector.extract_strided_slice %1171 {offsets = [0, 0], sizes = [4, 32], strides = [1, 1]} : vector<8x32xf32> to vector<4x32xf32>
    %1173 = vector.shape_cast %1172 : vector<4x32xf32> to vector<1x4x32xf32>
    %cst_332 = arith.constant dense<0.000000e+00> : vector<1xf32>
    %1174 = vector.multi_reduction <add>, %1173, %cst_332 [1, 2] : vector<1x4x32xf32> to vector<1xf32>
    %1175 = vector.shape_cast %1174 : vector<1xf32> to vector<1x1x1xf32>
    %1176 = vector.extract %1175[0, 0, 0] : f32 from vector<1x1x1xf32>
    %cst_333 = arith.constant 7.812500e-03 : f32
    %1177 = arith.mulf %1176, %cst_333 : f32
    %1178 = vector.broadcast %1177 : f32 to vector<4x32xf32>
    %1179 = arith.subf %1172, %1178 : vector<4x32xf32>
    %1180 = arith.mulf %1179, %1179 : vector<4x32xf32>
    %1181 = vector.shape_cast %1180 : vector<4x32xf32> to vector<1x4x32xf32>
    %cst_334 = arith.constant dense<0.000000e+00> : vector<1xf32>
    %1182 = vector.multi_reduction <add>, %1181, %cst_334 [1, 2] : vector<1x4x32xf32> to vector<1xf32>
    %1183 = vector.shape_cast %1182 : vector<1xf32> to vector<1x1x1xf32>
    %1184 = vector.extract %1183[0, 0, 0] : f32 from vector<1x1x1xf32>
    %cst_335 = arith.constant 7.812500e-03 : f32
    %1185 = arith.mulf %1184, %cst_335 : f32
    %1186 = vector.broadcast %1177 : f32 to vector<4x32xf32>
    %1187 = arith.subf %1172, %1186 : vector<4x32xf32>
    %cst_336 = arith.constant 9.99999974E-6 : f32
    %1188 = arith.addf %1185, %cst_336 : f32
    %1189 = math.rsqrt %1188 : f32
    %1190 = vector.broadcast %1189 : f32 to vector<4x32xf32>
    %1191 = arith.mulf %1187, %1190 : vector<4x32xf32>
    %c2_337 = arith.constant 2 : index
    %1192 = memref.load %arg3[%c2_337] : memref<8xf32, #tpu.memory_space<smem>>
    %1193 = vector.broadcast %1192 : f32 to vector<4x32xf32>
    %1194 = arith.mulf %1193, %1191 : vector<4x32xf32>
    %c2_338 = arith.constant 2 : index
    %1195 = memref.load %arg4[%c2_338] : memref<8xf32, #tpu.memory_space<smem>>
    %1196 = vector.broadcast %1195 : f32 to vector<4x32xf32>
    %1197 = arith.addf %1194, %1196 : vector<4x32xf32>
    %c0_339 = arith.constant 0 : index
    %c2_340 = arith.constant 2 : index
    %c0_341 = arith.constant 0 : index
    %1198 = vector.load %arg17[%c0_339, %c2_340, %c0_341] : memref<4x8x32xf32, #tpu.memory_space<vmem>>, vector<4x1x32xf32>
    %1199 = vector.shape_cast %1198 : vector<4x1x32xf32> to vector<4x32xf32>
    %1200 = vector.shape_cast %1197 : vector<4x32xf32> to vector<4x1x32xf32>
    tpu.vector_store %arg17[%c0_339, %c2_340, %c0_341], %1200 {strides = array<i32>} : memref<4x8x32xf32, #tpu.memory_space<vmem>>, vector<4x1x32xf32>,
    %c3_342 = arith.constant 3 : index
    %c0_343 = arith.constant 0 : index
    %c0_344 = arith.constant 0 : index
    %1201 = vector.load %arg20[%c3_342, %c0_343, %c0_344] : memref<8x8x32xf32, #tpu.memory_space<vmem>>, vector<1x8x32xf32>
    %1202 = vector.shape_cast %1201 : vector<1x8x32xf32> to vector<8x32xf32>
    %1203 = vector.extract_strided_slice %1202 {offsets = [0, 0], sizes = [4, 32], strides = [1, 1]} : vector<8x32xf32> to vector<4x32xf32>
    %1204 = vector.shape_cast %1203 : vector<4x32xf32> to vector<1x4x32xf32>
    %cst_345 = arith.constant dense<0.000000e+00> : vector<1xf32>
    %1205 = vector.multi_reduction <add>, %1204, %cst_345 [1, 2] : vector<1x4x32xf32> to vector<1xf32>
    %1206 = vector.shape_cast %1205 : vector<1xf32> to vector<1x1x1xf32>
    %1207 = vector.extract %1206[0, 0, 0] : f32 from vector<1x1x1xf32>
    %cst_346 = arith.constant 7.812500e-03 : f32
    %1208 = arith.mulf %1207, %cst_346 : f32
    %1209 = vector.broadcast %1208 : f32 to vector<4x32xf32>
    %1210 = arith.subf %1203, %1209 : vector<4x32xf32>
    %1211 = arith.mulf %1210, %1210 : vector<4x32xf32>
    %1212 = vector.shape_cast %1211 : vector<4x32xf32> to vector<1x4x32xf32>
    %cst_347 = arith.constant dense<0.000000e+00> : vector<1xf32>
    %1213 = vector.multi_reduction <add>, %1212, %cst_347 [1, 2] : vector<1x4x32xf32> to vector<1xf32>
    %1214 = vector.shape_cast %1213 : vector<1xf32> to vector<1x1x1xf32>
    %1215 = vector.extract %1214[0, 0, 0] : f32 from vector<1x1x1xf32>
    %cst_348 = arith.constant 7.812500e-03 : f32
    %1216 = arith.mulf %1215, %cst_348 : f32
    %1217 = vector.broadcast %1208 : f32 to vector<4x32xf32>
    %1218 = arith.subf %1203, %1217 : vector<4x32xf32>
    %cst_349 = arith.constant 9.99999974E-6 : f32
    %1219 = arith.addf %1216, %cst_349 : f32
    %1220 = math.rsqrt %1219 : f32
    %1221 = vector.broadcast %1220 : f32 to vector<4x32xf32>
    %1222 = arith.mulf %1218, %1221 : vector<4x32xf32>
    %c3_350 = arith.constant 3 : index
    %1223 = memref.load %arg3[%c3_350] : memref<8xf32, #tpu.memory_space<smem>>
    %1224 = vector.broadcast %1223 : f32 to vector<4x32xf32>
    %1225 = arith.mulf %1224, %1222 : vector<4x32xf32>
    %c3_351 = arith.constant 3 : index
    %1226 = memref.load %arg4[%c3_351] : memref<8xf32, #tpu.memory_space<smem>>
    %1227 = vector.broadcast %1226 : f32 to vector<4x32xf32>
    %1228 = arith.addf %1225, %1227 : vector<4x32xf32>
    %c0_352 = arith.constant 0 : index
    %c3_353 = arith.constant 3 : index
    %c0_354 = arith.constant 0 : index
    %1229 = vector.load %arg17[%c0_352, %c3_353, %c0_354] : memref<4x8x32xf32, #tpu.memory_space<vmem>>, vector<4x1x32xf32>
    %1230 = vector.shape_cast %1229 : vector<4x1x32xf32> to vector<4x32xf32>
    %1231 = vector.shape_cast %1228 : vector<4x32xf32> to vector<4x1x32xf32>
    tpu.vector_store %arg17[%c0_352, %c3_353, %c0_354], %1231 {strides = array<i32>} : memref<4x8x32xf32, #tpu.memory_space<vmem>>, vector<4x1x32xf32>,
    %c4_355 = arith.constant 4 : index
    %c0_356 = arith.constant 0 : index
    %c0_357 = arith.constant 0 : index
    %1232 = vector.load %arg20[%c4_355, %c0_356, %c0_357] : memref<8x8x32xf32, #tpu.memory_space<vmem>>, vector<1x8x32xf32>
    %1233 = vector.shape_cast %1232 : vector<1x8x32xf32> to vector<8x32xf32>
    %1234 = vector.extract_strided_slice %1233 {offsets = [0, 0], sizes = [4, 32], strides = [1, 1]} : vector<8x32xf32> to vector<4x32xf32>
    %1235 = vector.shape_cast %1234 : vector<4x32xf32> to vector<1x4x32xf32>
    %cst_358 = arith.constant dense<0.000000e+00> : vector<1xf32>
    %1236 = vector.multi_reduction <add>, %1235, %cst_358 [1, 2] : vector<1x4x32xf32> to vector<1xf32>
    %1237 = vector.shape_cast %1236 : vector<1xf32> to vector<1x1x1xf32>
    %1238 = vector.extract %1237[0, 0, 0] : f32 from vector<1x1x1xf32>
    %cst_359 = arith.constant 7.812500e-03 : f32
    %1239 = arith.mulf %1238, %cst_359 : f32
    %1240 = vector.broadcast %1239 : f32 to vector<4x32xf32>
    %1241 = arith.subf %1234, %1240 : vector<4x32xf32>
    %1242 = arith.mulf %1241, %1241 : vector<4x32xf32>
    %1243 = vector.shape_cast %1242 : vector<4x32xf32> to vector<1x4x32xf32>
    %cst_360 = arith.constant dense<0.000000e+00> : vector<1xf32>
    %1244 = vector.multi_reduction <add>, %1243, %cst_360 [1, 2] : vector<1x4x32xf32> to vector<1xf32>
    %1245 = vector.shape_cast %1244 : vector<1xf32> to vector<1x1x1xf32>
    %1246 = vector.extract %1245[0, 0, 0] : f32 from vector<1x1x1xf32>
    %cst_361 = arith.constant 7.812500e-03 : f32
    %1247 = arith.mulf %1246, %cst_361 : f32
    %1248 = vector.broadcast %1239 : f32 to vector<4x32xf32>
    %1249 = arith.subf %1234, %1248 : vector<4x32xf32>
    %cst_362 = arith.constant 9.99999974E-6 : f32
    %1250 = arith.addf %1247, %cst_362 : f32
    %1251 = math.rsqrt %1250 : f32
    %1252 = vector.broadcast %1251 : f32 to vector<4x32xf32>
    %1253 = arith.mulf %1249, %1252 : vector<4x32xf32>
    %c4_363 = arith.constant 4 : index
    %1254 = memref.load %arg3[%c4_363] : memref<8xf32, #tpu.memory_space<smem>>
    %1255 = vector.broadcast %1254 : f32 to vector<4x32xf32>
    %1256 = arith.mulf %1255, %1253 : vector<4x32xf32>
    %c4_364 = arith.constant 4 : index
    %1257 = memref.load %arg4[%c4_364] : memref<8xf32, #tpu.memory_space<smem>>
    %1258 = vector.broadcast %1257 : f32 to vector<4x32xf32>
    %1259 = arith.addf %1256, %1258 : vector<4x32xf32>
    %c0_365 = arith.constant 0 : index
    %c4_366 = arith.constant 4 : index
    %c0_367 = arith.constant 0 : index
    %1260 = vector.load %arg17[%c0_365, %c4_366, %c0_367] : memref<4x8x32xf32, #tpu.memory_space<vmem>>, vector<4x1x32xf32>
    %1261 = vector.shape_cast %1260 : vector<4x1x32xf32> to vector<4x32xf32>
    %1262 = vector.shape_cast %1259 : vector<4x32xf32> to vector<4x1x32xf32>
    tpu.vector_store %arg17[%c0_365, %c4_366, %c0_367], %1262 {strides = array<i32>} : memref<4x8x32xf32, #tpu.memory_space<vmem>>, vector<4x1x32xf32>,
    %c5_368 = arith.constant 5 : index
    %c0_369 = arith.constant 0 : index
    %c0_370 = arith.constant 0 : index
    %1263 = vector.load %arg20[%c5_368, %c0_369, %c0_370] : memref<8x8x32xf32, #tpu.memory_space<vmem>>, vector<1x8x32xf32>
    %1264 = vector.shape_cast %1263 : vector<1x8x32xf32> to vector<8x32xf32>
    %1265 = vector.extract_strided_slice %1264 {offsets = [0, 0], sizes = [4, 32], strides = [1, 1]} : vector<8x32xf32> to vector<4x32xf32>
    %1266 = vector.shape_cast %1265 : vector<4x32xf32> to vector<1x4x32xf32>
    %cst_371 = arith.constant dense<0.000000e+00> : vector<1xf32>
    %1267 = vector.multi_reduction <add>, %1266, %cst_371 [1, 2] : vector<1x4x32xf32> to vector<1xf32>
    %1268 = vector.shape_cast %1267 : vector<1xf32> to vector<1x1x1xf32>
    %1269 = vector.extract %1268[0, 0, 0] : f32 from vector<1x1x1xf32>
    %cst_372 = arith.constant 7.812500e-03 : f32
    %1270 = arith.mulf %1269, %cst_372 : f32
    %1271 = vector.broadcast %1270 : f32 to vector<4x32xf32>
    %1272 = arith.subf %1265, %1271 : vector<4x32xf32>
    %1273 = arith.mulf %1272, %1272 : vector<4x32xf32>
    %1274 = vector.shape_cast %1273 : vector<4x32xf32> to vector<1x4x32xf32>
    %cst_373 = arith.constant dense<0.000000e+00> : vector<1xf32>
    %1275 = vector.multi_reduction <add>, %1274, %cst_373 [1, 2] : vector<1x4x32xf32> to vector<1xf32>
    %1276 = vector.shape_cast %1275 : vector<1xf32> to vector<1x1x1xf32>
    %1277 = vector.extract %1276[0, 0, 0] : f32 from vector<1x1x1xf32>
    %cst_374 = arith.constant 7.812500e-03 : f32
    %1278 = arith.mulf %1277, %cst_374 : f32
    %1279 = vector.broadcast %1270 : f32 to vector<4x32xf32>
    %1280 = arith.subf %1265, %1279 : vector<4x32xf32>
    %cst_375 = arith.constant 9.99999974E-6 : f32
    %1281 = arith.addf %1278, %cst_375 : f32
    %1282 = math.rsqrt %1281 : f32
    %1283 = vector.broadcast %1282 : f32 to vector<4x32xf32>
    %1284 = arith.mulf %1280, %1283 : vector<4x32xf32>
    %c5_376 = arith.constant 5 : index
    %1285 = memref.load %arg3[%c5_376] : memref<8xf32, #tpu.memory_space<smem>>
    %1286 = vector.broadcast %1285 : f32 to vector<4x32xf32>
    %1287 = arith.mulf %1286, %1284 : vector<4x32xf32>
    %c5_377 = arith.constant 5 : index
    %1288 = memref.load %arg4[%c5_377] : memref<8xf32, #tpu.memory_space<smem>>
    %1289 = vector.broadcast %1288 : f32 to vector<4x32xf32>
    %1290 = arith.addf %1287, %1289 : vector<4x32xf32>
    %c0_378 = arith.constant 0 : index
    %c5_379 = arith.constant 5 : index
    %c0_380 = arith.constant 0 : index
    %1291 = vector.load %arg17[%c0_378, %c5_379, %c0_380] : memref<4x8x32xf32, #tpu.memory_space<vmem>>, vector<4x1x32xf32>
    %1292 = vector.shape_cast %1291 : vector<4x1x32xf32> to vector<4x32xf32>
    %1293 = vector.shape_cast %1290 : vector<4x32xf32> to vector<4x1x32xf32>
    tpu.vector_store %arg17[%c0_378, %c5_379, %c0_380], %1293 {strides = array<i32>} : memref<4x8x32xf32, #tpu.memory_space<vmem>>, vector<4x1x32xf32>,
    %c6_381 = arith.constant 6 : index
    %c0_382 = arith.constant 0 : index
    %c0_383 = arith.constant 0 : index
    %1294 = vector.load %arg20[%c6_381, %c0_382, %c0_383] : memref<8x8x32xf32, #tpu.memory_space<vmem>>, vector<1x8x32xf32>
    %1295 = vector.shape_cast %1294 : vector<1x8x32xf32> to vector<8x32xf32>
    %1296 = vector.extract_strided_slice %1295 {offsets = [0, 0], sizes = [4, 32], strides = [1, 1]} : vector<8x32xf32> to vector<4x32xf32>
    %1297 = vector.shape_cast %1296 : vector<4x32xf32> to vector<1x4x32xf32>
    %cst_384 = arith.constant dense<0.000000e+00> : vector<1xf32>
    %1298 = vector.multi_reduction <add>, %1297, %cst_384 [1, 2] : vector<1x4x32xf32> to vector<1xf32>
    %1299 = vector.shape_cast %1298 : vector<1xf32> to vector<1x1x1xf32>
    %1300 = vector.extract %1299[0, 0, 0] : f32 from vector<1x1x1xf32>
    %cst_385 = arith.constant 7.812500e-03 : f32
    %1301 = arith.mulf %1300, %cst_385 : f32
    %1302 = vector.broadcast %1301 : f32 to vector<4x32xf32>
    %1303 = arith.subf %1296, %1302 : vector<4x32xf32>
    %1304 = arith.mulf %1303, %1303 : vector<4x32xf32>
    %1305 = vector.shape_cast %1304 : vector<4x32xf32> to vector<1x4x32xf32>
    %cst_386 = arith.constant dense<0.000000e+00> : vector<1xf32>
    %1306 = vector.multi_reduction <add>, %1305, %cst_386 [1, 2] : vector<1x4x32xf32> to vector<1xf32>
    %1307 = vector.shape_cast %1306 : vector<1xf32> to vector<1x1x1xf32>
    %1308 = vector.extract %1307[0, 0, 0] : f32 from vector<1x1x1xf32>
    %cst_387 = arith.constant 7.812500e-03 : f32
    %1309 = arith.mulf %1308, %cst_387 : f32
    %1310 = vector.broadcast %1301 : f32 to vector<4x32xf32>
    %1311 = arith.subf %1296, %1310 : vector<4x32xf32>
    %cst_388 = arith.constant 9.99999974E-6 : f32
    %1312 = arith.addf %1309, %cst_388 : f32
    %1313 = math.rsqrt %1312 : f32
    %1314 = vector.broadcast %1313 : f32 to vector<4x32xf32>
    %1315 = arith.mulf %1311, %1314 : vector<4x32xf32>
    %c6_389 = arith.constant 6 : index
    %1316 = memref.load %arg3[%c6_389] : memref<8xf32, #tpu.memory_space<smem>>
    %1317 = vector.broadcast %1316 : f32 to vector<4x32xf32>
    %1318 = arith.mulf %1317, %1315 : vector<4x32xf32>
    %c6_390 = arith.constant 6 : index
    %1319 = memref.load %arg4[%c6_390] : memref<8xf32, #tpu.memory_space<smem>>
    %1320 = vector.broadcast %1319 : f32 to vector<4x32xf32>
    %1321 = arith.addf %1318, %1320 : vector<4x32xf32>
    %c0_391 = arith.constant 0 : index
    %c6_392 = arith.constant 6 : index
    %c0_393 = arith.constant 0 : index
    %1322 = vector.load %arg17[%c0_391, %c6_392, %c0_393] : memref<4x8x32xf32, #tpu.memory_space<vmem>>, vector<4x1x32xf32>
    %1323 = vector.shape_cast %1322 : vector<4x1x32xf32> to vector<4x32xf32>
    %1324 = vector.shape_cast %1321 : vector<4x32xf32> to vector<4x1x32xf32>
    tpu.vector_store %arg17[%c0_391, %c6_392, %c0_393], %1324 {strides = array<i32>} : memref<4x8x32xf32, #tpu.memory_space<vmem>>, vector<4x1x32xf32>,
    %c7_394 = arith.constant 7 : index
    %c0_395 = arith.constant 0 : index
    %c0_396 = arith.constant 0 : index
    %1325 = vector.load %arg20[%c7_394, %c0_395, %c0_396] : memref<8x8x32xf32, #tpu.memory_space<vmem>>, vector<1x8x32xf32>
    %1326 = vector.shape_cast %1325 : vector<1x8x32xf32> to vector<8x32xf32>
    %1327 = vector.extract_strided_slice %1326 {offsets = [0, 0], sizes = [4, 32], strides = [1, 1]} : vector<8x32xf32> to vector<4x32xf32>
    %1328 = vector.shape_cast %1327 : vector<4x32xf32> to vector<1x4x32xf32>
    %cst_397 = arith.constant dense<0.000000e+00> : vector<1xf32>
    %1329 = vector.multi_reduction <add>, %1328, %cst_397 [1, 2] : vector<1x4x32xf32> to vector<1xf32>
    %1330 = vector.shape_cast %1329 : vector<1xf32> to vector<1x1x1xf32>
    %1331 = vector.extract %1330[0, 0, 0] : f32 from vector<1x1x1xf32>
    %cst_398 = arith.constant 7.812500e-03 : f32
    %1332 = arith.mulf %1331, %cst_398 : f32
    %1333 = vector.broadcast %1332 : f32 to vector<4x32xf32>
    %1334 = arith.subf %1327, %1333 : vector<4x32xf32>
    %1335 = arith.mulf %1334, %1334 : vector<4x32xf32>
    %1336 = vector.shape_cast %1335 : vector<4x32xf32> to vector<1x4x32xf32>
    %cst_399 = arith.constant dense<0.000000e+00> : vector<1xf32>
    %1337 = vector.multi_reduction <add>, %1336, %cst_399 [1, 2] : vector<1x4x32xf32> to vector<1xf32>
    %1338 = vector.shape_cast %1337 : vector<1xf32> to vector<1x1x1xf32>
    %1339 = vector.extract %1338[0, 0, 0] : f32 from vector<1x1x1xf32>
    %cst_400 = arith.constant 7.812500e-03 : f32
    %1340 = arith.mulf %1339, %cst_400 : f32
    %1341 = vector.broadcast %1332 : f32 to vector<4x32xf32>
    %1342 = arith.subf %1327, %1341 : vector<4x32xf32>
    %cst_401 = arith.constant 9.99999974E-6 : f32
    %1343 = arith.addf %1340, %cst_401 : f32
    %1344 = math.rsqrt %1343 : f32
    %1345 = vector.broadcast %1344 : f32 to vector<4x32xf32>
    %1346 = arith.mulf %1342, %1345 : vector<4x32xf32>
    %c7_402 = arith.constant 7 : index
    %1347 = memref.load %arg3[%c7_402] : memref<8xf32, #tpu.memory_space<smem>>
    %1348 = vector.broadcast %1347 : f32 to vector<4x32xf32>
    %1349 = arith.mulf %1348, %1346 : vector<4x32xf32>
    %c7_403 = arith.constant 7 : index
    %1350 = memref.load %arg4[%c7_403] : memref<8xf32, #tpu.memory_space<smem>>
    %1351 = vector.broadcast %1350 : f32 to vector<4x32xf32>
    %1352 = arith.addf %1349, %1351 : vector<4x32xf32>
    %c0_404 = arith.constant 0 : index
    %c7_405 = arith.constant 7 : index
    %c0_406 = arith.constant 0 : index
    %1353 = vector.load %arg17[%c0_404, %c7_405, %c0_406] : memref<4x8x32xf32, #tpu.memory_space<vmem>>, vector<4x1x32xf32>
    %1354 = vector.shape_cast %1353 : vector<4x1x32xf32> to vector<4x32xf32>
    %1355 = vector.shape_cast %1352 : vector<4x32xf32> to vector<4x1x32xf32>
    tpu.vector_store %arg17[%c0_404, %c7_405, %c0_406], %1355 {strides = array<i32>} : memref<4x8x32xf32, #tpu.memory_space<vmem>>, vector<4x1x32xf32>,
    return
  }
}

</mosaic_0001>

<llo_original>
// kernel: _forward_impl.1
$region0: #{_forward_impl.1}
  #allocation0 [shape = 'u32[]', space=smem, size = 0x4, offset = 0x4, fixed_abs, tag = 'smem constant byte address 0x4 - core index']
  #allocation1 [shape = 'u32[72,128]{1,0:T(1,128)}', space=vmem, size = 0x9000, scoped, tag = 'internal scratch']
  #allocation2 [shape = 'f32[8,8,32]{2,1,0:T(8,128)}', space=vmem, size = 0x8000, scoped, tag = 'scratch operand']
  %s0 = inlined_call_operand.vmem [shape: f32[8,8,4], index: 0, kind: input, shape index: {}]
  %s1 = inlined_call_operand.vmem [shape: f32[4,8,32], index: 1, kind: input, shape index: {}]
  %s2 = inlined_call_operand.vmem [shape: f32[4,8,32], index: 2, kind: input, shape index: {}]
  %s3 = inlined_call_operand.vmem [shape: f32[8], index: 3, kind: input, shape index: {}]
  %s4 = inlined_call_operand.vmem [shape: f32[8], index: 4, kind: input, shape index: {}]
  %s5 = inlined_call_operand.vmem [shape: f32[4,128], index: 5, kind: input, shape index: {}]
  %s6 = inlined_call_operand.vmem [shape: f32[32,128], index: 6, kind: input, shape index: {}]
  %s7 = inlined_call_operand.vmem [shape: f32[1,128], index: 7, kind: input, shape index: {}]
  %s8 = inlined_call_operand.vmem [shape: f32[32,128], index: 8, kind: input, shape index: {}]
  %s9 = inlined_call_operand.vmem [shape: f32[32,128], index: 9, kind: input, shape index: {}]
  %s10 = inlined_call_operand.vmem [shape: f32[1,128], index: 10, kind: input, shape index: {}]
  %s11 = inlined_call_operand.vmem [shape: f32[32,128], index: 11, kind: input, shape index: {}]
  %s12 = inlined_call_operand.vmem [shape: f32[32,128], index: 12, kind: input, shape index: {}]
  %s13 = inlined_call_operand.vmem [shape: f32[1,128], index: 13, kind: input, shape index: {}]
  %s14 = inlined_call_operand.vmem [shape: f32[32,128], index: 14, kind: input, shape index: {}]
  %s15 = inlined_call_operand.hbm [shape: f32[32,128], index: 15, kind: input, shape index: {}]
  %s16 = inlined_call_operand.vmem [shape: f32[1,128], index: 16, kind: input, shape index: {}]
  %s17 = inlined_call_operand.hbm [shape: f32[4,8,32], index: 17, kind: output, shape index: {0}]
  %s18 = inlined_call_operand.hbm [shape: f32[4,4,32], index: 18, kind: output, shape index: {1}]
  %s19 = inlined_call_operand.hbm [shape: f32[4,4,32], index: 19, kind: output, shape index: {2}]
  %20 = xla_tuple %s17, %s18, %s19
  %s21 = sld [smem:[#allocation0]]
  $region106: #{_forward_impl.1} parent=0
    _
  %s23 = ssub.s32 1, %s21
  %s24 = scalar_select 0, %s23, %s21
  $region1: #{_forward_impl.1} parent=0
    #allocation3 [shape = 'u8[512]{0}', space=smem, size = 0x200, scoped, tag = 'input window, operand 3, single buffered']
    #allocation4 [shape = 's32[1]{0}', space=sflag, size = 0x4, scoped, tag = 'scoped memory for _forward_impl.1']
    #allocation5 [shape = 's32[1]{0}', space=sflag, size = 0x4, scoped, tag = 'scoped memory for _forward_impl.1']
    #allocation6 [shape = 's32[1]{0}', space=sflag, size = 0x4, scoped, tag = 'scoped memory for _forward_impl.1']
    #allocation7 [shape = 'u8[512]{0}', space=smem, size = 0x200, scoped, tag = 'input window, operand 4, single buffered']
    #allocation8 [shape = 's32[1]{0}', space=sflag, size = 0x4, scoped, tag = 'scoped memory for _forward_impl.1']
    #allocation9 [shape = 'u8[16384]{0}', space=vmem, size = 0x4000, scoped, tag = 'input window, operand 15, single buffered']
    #allocation10 [shape = 'u8[16384]{0}', space=vmem, size = 0x4000, scoped, tag = 'output window, operand 0, single buffered']
    #allocation11 [shape = 'u8[8192]{0}', space=vmem, size = 0x2000, scoped, tag = 'output window, operand 1, single buffered']
    #allocation12 [shape = 's32[1]{0}', space=sflag, size = 0x4, scoped, tag = 'scoped memory for _forward_impl.1']
    #allocation13 [shape = 'u8[8192]{0}', space=vmem, size = 0x2000, scoped, tag = 'output window, operand 2, single buffered']
    %25 = vsyncpa [#allocation6], 0
    %26 = vsyncpa [#allocation8], 0
    %27 = vsyncpa [#allocation4], 0
    %28 = vsyncpa [#allocation5], 0
    %29 = vsyncpa [#allocation12], 0
    // Predicated region
    $region2: #{_forward_impl.1} parent=1 // pred_check
      _
    $region3: #{_forward_impl.1} parent=1 // pred_check_branch
      %31 = sbr.rel (0) target = $region5
    $region4: #{_forward_impl.1} parent=1 // pred_region
      _
    $region5: #{_forward_impl.1} parent=1 // pred_fallthru
      _
    // Predicated region
    $region6: #{_forward_impl.1} parent=1 // pred_check
      _
    $region7: #{_forward_impl.1} parent=1 // pred_check_branch
      %33 = sbr.rel (0) target = $region9
    $region8: #{_forward_impl.1} parent=1 // pred_region
      _
    $region9: #{_forward_impl.1} parent=1 // pred_fallthru
      _
    // Predicated region
    $region10: #{_forward_impl.1} parent=1 // pred_check
      _
    $region11: #{_forward_impl.1} parent=1 // pred_check_branch
      %35 = sbr.rel (0) target = $region13
    $region12: #{_forward_impl.1} parent=1 // pred_region
      _
    $region13: #{_forward_impl.1} parent=1 // pred_fallthru
      _
    // Predicated region
    $region14: #{_forward_impl.1} parent=1 // pred_check
      _
    $region15: #{_forward_impl.1} parent=1 // pred_check_branch
      %37 = sbr.rel (0) target = $region17
    $region16: #{_forward_impl.1} parent=1 // pred_region
      %39 = vsyncadd [#allocation6], 0
      %s41 = sshll.u32 %s3, 4
      %s42 = int_to_ptr.vmem [resolvable:$true] %s41
      %44 = dma.vmem_to_smem %s42, 16, [#allocation3], [#allocation6]
    $region17: #{_forward_impl.1} parent=1 // pred_fallthru
      _
    // Predicated region
    $region18: #{_forward_impl.1} parent=1 // pred_check
      _
    $region19: #{_forward_impl.1} parent=1 // pred_check_branch
      %46 = sbr.rel (0) target = $region21
    $region20: #{_forward_impl.1} parent=1 // pred_region
      %48 = vsyncadd [#allocation8], 0
      %s50 = sshll.u32 %s4, 4
      %s51 = int_to_ptr.vmem [resolvable:$true] %s50
      %53 = dma.vmem_to_smem %s51, 16, [#allocation7], [#allocation8]
    $region21: #{_forward_impl.1} parent=1 // pred_fallthru
      _
    // Predicated region
    $region22: #{_forward_impl.1} parent=1 // pred_check
      _
    $region23: #{_forward_impl.1} parent=1 // pred_check_branch
      %55 = sbr.rel (0) target = $region25
    $region24: #{_forward_impl.1} parent=1 // pred_region
      _
    $region25: #{_forward_impl.1} parent=1 // pred_fallthru
      _
    // Predicated region
    $region26: #{_forward_impl.1} parent=1 // pred_check
      _
    $region27: #{_forward_impl.1} parent=1 // pred_check_branch
      %57 = sbr.rel (0) target = $region29
    $region28: #{_forward_impl.1} parent=1 // pred_region
      _
    $region29: #{_forward_impl.1} parent=1 // pred_fallthru
      _
    // Predicated region
    $region30: #{_forward_impl.1} parent=1 // pred_check
      _
    $region31: #{_forward_impl.1} parent=1 // pred_check_branch
      %59 = sbr.rel (0) target = $region33
    $region32: #{_forward_impl.1} parent=1 // pred_region
      _
    $region33: #{_forward_impl.1} parent=1 // pred_fallthru
      _
    // Predicated region
    $region34: #{_forward_impl.1} parent=1 // pred_check
      _
    $region35: #{_forward_impl.1} parent=1 // pred_check_branch
      %61 = sbr.rel (0) target = $region37
    $region36: #{_forward_impl.1} parent=1 // pred_region
      _
    $region37: #{_forward_impl.1} parent=1 // pred_fallthru
      _
    // Predicated region
    $region38: #{_forward_impl.1} parent=1 // pred_check
      _
    $region39: #{_forward_impl.1} parent=1 // pred_check_branch
      %63 = sbr.rel (0) target = $region41
    $region40: #{_forward_impl.1} parent=1 // pred_region
      _
    $region41: #{_forward_impl.1} parent=1 // pred_fallthru
      _
    // Predicated region
    $region42: #{_forward_impl.1} parent=1 // pred_check
      _
    $region43: #{_forward_impl.1} parent=1 // pred_check_branch
      %65 = sbr.rel (0) target = $region45
    $region44: #{_forward_impl.1} parent=1 // pred_region
      _
    $region45: #{_forward_impl.1} parent=1 // pred_fallthru
      _
    // Predicated region
    $region46: #{_forward_impl.1} parent=1 // pred_check
      _
    $region47: #{_forward_impl.1} parent=1 // pred_check_branch
      %67 = sbr.rel (0) target = $region49
    $region48: #{_forward_impl.1} parent=1 // pred_region
      _
    $region49: #{_forward_impl.1} parent=1 // pred_fallthru
      _
    // Predicated region
    $region50: #{_forward_impl.1} parent=1 // pred_check
      _
    $region51: #{_forward_impl.1} parent=1 // pred_check_branch
      %69 = sbr.rel (0) target = $region53
    $region52: #{_forward_impl.1} parent=1 // pred_region
      _
    $region53: #{_forward_impl.1} parent=1 // pred_fallthru
      _
    // Predicated region
    $region54: #{_forward_impl.1} parent=1 // pred_check
      _
    $region55: #{_forward_impl.1} parent=1 // pred_check_branch
      %71 = sbr.rel (0) target = $region57
    $region56: #{_forward_impl.1} parent=1 // pred_region
      _
    $region57: #{_forward_impl.1} parent=1 // pred_fallthru
      _
    // Predicated region
    $region58: #{_forward_impl.1} parent=1 // pred_check
      _
    $region59: #{_forward_impl.1} parent=1 // pred_check_branch
      %73 = sbr.rel (0) target = $region61
    $region60: #{_forward_impl.1} parent=1 // pred_region
      _
    $region61: #{_forward_impl.1} parent=1 // pred_fallthru
      _
    // Predicated region
    $region62: #{_forward_impl.1} parent=1 // pred_check
      _
    $region63: #{_forward_impl.1} parent=1 // pred_check_branch
      %75 = sbr.rel (0) target = $region65
    $region64: #{_forward_impl.1} parent=1 // pred_region
      %77 = vsyncadd [#allocation4], 0
      %s78 = sshll.u32 %s15, 4
      %s79 = int_to_ptr.hbm [resolvable:$true] %s78
      %s80 = sshll.u32 [#allocation9], 4
      %s81 = int_to_ptr.vmem [resolvable:$true] %s80
      %86 = dma.hbm_to_vmem [thread:$0]  %s79, 512, %s81, [#allocation4], 128, 128, 8
    $region65: #{_forward_impl.1} parent=1 // pred_fallthru
      _
    // Predicated region
    $region66: #{_forward_impl.1} parent=1 // pred_check
      _
    $region67: #{_forward_impl.1} parent=1 // pred_check_branch
      %88 = sbr.rel (0) target = $region69
    $region68: #{_forward_impl.1} parent=1 // pred_region
      _
    $region69: #{_forward_impl.1} parent=1 // pred_fallthru
      _
    // Predicated region
    $region70: #{_forward_impl.1} parent=1 // pred_check
      _
    $region71: #{_forward_impl.1} parent=1 // pred_check_branch
      %90 = sbr.rel (0) target = $region73
    $region72: #{_forward_impl.1} parent=1 // pred_region
      %92 = dma.done [#allocation6], 16
    $region73: #{_forward_impl.1} parent=1 // pred_fallthru
      _
    // Predicated region
    $region74: #{_forward_impl.1} parent=1 // pred_check
      _
    $region75: #{_forward_impl.1} parent=1 // pred_check_branch
      %94 = sbr.rel (0) target = $region77
    $region76: #{_forward_impl.1} parent=1 // pred_region
      %96 = dma.done [#allocation8], 16
    $region77: #{_forward_impl.1} parent=1 // pred_fallthru
      _
    // Predicated region
    $region78: #{_forward_impl.1} parent=1 // pred_check
      _
    $region79: #{_forward_impl.1} parent=1 // pred_check_branch
      %98 = sbr.rel (0) target = $region81
    $region80: #{_forward_impl.1} parent=1 // pred_region
      %100 = dma.done [#allocation4], 512
    $region81: #{_forward_impl.1} parent=1 // pred_fallthru
      _
    %101 = sfence
    %v102 = vld [vmem:[%s5] sm:$0xf]
    %v103 = vld [vmem:[%s6] sm:$0xff]
    %v104 = vld [vmem:[%s6 + $0x8] sm:$0xff]
    %v105 = vld [vmem:[%s6 + $0x10] sm:$0xff]
    %v106 = vld [vmem:[%s6 + $0x18] sm:$0xff]
    %v107 = vld [vmem:[%s7] sm:$0x1]
    %v108 = vld [vmem:[%s0] sm:$0xff]
    %v109 = vld [vmem:[%s0 + $0x8] sm:$0xff]
    %v110 = vld [vmem:[%s0 + $0x10] sm:$0xff]
    %v111 = vld [vmem:[%s0 + $0x18] sm:$0xff]
    %v112 = vld [vmem:[%s0 + $0x20] sm:$0xff]
    %v113 = vld [vmem:[%s0 + $0x28] sm:$0xff]
    %v114 = vld [vmem:[%s0 + $0x30] sm:$0xff]
    %v115 = vld [vmem:[%s0 + $0x38] sm:$0xff]
    %v117 = vperm.slane %v107, 0
    %vm119 = vcmask 31744
    %v121 = vsel %vm119, %v108, 0
    %v124 = vsel %vm119, %v109, 0
    %v127 = vsel %vm119, %v110, 0
    %v130 = vsel %vm119, %v111, 0
    %v133 = vsel %vm119, %v112, 0
    %v136 = vsel %vm119, %v113, 0
    %v139 = vsel %vm119, %v114, 0
    %v142 = vsel %vm119, %v115, 0
    %vm144 = vcmask 1043456
    %v146 = vsel %vm144, %v102, 0
    %148 = vmatpush.msra.mxu0 0.0
    %149 = vmatpush.msra.mxu0 0.0
    %150 = vmatpush.msra.mxu0 0.0
    %151 = vmatpush.msra.mxu0 0.0
    %152 = vmatpush.msra.mxu0 0.0
    %153 = vmatpush.msra.mxu0 0.0
    %154 = vmatpush.msra.mxu0 0.0
    %155 = vmatpush.msra.mxu0 0.0
    %156 = vmatpush.msra.mxu0 0.0
    %157 = vmatpush.msra.mxu0 0.0
    %158 = vmatpush.msra.mxu0 0.0
    %159 = vmatpush.msra.mxu0 0.0
    %160 = vmatpush.msra.mxu0 0.0
    %161 = vmatpush.msra.mxu0 0.0
    %162 = vmatpush.msra.mxu0 0.0
    %163 = vmatpush.msra.mxu0 %v146
    %164 = vmatmul.f32.gmra.mxu0 %v121
    %v165 = vpop.f32.mrf.mxu0
    %v166 = vadd.f32 %v117, %v165
    %167 = vmatmul.f32.gmra.mxu0 %v124
    %v168 = vpop.f32.mrf.mxu0
    %v169 = vadd.f32 %v117, %v168
    %170 = vmatmul.f32.gmra.mxu0 %v127
    %v171 = vpop.f32.mrf.mxu0
    %v172 = vadd.f32 %v117, %v171
    %173 = vmatmul.f32.gmra.mxu0 %v130
    %v174 = vpop.f32.mrf.mxu0
    %v175 = vadd.f32 %v117, %v174
    %176 = vmatmul.f32.gmra.mxu0 %v133
    %v177 = vpop.f32.mrf.mxu0
    %v178 = vadd.f32 %v117, %v177
    %179 = vmatmul.f32.gmra.mxu0 %v136
    %v180 = vpop.f32.mrf.mxu0
    %v181 = vadd.f32 %v117, %v180
    %182 = vmatmul.f32.gmra.mxu0 %v139
    %v183 = vpop.f32.mrf.mxu0
    %v184 = vadd.f32 %v117, %v183
    %185 = vmatmul.f32.gmra.mxu0 %v142
    %v186 = vpop.f32.mrf.mxu0
    %v187 = vadd.f32 %v117, %v186
    %188 = vdwg.mxu0
    %v189 = vld [vmem:[%s1] sm:$0xff]
    %v190 = vld [vmem:[%s2] sm:$0xff]
    %vm191 = vcmask 261120
    %v193 = vsel %vm191, %v189, 0
    %195 = vmatpush.msra.mxu0 0.0
    %196 = vmatpush.msra.mxu0 0.0
    %197 = vmatpush.msra.mxu0 0.0
    %198 = vmatpush.msra.mxu0 0.0
    %199 = vmatpush.msra.mxu0 0.0
    %200 = vmatpush.msra.mxu0 0.0
    %201 = vmatpush.msra.mxu0 0.0
    %202 = vmatpush.msra.mxu0 0.0
    %203 = vmatpush.msra.mxu0 0.0
    %204 = vmatpush.msra.mxu0 0.0
    %205 = vmatpush.msra.mxu0 0.0
    %206 = vmatpush.msra.mxu0 0.0
    %207 = vmatpush.msra.mxu0 %v106
    %208 = vmatpush.msra.mxu0 %v105
    %209 = vmatpush.msra.mxu0 %v104
    %210 = vmatpush.msra.mxu0 %v103
    %211 = vmatmul.f32.gmra.mxu0 %v193
    %v212 = vpop.f32.mrf.mxu0
    %v213 = vadd.f32 0.0, %v212
    %214 = vdwg.mxu0
    %v216 = vrot.slane %v213, 1
    %v217 = vrot.slane %v213, 2
    %v218 = vrot.slane %v213, 3
    %v219 = vrot.slane %v213, 4
    %v220 = vrot.slane %v213, 5
    %v221 = vrot.slane %v213, 6
    %v222 = vrot.slane %v213, 7
    %v231 = vadd.f32 %v166, %v213
    %v232 = vadd.f32 %v169, %v216
    %v233 = vadd.f32 %v172, %v217
    %v234 = vadd.f32 %v175, %v218
    %v235 = vadd.f32 %v178, %v219
    %v236 = vadd.f32 %v181, %v220
    %v237 = vadd.f32 %v184, %v221
    %v238 = vadd.f32 %v187, %v222
    %v239 = vxor.u32 %v231, 2147483648
    %v240 = vxor.u32 %v232, 2147483648
    %v241 = vxor.u32 %v233, 2147483648
    %v242 = vxor.u32 %v234, 2147483648
    %v243 = vxor.u32 %v235, 2147483648
    %v244 = vxor.u32 %v236, 2147483648
    %v245 = vxor.u32 %v237, 2147483648
    %v246 = vxor.u32 %v238, 2147483648
    %v247 = vmul.f32 %v239, 1.442695
    %v248 = vpow.pop %v247
    %v249 = vmul.f32 %v240, 1.442695
    %v250 = vpow.pop %v249
    %v251 = vmul.f32 %v241, 1.442695
    %v252 = vpow.pop %v251
    %v253 = vmul.f32 %v242, 1.442695
    %v254 = vpow.pop %v253
    %v255 = vmul.f32 %v243, 1.442695
    %v256 = vpow.pop %v255
    %v257 = vmul.f32 %v244, 1.442695
    %v258 = vpow.pop %v257
    %v259 = vmul.f32 %v245, 1.442695
    %v260 = vpow.pop %v259
    %v261 = vmul.f32 %v246, 1.442695
    %v262 = vpow.pop %v261
    %v263 = vadd.f32 %v248, 1.0
    %v264 = vadd.f32 %v250, 1.0
    %v265 = vadd.f32 %v252, 1.0
    %v266 = vadd.f32 %v254, 1.0
    %v267 = vadd.f32 %v256, 1.0
    %v268 = vadd.f32 %v258, 1.0
    %v269 = vadd.f32 %v260, 1.0
    %v270 = vadd.f32 %v262, 1.0
    %v271 = vrcp.pop %v263
    %v272 = vmul.f32 %v263, %v271
    %v273 = vsub.f32 1.0, %v272
    %v274 = vmul.f32 %v271, %v273
    %v275 = vadd.f32 %v271, %v274
    %vm276 = vweird.f32 %v263
    %vm277 = vweird.f32 %v271
    %vm278 = vmor %vm276, %vm277
    %v279 = vsel %vm278, %v271, %v275
    %v280 = vand.u32 2147483647, %v263
    %vm281 = vcmp.eq.f32.partialorder %v280, 8.507059e+37
    %v282 = vand.u32 %v263, 2147483648
    %v283 = vor.u32 1.1754944e-38, %v282
    %v284 = vsel %vm281, %v283, %v279
    %v285 = vmul.f32 1.0, %v284
    %v286 = vrcp.pop %v264
    %v287 = vmul.f32 %v264, %v286
    %v288 = vsub.f32 1.0, %v287
    %v289 = vmul.f32 %v286, %v288
    %v290 = vadd.f32 %v286, %v289
    %vm291 = vweird.f32 %v264
    %vm292 = vweird.f32 %v286
    %vm293 = vmor %vm291, %vm292
    %v294 = vsel %vm293, %v286, %v290
    %v295 = vand.u32 2147483647, %v264
    %vm296 = vcmp.eq.f32.partialorder %v295, 8.507059e+37
    %v297 = vand.u32 %v264, 2147483648
    %v298 = vor.u32 1.1754944e-38, %v297
    %v299 = vsel %vm296, %v298, %v294
    %v300 = vmul.f32 1.0, %v299
    %v301 = vrcp.pop %v265
    %v302 = vmul.f32 %v265, %v301
    %v303 = vsub.f32 1.0, %v302
    %v304 = vmul.f32 %v301, %v303
    %v305 = vadd.f32 %v301, %v304
    %vm306 = vweird.f32 %v265
    %vm307 = vweird.f32 %v301
    %vm308 = vmor %vm306, %vm307
    %v309 = vsel %vm308, %v301, %v305
    %v310 = vand.u32 2147483647, %v265
    %vm311 = vcmp.eq.f32.partialorder %v310, 8.507059e+37
    %v312 = vand.u32 %v265, 2147483648
    %v313 = vor.u32 1.1754944e-38, %v312
    %v314 = vsel %vm311, %v313, %v309
    %v315 = vmul.f32 1.0, %v314
    %v316 = vrcp.pop %v266
    %v317 = vmul.f32 %v266, %v316
    %v318 = vsub.f32 1.0, %v317
    %v319 = vmul.f32 %v316, %v318
    %v320 = vadd.f32 %v316, %v319
    %vm321 = vweird.f32 %v266
    %vm322 = vweird.f32 %v316
    %vm323 = vmor %vm321, %vm322
    %v324 = vsel %vm323, %v316, %v320
    %v325 = vand.u32 2147483647, %v266
    %vm326 = vcmp.eq.f32.partialorder %v325, 8.507059e+37
    %v327 = vand.u32 %v266, 2147483648
    %v328 = vor.u32 1.1754944e-38, %v327
    %v329 = vsel %vm326, %v328, %v324
    %v330 = vmul.f32 1.0, %v329
    %v331 = vrcp.pop %v267
    %v332 = vmul.f32 %v267, %v331
    %v333 = vsub.f32 1.0, %v332
    %v334 = vmul.f32 %v331, %v333
    %v335 = vadd.f32 %v331, %v334
    %vm336 = vweird.f32 %v267
    %vm337 = vweird.f32 %v331
    %vm338 = vmor %vm336, %vm337
    %v339 = vsel %vm338, %v331, %v335
    %v340 = vand.u32 2147483647, %v267
    %vm341 = vcmp.eq.f32.partialorder %v340, 8.507059e+37
    %v342 = vand.u32 %v267, 2147483648
    %v343 = vor.u32 1.1754944e-38, %v342
    %v344 = vsel %vm341, %v343, %v339
    %v345 = vmul.f32 1.0, %v344
    %v346 = vrcp.pop %v268
    %v347 = vmul.f32 %v268, %v346
    %v348 = vsub.f32 1.0, %v347
    %v349 = vmul.f32 %v346, %v348
    %v350 = vadd.f32 %v346, %v349
    %vm351 = vweird.f32 %v268
    %vm352 = vweird.f32 %v346
    %vm353 = vmor %vm351, %vm352
    %v354 = vsel %vm353, %v346, %v350
    %v355 = vand.u32 2147483647, %v268
    %vm356 = vcmp.eq.f32.partialorder %v355, 8.507059e+37
    %v357 = vand.u32 %v268, 2147483648
    %v358 = vor.u32 1.1754944e-38, %v357
    %v359 = vsel %vm356, %v358, %v354
    %v360 = vmul.f32 1.0, %v359
    %v361 = vrcp.pop %v269
    %v362 = vmul.f32 %v269, %v361
    %v363 = vsub.f32 1.0, %v362
    %v364 = vmul.f32 %v361, %v363
    %v365 = vadd.f32 %v361, %v364
    %vm366 = vweird.f32 %v269
    %vm367 = vweird.f32 %v361
    %vm368 = vmor %vm366, %vm367
    %v369 = vsel %vm368, %v361, %v365
    %v370 = vand.u32 2147483647, %v269
    %vm371 = vcmp.eq.f32.partialorder %v370, 8.507059e+37
    %v372 = vand.u32 %v269, 2147483648
    %v373 = vor.u32 1.1754944e-38, %v372
    %v374 = vsel %vm371, %v373, %v369
    %v375 = vmul.f32 1.0, %v374
    %v376 = vrcp.pop %v270
    %v377 = vmul.f32 %v270, %v376
    %v378 = vsub.f32 1.0, %v377
    %v379 = vmul.f32 %v376, %v378
    %v380 = vadd.f32 %v376, %v379
    %vm381 = vweird.f32 %v270
    %vm382 = vweird.f32 %v376
    %vm383 = vmor %vm381, %vm382
    %v384 = vsel %vm383, %v376, %v380
    %v385 = vand.u32 2147483647, %v270
    %vm386 = vcmp.eq.f32.partialorder %v385, 8.507059e+37
    %v387 = vand.u32 %v270, 2147483648
    %v388 = vor.u32 1.1754944e-38, %v387
    %v389 = vsel %vm386, %v388, %v384
    %v390 = vmul.f32 1.0, %v389
    %v391 = vtanh.pop %v231
    %v392 = vtanh.pop %v232
    %v393 = vtanh.pop %v233
    %v394 = vtanh.pop %v234
    %v395 = vtanh.pop %v235
    %v396 = vtanh.pop %v236
    %v397 = vtanh.pop %v237
    %v398 = vtanh.pop %v238
    %v400 = vrot.slane %v190, 1
    %v401 = vrot.slane %v190, 2
    %v402 = vrot.slane %v190, 3
    %v403 = vrot.slane %v190, 4
    %v404 = vrot.slane %v190, 5
    %v405 = vrot.slane %v190, 6
    %v406 = vrot.slane %v190, 7
    %407 = vrot.lane.b32.xlu0 %v190, 32
    %v408 = vpop.permute.xlu0 %407
    %409 = vrot.lane.b32.xlu0 %v400, 32
    %v410 = vpop.permute.xlu0 %409
    %411 = vrot.lane.b32.xlu0 %v401, 32
    %v412 = vpop.permute.xlu0 %411
    %413 = vrot.lane.b32.xlu0 %v402, 32
    %v414 = vpop.permute.xlu0 %413
    %415 = vrot.lane.b32.xlu0 %v403, 32
    %v416 = vpop.permute.xlu0 %415
    %417 = vrot.lane.b32.xlu0 %v404, 32
    %v418 = vpop.permute.xlu0 %417
    %419 = vrot.lane.b32.xlu0 %v405, 32
    %v420 = vpop.permute.xlu0 %419
    %421 = vrot.lane.b32.xlu0 %v406, 32
    %v422 = vpop.permute.xlu0 %421
    %v431 = vmul.f32 %v285, %v408
    %v432 = vmul.f32 %v300, %v410
    %v433 = vmul.f32 %v315, %v412
    %v434 = vmul.f32 %v330, %v414
    %v435 = vmul.f32 %v345, %v416
    %v436 = vmul.f32 %v360, %v418
    %v437 = vmul.f32 %v375, %v420
    %v438 = vmul.f32 %v390, %v422
    %447 = vrot.lane.b32.xlu0 %v391, 64
    %v448 = vpop.permute.xlu0 %447
    %449 = vrot.lane.b32.xlu0 %v392, 64
    %v450 = vpop.permute.xlu0 %449
    %451 = vrot.lane.b32.xlu0 %v393, 64
    %v452 = vpop.permute.xlu0 %451
    %453 = vrot.lane.b32.xlu0 %v394, 64
    %v454 = vpop.permute.xlu0 %453
    %455 = vrot.lane.b32.xlu0 %v395, 64
    %v456 = vpop.permute.xlu0 %455
    %457 = vrot.lane.b32.xlu0 %v396, 64
    %v458 = vpop.permute.xlu0 %457
    %459 = vrot.lane.b32.xlu0 %v397, 64
    %v460 = vpop.permute.xlu0 %459
    %461 = vrot.lane.b32.xlu0 %v398, 64
    %v462 = vpop.permute.xlu0 %461
    %v471 = vmul.f32 %v285, %v448
    %v472 = vmul.f32 %v300, %v450
    %v473 = vmul.f32 %v315, %v452
    %v474 = vmul.f32 %v330, %v454
    %v475 = vmul.f32 %v345, %v456
    %v476 = vmul.f32 %v360, %v458
    %v477 = vmul.f32 %v375, %v460
    %v478 = vmul.f32 %v390, %v462
    %487 = vrot.lane.b32.xlu0 %v471, 32
    %v488 = vpop.permute.xlu0 %487
    %489 = vrot.lane.b32.xlu0 %v472, 32
    %v490 = vpop.permute.xlu0 %489
    %491 = vrot.lane.b32.xlu0 %v473, 32
    %v492 = vpop.permute.xlu0 %491
    %493 = vrot.lane.b32.xlu0 %v474, 32
    %v494 = vpop.permute.xlu0 %493
    %495 = vrot.lane.b32.xlu0 %v475, 32
    %v496 = vpop.permute.xlu0 %495
    %497 = vrot.lane.b32.xlu0 %v476, 32
    %v498 = vpop.permute.xlu0 %497
    %499 = vrot.lane.b32.xlu0 %v477, 32
    %v500 = vpop.permute.xlu0 %499
    %501 = vrot.lane.b32.xlu0 %v478, 32
    %v502 = vpop.permute.xlu0 %501
    %v511 = vadd.f32 %v431, %v488
    %v512 = vadd.f32 %v432, %v490
    %v513 = vadd.f32 %v433, %v492
    %v514 = vadd.f32 %v434, %v494
    %v515 = vadd.f32 %v435, %v496
    %v516 = vadd.f32 %v436, %v498
    %v517 = vadd.f32 %v437, %v500
    %v518 = vadd.f32 %v438, %v502
    %v519 = vtanh.pop %v511
    %v520 = vtanh.pop %v512
    %v521 = vtanh.pop %v513
    %v522 = vtanh.pop %v514
    %v523 = vtanh.pop %v515
    %v524 = vtanh.pop %v516
    %v525 = vtanh.pop %v517
    %v526 = vtanh.pop %v518
    %535 = vrot.lane.b32.xlu0 %v519, 64
    %v536 = vpop.permute.xlu0 %535
    %537 = vrot.lane.b32.xlu0 %v520, 64
    %v538 = vpop.permute.xlu0 %537
    %539 = vrot.lane.b32.xlu0 %v521, 64
    %v540 = vpop.permute.xlu0 %539
    %541 = vrot.lane.b32.xlu0 %v522, 64
    %v542 = vpop.permute.xlu0 %541
    %543 = vrot.lane.b32.xlu0 %v523, 64
    %v544 = vpop.permute.xlu0 %543
    %545 = vrot.lane.b32.xlu0 %v524, 64
    %v546 = vpop.permute.xlu0 %545
    %547 = vrot.lane.b32.xlu0 %v525, 64
    %v548 = vpop.permute.xlu0 %547
    %549 = vrot.lane.b32.xlu0 %v526, 64
    %v550 = vpop.permute.xlu0 %549
    %v559 = vmul.f32 %v285, %v536
    %v560 = vmul.f32 %v300, %v538
    %v561 = vmul.f32 %v315, %v540
    %v562 = vmul.f32 %v330, %v542
    %v563 = vmul.f32 %v345, %v544
    %v564 = vmul.f32 %v360, %v546
    %v565 = vmul.f32 %v375, %v548
    %v566 = vmul.f32 %v390, %v550
    %v575 = vrot.slane %v560, 7
    %vm576 = vcmask 1041409
    %v577 = vsel %vm576, %v575, %v559
    %v578 = vrot.slane %v561, 6
    %vm579 = vcmask 1042434
    %v580 = vsel %vm579, %v578, %v577
    %v581 = vrot.slane %v562, 5
    %vm582 = vcmask 1043459
    %v583 = vsel %vm582, %v581, %v580
    %v584 = vrot.slane %v563, 4
    %vm585 = vcmask 1044484
    %v586 = vsel %vm585, %v584, %v583
    %v587 = vrot.slane %v564, 3
    %vm588 = vcmask 1045509
    %v589 = vsel %vm588, %v587, %v586
    %v590 = vrot.slane %v565, 2
    %vm591 = vcmask 1046534
    %v592 = vsel %vm591, %v590, %v589
    %v593 = vrot.slane %v566, 1
    %vm594 = vcmask 1047559
    %v595 = vsel %vm594, %v593, %v592
    %596 = vrot.lane.b32.xlu0 %v595, 32
    %v597 = vpop.permute.xlu0 %596
    %599 = vst.msk [vmem:[#allocation2] sm:$0xff] %vm191, %v597
    %v600 = vsel %vm191, %v597, 0
    %602 = vmatpush.msra.mxu0 0.0
    %603 = vmatpush.msra.mxu0 0.0
    %604 = vmatpush.msra.mxu0 0.0
    %605 = vmatpush.msra.mxu0 0.0
    %606 = vmatpush.msra.mxu0 0.0
    %607 = vmatpush.msra.mxu0 0.0
    %608 = vmatpush.msra.mxu0 0.0
    %609 = vmatpush.msra.mxu0 0.0
    %610 = vmatpush.msra.mxu0 0.0
    %611 = vmatpush.msra.mxu0 0.0
    %612 = vmatpush.msra.mxu0 0.0
    %613 = vmatpush.msra.mxu0 0.0
    %614 = vmatpush.msra.mxu0 %v106
    %615 = vmatpush.msra.mxu0 %v105
    %616 = vmatpush.msra.mxu0 %v104
    %617 = vmatpush.msra.mxu0 %v103
    %618 = vmatmul.f32.gmra.mxu0 %v600
    %v619 = vpop.f32.mrf.mxu0
    %v620 = vadd.f32 0.0, %v619
    %621 = vdwg.mxu0
    %v623 = vrot.slane %v620, 7
    %v624 = vrot.slane %v620, 1
    %v625 = vrot.slane %v620, 2
    %v626 = vrot.slane %v620, 3
    %v627 = vrot.slane %v620, 4
    %v628 = vrot.slane %v620, 5
    %v629 = vrot.slane %v620, 6
    %v638 = vadd.f32 %v166, %v623
    %v639 = vadd.f32 %v169, %v620
    %v640 = vadd.f32 %v172, %v624
    %v641 = vadd.f32 %v175, %v625
    %v642 = vadd.f32 %v178, %v626
    %v643 = vadd.f32 %v181, %v627
    %v644 = vadd.f32 %v184, %v628
    %v645 = vadd.f32 %v187, %v629
    %v646 = vxor.u32 %v638, 2147483648
    %v647 = vxor.u32 %v639, 2147483648
    %v648 = vxor.u32 %v640, 2147483648
    %v649 = vxor.u32 %v641, 2147483648
    %v650 = vxor.u32 %v642, 2147483648
    %v651 = vxor.u32 %v643, 2147483648
    %v652 = vxor.u32 %v644, 2147483648
    %v653 = vxor.u32 %v645, 2147483648
    %v654 = vmul.f32 %v646, 1.442695
    %v655 = vpow.pop %v654
    %v656 = vmul.f32 %v647, 1.442695
    %v657 = vpow.pop %v656
    %v658 = vmul.f32 %v648, 1.442695
    %v659 = vpow.pop %v658
    %v660 = vmul.f32 %v649, 1.442695
    %v661 = vpow.pop %v660
    %v662 = vmul.f32 %v650, 1.442695
    %v663 = vpow.pop %v662
    %v664 = vmul.f32 %v651, 1.442695
    %v665 = vpow.pop %v664
    %v666 = vmul.f32 %v652, 1.442695
    %v667 = vpow.pop %v666
    %v668 = vmul.f32 %v653, 1.442695
    %v669 = vpow.pop %v668
    %v670 = vadd.f32 %v655, 1.0
    %v671 = vadd.f32 %v657, 1.0
    %v672 = vadd.f32 %v659, 1.0
    %v673 = vadd.f32 %v661, 1.0
    %v674 = vadd.f32 %v663, 1.0
    %v675 = vadd.f32 %v665, 1.0
    %v676 = vadd.f32 %v667, 1.0
    %v677 = vadd.f32 %v669, 1.0
    %v678 = vrcp.pop %v670
    %v679 = vmul.f32 %v670, %v678
    %v680 = vsub.f32 1.0, %v679
    %v681 = vmul.f32 %v678, %v680
    %v682 = vadd.f32 %v678, %v681
    %vm683 = vweird.f32 %v670
    %vm684 = vweird.f32 %v678
    %vm685 = vmor %vm683, %vm684
    %v686 = vsel %vm685, %v678, %v682
    %v687 = vand.u32 2147483647, %v670
    %vm688 = vcmp.eq.f32.partialorder %v687, 8.507059e+37
    %v689 = vand.u32 %v670, 2147483648
    %v690 = vor.u32 1.1754944e-38, %v689
    %v691 = vsel %vm688, %v690, %v686
    %v692 = vmul.f32 1.0, %v691
    %v693 = vrcp.pop %v671
    %v694 = vmul.f32 %v671, %v693
    %v695 = vsub.f32 1.0, %v694
    %v696 = vmul.f32 %v693, %v695
    %v697 = vadd.f32 %v693, %v696
    %vm698 = vweird.f32 %v671
    %vm699 = vweird.f32 %v693
    %vm700 = vmor %vm698, %vm699
    %v701 = vsel %vm700, %v693, %v697
    %v702 = vand.u32 2147483647, %v671
    %vm703 = vcmp.eq.f32.partialorder %v702, 8.507059e+37
    %v704 = vand.u32 %v671, 2147483648
    %v705 = vor.u32 1.1754944e-38, %v704
    %v706 = vsel %vm703, %v705, %v701
    %v707 = vmul.f32 1.0, %v706
    %v708 = vrcp.pop %v672
    %v709 = vmul.f32 %v672, %v708
    %v710 = vsub.f32 1.0, %v709
    %v711 = vmul.f32 %v708, %v710
    %v712 = vadd.f32 %v708, %v711
    %vm713 = vweird.f32 %v672
    %vm714 = vweird.f32 %v708
    %vm715 = vmor %vm713, %vm714
    %v716 = vsel %vm715, %v708, %v712
    %v717 = vand.u32 2147483647, %v672
    %vm718 = vcmp.eq.f32.partialorder %v717, 8.507059e+37
    %v719 = vand.u32 %v672, 2147483648
    %v720 = vor.u32 1.1754944e-38, %v719
    %v721 = vsel %vm718, %v720, %v716
    %v722 = vmul.f32 1.0, %v721
    %v723 = vrcp.pop %v673
    %v724 = vmul.f32 %v673, %v723
    %v725 = vsub.f32 1.0, %v724
    %v726 = vmul.f32 %v723, %v725
    %v727 = vadd.f32 %v723, %v726
    %vm728 = vweird.f32 %v673
    %vm729 = vweird.f32 %v723
    %vm730 = vmor %vm728, %vm729
    %v731 = vsel %vm730, %v723, %v727
    %v732 = vand.u32 2147483647, %v673
    %vm733 = vcmp.eq.f32.partialorder %v732, 8.507059e+37
    %v734 = vand.u32 %v673, 2147483648
    %v735 = vor.u32 1.1754944e-38, %v734
    %v736 = vsel %vm733, %v735, %v731
    %v737 = vmul.f32 1.0, %v736
    %v738 = vrcp.pop %v674
    %v739 = vmul.f32 %v674, %v738
    %v740 = vsub.f32 1.0, %v739
    %v741 = vmul.f32 %v738, %v740
    %v742 = vadd.f32 %v738, %v741
    %vm743 = vweird.f32 %v674
    %vm744 = vweird.f32 %v738
    %vm745 = vmor %vm743, %vm744
    %v746 = vsel %vm745, %v738, %v742
    %v747 = vand.u32 2147483647, %v674
    %vm748 = vcmp.eq.f32.partialorder %v747, 8.507059e+37
    %v749 = vand.u32 %v674, 2147483648
    %v750 = vor.u32 1.1754944e-38, %v749
    %v751 = vsel %vm748, %v750, %v746
    %v752 = vmul.f32 1.0, %v751
    %v753 = vrcp.pop %v675
    %v754 = vmul.f32 %v675, %v753
    %v755 = vsub.f32 1.0, %v754
    %v756 = vmul.f32 %v753, %v755
    %v757 = vadd.f32 %v753, %v756
    %vm758 = vweird.f32 %v675
    %vm759 = vweird.f32 %v753
    %vm760 = vmor %vm758, %vm759
    %v761 = vsel %vm760, %v753, %v757
    %v762 = vand.u32 2147483647, %v675
    %vm763 = vcmp.eq.f32.partialorder %v762, 8.507059e+37
    %v764 = vand.u32 %v675, 2147483648
    %v765 = vor.u32 1.1754944e-38, %v764
    %v766 = vsel %vm763, %v765, %v761
    %v767 = vmul.f32 1.0, %v766
    %v768 = vrcp.pop %v676
    %v769 = vmul.f32 %v676, %v768
    %v770 = vsub.f32 1.0, %v769
    %v771 = vmul.f32 %v768, %v770
    %v772 = vadd.f32 %v768, %v771
    %vm773 = vweird.f32 %v676
    %vm774 = vweird.f32 %v768
    %vm775 = vmor %vm773, %vm774
    %v776 = vsel %vm775, %v768, %v772
    %v777 = vand.u32 2147483647, %v676
    %vm778 = vcmp.eq.f32.partialorder %v777, 8.507059e+37
    %v779 = vand.u32 %v676, 2147483648
    %v780 = vor.u32 1.1754944e-38, %v779
    %v781 = vsel %vm778, %v780, %v776
    %v782 = vmul.f32 1.0, %v781
    %v783 = vrcp.pop %v677
    %v784 = vmul.f32 %v677, %v783
    %v785 = vsub.f32 1.0, %v784
    %v786 = vmul.f32 %v783, %v785
    %v787 = vadd.f32 %v783, %v786
    %vm788 = vweird.f32 %v677
    %vm789 = vweird.f32 %v783
    %vm790 = vmor %vm788, %vm789
    %v791 = vsel %vm790, %v783, %v787
    %v792 = vand.u32 2147483647, %v677
    %vm793 = vcmp.eq.f32.partialorder %v792, 8.507059e+37
    %v794 = vand.u32 %v677, 2147483648
    %v795 = vor.u32 1.1754944e-38, %v794
    %v796 = vsel %vm793, %v795, %v791
    %v797 = vmul.f32 1.0, %v796
    %v798 = vtanh.pop %v638
    %v799 = vtanh.pop %v639
    %v800 = vtanh.pop %v640
    %v801 = vtanh.pop %v641
    %v802 = vtanh.pop %v642
    %v803 = vtanh.pop %v643
    %v804 = vtanh.pop %v644
    %v805 = vtanh.pop %v645
    %v814 = vrot.slane %v511, 7
    %v815 = vrot.slane %v512, 7
    %v816 = vrot.slane %v513, 7
    %v817 = vrot.slane %v514, 7
    %v818 = vrot.slane %v515, 7
    %v819 = vrot.slane %v516, 7
    %v820 = vrot.slane %v517, 7
    %v821 = vrot.slane %v518, 7
    %v830 = vmul.f32 %v692, %v814
    %v831 = vmul.f32 %v707, %v815
    %v832 = vmul.f32 %v722, %v816
    %v833 = vmul.f32 %v737, %v817
    %v834 = vmul.f32 %v752, %v818
    %v835 = vmul.f32 %v767, %v819
    %v836 = vmul.f32 %v782, %v820
    %v837 = vmul.f32 %v797, %v821
    %846 = vrot.lane.b32.xlu0 %v798, 64
    %v847 = vpop.permute.xlu0 %846
    %848 = vrot.lane.b32.xlu0 %v799, 64
    %v849 = vpop.permute.xlu0 %848
    %850 = vrot.lane.b32.xlu0 %v800, 64
    %v851 = vpop.permute.xlu0 %850
    %852 = vrot.lane.b32.xlu0 %v801, 64
    %v853 = vpop.permute.xlu0 %852
    %854 = vrot.lane.b32.xlu0 %v802, 64
    %v855 = vpop.permute.xlu0 %854
    %856 = vrot.lane.b32.xlu0 %v803, 64
    %v857 = vpop.permute.xlu0 %856
    %858 = vrot.lane.b32.xlu0 %v804, 64
    %v859 = vpop.permute.xlu0 %858
    %860 = vrot.lane.b32.xlu0 %v805, 64
    %v861 = vpop.permute.xlu0 %860
    %v870 = vmul.f32 %v692, %v847
    %v871 = vmul.f32 %v707, %v849
    %v872 = vmul.f32 %v722, %v851
    %v873 = vmul.f32 %v737, %v853
    %v874 = vmul.f32 %v752, %v855
    %v875 = vmul.f32 %v767, %v857
    %v876 = vmul.f32 %v782, %v859
    %v877 = vmul.f32 %v797, %v861
    %886 = vrot.lane.b32.xlu0 %v870, 32
    %v887 = vpop.permute.xlu0 %886
    %888 = vrot.lane.b32.xlu0 %v871, 32
    %v889 = vpop.permute.xlu0 %888
    %890 = vrot.lane.b32.xlu0 %v872, 32
    %v891 = vpop.permute.xlu0 %890
    %892 = vrot.lane.b32.xlu0 %v873, 32
    %v893 = vpop.permute.xlu0 %892
    %894 = vrot.lane.b32.xlu0 %v874, 32
    %v895 = vpop.permute.xlu0 %894
    %896 = vrot.lane.b32.xlu0 %v875, 32
    %v897 = vpop.permute.xlu0 %896
    %898 = vrot.lane.b32.xlu0 %v876, 32
    %v899 = vpop.permute.xlu0 %898
    %900 = vrot.lane.b32.xlu0 %v877, 32
    %v901 = vpop.permute.xlu0 %900
    %v910 = vadd.f32 %v830, %v887
    %v911 = vadd.f32 %v831, %v889
    %v912 = vadd.f32 %v832, %v891
    %v913 = vadd.f32 %v833, %v893
    %v914 = vadd.f32 %v834, %v895
    %v915 = vadd.f32 %v835, %v897
    %v916 = vadd.f32 %v836, %v899
    %v917 = vadd.f32 %v837, %v901
    %v918 = vtanh.pop %v910
    %v919 = vtanh.pop %v911
    %v920 = vtanh.pop %v912
    %v921 = vtanh.pop %v913
    %v922 = vtanh.pop %v914
    %v923 = vtanh.pop %v915
    %v924 = vtanh.pop %v916
    %v925 = vtanh.pop %v917
    %934 = vrot.lane.b32.xlu0 %v918, 64
    %v935 = vpop.permute.xlu0 %934
    %936 = vrot.lane.b32.xlu0 %v919, 64
    %v937 = vpop.permute.xlu0 %936
    %938 = vrot.lane.b32.xlu0 %v920, 64
    %v939 = vpop.permute.xlu0 %938
    %940 = vrot.lane.b32.xlu0 %v921, 64
    %v941 = vpop.permute.xlu0 %940
    %942 = vrot.lane.b32.xlu0 %v922, 64
    %v943 = vpop.permute.xlu0 %942
    %944 = vrot.lane.b32.xlu0 %v923, 64
    %v945 = vpop.permute.xlu0 %944
    %946 = vrot.lane.b32.xlu0 %v924, 64
    %v947 = vpop.permute.xlu0 %946
    %948 = vrot.lane.b32.xlu0 %v925, 64
    %v949 = vpop.permute.xlu0 %948
    %v958 = vmul.f32 %v692, %v935
    %v959 = vmul.f32 %v707, %v937
    %v960 = vmul.f32 %v722, %v939
    %v961 = vmul.f32 %v737, %v941
    %v962 = vmul.f32 %v752, %v943
    %v963 = vmul.f32 %v767, %v945
    %v964 = vmul.f32 %v782, %v947
    %v965 = vmul.f32 %v797, %v949
    %v974 = vrot.slane %v959, 7
    %v975 = vsel %vm579, %v974, %v958
    %v976 = vrot.slane %v960, 6
    %v977 = vsel %vm582, %v976, %v975
    %v978 = vrot.slane %v961, 5
    %v979 = vsel %vm585, %v978, %v977
    %v980 = vrot.slane %v962, 4
    %v981 = vsel %vm588, %v980, %v979
    %v982 = vrot.slane %v963, 3
    %v983 = vsel %vm591, %v982, %v981
    %v984 = vrot.slane %v964, 2
    %v985 = vsel %vm594, %v984, %v983
    %v986 = vrot.slane %v965, 1
    %987 = vrot.lane.b32.xlu0 %v985, 32
    %v988 = vpop.permute.xlu0 %987
    %989 = vrot.lane.b32.xlu0 %v986, 32
    %v990 = vpop.permute.xlu0 %989
    %s993 = scalar_lea.vmem [#allocation2], 8
    %vm994 = vcmask 261121
    %995 = vst.msk [vmem:[%s993 - $0x1] sm:$0xfe] %vm994, %v988
    %vm996 = vcmask 253952
    %997 = vst.msk [vmem:[%s993 + $0x7] sm:$0x1] %vm996, %v990
    %v998 = vrot.slane %v958, 1
    %v999 = vsel %vm576, %v959, %v998
    %v1000 = vrot.slane %v960, 7
    %v1001 = vsel %vm579, %v1000, %v999
    %v1002 = vrot.slane %v961, 6
    %v1003 = vsel %vm582, %v1002, %v1001
    %v1004 = vrot.slane %v962, 5
    %v1005 = vsel %vm585, %v1004, %v1003
    %v1006 = vrot.slane %v963, 4
    %v1007 = vsel %vm588, %v1006, %v1005
    %v1008 = vrot.slane %v964, 3
    %v1009 = vsel %vm591, %v1008, %v1007
    %v1010 = vrot.slane %v965, 2
    %v1011 = vsel %vm594, %v1010, %v1009
    %1012 = vrot.lane.b32.xlu0 %v1011, 32
    %v1013 = vpop.permute.xlu0 %1012
    %v1014 = vsel %vm191, %v1013, 0
    %1016 = vmatpush.msra.mxu0 0.0
    %1017 = vmatpush.msra.mxu0 0.0
    %1018 = vmatpush.msra.mxu0 0.0
    %1019 = vmatpush.msra.mxu0 0.0
    %1020 = vmatpush.msra.mxu0 0.0
    %1021 = vmatpush.msra.mxu0 0.0
    %1022 = vmatpush.msra.mxu0 0.0
    %1023 = vmatpush.msra.mxu0 0.0
    %1024 = vmatpush.msra.mxu0 0.0
    %1025 = vmatpush.msra.mxu0 0.0
    %1026 = vmatpush.msra.mxu0 0.0
    %1027 = vmatpush.msra.mxu0 0.0
    %1028 = vmatpush.msra.mxu0 %v106
    %1029 = vmatpush.msra.mxu0 %v105
    %1030 = vmatpush.msra.mxu0 %v104
    %1031 = vmatpush.msra.mxu0 %v103
    %1032 = vmatmul.f32.gmra.mxu0 %v1014
    %v1033 = vpop.f32.mrf.mxu0
    %v1034 = vadd.f32 0.0, %v1033
    %1035 = vdwg.mxu0
    %v1037 = vrot.slane %v1034, 6
    %v1038 = vrot.slane %v1034, 7
    %v1039 = vrot.slane %v1034, 1
    %v1040 = vrot.slane %v1034, 2
    %v1041 = vrot.slane %v1034, 3
    %v1042 = vrot.slane %v1034, 4
    %v1043 = vrot.slane %v1034, 5
    %v1052 = vadd.f32 %v166, %v1037
    %v1053 = vadd.f32 %v169, %v1038
    %v1054 = vadd.f32 %v172, %v1034
    %v1055 = vadd.f32 %v175, %v1039
    %v1056 = vadd.f32 %v178, %v1040
    %v1057 = vadd.f32 %v181, %v1041
    %v1058 = vadd.f32 %v184, %v1042
    %v1059 = vadd.f32 %v187, %v1043
    %v1060 = vxor.u32 %v1052, 2147483648
    %v1061 = vxor.u32 %v1053, 2147483648
    %v1062 = vxor.u32 %v1054, 2147483648
    %v1063 = vxor.u32 %v1055, 2147483648
    %v1064 = vxor.u32 %v1056, 2147483648
    %v1065 = vxor.u32 %v1057, 2147483648
    %v1066 = vxor.u32 %v1058, 2147483648
    %v1067 = vxor.u32 %v1059, 2147483648
    %v1068 = vmul.f32 %v1060, 1.442695
    %v1069 = vpow.pop %v1068
    %v1070 = vmul.f32 %v1061, 1.442695
    %v1071 = vpow.pop %v1070
    %v1072 = vmul.f32 %v1062, 1.442695
    %v1073 = vpow.pop %v1072
    %v1074 = vmul.f32 %v1063, 1.442695
    %v1075 = vpow.pop %v1074
    %v1076 = vmul.f32 %v1064, 1.442695
    %v1077 = vpow.pop %v1076
    %v1078 = vmul.f32 %v1065, 1.442695
    %v1079 = vpow.pop %v1078
    %v1080 = vmul.f32 %v1066, 1.442695
    %v1081 = vpow.pop %v1080
    %v1082 = vmul.f32 %v1067, 1.442695
    %v1083 = vpow.pop %v1082
    %v1084 = vadd.f32 %v1069, 1.0
    %v1085 = vadd.f32 %v1071, 1.0
    %v1086 = vadd.f32 %v1073, 1.0
    %v1087 = vadd.f32 %v1075, 1.0
    %v1088 = vadd.f32 %v1077, 1.0
    %v1089 = vadd.f32 %v1079, 1.0
    %v1090 = vadd.f32 %v1081, 1.0
    %v1091 = vadd.f32 %v1083, 1.0
    %v1092 = vrcp.pop %v1084
    %v1093 = vmul.f32 %v1084, %v1092
    %v1094 = vsub.f32 1.0, %v1093
    %v1095 = vmul.f32 %v1092, %v1094
    %v1096 = vadd.f32 %v1092, %v1095
    %vm1097 = vweird.f32 %v1084
    %vm1098 = vweird.f32 %v1092
    %vm1099 = vmor %vm1097, %vm1098
    %v1100 = vsel %vm1099, %v1092, %v1096
    %v1101 = vand.u32 2147483647, %v1084
    %vm1102 = vcmp.eq.f32.partialorder %v1101, 8.507059e+37
    %v1103 = vand.u32 %v1084, 2147483648
    %v1104 = vor.u32 1.1754944e-38, %v1103
    %v1105 = vsel %vm1102, %v1104, %v1100
    %v1106 = vmul.f32 1.0, %v1105
    %v1107 = vrcp.pop %v1085
    %v1108 = vmul.f32 %v1085, %v1107
    %v1109 = vsub.f32 1.0, %v1108
    %v1110 = vmul.f32 %v1107, %v1109
    %v1111 = vadd.f32 %v1107, %v1110
    %vm1112 = vweird.f32 %v1085
    %vm1113 = vweird.f32 %v1107
    %vm1114 = vmor %vm1112, %vm1113
    %v1115 = vsel %vm1114, %v1107, %v1111
    %v1116 = vand.u32 2147483647, %v1085
    %vm1117 = vcmp.eq.f32.partialorder %v1116, 8.507059e+37
    %v1118 = vand.u32 %v1085, 2147483648
    %v1119 = vor.u32 1.1754944e-38, %v1118
    %v1120 = vsel %vm1117, %v1119, %v1115
    %v1121 = vmul.f32 1.0, %v1120
    %v1122 = vrcp.pop %v1086
    %v1123 = vmul.f32 %v1086, %v1122
    %v1124 = vsub.f32 1.0, %v1123
    %v1125 = vmul.f32 %v1122, %v1124
    %v1126 = vadd.f32 %v1122, %v1125
    %vm1127 = vweird.f32 %v1086
    %vm1128 = vweird.f32 %v1122
    %vm1129 = vmor %vm1127, %vm1128
    %v1130 = vsel %vm1129, %v1122, %v1126
    %v1131 = vand.u32 2147483647, %v1086
    %vm1132 = vcmp.eq.f32.partialorder %v1131, 8.507059e+37
    %v1133 = vand.u32 %v1086, 2147483648
    %v1134 = vor.u32 1.1754944e-38, %v1133
    %v1135 = vsel %vm1132, %v1134, %v1130
    %v1136 = vmul.f32 1.0, %v1135
    %v1137 = vrcp.pop %v1087
    %v1138 = vmul.f32 %v1087, %v1137
    %v1139 = vsub.f32 1.0, %v1138
    %v1140 = vmul.f32 %v1137, %v1139
    %v1141 = vadd.f32 %v1137, %v1140
    %vm1142 = vweird.f32 %v1087
    %vm1143 = vweird.f32 %v1137
    %vm1144 = vmor %vm1142, %vm1143
    %v1145 = vsel %vm1144, %v1137, %v1141
    %v1146 = vand.u32 2147483647, %v1087
    %vm1147 = vcmp.eq.f32.partialorder %v1146, 8.507059e+37
    %v1148 = vand.u32 %v1087, 2147483648
    %v1149 = vor.u32 1.1754944e-38, %v1148
    %v1150 = vsel %vm1147, %v1149, %v1145
    %v1151 = vmul.f32 1.0, %v1150
    %v1152 = vrcp.pop %v1088
    %v1153 = vmul.f32 %v1088, %v1152
    %v1154 = vsub.f32 1.0, %v1153
    %v1155 = vmul.f32 %v1152, %v1154
    %v1156 = vadd.f32 %v1152, %v1155
    %vm1157 = vweird.f32 %v1088
    %vm1158 = vweird.f32 %v1152
    %vm1159 = vmor %vm1157, %vm1158
    %v1160 = vsel %vm1159, %v1152, %v1156
    %v1161 = vand.u32 2147483647, %v1088
    %vm1162 = vcmp.eq.f32.partialorder %v1161, 8.507059e+37
    %v1163 = vand.u32 %v1088, 2147483648
    %v1164 = vor.u32 1.1754944e-38, %v1163
    %v1165 = vsel %vm1162, %v1164, %v1160
    %v1166 = vmul.f32 1.0, %v1165
    %v1167 = vrcp.pop %v1089
    %v1168 = vmul.f32 %v1089, %v1167
    %v1169 = vsub.f32 1.0, %v1168
    %v1170 = vmul.f32 %v1167, %v1169
    %v1171 = vadd.f32 %v1167, %v1170
    %vm1172 = vweird.f32 %v1089
    %vm1173 = vweird.f32 %v1167
    %vm1174 = vmor %vm1172, %vm1173
    %v1175 = vsel %vm1174, %v1167, %v1171
    %v1176 = vand.u32 2147483647, %v1089
    %vm1177 = vcmp.eq.f32.partialorder %v1176, 8.507059e+37
    %v1178 = vand.u32 %v1089, 2147483648
    %v1179 = vor.u32 1.1754944e-38, %v1178
    %v1180 = vsel %vm1177, %v1179, %v1175
    %v1181 = vmul.f32 1.0, %v1180
    %v1182 = vrcp.pop %v1090
    %v1183 = vmul.f32 %v1090, %v1182
    %v1184 = vsub.f32 1.0, %v1183
    %v1185 = vmul.f32 %v1182, %v1184
    %v1186 = vadd.f32 %v1182, %v1185
    %vm1187 = vweird.f32 %v1090
    %vm1188 = vweird.f32 %v1182
    %vm1189 = vmor %vm1187, %vm1188
    %v1190 = vsel %vm1189, %v1182, %v1186
    %v1191 = vand.u32 2147483647, %v1090
    %vm1192 = vcmp.eq.f32.partialorder %v1191, 8.507059e+37
    %v1193 = vand.u32 %v1090, 2147483648
    %v1194 = vor.u32 1.1754944e-38, %v1193
    %v1195 = vsel %vm1192, %v1194, %v1190
    %v1196 = vmul.f32 1.0, %v1195
    %v1197 = vrcp.pop %v1091
    %v1198 = vmul.f32 %v1091, %v1197
    %v1199 = vsub.f32 1.0, %v1198
    %v1200 = vmul.f32 %v1197, %v1199
    %v1201 = vadd.f32 %v1197, %v1200
    %vm1202 = vweird.f32 %v1091
    %vm1203 = vweird.f32 %v1197
    %vm1204 = vmor %vm1202, %vm1203
    %v1205 = vsel %vm1204, %v1197, %v1201
    %v1206 = vand.u32 2147483647, %v1091
    %vm1207 = vcmp.eq.f32.partialorder %v1206, 8.507059e+37
    %v1208 = vand.u32 %v1091, 2147483648
    %v1209 = vor.u32 1.1754944e-38, %v1208
    %v1210 = vsel %vm1207, %v1209, %v1205
    %v1211 = vmul.f32 1.0, %v1210
    %v1212 = vtanh.pop %v1052
    %v1213 = vtanh.pop %v1053
    %v1214 = vtanh.pop %v1054
    %v1215 = vtanh.pop %v1055
    %v1216 = vtanh.pop %v1056
    %v1217 = vtanh.pop %v1057
    %v1218 = vtanh.pop %v1058
    %v1219 = vtanh.pop %v1059
    %v1228 = vrot.slane %v910, 7
    %v1229 = vrot.slane %v911, 7
    %v1230 = vrot.slane %v912, 7
    %v1231 = vrot.slane %v913, 7
    %v1232 = vrot.slane %v914, 7
    %v1233 = vrot.slane %v915, 7
    %v1234 = vrot.slane %v916, 7
    %v1235 = vrot.slane %v917, 7
    %v1244 = vmul.f32 %v1106, %v1228
    %v1245 = vmul.f32 %v1121, %v1229
    %v1246 = vmul.f32 %v1136, %v1230
    %v1247 = vmul.f32 %v1151, %v1231
    %v1248 = vmul.f32 %v1166, %v1232
    %v1249 = vmul.f32 %v1181, %v1233
    %v1250 = vmul.f32 %v1196, %v1234
    %v1251 = vmul.f32 %v1211, %v1235
    %1260 = vrot.lane.b32.xlu0 %v1212, 64
    %v1261 = vpop.permute.xlu0 %1260
    %1262 = vrot.lane.b32.xlu0 %v1213, 64
    %v1263 = vpop.permute.xlu0 %1262
    %1264 = vrot.lane.b32.xlu0 %v1214, 64
    %v1265 = vpop.permute.xlu0 %1264
    %1266 = vrot.lane.b32.xlu0 %v1215, 64
    %v1267 = vpop.permute.xlu0 %1266
    %1268 = vrot.lane.b32.xlu0 %v1216, 64
    %v1269 = vpop.permute.xlu0 %1268
    %1270 = vrot.lane.b32.xlu0 %v1217, 64
    %v1271 = vpop.permute.xlu0 %1270
    %1272 = vrot.lane.b32.xlu0 %v1218, 64
    %v1273 = vpop.permute.xlu0 %1272
    %1274 = vrot.lane.b32.xlu0 %v1219, 64
    %v1275 = vpop.permute.xlu0 %1274
    %v1284 = vmul.f32 %v1106, %v1261
    %v1285 = vmul.f32 %v1121, %v1263
    %v1286 = vmul.f32 %v1136, %v1265
    %v1287 = vmul.f32 %v1151, %v1267
    %v1288 = vmul.f32 %v1166, %v1269
    %v1289 = vmul.f32 %v1181, %v1271
    %v1290 = vmul.f32 %v1196, %v1273
    %v1291 = vmul.f32 %v1211, %v1275
    %1300 = vrot.lane.b32.xlu0 %v1284, 32
    %v1301 = vpop.permute.xlu0 %1300
    %1302 = vrot.lane.b32.xlu0 %v1285, 32
    %v1303 = vpop.permute.xlu0 %1302
    %1304 = vrot.lane.b32.xlu0 %v1286, 32
    %v1305 = vpop.permute.xlu0 %1304
    %1306 = vrot.lane.b32.xlu0 %v1287, 32
    %v1307 = vpop.permute.xlu0 %1306
    %1308 = vrot.lane.b32.xlu0 %v1288, 32
    %v1309 = vpop.permute.xlu0 %1308
    %1310 = vrot.lane.b32.xlu0 %v1289, 32
    %v1311 = vpop.permute.xlu0 %1310
    %1312 = vrot.lane.b32.xlu0 %v1290, 32
    %v1313 = vpop.permute.xlu0 %1312
    %1314 = vrot.lane.b32.xlu0 %v1291, 32
    %v1315 = vpop.permute.xlu0 %1314
    %v1324 = vadd.f32 %v1244, %v1301
    %v1325 = vadd.f32 %v1245, %v1303
    %v1326 = vadd.f32 %v1246, %v1305
    %v1327 = vadd.f32 %v1247, %v1307
    %v1328 = vadd.f32 %v1248, %v1309
    %v1329 = vadd.f32 %v1249, %v1311
    %v1330 = vadd.f32 %v1250, %v1313
    %v1331 = vadd.f32 %v1251, %v1315
    %v1332 = vtanh.pop %v1324
    %v1333 = vtanh.pop %v1325
    %v1334 = vtanh.pop %v1326
    %v1335 = vtanh.pop %v1327
    %v1336 = vtanh.pop %v1328
    %v1337 = vtanh.pop %v1329
    %v1338 = vtanh.pop %v1330
    %v1339 = vtanh.pop %v1331
    %1348 = vrot.lane.b32.xlu0 %v1332, 64
    %v1349 = vpop.permute.xlu0 %1348
    %1350 = vrot.lane.b32.xlu0 %v1333, 64
    %v1351 = vpop.permute.xlu0 %1350
    %1352 = vrot.lane.b32.xlu0 %v1334, 64
    %v1353 = vpop.permute.xlu0 %1352
    %1354 = vrot.lane.b32.xlu0 %v1335, 64
    %v1355 = vpop.permute.xlu0 %1354
    %1356 = vrot.lane.b32.xlu0 %v1336, 64
    %v1357 = vpop.permute.xlu0 %1356
    %1358 = vrot.lane.b32.xlu0 %v1337, 64
    %v1359 = vpop.permute.xlu0 %1358
    %1360 = vrot.lane.b32.xlu0 %v1338, 64
    %v1361 = vpop.permute.xlu0 %1360
    %1362 = vrot.lane.b32.xlu0 %v1339, 64
    %v1363 = vpop.permute.xlu0 %1362
    %v1372 = vmul.f32 %v1106, %v1349
    %v1373 = vmul.f32 %v1121, %v1351
    %v1374 = vmul.f32 %v1136, %v1353
    %v1375 = vmul.f32 %v1151, %v1355
    %v1376 = vmul.f32 %v1166, %v1357
    %v1377 = vmul.f32 %v1181, %v1359
    %v1378 = vmul.f32 %v1196, %v1361
    %v1379 = vmul.f32 %v1211, %v1363
    %v1388 = vrot.slane %v1373, 7
    %v1389 = vsel %vm582, %v1388, %v1372
    %v1390 = vrot.slane %v1374, 6
    %v1391 = vsel %vm585, %v1390, %v1389
    %v1392 = vrot.slane %v1375, 5
    %v1393 = vsel %vm588, %v1392, %v1391
    %v1394 = vrot.slane %v1376, 4
    %v1395 = vsel %vm591, %v1394, %v1393
    %v1396 = vrot.slane %v1377, 3
    %v1397 = vsel %vm594, %v1396, %v1395
    %v1398 = vrot.slane %v1378, 2
    %v1399 = vrot.slane %v1379, 1
    %v1400 = vsel %vm576, %v1399, %v1398
    %1401 = vrot.lane.b32.xlu0 %v1397, 32
    %v1402 = vpop.permute.xlu0 %1401
    %1403 = vrot.lane.b32.xlu0 %v1400, 32
    %v1404 = vpop.permute.xlu0 %1403
    %s1407 = scalar_lea.vmem [#allocation2], 16
    %vm1408 = vcmask 261122
    %1409 = vst.msk [vmem:[%s1407 - $0x2] sm:$0xfc] %vm1408, %v1402
    %vm1410 = vcmask 254976
    %1411 = vst.msk [vmem:[%s1407 + $0x6] sm:$0x3] %vm1410, %v1404
    %v1412 = vrot.slane %v1372, 2
    %v1413 = vrot.slane %v1373, 1
    %v1414 = vsel %vm576, %v1413, %v1412
    %v1415 = vsel %vm579, %v1374, %v1414
    %v1416 = vrot.slane %v1375, 7
    %v1417 = vsel %vm582, %v1416, %v1415
    %v1418 = vrot.slane %v1376, 6
    %v1419 = vsel %vm585, %v1418, %v1417
    %v1420 = vrot.slane %v1377, 5
    %v1421 = vsel %vm588, %v1420, %v1419
    %v1422 = vrot.slane %v1378, 4
    %v1423 = vsel %vm591, %v1422, %v1421
    %v1424 = vrot.slane %v1379, 3
    %v1425 = vsel %vm594, %v1424, %v1423
    %1426 = vrot.lane.b32.xlu0 %v1425, 32
    %v1427 = vpop.permute.xlu0 %1426
    %v1428 = vsel %vm191, %v1427, 0
    %1430 = vmatpush.msra.mxu0 0.0
    %1431 = vmatpush.msra.mxu0 0.0
    %1432 = vmatpush.msra.mxu0 0.0
    %1433 = vmatpush.msra.mxu0 0.0
    %1434 = vmatpush.msra.mxu0 0.0
    %1435 = vmatpush.msra.mxu0 0.0
    %1436 = vmatpush.msra.mxu0 0.0
    %1437 = vmatpush.msra.mxu0 0.0
    %1438 = vmatpush.msra.mxu0 0.0
    %1439 = vmatpush.msra.mxu0 0.0
    %1440 = vmatpush.msra.mxu0 0.0
    %1441 = vmatpush.msra.mxu0 0.0
    %1442 = vmatpush.msra.mxu0 %v106
    %1443 = vmatpush.msra.mxu0 %v105
    %1444 = vmatpush.msra.mxu0 %v104
    %1445 = vmatpush.msra.mxu0 %v103
    %1446 = vmatmul.f32.gmra.mxu0 %v1428
    %v1447 = vpop.f32.mrf.mxu0
    %v1448 = vadd.f32 0.0, %v1447
    %1449 = vdwg.mxu0
    %v1451 = vrot.slane %v1448, 5
    %v1452 = vrot.slane %v1448, 6
    %v1453 = vrot.slane %v1448, 7
    %v1454 = vrot.slane %v1448, 1
    %v1455 = vrot.slane %v1448, 2
    %v1456 = vrot.slane %v1448, 3
    %v1457 = vrot.slane %v1448, 4
    %v1466 = vadd.f32 %v166, %v1451
    %v1467 = vadd.f32 %v169, %v1452
    %v1468 = vadd.f32 %v172, %v1453
    %v1469 = vadd.f32 %v175, %v1448
    %v1470 = vadd.f32 %v178, %v1454
    %v1471 = vadd.f32 %v181, %v1455
    %v1472 = vadd.f32 %v184, %v1456
    %v1473 = vadd.f32 %v187, %v1457
    %v1474 = vxor.u32 %v1466, 2147483648
    %v1475 = vxor.u32 %v1467, 2147483648
    %v1476 = vxor.u32 %v1468, 2147483648
    %v1477 = vxor.u32 %v1469, 2147483648
    %v1478 = vxor.u32 %v1470, 2147483648
    %v1479 = vxor.u32 %v1471, 2147483648
    %v1480 = vxor.u32 %v1472, 2147483648
    %v1481 = vxor.u32 %v1473, 2147483648
    %v1482 = vmul.f32 %v1474, 1.442695
    %v1483 = vpow.pop %v1482
    %v1484 = vmul.f32 %v1475, 1.442695
    %v1485 = vpow.pop %v1484
    %v1486 = vmul.f32 %v1476, 1.442695
    %v1487 = vpow.pop %v1486
    %v1488 = vmul.f32 %v1477, 1.442695
    %v1489 = vpow.pop %v1488
    %v1490 = vmul.f32 %v1478, 1.442695
    %v1491 = vpow.pop %v1490
    %v1492 = vmul.f32 %v1479, 1.442695
    %v1493 = vpow.pop %v1492
    %v1494 = vmul.f32 %v1480, 1.442695
    %v1495 = vpow.pop %v1494
    %v1496 = vmul.f32 %v1481, 1.442695
    %v1497 = vpow.pop %v1496
    %v1498 = vadd.f32 %v1483, 1.0
    %v1499 = vadd.f32 %v1485, 1.0
    %v1500 = vadd.f32 %v1487, 1.0
    %v1501 = vadd.f32 %v1489, 1.0
    %v1502 = vadd.f32 %v1491, 1.0
    %v1503 = vadd.f32 %v1493, 1.0
    %v1504 = vadd.f32 %v1495, 1.0
    %v1505 = vadd.f32 %v1497, 1.0
    %v1506 = vrcp.pop %v1498
    %v1507 = vmul.f32 %v1498, %v1506
    %v1508 = vsub.f32 1.0, %v1507
    %v1509 = vmul.f32 %v1506, %v1508
    %v1510 = vadd.f32 %v1506, %v1509
    %vm1511 = vweird.f32 %v1498
    %vm1512 = vweird.f32 %v1506
    %vm1513 = vmor %vm1511, %vm1512
    %v1514 = vsel %vm1513, %v1506, %v1510
    %v1515 = vand.u32 2147483647, %v1498
    %vm1516 = vcmp.eq.f32.partialorder %v1515, 8.507059e+37
    %v1517 = vand.u32 %v1498, 2147483648
    %v1518 = vor.u32 1.1754944e-38, %v1517
    %v1519 = vsel %vm1516, %v1518, %v1514
    %v1520 = vmul.f32 1.0, %v1519
    %v1521 = vrcp.pop %v1499
    %v1522 = vmul.f32 %v1499, %v1521
    %v1523 = vsub.f32 1.0, %v1522
    %v1524 = vmul.f32 %v1521, %v1523
    %v1525 = vadd.f32 %v1521, %v1524
    %vm1526 = vweird.f32 %v1499
    %vm1527 = vweird.f32 %v1521
    %vm1528 = vmor %vm1526, %vm1527
    %v1529 = vsel %vm1528, %v1521, %v1525
    %v1530 = vand.u32 2147483647, %v1499
    %vm1531 = vcmp.eq.f32.partialorder %v1530, 8.507059e+37
    %v1532 = vand.u32 %v1499, 2147483648
    %v1533 = vor.u32 1.1754944e-38, %v1532
    %v1534 = vsel %vm1531, %v1533, %v1529
    %v1535 = vmul.f32 1.0, %v1534
    %v1536 = vrcp.pop %v1500
    %v1537 = vmul.f32 %v1500, %v1536
    %v1538 = vsub.f32 1.0, %v1537
    %v1539 = vmul.f32 %v1536, %v1538
    %v1540 = vadd.f32 %v1536, %v1539
    %vm1541 = vweird.f32 %v1500
    %vm1542 = vweird.f32 %v1536
    %vm1543 = vmor %vm1541, %vm1542
    %v1544 = vsel %vm1543, %v1536, %v1540
    %v1545 = vand.u32 2147483647, %v1500
    %vm1546 = vcmp.eq.f32.partialorder %v1545, 8.507059e+37
    %v1547 = vand.u32 %v1500, 2147483648
    %v1548 = vor.u32 1.1754944e-38, %v1547
    %v1549 = vsel %vm1546, %v1548, %v1544
    %v1550 = vmul.f32 1.0, %v1549
    %v1551 = vrcp.pop %v1501
    %v1552 = vmul.f32 %v1501, %v1551
    %v1553 = vsub.f32 1.0, %v1552
    %v1554 = vmul.f32 %v1551, %v1553
    %v1555 = vadd.f32 %v1551, %v1554
    %vm1556 = vweird.f32 %v1501
    %vm1557 = vweird.f32 %v1551
    %vm1558 = vmor %vm1556, %vm1557
    %v1559 = vsel %vm1558, %v1551, %v1555
    %v1560 = vand.u32 2147483647, %v1501
    %vm1561 = vcmp.eq.f32.partialorder %v1560, 8.507059e+37
    %v1562 = vand.u32 %v1501, 2147483648
    %v1563 = vor.u32 1.1754944e-38, %v1562
    %v1564 = vsel %vm1561, %v1563, %v1559
    %v1565 = vmul.f32 1.0, %v1564
    %v1566 = vrcp.pop %v1502
    %v1567 = vmul.f32 %v1502, %v1566
    %v1568 = vsub.f32 1.0, %v1567
    %v1569 = vmul.f32 %v1566, %v1568
    %v1570 = vadd.f32 %v1566, %v1569
    %vm1571 = vweird.f32 %v1502
    %vm1572 = vweird.f32 %v1566
    %vm1573 = vmor %vm1571, %vm1572
    %v1574 = vsel %vm1573, %v1566, %v1570
    %v1575 = vand.u32 2147483647, %v1502
    %vm1576 = vcmp.eq.f32.partialorder %v1575, 8.507059e+37
    %v1577 = vand.u32 %v1502, 2147483648
    %v1578 = vor.u32 1.1754944e-38, %v1577
    %v1579 = vsel %vm1576, %v1578, %v1574
    %v1580 = vmul.f32 1.0, %v1579
    %v1581 = vrcp.pop %v1503
    %v1582 = vmul.f32 %v1503, %v1581
    %v1583 = vsub.f32 1.0, %v1582
    %v1584 = vmul.f32 %v1581, %v1583
    %v1585 = vadd.f32 %v1581, %v1584
    %vm1586 = vweird.f32 %v1503
    %vm1587 = vweird.f32 %v1581
    %vm1588 = vmor %vm1586, %vm1587
    %v1589 = vsel %vm1588, %v1581, %v1585
    %v1590 = vand.u32 2147483647, %v1503
    %vm1591 = vcmp.eq.f32.partialorder %v1590, 8.507059e+37
    %v1592 = vand.u32 %v1503, 2147483648
    %v1593 = vor.u32 1.1754944e-38, %v1592
    %v1594 = vsel %vm1591, %v1593, %v1589
    %v1595 = vmul.f32 1.0, %v1594
    %v1596 = vrcp.pop %v1504
    %v1597 = vmul.f32 %v1504, %v1596
    %v1598 = vsub.f32 1.0, %v1597
    %v1599 = vmul.f32 %v1596, %v1598
    %v1600 = vadd.f32 %v1596, %v1599
    %vm1601 = vweird.f32 %v1504
    %vm1602 = vweird.f32 %v1596
    %vm1603 = vmor %vm1601, %vm1602
    %v1604 = vsel %vm1603, %v1596, %v1600
    %v1605 = vand.u32 2147483647, %v1504
    %vm1606 = vcmp.eq.f32.partialorder %v1605, 8.507059e+37
    %v1607 = vand.u32 %v1504, 2147483648
    %v1608 = vor.u32 1.1754944e-38, %v1607
    %v1609 = vsel %vm1606, %v1608, %v1604
    %v1610 = vmul.f32 1.0, %v1609
    %v1611 = vrcp.pop %v1505
    %v1612 = vmul.f32 %v1505, %v1611
    %v1613 = vsub.f32 1.0, %v1612
    %v1614 = vmul.f32 %v1611, %v1613
    %v1615 = vadd.f32 %v1611, %v1614
    %vm1616 = vweird.f32 %v1505
    %vm1617 = vweird.f32 %v1611
    %vm1618 = vmor %vm1616, %vm1617
    %v1619 = vsel %vm1618, %v1611, %v1615
    %v1620 = vand.u32 2147483647, %v1505
    %vm1621 = vcmp.eq.f32.partialorder %v1620, 8.507059e+37
    %v1622 = vand.u32 %v1505, 2147483648
    %v1623 = vor.u32 1.1754944e-38, %v1622
    %v1624 = vsel %vm1621, %v1623, %v1619
    %v1625 = vmul.f32 1.0, %v1624
    %v1626 = vtanh.pop %v1466
    %v1627 = vtanh.pop %v1467
    %v1628 = vtanh.pop %v1468
    %v1629 = vtanh.pop %v1469
    %v1630 = vtanh.pop %v1470
    %v1631 = vtanh.pop %v1471
    %v1632 = vtanh.pop %v1472
    %v1633 = vtanh.pop %v1473
    %v1642 = vrot.slane %v1324, 7
    %v1643 = vrot.slane %v1325, 7
    %v1644 = vrot.slane %v1326, 7
    %v1645 = vrot.slane %v1327, 7
    %v1646 = vrot.slane %v1328, 7
    %v1647 = vrot.slane %v1329, 7
    %v1648 = vrot.slane %v1330, 7
    %v1649 = vrot.slane %v1331, 7
    %v1658 = vmul.f32 %v1520, %v1642
    %v1659 = vmul.f32 %v1535, %v1643
    %v1660 = vmul.f32 %v1550, %v1644
    %v1661 = vmul.f32 %v1565, %v1645
    %v1662 = vmul.f32 %v1580, %v1646
    %v1663 = vmul.f32 %v1595, %v1647
    %v1664 = vmul.f32 %v1610, %v1648
    %v1665 = vmul.f32 %v1625, %v1649
    %1674 = vrot.lane.b32.xlu0 %v1626, 64
    %v1675 = vpop.permute.xlu0 %1674
    %1676 = vrot.lane.b32.xlu0 %v1627, 64
    %v1677 = vpop.permute.xlu0 %1676
    %1678 = vrot.lane.b32.xlu0 %v1628, 64
    %v1679 = vpop.permute.xlu0 %1678
    %1680 = vrot.lane.b32.xlu0 %v1629, 64
    %v1681 = vpop.permute.xlu0 %1680
    %1682 = vrot.lane.b32.xlu0 %v1630, 64
    %v1683 = vpop.permute.xlu0 %1682
    %1684 = vrot.lane.b32.xlu0 %v1631, 64
    %v1685 = vpop.permute.xlu0 %1684
    %1686 = vrot.lane.b32.xlu0 %v1632, 64
    %v1687 = vpop.permute.xlu0 %1686
    %1688 = vrot.lane.b32.xlu0 %v1633, 64
    %v1689 = vpop.permute.xlu0 %1688
    %v1698 = vmul.f32 %v1520, %v1675
    %v1699 = vmul.f32 %v1535, %v1677
    %v1700 = vmul.f32 %v1550, %v1679
    %v1701 = vmul.f32 %v1565, %v1681
    %v1702 = vmul.f32 %v1580, %v1683
    %v1703 = vmul.f32 %v1595, %v1685
    %v1704 = vmul.f32 %v1610, %v1687
    %v1705 = vmul.f32 %v1625, %v1689
    %1714 = vrot.lane.b32.xlu0 %v1698, 32
    %v1715 = vpop.permute.xlu0 %1714
    %1716 = vrot.lane.b32.xlu0 %v1699, 32
    %v1717 = vpop.permute.xlu0 %1716
    %1718 = vrot.lane.b32.xlu0 %v1700, 32
    %v1719 = vpop.permute.xlu0 %1718
    %1720 = vrot.lane.b32.xlu0 %v1701, 32
    %v1721 = vpop.permute.xlu0 %1720
    %1722 = vrot.lane.b32.xlu0 %v1702, 32
    %v1723 = vpop.permute.xlu0 %1722
    %1724 = vrot.lane.b32.xlu0 %v1703, 32
    %v1725 = vpop.permute.xlu0 %1724
    %1726 = vrot.lane.b32.xlu0 %v1704, 32
    %v1727 = vpop.permute.xlu0 %1726
    %1728 = vrot.lane.b32.xlu0 %v1705, 32
    %v1729 = vpop.permute.xlu0 %1728
    %v1738 = vadd.f32 %v1658, %v1715
    %v1739 = vadd.f32 %v1659, %v1717
    %v1740 = vadd.f32 %v1660, %v1719
    %v1741 = vadd.f32 %v1661, %v1721
    %v1742 = vadd.f32 %v1662, %v1723
    %v1743 = vadd.f32 %v1663, %v1725
    %v1744 = vadd.f32 %v1664, %v1727
    %v1745 = vadd.f32 %v1665, %v1729
    %v1746 = vtanh.pop %v1738
    %v1747 = vtanh.pop %v1739
    %v1748 = vtanh.pop %v1740
    %v1749 = vtanh.pop %v1741
    %v1750 = vtanh.pop %v1742
    %v1751 = vtanh.pop %v1743
    %v1752 = vtanh.pop %v1744
    %v1753 = vtanh.pop %v1745
    %1762 = vrot.lane.b32.xlu0 %v1746, 64
    %v1763 = vpop.permute.xlu0 %1762
    %1764 = vrot.lane.b32.xlu0 %v1747, 64
    %v1765 = vpop.permute.xlu0 %1764
    %1766 = vrot.lane.b32.xlu0 %v1748, 64
    %v1767 = vpop.permute.xlu0 %1766
    %1768 = vrot.lane.b32.xlu0 %v1749, 64
    %v1769 = vpop.permute.xlu0 %1768
    %1770 = vrot.lane.b32.xlu0 %v1750, 64
    %v1771 = vpop.permute.xlu0 %1770
    %1772 = vrot.lane.b32.xlu0 %v1751, 64
    %v1773 = vpop.permute.xlu0 %1772
    %1774 = vrot.lane.b32.xlu0 %v1752, 64
    %v1775 = vpop.permute.xlu0 %1774
    %1776 = vrot.lane.b32.xlu0 %v1753, 64
    %v1777 = vpop.permute.xlu0 %1776
    %v1786 = vmul.f32 %v1520, %v1763
    %v1787 = vmul.f32 %v1535, %v1765
    %v1788 = vmul.f32 %v1550, %v1767
    %v1789 = vmul.f32 %v1565, %v1769
    %v1790 = vmul.f32 %v1580, %v1771
    %v1791 = vmul.f32 %v1595, %v1773
    %v1792 = vmul.f32 %v1610, %v1775
    %v1793 = vmul.f32 %v1625, %v1777
    %v1802 = vrot.slane %v1787, 7
    %v1803 = vsel %vm585, %v1802, %v1786
    %v1804 = vrot.slane %v1788, 6
    %v1805 = vsel %vm588, %v1804, %v1803
    %v1806 = vrot.slane %v1789, 5
    %v1807 = vsel %vm591, %v1806, %v1805
    %v1808 = vrot.slane %v1790, 4
    %v1809 = vsel %vm594, %v1808, %v1807
    %v1810 = vrot.slane %v1791, 3
    %v1811 = vrot.slane %v1792, 2
    %v1812 = vsel %vm576, %v1811, %v1810
    %v1813 = vrot.slane %v1793, 1
    %v1814 = vsel %vm579, %v1813, %v1812
    %1815 = vrot.lane.b32.xlu0 %v1809, 32
    %v1816 = vpop.permute.xlu0 %1815
    %1817 = vrot.lane.b32.xlu0 %v1814, 32
    %v1818 = vpop.permute.xlu0 %1817
    %s1821 = scalar_lea.vmem [#allocation2], 24
    %vm1822 = vcmask 261123
    %1823 = vst.msk [vmem:[%s1821 - $0x3] sm:$0xf8] %vm1822, %v1816
    %vm1824 = vcmask 256000
    %1825 = vst.msk [vmem:[%s1821 + $0x5] sm:$0x7] %vm1824, %v1818
    %v1826 = vrot.slane %v1786, 3
    %v1827 = vrot.slane %v1787, 2
    %v1828 = vsel %vm576, %v1827, %v1826
    %v1829 = vrot.slane %v1788, 1
    %v1830 = vsel %vm579, %v1829, %v1828
    %v1831 = vsel %vm582, %v1789, %v1830
    %v1832 = vrot.slane %v1790, 7
    %v1833 = vsel %vm585, %v1832, %v1831
    %v1834 = vrot.slane %v1791, 6
    %v1835 = vsel %vm588, %v1834, %v1833
    %v1836 = vrot.slane %v1792, 5
    %v1837 = vsel %vm591, %v1836, %v1835
    %v1838 = vrot.slane %v1793, 4
    %v1839 = vsel %vm594, %v1838, %v1837
    %1840 = vrot.lane.b32.xlu0 %v1839, 32
    %v1841 = vpop.permute.xlu0 %1840
    %v1842 = vsel %vm191, %v1841, 0
    %1844 = vmatpush.msra.mxu0 0.0
    %1845 = vmatpush.msra.mxu0 0.0
    %1846 = vmatpush.msra.mxu0 0.0
    %1847 = vmatpush.msra.mxu0 0.0
    %1848 = vmatpush.msra.mxu0 0.0
    %1849 = vmatpush.msra.mxu0 0.0
    %1850 = vmatpush.msra.mxu0 0.0
    %1851 = vmatpush.msra.mxu0 0.0
    %1852 = vmatpush.msra.mxu0 0.0
    %1853 = vmatpush.msra.mxu0 0.0
    %1854 = vmatpush.msra.mxu0 0.0
    %1855 = vmatpush.msra.mxu0 0.0
    %1856 = vmatpush.msra.mxu0 %v106
    %1857 = vmatpush.msra.mxu0 %v105
    %1858 = vmatpush.msra.mxu0 %v104
    %1859 = vmatpush.msra.mxu0 %v103
    %1860 = vmatmul.f32.gmra.mxu0 %v1842
    %v1861 = vpop.f32.mrf.mxu0
    %v1862 = vadd.f32 0.0, %v1861
    %1863 = vdwg.mxu0
    %v1865 = vrot.slane %v1862, 4
    %v1866 = vrot.slane %v1862, 5
    %v1867 = vrot.slane %v1862, 6
    %v1868 = vrot.slane %v1862, 7
    %v1869 = vrot.slane %v1862, 1
    %v1870 = vrot.slane %v1862, 2
    %v1871 = vrot.slane %v1862, 3
    %v1880 = vadd.f32 %v166, %v1865
    %v1881 = vadd.f32 %v169, %v1866
    %v1882 = vadd.f32 %v172, %v1867
    %v1883 = vadd.f32 %v175, %v1868
    %v1884 = vadd.f32 %v178, %v1862
    %v1885 = vadd.f32 %v181, %v1869
    %v1886 = vadd.f32 %v184, %v1870
    %v1887 = vadd.f32 %v187, %v1871
    %v1888 = vxor.u32 %v1880, 2147483648
    %v1889 = vxor.u32 %v1881, 2147483648
    %v1890 = vxor.u32 %v1882, 2147483648
    %v1891 = vxor.u32 %v1883, 2147483648
    %v1892 = vxor.u32 %v1884, 2147483648
    %v1893 = vxor.u32 %v1885, 2147483648
    %v1894 = vxor.u32 %v1886, 2147483648
    %v1895 = vxor.u32 %v1887, 2147483648
    %v1896 = vmul.f32 %v1888, 1.442695
    %v1897 = vpow.pop %v1896
    %v1898 = vmul.f32 %v1889, 1.442695
    %v1899 = vpow.pop %v1898
    %v1900 = vmul.f32 %v1890, 1.442695
    %v1901 = vpow.pop %v1900
    %v1902 = vmul.f32 %v1891, 1.442695
    %v1903 = vpow.pop %v1902
    %v1904 = vmul.f32 %v1892, 1.442695
    %v1905 = vpow.pop %v1904
    %v1906 = vmul.f32 %v1893, 1.442695
    %v1907 = vpow.pop %v1906
    %v1908 = vmul.f32 %v1894, 1.442695
    %v1909 = vpow.pop %v1908
    %v1910 = vmul.f32 %v1895, 1.442695
    %v1911 = vpow.pop %v1910
    %v1912 = vadd.f32 %v1897, 1.0
    %v1913 = vadd.f32 %v1899, 1.0
    %v1914 = vadd.f32 %v1901, 1.0
    %v1915 = vadd.f32 %v1903, 1.0
    %v1916 = vadd.f32 %v1905, 1.0
    %v1917 = vadd.f32 %v1907, 1.0
    %v1918 = vadd.f32 %v1909, 1.0
    %v1919 = vadd.f32 %v1911, 1.0
    %v1920 = vrcp.pop %v1912
    %v1921 = vmul.f32 %v1912, %v1920
    %v1922 = vsub.f32 1.0, %v1921
    %v1923 = vmul.f32 %v1920, %v1922
    %v1924 = vadd.f32 %v1920, %v1923
    %vm1925 = vweird.f32 %v1912
    %vm1926 = vweird.f32 %v1920
    %vm1927 = vmor %vm1925, %vm1926
    %v1928 = vsel %vm1927, %v1920, %v1924
    %v1929 = vand.u32 2147483647, %v1912
    %vm1930 = vcmp.eq.f32.partialorder %v1929, 8.507059e+37
    %v1931 = vand.u32 %v1912, 2147483648
    %v1932 = vor.u32 1.1754944e-38, %v1931
    %v1933 = vsel %vm1930, %v1932, %v1928
    %v1934 = vmul.f32 1.0, %v1933
    %v1935 = vrcp.pop %v1913
    %v1936 = vmul.f32 %v1913, %v1935
    %v1937 = vsub.f32 1.0, %v1936
    %v1938 = vmul.f32 %v1935, %v1937
    %v1939 = vadd.f32 %v1935, %v1938
    %vm1940 = vweird.f32 %v1913
    %vm1941 = vweird.f32 %v1935
    %vm1942 = vmor %vm1940, %vm1941
    %v1943 = vsel %vm1942, %v1935, %v1939
    %v1944 = vand.u32 2147483647, %v1913
    %vm1945 = vcmp.eq.f32.partialorder %v1944, 8.507059e+37
    %v1946 = vand.u32 %v1913, 2147483648
    %v1947 = vor.u32 1.1754944e-38, %v1946
    %v1948 = vsel %vm1945, %v1947, %v1943
    %v1949 = vmul.f32 1.0, %v1948
    %v1950 = vrcp.pop %v1914
    %v1951 = vmul.f32 %v1914, %v1950
    %v1952 = vsub.f32 1.0, %v1951
    %v1953 = vmul.f32 %v1950, %v1952
    %v1954 = vadd.f32 %v1950, %v1953
    %vm1955 = vweird.f32 %v1914
    %vm1956 = vweird.f32 %v1950
    %vm1957 = vmor %vm1955, %vm1956
    %v1958 = vsel %vm1957, %v1950, %v1954
    %v1959 = vand.u32 2147483647, %v1914
    %vm1960 = vcmp.eq.f32.partialorder %v1959, 8.507059e+37
    %v1961 = vand.u32 %v1914, 2147483648
    %v1962 = vor.u32 1.1754944e-38, %v1961
    %v1963 = vsel %vm1960, %v1962, %v1958
    %v1964 = vmul.f32 1.0, %v1963
    %v1965 = vrcp.pop %v1915
    %v1966 = vmul.f32 %v1915, %v1965
    %v1967 = vsub.f32 1.0, %v1966
    %v1968 = vmul.f32 %v1965, %v1967
    %v1969 = vadd.f32 %v1965, %v1968
    %vm1970 = vweird.f32 %v1915
    %vm1971 = vweird.f32 %v1965
    %vm1972 = vmor %vm1970, %vm1971
    %v1973 = vsel %vm1972, %v1965, %v1969
    %v1974 = vand.u32 2147483647, %v1915
    %vm1975 = vcmp.eq.f32.partialorder %v1974, 8.507059e+37
    %v1976 = vand.u32 %v1915, 2147483648
    %v1977 = vor.u32 1.1754944e-38, %v1976
    %v1978 = vsel %vm1975, %v1977, %v1973
    %v1979 = vmul.f32 1.0, %v1978
    %v1980 = vrcp.pop %v1916
    %v1981 = vmul.f32 %v1916, %v1980
    %v1982 = vsub.f32 1.0, %v1981
    %v1983 = vmul.f32 %v1980, %v1982
    %v1984 = vadd.f32 %v1980, %v1983
    %vm1985 = vweird.f32 %v1916
    %vm1986 = vweird.f32 %v1980
    %vm1987 = vmor %vm1985, %vm1986
    %v1988 = vsel %vm1987, %v1980, %v1984
    %v1989 = vand.u32 2147483647, %v1916
    %vm1990 = vcmp.eq.f32.partialorder %v1989, 8.507059e+37
    %v1991 = vand.u32 %v1916, 2147483648
    %v1992 = vor.u32 1.1754944e-38, %v1991
    %v1993 = vsel %vm1990, %v1992, %v1988
    %v1994 = vmul.f32 1.0, %v1993
    %v1995 = vrcp.pop %v1917
    %v1996 = vmul.f32 %v1917, %v1995
    %v1997 = vsub.f32 1.0, %v1996
    %v1998 = vmul.f32 %v1995, %v1997
    %v1999 = vadd.f32 %v1995, %v1998
    %vm2000 = vweird.f32 %v1917
    %vm2001 = vweird.f32 %v1995
    %vm2002 = vmor %vm2000, %vm2001
    %v2003 = vsel %vm2002, %v1995, %v1999
    %v2004 = vand.u32 2147483647, %v1917
    %vm2005 = vcmp.eq.f32.partialorder %v2004, 8.507059e+37
    %v2006 = vand.u32 %v1917, 2147483648
    %v2007 = vor.u32 1.1754944e-38, %v2006
    %v2008 = vsel %vm2005, %v2007, %v2003
    %v2009 = vmul.f32 1.0, %v2008
    %v2010 = vrcp.pop %v1918
    %v2011 = vmul.f32 %v1918, %v2010
    %v2012 = vsub.f32 1.0, %v2011
    %v2013 = vmul.f32 %v2010, %v2012
    %v2014 = vadd.f32 %v2010, %v2013
    %vm2015 = vweird.f32 %v1918
    %vm2016 = vweird.f32 %v2010
    %vm2017 = vmor %vm2015, %vm2016
    %v2018 = vsel %vm2017, %v2010, %v2014
    %v2019 = vand.u32 2147483647, %v1918
    %vm2020 = vcmp.eq.f32.partialorder %v2019, 8.507059e+37
    %v2021 = vand.u32 %v1918, 2147483648
    %v2022 = vor.u32 1.1754944e-38, %v2021
    %v2023 = vsel %vm2020, %v2022, %v2018
    %v2024 = vmul.f32 1.0, %v2023
    %v2025 = vrcp.pop %v1919
    %v2026 = vmul.f32 %v1919, %v2025
    %v2027 = vsub.f32 1.0, %v2026
    %v2028 = vmul.f32 %v2025, %v2027
    %v2029 = vadd.f32 %v2025, %v2028
    %vm2030 = vweird.f32 %v1919
    %vm2031 = vweird.f32 %v2025
    %vm2032 = vmor %vm2030, %vm2031
    %v2033 = vsel %vm2032, %v2025, %v2029
    %v2034 = vand.u32 2147483647, %v1919
    %vm2035 = vcmp.eq.f32.partialorder %v2034, 8.507059e+37
    %v2036 = vand.u32 %v1919, 2147483648
    %v2037 = vor.u32 1.1754944e-38, %v2036
    %v2038 = vsel %vm2035, %v2037, %v2033
    %v2039 = vmul.f32 1.0, %v2038
    %v2040 = vtanh.pop %v1880
    %v2041 = vtanh.pop %v1881
    %v2042 = vtanh.pop %v1882
    %v2043 = vtanh.pop %v1883
    %v2044 = vtanh.pop %v1884
    %v2045 = vtanh.pop %v1885
    %v2046 = vtanh.pop %v1886
    %v2047 = vtanh.pop %v1887
    %v2056 = vrot.slane %v1738, 7
    %v2057 = vrot.slane %v1739, 7
    %v2058 = vrot.slane %v1740, 7
    %v2059 = vrot.slane %v1741, 7
    %v2060 = vrot.slane %v1742, 7
    %v2061 = vrot.slane %v1743, 7
    %v2062 = vrot.slane %v1744, 7
    %v2063 = vrot.slane %v1745, 7
    %v2072 = vmul.f32 %v1934, %v2056
    %v2073 = vmul.f32 %v1949, %v2057
    %v2074 = vmul.f32 %v1964, %v2058
    %v2075 = vmul.f32 %v1979, %v2059
    %v2076 = vmul.f32 %v1994, %v2060
    %v2077 = vmul.f32 %v2009, %v2061
    %v2078 = vmul.f32 %v2024, %v2062
    %v2079 = vmul.f32 %v2039, %v2063
    %2088 = vrot.lane.b32.xlu0 %v2040, 64
    %v2089 = vpop.permute.xlu0 %2088
    %2090 = vrot.lane.b32.xlu0 %v2041, 64
    %v2091 = vpop.permute.xlu0 %2090
    %2092 = vrot.lane.b32.xlu0 %v2042, 64
    %v2093 = vpop.permute.xlu0 %2092
    %2094 = vrot.lane.b32.xlu0 %v2043, 64
    %v2095 = vpop.permute.xlu0 %2094
    %2096 = vrot.lane.b32.xlu0 %v2044, 64
    %v2097 = vpop.permute.xlu0 %2096
    %2098 = vrot.lane.b32.xlu0 %v2045, 64
    %v2099 = vpop.permute.xlu0 %2098
    %2100 = vrot.lane.b32.xlu0 %v2046, 64
    %v2101 = vpop.permute.xlu0 %2100
    %2102 = vrot.lane.b32.xlu0 %v2047, 64
    %v2103 = vpop.permute.xlu0 %2102
    %v2112 = vmul.f32 %v1934, %v2089
    %v2113 = vmul.f32 %v1949, %v2091
    %v2114 = vmul.f32 %v1964, %v2093
    %v2115 = vmul.f32 %v1979, %v2095
    %v2116 = vmul.f32 %v1994, %v2097
    %v2117 = vmul.f32 %v2009, %v2099
    %v2118 = vmul.f32 %v2024, %v2101
    %v2119 = vmul.f32 %v2039, %v2103
    %2128 = vrot.lane.b32.xlu0 %v2112, 32
    %v2129 = vpop.permute.xlu0 %2128
    %2130 = vrot.lane.b32.xlu0 %v2113, 32
    %v2131 = vpop.permute.xlu0 %2130
    %2132 = vrot.lane.b32.xlu0 %v2114, 32
    %v2133 = vpop.permute.xlu0 %2132
    %2134 = vrot.lane.b32.xlu0 %v2115, 32
    %v2135 = vpop.permute.xlu0 %2134
    %2136 = vrot.lane.b32.xlu0 %v2116, 32
    %v2137 = vpop.permute.xlu0 %2136
    %2138 = vrot.lane.b32.xlu0 %v2117, 32
    %v2139 = vpop.permute.xlu0 %2138
    %2140 = vrot.lane.b32.xlu0 %v2118, 32
    %v2141 = vpop.permute.xlu0 %2140
    %2142 = vrot.lane.b32.xlu0 %v2119, 32
    %v2143 = vpop.permute.xlu0 %2142
    %v2152 = vadd.f32 %v2072, %v2129
    %v2153 = vadd.f32 %v2073, %v2131
    %v2154 = vadd.f32 %v2074, %v2133
    %v2155 = vadd.f32 %v2075, %v2135
    %v2156 = vadd.f32 %v2076, %v2137
    %v2157 = vadd.f32 %v2077, %v2139
    %v2158 = vadd.f32 %v2078, %v2141
    %v2159 = vadd.f32 %v2079, %v2143
    %v2160 = vtanh.pop %v2152
    %v2161 = vtanh.pop %v2153
    %v2162 = vtanh.pop %v2154
    %v2163 = vtanh.pop %v2155
    %v2164 = vtanh.pop %v2156
    %v2165 = vtanh.pop %v2157
    %v2166 = vtanh.pop %v2158
    %v2167 = vtanh.pop %v2159
    %2176 = vrot.lane.b32.xlu0 %v2160, 64
    %v2177 = vpop.permute.xlu0 %2176
    %2178 = vrot.lane.b32.xlu0 %v2161, 64
    %v2179 = vpop.permute.xlu0 %2178
    %2180 = vrot.lane.b32.xlu0 %v2162, 64
    %v2181 = vpop.permute.xlu0 %2180
    %2182 = vrot.lane.b32.xlu0 %v2163, 64
    %v2183 = vpop.permute.xlu0 %2182
    %2184 = vrot.lane.b32.xlu0 %v2164, 64
    %v2185 = vpop.permute.xlu0 %2184
    %2186 = vrot.lane.b32.xlu0 %v2165, 64
    %v2187 = vpop.permute.xlu0 %2186
    %2188 = vrot.lane.b32.xlu0 %v2166, 64
    %v2189 = vpop.permute.xlu0 %2188
    %2190 = vrot.lane.b32.xlu0 %v2167, 64
    %v2191 = vpop.permute.xlu0 %2190
    %v2200 = vmul.f32 %v1934, %v2177
    %v2201 = vmul.f32 %v1949, %v2179
    %v2202 = vmul.f32 %v1964, %v2181
    %v2203 = vmul.f32 %v1979, %v2183
    %v2204 = vmul.f32 %v1994, %v2185
    %v2205 = vmul.f32 %v2009, %v2187
    %v2206 = vmul.f32 %v2024, %v2189
    %v2207 = vmul.f32 %v2039, %v2191
    %v2216 = vrot.slane %v2201, 7
    %v2217 = vsel %vm588, %v2216, %v2200
    %v2218 = vrot.slane %v2202, 6
    %v2219 = vsel %vm591, %v2218, %v2217
    %v2220 = vrot.slane %v2203, 5
    %v2221 = vsel %vm594, %v2220, %v2219
    %v2222 = vrot.slane %v2204, 4
    %v2223 = vrot.slane %v2205, 3
    %v2224 = vsel %vm576, %v2223, %v2222
    %v2225 = vrot.slane %v2206, 2
    %v2226 = vsel %vm579, %v2225, %v2224
    %v2227 = vrot.slane %v2207, 1
    %v2228 = vsel %vm582, %v2227, %v2226
    %2229 = vrot.lane.b32.xlu0 %v2221, 32
    %v2230 = vpop.permute.xlu0 %2229
    %2231 = vrot.lane.b32.xlu0 %v2228, 32
    %v2232 = vpop.permute.xlu0 %2231
    %s2235 = scalar_lea.vmem [#allocation2], 32
    %vm2236 = vcmask 261124
    %2237 = vst.msk [vmem:[%s2235 - $0x4] sm:$0xf0] %vm2236, %v2230
    %vm2238 = vcmask 257024
    %2239 = vst.msk [vmem:[%s2235 + $0x4] sm:$0xf] %vm2238, %v2232
    %v2240 = vrot.slane %v2200, 4
    %v2241 = vrot.slane %v2201, 3
    %v2242 = vsel %vm576, %v2241, %v2240
    %v2243 = vrot.slane %v2202, 2
    %v2244 = vsel %vm579, %v2243, %v2242
    %v2245 = vrot.slane %v2203, 1
    %v2246 = vsel %vm582, %v2245, %v2244
    %v2247 = vsel %vm585, %v2204, %v2246
    %v2248 = vrot.slane %v2205, 7
    %v2249 = vsel %vm588, %v2248, %v2247
    %v2250 = vrot.slane %v2206, 6
    %v2251 = vsel %vm591, %v2250, %v2249
    %v2252 = vrot.slane %v2207, 5
    %v2253 = vsel %vm594, %v2252, %v2251
    %2254 = vrot.lane.b32.xlu0 %v2253, 32
    %v2255 = vpop.permute.xlu0 %2254
    %v2256 = vsel %vm191, %v2255, 0
    %2258 = vmatpush.msra.mxu0 0.0
    %2259 = vmatpush.msra.mxu0 0.0
    %2260 = vmatpush.msra.mxu0 0.0
    %2261 = vmatpush.msra.mxu0 0.0
    %2262 = vmatpush.msra.mxu0 0.0
    %2263 = vmatpush.msra.mxu0 0.0
    %2264 = vmatpush.msra.mxu0 0.0
    %2265 = vmatpush.msra.mxu0 0.0
    %2266 = vmatpush.msra.mxu0 0.0
    %2267 = vmatpush.msra.mxu0 0.0
    %2268 = vmatpush.msra.mxu0 0.0
    %2269 = vmatpush.msra.mxu0 0.0
    %2270 = vmatpush.msra.mxu0 %v106
    %2271 = vmatpush.msra.mxu0 %v105
    %2272 = vmatpush.msra.mxu0 %v104
    %2273 = vmatpush.msra.mxu0 %v103
    %2274 = vmatmul.f32.gmra.mxu0 %v2256
    %v2275 = vpop.f32.mrf.mxu0
    %v2276 = vadd.f32 0.0, %v2275
    %2277 = vdwg.mxu0
    %v2279 = vrot.slane %v2276, 3
    %v2280 = vrot.slane %v2276, 4
    %v2281 = vrot.slane %v2276, 5
    %v2282 = vrot.slane %v2276, 6
    %v2283 = vrot.slane %v2276, 7
    %v2284 = vrot.slane %v2276, 1
    %v2285 = vrot.slane %v2276, 2
    %v2294 = vadd.f32 %v166, %v2279
    %v2295 = vadd.f32 %v169, %v2280
    %v2296 = vadd.f32 %v172, %v2281
    %v2297 = vadd.f32 %v175, %v2282
    %v2298 = vadd.f32 %v178, %v2283
    %v2299 = vadd.f32 %v181, %v2276
    %v2300 = vadd.f32 %v184, %v2284
    %v2301 = vadd.f32 %v187, %v2285
    %v2302 = vxor.u32 %v2294, 2147483648
    %v2303 = vxor.u32 %v2295, 2147483648
    %v2304 = vxor.u32 %v2296, 2147483648
    %v2305 = vxor.u32 %v2297, 2147483648
    %v2306 = vxor.u32 %v2298, 2147483648
    %v2307 = vxor.u32 %v2299, 2147483648
    %v2308 = vxor.u32 %v2300, 2147483648
    %v2309 = vxor.u32 %v2301, 2147483648
    %v2310 = vmul.f32 %v2302, 1.442695
    %v2311 = vpow.pop %v2310
    %v2312 = vmul.f32 %v2303, 1.442695
    %v2313 = vpow.pop %v2312
    %v2314 = vmul.f32 %v2304, 1.442695
    %v2315 = vpow.pop %v2314
    %v2316 = vmul.f32 %v2305, 1.442695
    %v2317 = vpow.pop %v2316
    %v2318 = vmul.f32 %v2306, 1.442695
    %v2319 = vpow.pop %v2318
    %v2320 = vmul.f32 %v2307, 1.442695
    %v2321 = vpow.pop %v2320
    %v2322 = vmul.f32 %v2308, 1.442695
    %v2323 = vpow.pop %v2322
    %v2324 = vmul.f32 %v2309, 1.442695
    %v2325 = vpow.pop %v2324
    %v2326 = vadd.f32 %v2311, 1.0
    %v2327 = vadd.f32 %v2313, 1.0
    %v2328 = vadd.f32 %v2315, 1.0
    %v2329 = vadd.f32 %v2317, 1.0
    %v2330 = vadd.f32 %v2319, 1.0
    %v2331 = vadd.f32 %v2321, 1.0
    %v2332 = vadd.f32 %v2323, 1.0
    %v2333 = vadd.f32 %v2325, 1.0
    %v2334 = vrcp.pop %v2326
    %v2335 = vmul.f32 %v2326, %v2334
    %v2336 = vsub.f32 1.0, %v2335
    %v2337 = vmul.f32 %v2334, %v2336
    %v2338 = vadd.f32 %v2334, %v2337
    %vm2339 = vweird.f32 %v2326
    %vm2340 = vweird.f32 %v2334
    %vm2341 = vmor %vm2339, %vm2340
    %v2342 = vsel %vm2341, %v2334, %v2338
    %v2343 = vand.u32 2147483647, %v2326
    %vm2344 = vcmp.eq.f32.partialorder %v2343, 8.507059e+37
    %v2345 = vand.u32 %v2326, 2147483648
    %v2346 = vor.u32 1.1754944e-38, %v2345
    %v2347 = vsel %vm2344, %v2346, %v2342
    %v2348 = vmul.f32 1.0, %v2347
    %v2349 = vrcp.pop %v2327
    %v2350 = vmul.f32 %v2327, %v2349
    %v2351 = vsub.f32 1.0, %v2350
    %v2352 = vmul.f32 %v2349, %v2351
    %v2353 = vadd.f32 %v2349, %v2352
    %vm2354 = vweird.f32 %v2327
    %vm2355 = vweird.f32 %v2349
    %vm2356 = vmor %vm2354, %vm2355
    %v2357 = vsel %vm2356, %v2349, %v2353
    %v2358 = vand.u32 2147483647, %v2327
    %vm2359 = vcmp.eq.f32.partialorder %v2358, 8.507059e+37
    %v2360 = vand.u32 %v2327, 2147483648
    %v2361 = vor.u32 1.1754944e-38, %v2360
    %v2362 = vsel %vm2359, %v2361, %v2357
    %v2363 = vmul.f32 1.0, %v2362
    %v2364 = vrcp.pop %v2328
    %v2365 = vmul.f32 %v2328, %v2364
    %v2366 = vsub.f32 1.0, %v2365
    %v2367 = vmul.f32 %v2364, %v2366
    %v2368 = vadd.f32 %v2364, %v2367
    %vm2369 = vweird.f32 %v2328
    %vm2370 = vweird.f32 %v2364
    %vm2371 = vmor %vm2369, %vm2370
    %v2372 = vsel %vm2371, %v2364, %v2368
    %v2373 = vand.u32 2147483647, %v2328
    %vm2374 = vcmp.eq.f32.partialorder %v2373, 8.507059e+37
    %v2375 = vand.u32 %v2328, 2147483648
    %v2376 = vor.u32 1.1754944e-38, %v2375
    %v2377 = vsel %vm2374, %v2376, %v2372
    %v2378 = vmul.f32 1.0, %v2377
    %v2379 = vrcp.pop %v2329
    %v2380 = vmul.f32 %v2329, %v2379
    %v2381 = vsub.f32 1.0, %v2380
    %v2382 = vmul.f32 %v2379, %v2381
    %v2383 = vadd.f32 %v2379, %v2382
    %vm2384 = vweird.f32 %v2329
    %vm2385 = vweird.f32 %v2379
    %vm2386 = vmor %vm2384, %vm2385
    %v2387 = vsel %vm2386, %v2379, %v2383
    %v2388 = vand.u32 2147483647, %v2329
    %vm2389 = vcmp.eq.f32.partialorder %v2388, 8.507059e+37
    %v2390 = vand.u32 %v2329, 2147483648
    %v2391 = vor.u32 1.1754944e-38, %v2390
    %v2392 = vsel %vm2389, %v2391, %v2387
    %v2393 = vmul.f32 1.0, %v2392
    %v2394 = vrcp.pop %v2330
    %v2395 = vmul.f32 %v2330, %v2394
    %v2396 = vsub.f32 1.0, %v2395
    %v2397 = vmul.f32 %v2394, %v2396
    %v2398 = vadd.f32 %v2394, %v2397
    %vm2399 = vweird.f32 %v2330
    %vm2400 = vweird.f32 %v2394
    %vm2401 = vmor %vm2399, %vm2400
    %v2402 = vsel %vm2401, %v2394, %v2398
    %v2403 = vand.u32 2147483647, %v2330
    %vm2404 = vcmp.eq.f32.partialorder %v2403, 8.507059e+37
    %v2405 = vand.u32 %v2330, 2147483648
    %v2406 = vor.u32 1.1754944e-38, %v2405
    %v2407 = vsel %vm2404, %v2406, %v2402
    %v2408 = vmul.f32 1.0, %v2407
    %v2409 = vrcp.pop %v2331
    %v2410 = vmul.f32 %v2331, %v2409
    %v2411 = vsub.f32 1.0, %v2410
    %v2412 = vmul.f32 %v2409, %v2411
    %v2413 = vadd.f32 %v2409, %v2412
    %vm2414 = vweird.f32 %v2331
    %vm2415 = vweird.f32 %v2409
    %vm2416 = vmor %vm2414, %vm2415
    %v2417 = vsel %vm2416, %v2409, %v2413
    %v2418 = vand.u32 2147483647, %v2331
    %vm2419 = vcmp.eq.f32.partialorder %v2418, 8.507059e+37
    %v2420 = vand.u32 %v2331, 2147483648
    %v2421 = vor.u32 1.1754944e-38, %v2420
    %v2422 = vsel %vm2419, %v2421, %v2417
    %v2423 = vmul.f32 1.0, %v2422
    %v2424 = vrcp.pop %v2332
    %v2425 = vmul.f32 %v2332, %v2424
    %v2426 = vsub.f32 1.0, %v2425
    %v2427 = vmul.f32 %v2424, %v2426
    %v2428 = vadd.f32 %v2424, %v2427
    %vm2429 = vweird.f32 %v2332
    %vm2430 = vweird.f32 %v2424
    %vm2431 = vmor %vm2429, %vm2430
    %v2432 = vsel %vm2431, %v2424, %v2428
    %v2433 = vand.u32 2147483647, %v2332
    %vm2434 = vcmp.eq.f32.partialorder %v2433, 8.507059e+37
    %v2435 = vand.u32 %v2332, 2147483648
    %v2436 = vor.u32 1.1754944e-38, %v2435
    %v2437 = vsel %vm2434, %v2436, %v2432
    %v2438 = vmul.f32 1.0, %v2437
    %v2439 = vrcp.pop %v2333
    %v2440 = vmul.f32 %v2333, %v2439
    %v2441 = vsub.f32 1.0, %v2440
    %v2442 = vmul.f32 %v2439, %v2441
    %v2443 = vadd.f32 %v2439, %v2442
    %vm2444 = vweird.f32 %v2333
    %vm2445 = vweird.f32 %v2439
    %vm2446 = vmor %vm2444, %vm2445
    %v2447 = vsel %vm2446, %v2439, %v2443
    %v2448 = vand.u32 2147483647, %v2333
    %vm2449 = vcmp.eq.f32.partialorder %v2448, 8.507059e+37
    %v2450 = vand.u32 %v2333, 2147483648
    %v2451 = vor.u32 1.1754944e-38, %v2450
    %v2452 = vsel %vm2449, %v2451, %v2447
    %v2453 = vmul.f32 1.0, %v2452
    %v2454 = vtanh.pop %v2294
    %v2455 = vtanh.pop %v2295
    %v2456 = vtanh.pop %v2296
    %v2457 = vtanh.pop %v2297
    %v2458 = vtanh.pop %v2298
    %v2459 = vtanh.pop %v2299
    %v2460 = vtanh.pop %v2300
    %v2461 = vtanh.pop %v2301
    %v2470 = vrot.slane %v2152, 7
    %v2471 = vrot.slane %v2153, 7
    %v2472 = vrot.slane %v2154, 7
    %v2473 = vrot.slane %v2155, 7
    %v2474 = vrot.slane %v2156, 7
    %v2475 = vrot.slane %v2157, 7
    %v2476 = vrot.slane %v2158, 7
    %v2477 = vrot.slane %v2159, 7
    %v2486 = vmul.f32 %v2348, %v2470
    %v2487 = vmul.f32 %v2363, %v2471
    %v2488 = vmul.f32 %v2378, %v2472
    %v2489 = vmul.f32 %v2393, %v2473
    %v2490 = vmul.f32 %v2408, %v2474
    %v2491 = vmul.f32 %v2423, %v2475
    %v2492 = vmul.f32 %v2438, %v2476
    %v2493 = vmul.f32 %v2453, %v2477
    %2502 = vrot.lane.b32.xlu0 %v2454, 64
    %v2503 = vpop.permute.xlu0 %2502
    %2504 = vrot.lane.b32.xlu0 %v2455, 64
    %v2505 = vpop.permute.xlu0 %2504
    %2506 = vrot.lane.b32.xlu0 %v2456, 64
    %v2507 = vpop.permute.xlu0 %2506
    %2508 = vrot.lane.b32.xlu0 %v2457, 64
    %v2509 = vpop.permute.xlu0 %2508
    %2510 = vrot.lane.b32.xlu0 %v2458, 64
    %v2511 = vpop.permute.xlu0 %2510
    %2512 = vrot.lane.b32.xlu0 %v2459, 64
    %v2513 = vpop.permute.xlu0 %2512
    %2514 = vrot.lane.b32.xlu0 %v2460, 64
    %v2515 = vpop.permute.xlu0 %2514
    %2516 = vrot.lane.b32.xlu0 %v2461, 64
    %v2517 = vpop.permute.xlu0 %2516
    %v2526 = vmul.f32 %v2348, %v2503
    %v2527 = vmul.f32 %v2363, %v2505
    %v2528 = vmul.f32 %v2378, %v2507
    %v2529 = vmul.f32 %v2393, %v2509
    %v2530 = vmul.f32 %v2408, %v2511
    %v2531 = vmul.f32 %v2423, %v2513
    %v2532 = vmul.f32 %v2438, %v2515
    %v2533 = vmul.f32 %v2453, %v2517
    %2542 = vrot.lane.b32.xlu0 %v2526, 32
    %v2543 = vpop.permute.xlu0 %2542
    %2544 = vrot.lane.b32.xlu0 %v2527, 32
    %v2545 = vpop.permute.xlu0 %2544
    %2546 = vrot.lane.b32.xlu0 %v2528, 32
    %v2547 = vpop.permute.xlu0 %2546
    %2548 = vrot.lane.b32.xlu0 %v2529, 32
    %v2549 = vpop.permute.xlu0 %2548
    %2550 = vrot.lane.b32.xlu0 %v2530, 32
    %v2551 = vpop.permute.xlu0 %2550
    %2552 = vrot.lane.b32.xlu0 %v2531, 32
    %v2553 = vpop.permute.xlu0 %2552
    %2554 = vrot.lane.b32.xlu0 %v2532, 32
    %v2555 = vpop.permute.xlu0 %2554
    %2556 = vrot.lane.b32.xlu0 %v2533, 32
    %v2557 = vpop.permute.xlu0 %2556
    %v2566 = vadd.f32 %v2486, %v2543
    %v2567 = vadd.f32 %v2487, %v2545
    %v2568 = vadd.f32 %v2488, %v2547
    %v2569 = vadd.f32 %v2489, %v2549
    %v2570 = vadd.f32 %v2490, %v2551
    %v2571 = vadd.f32 %v2491, %v2553
    %v2572 = vadd.f32 %v2492, %v2555
    %v2573 = vadd.f32 %v2493, %v2557
    %v2574 = vtanh.pop %v2566
    %v2575 = vtanh.pop %v2567
    %v2576 = vtanh.pop %v2568
    %v2577 = vtanh.pop %v2569
    %v2578 = vtanh.pop %v2570
    %v2579 = vtanh.pop %v2571
    %v2580 = vtanh.pop %v2572
    %v2581 = vtanh.pop %v2573
    %2590 = vrot.lane.b32.xlu0 %v2574, 64
    %v2591 = vpop.permute.xlu0 %2590
    %2592 = vrot.lane.b32.xlu0 %v2575, 64
    %v2593 = vpop.permute.xlu0 %2592
    %2594 = vrot.lane.b32.xlu0 %v2576, 64
    %v2595 = vpop.permute.xlu0 %2594
    %2596 = vrot.lane.b32.xlu0 %v2577, 64
    %v2597 = vpop.permute.xlu0 %2596
    %2598 = vrot.lane.b32.xlu0 %v2578, 64
    %v2599 = vpop.permute.xlu0 %2598
    %2600 = vrot.lane.b32.xlu0 %v2579, 64
    %v2601 = vpop.permute.xlu0 %2600
    %2602 = vrot.lane.b32.xlu0 %v2580, 64
    %v2603 = vpop.permute.xlu0 %2602
    %2604 = vrot.lane.b32.xlu0 %v2581, 64
    %v2605 = vpop.permute.xlu0 %2604
    %v2614 = vmul.f32 %v2348, %v2591
    %v2615 = vmul.f32 %v2363, %v2593
    %v2616 = vmul.f32 %v2378, %v2595
    %v2617 = vmul.f32 %v2393, %v2597
    %v2618 = vmul.f32 %v2408, %v2599
    %v2619 = vmul.f32 %v2423, %v2601
    %v2620 = vmul.f32 %v2438, %v2603
    %v2621 = vmul.f32 %v2453, %v2605
    %v2630 = vrot.slane %v2615, 7
    %v2631 = vsel %vm591, %v2630, %v2614
    %v2632 = vrot.slane %v2616, 6
    %v2633 = vsel %vm594, %v2632, %v2631
    %v2634 = vrot.slane %v2617, 5
    %v2635 = vrot.slane %v2618, 4
    %v2636 = vsel %vm576, %v2635, %v2634
    %v2637 = vrot.slane %v2619, 3
    %v2638 = vsel %vm579, %v2637, %v2636
    %v2639 = vrot.slane %v2620, 2
    %v2640 = vsel %vm582, %v2639, %v2638
    %v2641 = vrot.slane %v2621, 1
    %v2642 = vsel %vm585, %v2641, %v2640
    %2643 = vrot.lane.b32.xlu0 %v2633, 32
    %v2644 = vpop.permute.xlu0 %2643
    %2645 = vrot.lane.b32.xlu0 %v2642, 32
    %v2646 = vpop.permute.xlu0 %2645
    %s2649 = scalar_lea.vmem [#allocation2], 40
    %vm2650 = vcmask 261125
    %2651 = vst.msk [vmem:[%s2649 - $0x5] sm:$0xe0] %vm2650, %v2644
    %vm2652 = vcmask 258048
    %2653 = vst.msk [vmem:[%s2649 + $0x3] sm:$0x1f] %vm2652, %v2646
    %v2654 = vrot.slane %v2614, 5
    %v2655 = vrot.slane %v2615, 4
    %v2656 = vsel %vm576, %v2655, %v2654
    %v2657 = vrot.slane %v2616, 3
    %v2658 = vsel %vm579, %v2657, %v2656
    %v2659 = vrot.slane %v2617, 2
    %v2660 = vsel %vm582, %v2659, %v2658
    %v2661 = vrot.slane %v2618, 1
    %v2662 = vsel %vm585, %v2661, %v2660
    %v2663 = vsel %vm588, %v2619, %v2662
    %v2664 = vrot.slane %v2620, 7
    %v2665 = vsel %vm591, %v2664, %v2663
    %v2666 = vrot.slane %v2621, 6
    %v2667 = vsel %vm594, %v2666, %v2665
    %2668 = vrot.lane.b32.xlu0 %v2667, 32
    %v2669 = vpop.permute.xlu0 %2668
    %v2670 = vsel %vm191, %v2669, 0
    %2672 = vmatpush.msra.mxu0 0.0
    %2673 = vmatpush.msra.mxu0 0.0
    %2674 = vmatpush.msra.mxu0 0.0
    %2675 = vmatpush.msra.mxu0 0.0
    %2676 = vmatpush.msra.mxu0 0.0
    %2677 = vmatpush.msra.mxu0 0.0
    %2678 = vmatpush.msra.mxu0 0.0
    %2679 = vmatpush.msra.mxu0 0.0
    %2680 = vmatpush.msra.mxu0 0.0
    %2681 = vmatpush.msra.mxu0 0.0
    %2682 = vmatpush.msra.mxu0 0.0
    %2683 = vmatpush.msra.mxu0 0.0
    %2684 = vmatpush.msra.mxu0 %v106
    %2685 = vmatpush.msra.mxu0 %v105
    %2686 = vmatpush.msra.mxu0 %v104
    %2687 = vmatpush.msra.mxu0 %v103
    %2688 = vmatmul.f32.gmra.mxu0 %v2670
    %v2689 = vpop.f32.mrf.mxu0
    %v2690 = vadd.f32 0.0, %v2689
    %2691 = vdwg.mxu0
    %v2693 = vrot.slane %v2690, 2
    %v2694 = vrot.slane %v2690, 3
    %v2695 = vrot.slane %v2690, 4
    %v2696 = vrot.slane %v2690, 5
    %v2697 = vrot.slane %v2690, 6
    %v2698 = vrot.slane %v2690, 7
    %v2699 = vrot.slane %v2690, 1
    %v2708 = vadd.f32 %v166, %v2693
    %v2709 = vadd.f32 %v169, %v2694
    %v2710 = vadd.f32 %v172, %v2695
    %v2711 = vadd.f32 %v175, %v2696
    %v2712 = vadd.f32 %v178, %v2697
    %v2713 = vadd.f32 %v181, %v2698
    %v2714 = vadd.f32 %v184, %v2690
    %v2715 = vadd.f32 %v187, %v2699
    %v2716 = vxor.u32 %v2708, 2147483648
    %v2717 = vxor.u32 %v2709, 2147483648
    %v2718 = vxor.u32 %v2710, 2147483648
    %v2719 = vxor.u32 %v2711, 2147483648
    %v2720 = vxor.u32 %v2712, 2147483648
    %v2721 = vxor.u32 %v2713, 2147483648
    %v2722 = vxor.u32 %v2714, 2147483648
    %v2723 = vxor.u32 %v2715, 2147483648
    %v2724 = vmul.f32 %v2716, 1.442695
    %v2725 = vpow.pop %v2724
    %v2726 = vmul.f32 %v2717, 1.442695
    %v2727 = vpow.pop %v2726
    %v2728 = vmul.f32 %v2718, 1.442695
    %v2729 = vpow.pop %v2728
    %v2730 = vmul.f32 %v2719, 1.442695
    %v2731 = vpow.pop %v2730
    %v2732 = vmul.f32 %v2720, 1.442695
    %v2733 = vpow.pop %v2732
    %v2734 = vmul.f32 %v2721, 1.442695
    %v2735 = vpow.pop %v2734
    %v2736 = vmul.f32 %v2722, 1.442695
    %v2737 = vpow.pop %v2736
    %v2738 = vmul.f32 %v2723, 1.442695
    %v2739 = vpow.pop %v2738
    %v2740 = vadd.f32 %v2725, 1.0
    %v2741 = vadd.f32 %v2727, 1.0
    %v2742 = vadd.f32 %v2729, 1.0
    %v2743 = vadd.f32 %v2731, 1.0
    %v2744 = vadd.f32 %v2733, 1.0
    %v2745 = vadd.f32 %v2735, 1.0
    %v2746 = vadd.f32 %v2737, 1.0
    %v2747 = vadd.f32 %v2739, 1.0
    %v2748 = vrcp.pop %v2740
    %v2749 = vmul.f32 %v2740, %v2748
    %v2750 = vsub.f32 1.0, %v2749
    %v2751 = vmul.f32 %v2748, %v2750
    %v2752 = vadd.f32 %v2748, %v2751
    %vm2753 = vweird.f32 %v2740
    %vm2754 = vweird.f32 %v2748
    %vm2755 = vmor %vm2753, %vm2754
    %v2756 = vsel %vm2755, %v2748, %v2752
    %v2757 = vand.u32 2147483647, %v2740
    %vm2758 = vcmp.eq.f32.partialorder %v2757, 8.507059e+37
    %v2759 = vand.u32 %v2740, 2147483648
    %v2760 = vor.u32 1.1754944e-38, %v2759
    %v2761 = vsel %vm2758, %v2760, %v2756
    %v2762 = vmul.f32 1.0, %v2761
    %v2763 = vrcp.pop %v2741
    %v2764 = vmul.f32 %v2741, %v2763
    %v2765 = vsub.f32 1.0, %v2764
    %v2766 = vmul.f32 %v2763, %v2765
    %v2767 = vadd.f32 %v2763, %v2766
    %vm2768 = vweird.f32 %v2741
    %vm2769 = vweird.f32 %v2763
    %vm2770 = vmor %vm2768, %vm2769
    %v2771 = vsel %vm2770, %v2763, %v2767
    %v2772 = vand.u32 2147483647, %v2741
    %vm2773 = vcmp.eq.f32.partialorder %v2772, 8.507059e+37
    %v2774 = vand.u32 %v2741, 2147483648
    %v2775 = vor.u32 1.1754944e-38, %v2774
    %v2776 = vsel %vm2773, %v2775, %v2771
    %v2777 = vmul.f32 1.0, %v2776
    %v2778 = vrcp.pop %v2742
    %v2779 = vmul.f32 %v2742, %v2778
    %v2780 = vsub.f32 1.0, %v2779
    %v2781 = vmul.f32 %v2778, %v2780
    %v2782 = vadd.f32 %v2778, %v2781
    %vm2783 = vweird.f32 %v2742
    %vm2784 = vweird.f32 %v2778
    %vm2785 = vmor %vm2783, %vm2784
    %v2786 = vsel %vm2785, %v2778, %v2782
    %v2787 = vand.u32 2147483647, %v2742
    %vm2788 = vcmp.eq.f32.partialorder %v2787, 8.507059e+37
    %v2789 = vand.u32 %v2742, 2147483648
    %v2790 = vor.u32 1.1754944e-38, %v2789
    %v2791 = vsel %vm2788, %v2790, %v2786
    %v2792 = vmul.f32 1.0, %v2791
    %v2793 = vrcp.pop %v2743
    %v2794 = vmul.f32 %v2743, %v2793
    %v2795 = vsub.f32 1.0, %v2794
    %v2796 = vmul.f32 %v2793, %v2795
    %v2797 = vadd.f32 %v2793, %v2796
    %vm2798 = vweird.f32 %v2743
    %vm2799 = vweird.f32 %v2793
    %vm2800 = vmor %vm2798, %vm2799
    %v2801 = vsel %vm2800, %v2793, %v2797
    %v2802 = vand.u32 2147483647, %v2743
    %vm2803 = vcmp.eq.f32.partialorder %v2802, 8.507059e+37
    %v2804 = vand.u32 %v2743, 2147483648
    %v2805 = vor.u32 1.1754944e-38, %v2804
    %v2806 = vsel %vm2803, %v2805, %v2801
    %v2807 = vmul.f32 1.0, %v2806
    %v2808 = vrcp.pop %v2744
    %v2809 = vmul.f32 %v2744, %v2808
    %v2810 = vsub.f32 1.0, %v2809
    %v2811 = vmul.f32 %v2808, %v2810
    %v2812 = vadd.f32 %v2808, %v2811
    %vm2813 = vweird.f32 %v2744
    %vm2814 = vweird.f32 %v2808
    %vm2815 = vmor %vm2813, %vm2814
    %v2816 = vsel %vm2815, %v2808, %v2812
    %v2817 = vand.u32 2147483647, %v2744
    %vm2818 = vcmp.eq.f32.partialorder %v2817, 8.507059e+37
    %v2819 = vand.u32 %v2744, 2147483648
    %v2820 = vor.u32 1.1754944e-38, %v2819
    %v2821 = vsel %vm2818, %v2820, %v2816
    %v2822 = vmul.f32 1.0, %v2821
    %v2823 = vrcp.pop %v2745
    %v2824 = vmul.f32 %v2745, %v2823
    %v2825 = vsub.f32 1.0, %v2824
    %v2826 = vmul.f32 %v2823, %v2825
    %v2827 = vadd.f32 %v2823, %v2826
    %vm2828 = vweird.f32 %v2745
    %vm2829 = vweird.f32 %v2823
    %vm2830 = vmor %vm2828, %vm2829
    %v2831 = vsel %vm2830, %v2823, %v2827
    %v2832 = vand.u32 2147483647, %v2745
    %vm2833 = vcmp.eq.f32.partialorder %v2832, 8.507059e+37
    %v2834 = vand.u32 %v2745, 2147483648
    %v2835 = vor.u32 1.1754944e-38, %v2834
    %v2836 = vsel %vm2833, %v2835, %v2831
    %v2837 = vmul.f32 1.0, %v2836
    %v2838 = vrcp.pop %v2746
    %v2839 = vmul.f32 %v2746, %v2838
    %v2840 = vsub.f32 1.0, %v2839
    %v2841 = vmul.f32 %v2838, %v2840
    %v2842 = vadd.f32 %v2838, %v2841
    %vm2843 = vweird.f32 %v2746
    %vm2844 = vweird.f32 %v2838
    %vm2845 = vmor %vm2843, %vm2844
    %v2846 = vsel %vm2845, %v2838, %v2842
    %v2847 = vand.u32 2147483647, %v2746
    %vm2848 = vcmp.eq.f32.partialorder %v2847, 8.507059e+37
    %v2849 = vand.u32 %v2746, 2147483648
    %v2850 = vor.u32 1.1754944e-38, %v2849
    %v2851 = vsel %vm2848, %v2850, %v2846
    %v2852 = vmul.f32 1.0, %v2851
    %v2853 = vrcp.pop %v2747
    %v2854 = vmul.f32 %v2747, %v2853
    %v2855 = vsub.f32 1.0, %v2854
    %v2856 = vmul.f32 %v2853, %v2855
    %v2857 = vadd.f32 %v2853, %v2856
    %vm2858 = vweird.f32 %v2747
    %vm2859 = vweird.f32 %v2853
    %vm2860 = vmor %vm2858, %vm2859
    %v2861 = vsel %vm2860, %v2853, %v2857
    %v2862 = vand.u32 2147483647, %v2747
    %vm2863 = vcmp.eq.f32.partialorder %v2862, 8.507059e+37
    %v2864 = vand.u32 %v2747, 2147483648
    %v2865 = vor.u32 1.1754944e-38, %v2864
    %v2866 = vsel %vm2863, %v2865, %v2861
    %v2867 = vmul.f32 1.0, %v2866
    %v2868 = vtanh.pop %v2708
    %v2869 = vtanh.pop %v2709
    %v2870 = vtanh.pop %v2710
    %v2871 = vtanh.pop %v2711
    %v2872 = vtanh.pop %v2712
    %v2873 = vtanh.pop %v2713
    %v2874 = vtanh.pop %v2714
    %v2875 = vtanh.pop %v2715
    %v2884 = vrot.slane %v2566, 7
    %v2885 = vrot.slane %v2567, 7
    %v2886 = vrot.slane %v2568, 7
    %v2887 = vrot.slane %v2569, 7
    %v2888 = vrot.slane %v2570, 7
    %v2889 = vrot.slane %v2571, 7
    %v2890 = vrot.slane %v2572, 7
    %v2891 = vrot.slane %v2573, 7
    %v2900 = vmul.f32 %v2762, %v2884
    %v2901 = vmul.f32 %v2777, %v2885
    %v2902 = vmul.f32 %v2792, %v2886
    %v2903 = vmul.f32 %v2807, %v2887
    %v2904 = vmul.f32 %v2822, %v2888
    %v2905 = vmul.f32 %v2837, %v2889
    %v2906 = vmul.f32 %v2852, %v2890
    %v2907 = vmul.f32 %v2867, %v2891
    %2916 = vrot.lane.b32.xlu0 %v2868, 64
    %v2917 = vpop.permute.xlu0 %2916
    %2918 = vrot.lane.b32.xlu0 %v2869, 64
    %v2919 = vpop.permute.xlu0 %2918
    %2920 = vrot.lane.b32.xlu0 %v2870, 64
    %v2921 = vpop.permute.xlu0 %2920
    %2922 = vrot.lane.b32.xlu0 %v2871, 64
    %v2923 = vpop.permute.xlu0 %2922
    %2924 = vrot.lane.b32.xlu0 %v2872, 64
    %v2925 = vpop.permute.xlu0 %2924
    %2926 = vrot.lane.b32.xlu0 %v2873, 64
    %v2927 = vpop.permute.xlu0 %2926
    %2928 = vrot.lane.b32.xlu0 %v2874, 64
    %v2929 = vpop.permute.xlu0 %2928
    %2930 = vrot.lane.b32.xlu0 %v2875, 64
    %v2931 = vpop.permute.xlu0 %2930
    %v2940 = vmul.f32 %v2762, %v2917
    %v2941 = vmul.f32 %v2777, %v2919
    %v2942 = vmul.f32 %v2792, %v2921
    %v2943 = vmul.f32 %v2807, %v2923
    %v2944 = vmul.f32 %v2822, %v2925
    %v2945 = vmul.f32 %v2837, %v2927
    %v2946 = vmul.f32 %v2852, %v2929
    %v2947 = vmul.f32 %v2867, %v2931
    %2956 = vrot.lane.b32.xlu0 %v2940, 32
    %v2957 = vpop.permute.xlu0 %2956
    %2958 = vrot.lane.b32.xlu0 %v2941, 32
    %v2959 = vpop.permute.xlu0 %2958
    %2960 = vrot.lane.b32.xlu0 %v2942, 32
    %v2961 = vpop.permute.xlu0 %2960
    %2962 = vrot.lane.b32.xlu0 %v2943, 32
    %v2963 = vpop.permute.xlu0 %2962
    %2964 = vrot.lane.b32.xlu0 %v2944, 32
    %v2965 = vpop.permute.xlu0 %2964
    %2966 = vrot.lane.b32.xlu0 %v2945, 32
    %v2967 = vpop.permute.xlu0 %2966
    %2968 = vrot.lane.b32.xlu0 %v2946, 32
    %v2969 = vpop.permute.xlu0 %2968
    %2970 = vrot.lane.b32.xlu0 %v2947, 32
    %v2971 = vpop.permute.xlu0 %2970
    %v2980 = vadd.f32 %v2900, %v2957
    %v2981 = vadd.f32 %v2901, %v2959
    %v2982 = vadd.f32 %v2902, %v2961
    %v2983 = vadd.f32 %v2903, %v2963
    %v2984 = vadd.f32 %v2904, %v2965
    %v2985 = vadd.f32 %v2905, %v2967
    %v2986 = vadd.f32 %v2906, %v2969
    %v2987 = vadd.f32 %v2907, %v2971
    %v2988 = vtanh.pop %v2980
    %v2989 = vtanh.pop %v2981
    %v2990 = vtanh.pop %v2982
    %v2991 = vtanh.pop %v2983
    %v2992 = vtanh.pop %v2984
    %v2993 = vtanh.pop %v2985
    %v2994 = vtanh.pop %v2986
    %v2995 = vtanh.pop %v2987
    %3004 = vrot.lane.b32.xlu0 %v2988, 64
    %v3005 = vpop.permute.xlu0 %3004
    %3006 = vrot.lane.b32.xlu0 %v2989, 64
    %v3007 = vpop.permute.xlu0 %3006
    %3008 = vrot.lane.b32.xlu0 %v2990, 64
    %v3009 = vpop.permute.xlu0 %3008
    %3010 = vrot.lane.b32.xlu0 %v2991, 64
    %v3011 = vpop.permute.xlu0 %3010
    %3012 = vrot.lane.b32.xlu0 %v2992, 64
    %v3013 = vpop.permute.xlu0 %3012
    %3014 = vrot.lane.b32.xlu0 %v2993, 64
    %v3015 = vpop.permute.xlu0 %3014
    %3016 = vrot.lane.b32.xlu0 %v2994, 64
    %v3017 = vpop.permute.xlu0 %3016
    %3018 = vrot.lane.b32.xlu0 %v2995, 64
    %v3019 = vpop.permute.xlu0 %3018
    %v3028 = vmul.f32 %v2762, %v3005
    %v3029 = vmul.f32 %v2777, %v3007
    %v3030 = vmul.f32 %v2792, %v3009
    %v3031 = vmul.f32 %v2807, %v3011
    %v3032 = vmul.f32 %v2822, %v3013
    %v3033 = vmul.f32 %v2837, %v3015
    %v3034 = vmul.f32 %v2852, %v3017
    %v3035 = vmul.f32 %v2867, %v3019
    %v3044 = vrot.slane %v3029, 7
    %v3045 = vsel %vm594, %v3044, %v3028
    %v3046 = vrot.slane %v3030, 6
    %v3047 = vrot.slane %v3031, 5
    %v3048 = vsel %vm576, %v3047, %v3046
    %v3049 = vrot.slane %v3032, 4
    %v3050 = vsel %vm579, %v3049, %v3048
    %v3051 = vrot.slane %v3033, 3
    %v3052 = vsel %vm582, %v3051, %v3050
    %v3053 = vrot.slane %v3034, 2
    %v3054 = vsel %vm585, %v3053, %v3052
    %v3055 = vrot.slane %v3035, 1
    %v3056 = vsel %vm588, %v3055, %v3054
    %3057 = vrot.lane.b32.xlu0 %v3045, 32
    %v3058 = vpop.permute.xlu0 %3057
    %3059 = vrot.lane.b32.xlu0 %v3056, 32
    %v3060 = vpop.permute.xlu0 %3059
    %s3063 = scalar_lea.vmem [#allocation2], 48
    %vm3064 = vcmask 261126
    %3065 = vst.msk [vmem:[%s3063 - $0x6] sm:$0xc0] %vm3064, %v3058
    %vm3066 = vcmask 259072
    %3067 = vst.msk [vmem:[%s3063 + $0x2] sm:$0x3f] %vm3066, %v3060
    %v3068 = vrot.slane %v3028, 6
    %v3069 = vrot.slane %v3029, 5
    %v3070 = vsel %vm576, %v3069, %v3068
    %v3071 = vrot.slane %v3030, 4
    %v3072 = vsel %vm579, %v3071, %v3070
    %v3073 = vrot.slane %v3031, 3
    %v3074 = vsel %vm582, %v3073, %v3072
    %v3075 = vrot.slane %v3032, 2
    %v3076 = vsel %vm585, %v3075, %v3074
    %v3077 = vrot.slane %v3033, 1
    %v3078 = vsel %vm588, %v3077, %v3076
    %v3079 = vsel %vm591, %v3034, %v3078
    %v3080 = vrot.slane %v3035, 7
    %v3081 = vsel %vm594, %v3080, %v3079
    %3082 = vrot.lane.b32.xlu0 %v3081, 32
    %v3083 = vpop.permute.xlu0 %3082
    %v3084 = vsel %vm191, %v3083, 0
    %3086 = vmatpush.msra.mxu0 0.0
    %3087 = vmatpush.msra.mxu0 0.0
    %3088 = vmatpush.msra.mxu0 0.0
    %3089 = vmatpush.msra.mxu0 0.0
    %3090 = vmatpush.msra.mxu0 0.0
    %3091 = vmatpush.msra.mxu0 0.0
    %3092 = vmatpush.msra.mxu0 0.0
    %3093 = vmatpush.msra.mxu0 0.0
    %3094 = vmatpush.msra.mxu0 0.0
    %3095 = vmatpush.msra.mxu0 0.0
    %3096 = vmatpush.msra.mxu0 0.0
    %3097 = vmatpush.msra.mxu0 0.0
    %3098 = vmatpush.msra.mxu0 %v106
    %3099 = vmatpush.msra.mxu0 %v105
    %3100 = vmatpush.msra.mxu0 %v104
    %3101 = vmatpush.msra.mxu0 %v103
    %3102 = vmatmul.f32.gmra.mxu0 %v3084
    %v3103 = vpop.f32.mrf.mxu0
    %v3104 = vadd.f32 0.0, %v3103
    %3105 = vdwg.mxu0
    %v3107 = vrot.slane %v3104, 1
    %v3108 = vrot.slane %v3104, 2
    %v3109 = vrot.slane %v3104, 3
    %v3110 = vrot.slane %v3104, 4
    %v3111 = vrot.slane %v3104, 5
    %v3112 = vrot.slane %v3104, 6
    %v3113 = vrot.slane %v3104, 7
    %v3122 = vadd.f32 %v166, %v3107
    %v3123 = vadd.f32 %v169, %v3108
    %v3124 = vadd.f32 %v172, %v3109
    %v3125 = vadd.f32 %v175, %v3110
    %v3126 = vadd.f32 %v178, %v3111
    %v3127 = vadd.f32 %v181, %v3112
    %v3128 = vadd.f32 %v184, %v3113
    %v3129 = vadd.f32 %v187, %v3104
    %v3130 = vxor.u32 %v3122, 2147483648
    %v3131 = vxor.u32 %v3123, 2147483648
    %v3132 = vxor.u32 %v3124, 2147483648
    %v3133 = vxor.u32 %v3125, 2147483648
    %v3134 = vxor.u32 %v3126, 2147483648
    %v3135 = vxor.u32 %v3127, 2147483648
    %v3136 = vxor.u32 %v3128, 2147483648
    %v3137 = vxor.u32 %v3129, 2147483648
    %v3138 = vmul.f32 %v3130, 1.442695
    %v3139 = vpow.pop %v3138
    %v3140 = vmul.f32 %v3131, 1.442695
    %v3141 = vpow.pop %v3140
    %v3142 = vmul.f32 %v3132, 1.442695
    %v3143 = vpow.pop %v3142
    %v3144 = vmul.f32 %v3133, 1.442695
    %v3145 = vpow.pop %v3144
    %v3146 = vmul.f32 %v3134, 1.442695
    %v3147 = vpow.pop %v3146
    %v3148 = vmul.f32 %v3135, 1.442695
    %v3149 = vpow.pop %v3148
    %v3150 = vmul.f32 %v3136, 1.442695
    %v3151 = vpow.pop %v3150
    %v3152 = vmul.f32 %v3137, 1.442695
    %v3153 = vpow.pop %v3152
    %v3154 = vadd.f32 %v3139, 1.0
    %v3155 = vadd.f32 %v3141, 1.0
    %v3156 = vadd.f32 %v3143, 1.0
    %v3157 = vadd.f32 %v3145, 1.0
    %v3158 = vadd.f32 %v3147, 1.0
    %v3159 = vadd.f32 %v3149, 1.0
    %v3160 = vadd.f32 %v3151, 1.0
    %v3161 = vadd.f32 %v3153, 1.0
    %v3162 = vrcp.pop %v3154
    %v3163 = vmul.f32 %v3154, %v3162
    %v3164 = vsub.f32 1.0, %v3163
    %v3165 = vmul.f32 %v3162, %v3164
    %v3166 = vadd.f32 %v3162, %v3165
    %vm3167 = vweird.f32 %v3154
    %vm3168 = vweird.f32 %v3162
    %vm3169 = vmor %vm3167, %vm3168
    %v3170 = vsel %vm3169, %v3162, %v3166
    %v3171 = vand.u32 2147483647, %v3154
    %vm3172 = vcmp.eq.f32.partialorder %v3171, 8.507059e+37
    %v3173 = vand.u32 %v3154, 2147483648
    %v3174 = vor.u32 1.1754944e-38, %v3173
    %v3175 = vsel %vm3172, %v3174, %v3170
    %v3176 = vmul.f32 1.0, %v3175
    %v3177 = vrcp.pop %v3155
    %v3178 = vmul.f32 %v3155, %v3177
    %v3179 = vsub.f32 1.0, %v3178
    %v3180 = vmul.f32 %v3177, %v3179
    %v3181 = vadd.f32 %v3177, %v3180
    %vm3182 = vweird.f32 %v3155
    %vm3183 = vweird.f32 %v3177
    %vm3184 = vmor %vm3182, %vm3183
    %v3185 = vsel %vm3184, %v3177, %v3181
    %v3186 = vand.u32 2147483647, %v3155
    %vm3187 = vcmp.eq.f32.partialorder %v3186, 8.507059e+37
    %v3188 = vand.u32 %v3155, 2147483648
    %v3189 = vor.u32 1.1754944e-38, %v3188
    %v3190 = vsel %vm3187, %v3189, %v3185
    %v3191 = vmul.f32 1.0, %v3190
    %v3192 = vrcp.pop %v3156
    %v3193 = vmul.f32 %v3156, %v3192
    %v3194 = vsub.f32 1.0, %v3193
    %v3195 = vmul.f32 %v3192, %v3194
    %v3196 = vadd.f32 %v3192, %v3195
    %vm3197 = vweird.f32 %v3156
    %vm3198 = vweird.f32 %v3192
    %vm3199 = vmor %vm3197, %vm3198
    %v3200 = vsel %vm3199, %v3192, %v3196
    %v3201 = vand.u32 2147483647, %v3156
    %vm3202 = vcmp.eq.f32.partialorder %v3201, 8.507059e+37
    %v3203 = vand.u32 %v3156, 2147483648
    %v3204 = vor.u32 1.1754944e-38, %v3203
    %v3205 = vsel %vm3202, %v3204, %v3200
    %v3206 = vmul.f32 1.0, %v3205
    %v3207 = vrcp.pop %v3157
    %v3208 = vmul.f32 %v3157, %v3207
    %v3209 = vsub.f32 1.0, %v3208
    %v3210 = vmul.f32 %v3207, %v3209
    %v3211 = vadd.f32 %v3207, %v3210
    %vm3212 = vweird.f32 %v3157
    %vm3213 = vweird.f32 %v3207
    %vm3214 = vmor %vm3212, %vm3213
    %v3215 = vsel %vm3214, %v3207, %v3211
    %v3216 = vand.u32 2147483647, %v3157
    %vm3217 = vcmp.eq.f32.partialorder %v3216, 8.507059e+37
    %v3218 = vand.u32 %v3157, 2147483648
    %v3219 = vor.u32 1.1754944e-38, %v3218
    %v3220 = vsel %vm3217, %v3219, %v3215
    %v3221 = vmul.f32 1.0, %v3220
    %v3222 = vrcp.pop %v3158
    %v3223 = vmul.f32 %v3158, %v3222
    %v3224 = vsub.f32 1.0, %v3223
    %v3225 = vmul.f32 %v3222, %v3224
    %v3226 = vadd.f32 %v3222, %v3225
    %vm3227 = vweird.f32 %v3158
    %vm3228 = vweird.f32 %v3222
    %vm3229 = vmor %vm3227, %vm3228
    %v3230 = vsel %vm3229, %v3222, %v3226
    %v3231 = vand.u32 2147483647, %v3158
    %vm3232 = vcmp.eq.f32.partialorder %v3231, 8.507059e+37
    %v3233 = vand.u32 %v3158, 2147483648
    %v3234 = vor.u32 1.1754944e-38, %v3233
    %v3235 = vsel %vm3232, %v3234, %v3230
    %v3236 = vmul.f32 1.0, %v3235
    %v3237 = vrcp.pop %v3159
    %v3238 = vmul.f32 %v3159, %v3237
    %v3239 = vsub.f32 1.0, %v3238
    %v3240 = vmul.f32 %v3237, %v3239
    %v3241 = vadd.f32 %v3237, %v3240
    %vm3242 = vweird.f32 %v3159
    %vm3243 = vweird.f32 %v3237
    %vm3244 = vmor %vm3242, %vm3243
    %v3245 = vsel %vm3244, %v3237, %v3241
    %v3246 = vand.u32 2147483647, %v3159
    %vm3247 = vcmp.eq.f32.partialorder %v3246, 8.507059e+37
    %v3248 = vand.u32 %v3159, 2147483648
    %v3249 = vor.u32 1.1754944e-38, %v3248
    %v3250 = vsel %vm3247, %v3249, %v3245
    %v3251 = vmul.f32 1.0, %v3250
    %v3252 = vrcp.pop %v3160
    %v3253 = vmul.f32 %v3160, %v3252
    %v3254 = vsub.f32 1.0, %v3253
    %v3255 = vmul.f32 %v3252, %v3254
    %v3256 = vadd.f32 %v3252, %v3255
    %vm3257 = vweird.f32 %v3160
    %vm3258 = vweird.f32 %v3252
    %vm3259 = vmor %vm3257, %vm3258
    %v3260 = vsel %vm3259, %v3252, %v3256
    %v3261 = vand.u32 2147483647, %v3160
    %vm3262 = vcmp.eq.f32.partialorder %v3261, 8.507059e+37
    %v3263 = vand.u32 %v3160, 2147483648
    %v3264 = vor.u32 1.1754944e-38, %v3263
    %v3265 = vsel %vm3262, %v3264, %v3260
    %v3266 = vmul.f32 1.0, %v3265
    %v3267 = vrcp.pop %v3161
    %v3268 = vmul.f32 %v3161, %v3267
    %v3269 = vsub.f32 1.0, %v3268
    %v3270 = vmul.f32 %v3267, %v3269
    %v3271 = vadd.f32 %v3267, %v3270
    %vm3272 = vweird.f32 %v3161
    %vm3273 = vweird.f32 %v3267
    %vm3274 = vmor %vm3272, %vm3273
    %v3275 = vsel %vm3274, %v3267, %v3271
    %v3276 = vand.u32 2147483647, %v3161
    %vm3277 = vcmp.eq.f32.partialorder %v3276, 8.507059e+37
    %v3278 = vand.u32 %v3161, 2147483648
    %v3279 = vor.u32 1.1754944e-38, %v3278
    %v3280 = vsel %vm3277, %v3279, %v3275
    %v3281 = vmul.f32 1.0, %v3280
    %v3282 = vtanh.pop %v3122
    %v3283 = vtanh.pop %v3123
    %v3284 = vtanh.pop %v3124
    %v3285 = vtanh.pop %v3125
    %v3286 = vtanh.pop %v3126
    %v3287 = vtanh.pop %v3127
    %v3288 = vtanh.pop %v3128
    %v3289 = vtanh.pop %v3129
    %v3298 = vrot.slane %v2980, 7
    %v3299 = vrot.slane %v2981, 7
    %v3300 = vrot.slane %v2982, 7
    %v3301 = vrot.slane %v2983, 7
    %v3302 = vrot.slane %v2984, 7
    %v3303 = vrot.slane %v2985, 7
    %v3304 = vrot.slane %v2986, 7
    %v3305 = vrot.slane %v2987, 7
    %v3314 = vmul.f32 %v3176, %v3298
    %v3315 = vmul.f32 %v3191, %v3299
    %v3316 = vmul.f32 %v3206, %v3300
    %v3317 = vmul.f32 %v3221, %v3301
    %v3318 = vmul.f32 %v3236, %v3302
    %v3319 = vmul.f32 %v3251, %v3303
    %v3320 = vmul.f32 %v3266, %v3304
    %v3321 = vmul.f32 %v3281, %v3305
    %3330 = vrot.lane.b32.xlu0 %v3282, 64
    %v3331 = vpop.permute.xlu0 %3330
    %3332 = vrot.lane.b32.xlu0 %v3283, 64
    %v3333 = vpop.permute.xlu0 %3332
    %3334 = vrot.lane.b32.xlu0 %v3284, 64
    %v3335 = vpop.permute.xlu0 %3334
    %3336 = vrot.lane.b32.xlu0 %v3285, 64
    %v3337 = vpop.permute.xlu0 %3336
    %3338 = vrot.lane.b32.xlu0 %v3286, 64
    %v3339 = vpop.permute.xlu0 %3338
    %3340 = vrot.lane.b32.xlu0 %v3287, 64
    %v3341 = vpop.permute.xlu0 %3340
    %3342 = vrot.lane.b32.xlu0 %v3288, 64
    %v3343 = vpop.permute.xlu0 %3342
    %3344 = vrot.lane.b32.xlu0 %v3289, 64
    %v3345 = vpop.permute.xlu0 %3344
    %v3354 = vmul.f32 %v3176, %v3331
    %v3355 = vmul.f32 %v3191, %v3333
    %v3356 = vmul.f32 %v3206, %v3335
    %v3357 = vmul.f32 %v3221, %v3337
    %v3358 = vmul.f32 %v3236, %v3339
    %v3359 = vmul.f32 %v3251, %v3341
    %v3360 = vmul.f32 %v3266, %v3343
    %v3361 = vmul.f32 %v3281, %v3345
    %3370 = vrot.lane.b32.xlu0 %v3354, 32
    %v3371 = vpop.permute.xlu0 %3370
    %3372 = vrot.lane.b32.xlu0 %v3355, 32
    %v3373 = vpop.permute.xlu0 %3372
    %3374 = vrot.lane.b32.xlu0 %v3356, 32
    %v3375 = vpop.permute.xlu0 %3374
    %3376 = vrot.lane.b32.xlu0 %v3357, 32
    %v3377 = vpop.permute.xlu0 %3376
    %3378 = vrot.lane.b32.xlu0 %v3358, 32
    %v3379 = vpop.permute.xlu0 %3378
    %3380 = vrot.lane.b32.xlu0 %v3359, 32
    %v3381 = vpop.permute.xlu0 %3380
    %3382 = vrot.lane.b32.xlu0 %v3360, 32
    %v3383 = vpop.permute.xlu0 %3382
    %3384 = vrot.lane.b32.xlu0 %v3361, 32
    %v3385 = vpop.permute.xlu0 %3384
    %v3394 = vadd.f32 %v3314, %v3371
    %v3395 = vadd.f32 %v3315, %v3373
    %v3396 = vadd.f32 %v3316, %v3375
    %v3397 = vadd.f32 %v3317, %v3377
    %v3398 = vadd.f32 %v3318, %v3379
    %v3399 = vadd.f32 %v3319, %v3381
    %v3400 = vadd.f32 %v3320, %v3383
    %v3401 = vadd.f32 %v3321, %v3385
    %v3402 = vtanh.pop %v3394
    %v3403 = vtanh.pop %v3395
    %v3404 = vtanh.pop %v3396
    %v3405 = vtanh.pop %v3397
    %v3406 = vtanh.pop %v3398
    %v3407 = vtanh.pop %v3399
    %v3408 = vtanh.pop %v3400
    %v3409 = vtanh.pop %v3401
    %3418 = vrot.lane.b32.xlu0 %v3402, 64
    %v3419 = vpop.permute.xlu0 %3418
    %3420 = vrot.lane.b32.xlu0 %v3403, 64
    %v3421 = vpop.permute.xlu0 %3420
    %3422 = vrot.lane.b32.xlu0 %v3404, 64
    %v3423 = vpop.permute.xlu0 %3422
    %3424 = vrot.lane.b32.xlu0 %v3405, 64
    %v3425 = vpop.permute.xlu0 %3424
    %3426 = vrot.lane.b32.xlu0 %v3406, 64
    %v3427 = vpop.permute.xlu0 %3426
    %3428 = vrot.lane.b32.xlu0 %v3407, 64
    %v3429 = vpop.permute.xlu0 %3428
    %3430 = vrot.lane.b32.xlu0 %v3408, 64
    %v3431 = vpop.permute.xlu0 %3430
    %3432 = vrot.lane.b32.xlu0 %v3409, 64
    %v3433 = vpop.permute.xlu0 %3432
    %v3442 = vmul.f32 %v3176, %v3419
    %v3443 = vmul.f32 %v3191, %v3421
    %v3444 = vmul.f32 %v3206, %v3423
    %v3445 = vmul.f32 %v3221, %v3425
    %v3446 = vmul.f32 %v3236, %v3427
    %v3447 = vmul.f32 %v3251, %v3429
    %v3448 = vmul.f32 %v3266, %v3431
    %v3449 = vmul.f32 %v3281, %v3433
    %v3458 = vrot.slane %v3443, 7
    %v3459 = vrot.slane %v3444, 6
    %v3460 = vsel %vm576, %v3459, %v3458
    %v3461 = vrot.slane %v3445, 5
    %v3462 = vsel %vm579, %v3461, %v3460
    %v3463 = vrot.slane %v3446, 4
    %v3464 = vsel %vm582, %v3463, %v3462
    %v3465 = vrot.slane %v3447, 3
    %v3466 = vsel %vm585, %v3465, %v3464
    %v3467 = vrot.slane %v3448, 2
    %v3468 = vsel %vm588, %v3467, %v3466
    %v3469 = vrot.slane %v3449, 1
    %v3470 = vsel %vm591, %v3469, %v3468
    %3471 = vrot.lane.b32.xlu0 %v3442, 32
    %v3472 = vpop.permute.xlu0 %3471
    %3473 = vrot.lane.b32.xlu0 %v3470, 32
    %v3474 = vpop.permute.xlu0 %3473
    %s3477 = scalar_lea.vmem [#allocation2], 56
    %vm3478 = vcmask 261127
    %3479 = vst.msk [vmem:[%s3477 - $0x7] sm:$0x80] %vm3478, %v3472
    %vm3480 = vcmask 260096
    %3481 = vst.msk [vmem:[%s3477 + $0x1] sm:$0x7f] %vm3480, %v3474
    %3482 = vrot.lane.b32.xlu0 %v3462, 32
    %v3483 = vpop.permute.xlu0 %3482
    %3485 = vst.msk [vmem:[#allocation11 - $0x7] sm:$0x80] %vm3478, %v3472
    %3486 = vst.msk [vmem:[#allocation11 + $0x1] sm:$0x7] %vm1824, %v3483
    %v3491 = vrot.slane %v3395, 7
    %v3492 = vrot.slane %v3396, 6
    %v3493 = vsel %vm576, %v3492, %v3491
    %v3494 = vrot.slane %v3397, 5
    %v3495 = vsel %vm579, %v3494, %v3493
    %3496 = vrot.lane.b32.xlu0 %v3394, 96
    %v3497 = vpop.permute.xlu0 %3496
    %3498 = vrot.lane.b32.xlu0 %v3495, 96
    %v3499 = vpop.permute.xlu0 %3498
    %3502 = vst.msk [vmem:[#allocation13 - $0x7] sm:$0x80] %vm3478, %v3497
    %3503 = vst.msk [vmem:[#allocation13 + $0x1] sm:$0x7] %vm1824, %v3499
    %v3504 = vld [vmem:[%s8] sm:$0xff]
    %v3505 = vld [vmem:[%s8 + $0x8] sm:$0xff]
    %v3506 = vld [vmem:[%s8 + $0x10] sm:$0xff]
    %v3507 = vld [vmem:[%s8 + $0x18] sm:$0xff]
    %v3508 = vld [vmem:[%s9] sm:$0xff]
    %v3509 = vld [vmem:[%s9 + $0x8] sm:$0xff]
    %v3510 = vld [vmem:[%s9 + $0x10] sm:$0xff]
    %v3511 = vld [vmem:[%s9 + $0x18] sm:$0xff]
    %v3512 = vld [vmem:[%s10] sm:$0x1]
    %v3513 = vld [vmem:[#allocation2] sm:$0xff]
    %v3514 = vld [vmem:[#allocation2 + $0x8] sm:$0xff]
    %v3515 = vld [vmem:[#allocation2 + $0x10] sm:$0xff]
    %v3516 = vld [vmem:[#allocation2 + $0x18] sm:$0xff]
    %v3517 = vld [vmem:[#allocation2 + $0x20] sm:$0xff]
    %v3518 = vld [vmem:[#allocation2 + $0x28] sm:$0xff]
    %v3519 = vld [vmem:[#allocation2 + $0x30] sm:$0xff]
    %v3520 = vld [vmem:[#allocation2 + $0x38] sm:$0xff]
    %v3522 = vperm.slane %v3512, 0
    %v3525 = vsel %vm191, %v3513, 0
    %v3528 = vsel %vm191, %v3514, 0
    %v3531 = vsel %vm191, %v3515, 0
    %v3534 = vsel %vm191, %v3516, 0
    %v3537 = vsel %vm191, %v3517, 0
    %v3540 = vsel %vm191, %v3518, 0
    %v3543 = vsel %vm191, %v3519, 0
    %v3546 = vsel %vm191, %v3520, 0
    %3548 = vmatpush.msra.mxu0 0.0
    %3549 = vmatpush.msra.mxu0 0.0
    %3550 = vmatpush.msra.mxu0 0.0
    %3551 = vmatpush.msra.mxu0 0.0
    %3552 = vmatpush.msra.mxu0 0.0
    %3553 = vmatpush.msra.mxu0 0.0
    %3554 = vmatpush.msra.mxu0 0.0
    %3555 = vmatpush.msra.mxu0 0.0
    %3556 = vmatpush.msra.mxu0 0.0
    %3557 = vmatpush.msra.mxu0 0.0
    %3558 = vmatpush.msra.mxu0 0.0
    %3559 = vmatpush.msra.mxu0 0.0
    %3560 = vmatpush.msra.mxu0 %v3507
    %3561 = vmatpush.msra.mxu0 %v3506
    %3562 = vmatpush.msra.mxu0 %v3505
    %3563 = vmatpush.msra.mxu0 %v3504
    %3564 = vmatmul.f32.gmra.mxu0 %v3525
    %v3565 = vpop.f32.mrf.mxu0
    %v3566 = vadd.f32 %v3522, %v3565
    %3567 = vmatmul.f32.gmra.mxu0 %v3528
    %v3568 = vpop.f32.mrf.mxu0
    %v3569 = vadd.f32 %v3522, %v3568
    %3570 = vmatmul.f32.gmra.mxu0 %v3531
    %v3571 = vpop.f32.mrf.mxu0
    %v3572 = vadd.f32 %v3522, %v3571
    %3573 = vmatmul.f32.gmra.mxu0 %v3534
    %v3574 = vpop.f32.mrf.mxu0
    %v3575 = vadd.f32 %v3522, %v3574
    %3576 = vmatmul.f32.gmra.mxu0 %v3537
    %v3577 = vpop.f32.mrf.mxu0
    %v3578 = vadd.f32 %v3522, %v3577
    %3579 = vmatmul.f32.gmra.mxu0 %v3540
    %v3580 = vpop.f32.mrf.mxu0
    %v3581 = vadd.f32 %v3522, %v3580
    %3582 = vmatmul.f32.gmra.mxu0 %v3543
    %v3583 = vpop.f32.mrf.mxu0
    %v3584 = vadd.f32 %v3522, %v3583
    %3585 = vmatmul.f32.gmra.mxu0 %v3546
    %v3586 = vpop.f32.mrf.mxu0
    %v3587 = vadd.f32 %v3522, %v3586
    %3588 = vdwg.mxu0
    %s3589 = scalar_lea.vmem %s1, 8
    %v3590 = vld [vmem:[%s3589] sm:$0xff]
    %s3591 = scalar_lea.vmem %s2, 8
    %v3592 = vld [vmem:[%s3591] sm:$0xff]
    %v3594 = vsel %vm191, %v3590, 0
    %3596 = vmatpush.msra.mxu0 0.0
    %3597 = vmatpush.msra.mxu0 0.0
    %3598 = vmatpush.msra.mxu0 0.0
    %3599 = vmatpush.msra.mxu0 0.0
    %3600 = vmatpush.msra.mxu0 0.0
    %3601 = vmatpush.msra.mxu0 0.0
    %3602 = vmatpush.msra.mxu0 0.0
    %3603 = vmatpush.msra.mxu0 0.0
    %3604 = vmatpush.msra.mxu0 0.0
    %3605 = vmatpush.msra.mxu0 0.0
    %3606 = vmatpush.msra.mxu0 0.0
    %3607 = vmatpush.msra.mxu0 0.0
    %3608 = vmatpush.msra.mxu0 %v3511
    %3609 = vmatpush.msra.mxu0 %v3510
    %3610 = vmatpush.msra.mxu0 %v3509
    %3611 = vmatpush.msra.mxu0 %v3508
    %3612 = vmatmul.f32.gmra.mxu0 %v3594
    %v3613 = vpop.f32.mrf.mxu0
    %v3614 = vadd.f32 0.0, %v3613
    %3615 = vdwg.mxu0
    %v3616 = vadd.f32 %v3566, %v3614
    %v3617 = vxor.u32 %v3616, 2147483648
    %v3618 = vmul.f32 %v3617, 1.442695
    %v3619 = vpow.pop %v3618
    %v3620 = vadd.f32 %v3619, 1.0
    %v3621 = vrcp.pop %v3620
    %v3622 = vmul.f32 %v3620, %v3621
    %v3623 = vsub.f32 1.0, %v3622
    %v3624 = vmul.f32 %v3621, %v3623
    %v3625 = vadd.f32 %v3621, %v3624
    %vm3626 = vweird.f32 %v3620
    %vm3627 = vweird.f32 %v3621
    %vm3628 = vmor %vm3626, %vm3627
    %v3629 = vsel %vm3628, %v3621, %v3625
    %v3630 = vand.u32 2147483647, %v3620
    %vm3631 = vcmp.eq.f32.partialorder %v3630, 8.507059e+37
    %v3632 = vand.u32 %v3620, 2147483648
    %v3633 = vor.u32 1.1754944e-38, %v3632
    %v3634 = vsel %vm3631, %v3633, %v3629
    %v3635 = vmul.f32 1.0, %v3634
    %v3636 = vtanh.pop %v3616
    %3638 = vrot.lane.b32.xlu0 %v3592, 32
    %v3639 = vpop.permute.xlu0 %3638
    %v3641 = vmul.f32 %v3635, %v3639
    %3643 = vrot.lane.b32.xlu0 %v3636, 64
    %v3644 = vpop.permute.xlu0 %3643
    %v3646 = vmul.f32 %v3635, %v3644
    %3648 = vrot.lane.b32.xlu0 %v3646, 32
    %v3649 = vpop.permute.xlu0 %3648
    %v3651 = vadd.f32 %v3641, %v3649
    %v3652 = vtanh.pop %v3651
    %3654 = vrot.lane.b32.xlu0 %v3652, 64
    %v3655 = vpop.permute.xlu0 %3654
    %v3657 = vmul.f32 %v3635, %v3655
    %3659 = vrot.lane.b32.xlu0 %v3657, 32
    %v3660 = vpop.permute.xlu0 %3659
    %3662 = vst.msk [vmem:[#allocation2] sm:$0xff] %vm191, %v3660
    %v3663 = vsel %vm191, %v3660, 0
    %3665 = vmatpush.msra.mxu0 0.0
    %3666 = vmatpush.msra.mxu0 0.0
    %3667 = vmatpush.msra.mxu0 0.0
    %3668 = vmatpush.msra.mxu0 0.0
    %3669 = vmatpush.msra.mxu0 0.0
    %3670 = vmatpush.msra.mxu0 0.0
    %3671 = vmatpush.msra.mxu0 0.0
    %3672 = vmatpush.msra.mxu0 0.0
    %3673 = vmatpush.msra.mxu0 0.0
    %3674 = vmatpush.msra.mxu0 0.0
    %3675 = vmatpush.msra.mxu0 0.0
    %3676 = vmatpush.msra.mxu0 0.0
    %3677 = vmatpush.msra.mxu0 %v3511
    %3678 = vmatpush.msra.mxu0 %v3510
    %3679 = vmatpush.msra.mxu0 %v3509
    %3680 = vmatpush.msra.mxu0 %v3508
    %3681 = vmatmul.f32.gmra.mxu0 %v3663
    %v3682 = vpop.f32.mrf.mxu0
    %v3683 = vadd.f32 0.0, %v3682
    %3684 = vdwg.mxu0
    %v3685 = vadd.f32 %v3569, %v3683
    %v3686 = vxor.u32 %v3685, 2147483648
    %v3687 = vmul.f32 %v3686, 1.442695
    %v3688 = vpow.pop %v3687
    %v3689 = vadd.f32 %v3688, 1.0
    %v3690 = vrcp.pop %v3689
    %v3691 = vmul.f32 %v3689, %v3690
    %v3692 = vsub.f32 1.0, %v3691
    %v3693 = vmul.f32 %v3690, %v3692
    %v3694 = vadd.f32 %v3690, %v3693
    %vm3695 = vweird.f32 %v3689
    %vm3696 = vweird.f32 %v3690
    %vm3697 = vmor %vm3695, %vm3696
    %v3698 = vsel %vm3697, %v3690, %v3694
    %v3699 = vand.u32 2147483647, %v3689
    %vm3700 = vcmp.eq.f32.partialorder %v3699, 8.507059e+37
    %v3701 = vand.u32 %v3689, 2147483648
    %v3702 = vor.u32 1.1754944e-38, %v3701
    %v3703 = vsel %vm3700, %v3702, %v3698
    %v3704 = vmul.f32 1.0, %v3703
    %v3705 = vtanh.pop %v3685
    %v3706 = vmul.f32 %v3704, %v3651
    %3708 = vrot.lane.b32.xlu0 %v3705, 64
    %v3709 = vpop.permute.xlu0 %3708
    %v3711 = vmul.f32 %v3704, %v3709
    %3713 = vrot.lane.b32.xlu0 %v3711, 32
    %v3714 = vpop.permute.xlu0 %3713
    %v3716 = vadd.f32 %v3706, %v3714
    %v3717 = vtanh.pop %v3716
    %3719 = vrot.lane.b32.xlu0 %v3717, 64
    %v3720 = vpop.permute.xlu0 %3719
    %v3722 = vmul.f32 %v3704, %v3720
    %3724 = vrot.lane.b32.xlu0 %v3722, 32
    %v3725 = vpop.permute.xlu0 %3724
    %3727 = vst.msk [vmem:[%s993] sm:$0xff] %vm191, %v3725
    %v3728 = vsel %vm191, %v3725, 0
    %3730 = vmatpush.msra.mxu0 0.0
    %3731 = vmatpush.msra.mxu0 0.0
    %3732 = vmatpush.msra.mxu0 0.0
    %3733 = vmatpush.msra.mxu0 0.0
    %3734 = vmatpush.msra.mxu0 0.0
    %3735 = vmatpush.msra.mxu0 0.0
    %3736 = vmatpush.msra.mxu0 0.0
    %3737 = vmatpush.msra.mxu0 0.0
    %3738 = vmatpush.msra.mxu0 0.0
    %3739 = vmatpush.msra.mxu0 0.0
    %3740 = vmatpush.msra.mxu0 0.0
    %3741 = vmatpush.msra.mxu0 0.0
    %3742 = vmatpush.msra.mxu0 %v3511
    %3743 = vmatpush.msra.mxu0 %v3510
    %3744 = vmatpush.msra.mxu0 %v3509
    %3745 = vmatpush.msra.mxu0 %v3508
    %3746 = vmatmul.f32.gmra.mxu0 %v3728
    %v3747 = vpop.f32.mrf.mxu0
    %v3748 = vadd.f32 0.0, %v3747
    %3749 = vdwg.mxu0
    %v3750 = vadd.f32 %v3572, %v3748
    %v3751 = vxor.u32 %v3750, 2147483648
    %v3752 = vmul.f32 %v3751, 1.442695
    %v3753 = vpow.pop %v3752
    %v3754 = vadd.f32 %v3753, 1.0
    %v3755 = vrcp.pop %v3754
    %v3756 = vmul.f32 %v3754, %v3755
    %v3757 = vsub.f32 1.0, %v3756
    %v3758 = vmul.f32 %v3755, %v3757
    %v3759 = vadd.f32 %v3755, %v3758
    %vm3760 = vweird.f32 %v3754
    %vm3761 = vweird.f32 %v3755
    %vm3762 = vmor %vm3760, %vm3761
    %v3763 = vsel %vm3762, %v3755, %v3759
    %v3764 = vand.u32 2147483647, %v3754
    %vm3765 = vcmp.eq.f32.partialorder %v3764, 8.507059e+37
    %v3766 = vand.u32 %v3754, 2147483648
    %v3767 = vor.u32 1.1754944e-38, %v3766
    %v3768 = vsel %vm3765, %v3767, %v3763
    %v3769 = vmul.f32 1.0, %v3768
    %v3770 = vtanh.pop %v3750
    %v3771 = vmul.f32 %v3769, %v3716
    %3773 = vrot.lane.b32.xlu0 %v3770, 64
    %v3774 = vpop.permute.xlu0 %3773
    %v3776 = vmul.f32 %v3769, %v3774
    %3778 = vrot.lane.b32.xlu0 %v3776, 32
    %v3779 = vpop.permute.xlu0 %3778
    %v3781 = vadd.f32 %v3771, %v3779
    %v3782 = vtanh.pop %v3781
    %3784 = vrot.lane.b32.xlu0 %v3782, 64
    %v3785 = vpop.permute.xlu0 %3784
    %v3787 = vmul.f32 %v3769, %v3785
    %3789 = vrot.lane.b32.xlu0 %v3787, 32
    %v3790 = vpop.permute.xlu0 %3789
    %3792 = vst.msk [vmem:[%s1407] sm:$0xff] %vm191, %v3790
    %v3793 = vsel %vm191, %v3790, 0
    %3795 = vmatpush.msra.mxu0 0.0
    %3796 = vmatpush.msra.mxu0 0.0
    %3797 = vmatpush.msra.mxu0 0.0
    %3798 = vmatpush.msra.mxu0 0.0
    %3799 = vmatpush.msra.mxu0 0.0
    %3800 = vmatpush.msra.mxu0 0.0
    %3801 = vmatpush.msra.mxu0 0.0
    %3802 = vmatpush.msra.mxu0 0.0
    %3803 = vmatpush.msra.mxu0 0.0
    %3804 = vmatpush.msra.mxu0 0.0
    %3805 = vmatpush.msra.mxu0 0.0
    %3806 = vmatpush.msra.mxu0 0.0
    %3807 = vmatpush.msra.mxu0 %v3511
    %3808 = vmatpush.msra.mxu0 %v3510
    %3809 = vmatpush.msra.mxu0 %v3509
    %3810 = vmatpush.msra.mxu0 %v3508
    %3811 = vmatmul.f32.gmra.mxu0 %v3793
    %v3812 = vpop.f32.mrf.mxu0
    %v3813 = vadd.f32 0.0, %v3812
    %3814 = vdwg.mxu0
    %v3815 = vadd.f32 %v3575, %v3813
    %v3816 = vxor.u32 %v3815, 2147483648
    %v3817 = vmul.f32 %v3816, 1.442695
    %v3818 = vpow.pop %v3817
    %v3819 = vadd.f32 %v3818, 1.0
    %v3820 = vrcp.pop %v3819
    %v3821 = vmul.f32 %v3819, %v3820
    %v3822 = vsub.f32 1.0, %v3821
    %v3823 = vmul.f32 %v3820, %v3822
    %v3824 = vadd.f32 %v3820, %v3823
    %vm3825 = vweird.f32 %v3819
    %vm3826 = vweird.f32 %v3820
    %vm3827 = vmor %vm3825, %vm3826
    %v3828 = vsel %vm3827, %v3820, %v3824
    %v3829 = vand.u32 2147483647, %v3819
    %vm3830 = vcmp.eq.f32.partialorder %v3829, 8.507059e+37
    %v3831 = vand.u32 %v3819, 2147483648
    %v3832 = vor.u32 1.1754944e-38, %v3831
    %v3833 = vsel %vm3830, %v3832, %v3828
    %v3834 = vmul.f32 1.0, %v3833
    %v3835 = vtanh.pop %v3815
    %v3836 = vmul.f32 %v3834, %v3781
    %3838 = vrot.lane.b32.xlu0 %v3835, 64
    %v3839 = vpop.permute.xlu0 %3838
    %v3841 = vmul.f32 %v3834, %v3839
    %3843 = vrot.lane.b32.xlu0 %v3841, 32
    %v3844 = vpop.permute.xlu0 %3843
    %v3846 = vadd.f32 %v3836, %v3844
    %v3847 = vtanh.pop %v3846
    %3849 = vrot.lane.b32.xlu0 %v3847, 64
    %v3850 = vpop.permute.xlu0 %3849
    %v3852 = vmul.f32 %v3834, %v3850
    %3854 = vrot.lane.b32.xlu0 %v3852, 32
    %v3855 = vpop.permute.xlu0 %3854
    %3857 = vst.msk [vmem:[%s1821] sm:$0xff] %vm191, %v3855
    %v3858 = vsel %vm191, %v3855, 0
    %3860 = vmatpush.msra.mxu0 0.0
    %3861 = vmatpush.msra.mxu0 0.0
    %3862 = vmatpush.msra.mxu0 0.0
    %3863 = vmatpush.msra.mxu0 0.0
    %3864 = vmatpush.msra.mxu0 0.0
    %3865 = vmatpush.msra.mxu0 0.0
    %3866 = vmatpush.msra.mxu0 0.0
    %3867 = vmatpush.msra.mxu0 0.0
    %3868 = vmatpush.msra.mxu0 0.0
    %3869 = vmatpush.msra.mxu0 0.0
    %3870 = vmatpush.msra.mxu0 0.0
    %3871 = vmatpush.msra.mxu0 0.0
    %3872 = vmatpush.msra.mxu0 %v3511
    %3873 = vmatpush.msra.mxu0 %v3510
    %3874 = vmatpush.msra.mxu0 %v3509
    %3875 = vmatpush.msra.mxu0 %v3508
    %3876 = vmatmul.f32.gmra.mxu0 %v3858
    %v3877 = vpop.f32.mrf.mxu0
    %v3878 = vadd.f32 0.0, %v3877
    %3879 = vdwg.mxu0
    %v3880 = vadd.f32 %v3578, %v3878
    %v3881 = vxor.u32 %v3880, 2147483648
    %v3882 = vmul.f32 %v3881, 1.442695
    %v3883 = vpow.pop %v3882
    %v3884 = vadd.f32 %v3883, 1.0
    %v3885 = vrcp.pop %v3884
    %v3886 = vmul.f32 %v3884, %v3885
    %v3887 = vsub.f32 1.0, %v3886
    %v3888 = vmul.f32 %v3885, %v3887
    %v3889 = vadd.f32 %v3885, %v3888
    %vm3890 = vweird.f32 %v3884
    %vm3891 = vweird.f32 %v3885
    %vm3892 = vmor %vm3890, %vm3891
    %v3893 = vsel %vm3892, %v3885, %v3889
    %v3894 = vand.u32 2147483647, %v3884
    %vm3895 = vcmp.eq.f32.partialorder %v3894, 8.507059e+37
    %v3896 = vand.u32 %v3884, 2147483648
    %v3897 = vor.u32 1.1754944e-38, %v3896
    %v3898 = vsel %vm3895, %v3897, %v3893
    %v3899 = vmul.f32 1.0, %v3898
    %v3900 = vtanh.pop %v3880
    %v3901 = vmul.f32 %v3899, %v3846
    %3903 = vrot.lane.b32.xlu0 %v3900, 64
    %v3904 = vpop.permute.xlu0 %3903
    %v3906 = vmul.f32 %v3899, %v3904
    %3908 = vrot.lane.b32.xlu0 %v3906, 32
    %v3909 = vpop.permute.xlu0 %3908
    %v3911 = vadd.f32 %v3901, %v3909
    %v3912 = vtanh.pop %v3911
    %3914 = vrot.lane.b32.xlu0 %v3912, 64
    %v3915 = vpop.permute.xlu0 %3914
    %v3917 = vmul.f32 %v3899, %v3915
    %3919 = vrot.lane.b32.xlu0 %v3917, 32
    %v3920 = vpop.permute.xlu0 %3919
    %3922 = vst.msk [vmem:[%s2235] sm:$0xff] %vm191, %v3920
    %v3923 = vsel %vm191, %v3920, 0
    %3925 = vmatpush.msra.mxu0 0.0
    %3926 = vmatpush.msra.mxu0 0.0
    %3927 = vmatpush.msra.mxu0 0.0
    %3928 = vmatpush.msra.mxu0 0.0
    %3929 = vmatpush.msra.mxu0 0.0
    %3930 = vmatpush.msra.mxu0 0.0
    %3931 = vmatpush.msra.mxu0 0.0
    %3932 = vmatpush.msra.mxu0 0.0
    %3933 = vmatpush.msra.mxu0 0.0
    %3934 = vmatpush.msra.mxu0 0.0
    %3935 = vmatpush.msra.mxu0 0.0
    %3936 = vmatpush.msra.mxu0 0.0
    %3937 = vmatpush.msra.mxu0 %v3511
    %3938 = vmatpush.msra.mxu0 %v3510
    %3939 = vmatpush.msra.mxu0 %v3509
    %3940 = vmatpush.msra.mxu0 %v3508
    %3941 = vmatmul.f32.gmra.mxu0 %v3923
    %v3942 = vpop.f32.mrf.mxu0
    %v3943 = vadd.f32 0.0, %v3942
    %3944 = vdwg.mxu0
    %v3945 = vadd.f32 %v3581, %v3943
    %v3946 = vxor.u32 %v3945, 2147483648
    %v3947 = vmul.f32 %v3946, 1.442695
    %v3948 = vpow.pop %v3947
    %v3949 = vadd.f32 %v3948, 1.0
    %v3950 = vrcp.pop %v3949
    %v3951 = vmul.f32 %v3949, %v3950
    %v3952 = vsub.f32 1.0, %v3951
    %v3953 = vmul.f32 %v3950, %v3952
    %v3954 = vadd.f32 %v3950, %v3953
    %vm3955 = vweird.f32 %v3949
    %vm3956 = vweird.f32 %v3950
    %vm3957 = vmor %vm3955, %vm3956
    %v3958 = vsel %vm3957, %v3950, %v3954
    %v3959 = vand.u32 2147483647, %v3949
    %vm3960 = vcmp.eq.f32.partialorder %v3959, 8.507059e+37
    %v3961 = vand.u32 %v3949, 2147483648
    %v3962 = vor.u32 1.1754944e-38, %v3961
    %v3963 = vsel %vm3960, %v3962, %v3958
    %v3964 = vmul.f32 1.0, %v3963
    %v3965 = vtanh.pop %v3945
    %v3966 = vmul.f32 %v3964, %v3911
    %3968 = vrot.lane.b32.xlu0 %v3965, 64
    %v3969 = vpop.permute.xlu0 %3968
    %v3971 = vmul.f32 %v3964, %v3969
    %3973 = vrot.lane.b32.xlu0 %v3971, 32
    %v3974 = vpop.permute.xlu0 %3973
    %v3976 = vadd.f32 %v3966, %v3974
    %v3977 = vtanh.pop %v3976
    %3979 = vrot.lane.b32.xlu0 %v3977, 64
    %v3980 = vpop.permute.xlu0 %3979
    %v3982 = vmul.f32 %v3964, %v3980
    %3984 = vrot.lane.b32.xlu0 %v3982, 32
    %v3985 = vpop.permute.xlu0 %3984
    %3987 = vst.msk [vmem:[%s2649] sm:$0xff] %vm191, %v3985
    %v3988 = vsel %vm191, %v3985, 0
    %3990 = vmatpush.msra.mxu0 0.0
    %3991 = vmatpush.msra.mxu0 0.0
    %3992 = vmatpush.msra.mxu0 0.0
    %3993 = vmatpush.msra.mxu0 0.0
    %3994 = vmatpush.msra.mxu0 0.0
    %3995 = vmatpush.msra.mxu0 0.0
    %3996 = vmatpush.msra.mxu0 0.0
    %3997 = vmatpush.msra.mxu0 0.0
    %3998 = vmatpush.msra.mxu0 0.0
    %3999 = vmatpush.msra.mxu0 0.0
    %4000 = vmatpush.msra.mxu0 0.0
    %4001 = vmatpush.msra.mxu0 0.0
    %4002 = vmatpush.msra.mxu0 %v3511
    %4003 = vmatpush.msra.mxu0 %v3510
    %4004 = vmatpush.msra.mxu0 %v3509
    %4005 = vmatpush.msra.mxu0 %v3508
    %4006 = vmatmul.f32.gmra.mxu0 %v3988
    %v4007 = vpop.f32.mrf.mxu0
    %v4008 = vadd.f32 0.0, %v4007
    %4009 = vdwg.mxu0
    %v4010 = vadd.f32 %v3584, %v4008
    %v4011 = vxor.u32 %v4010, 2147483648
    %v4012 = vmul.f32 %v4011, 1.442695
    %v4013 = vpow.pop %v4012
    %v4014 = vadd.f32 %v4013, 1.0
    %v4015 = vrcp.pop %v4014
    %v4016 = vmul.f32 %v4014, %v4015
    %v4017 = vsub.f32 1.0, %v4016
    %v4018 = vmul.f32 %v4015, %v4017
    %v4019 = vadd.f32 %v4015, %v4018
    %vm4020 = vweird.f32 %v4014
    %vm4021 = vweird.f32 %v4015
    %vm4022 = vmor %vm4020, %vm4021
    %v4023 = vsel %vm4022, %v4015, %v4019
    %v4024 = vand.u32 2147483647, %v4014
    %vm4025 = vcmp.eq.f32.partialorder %v4024, 8.507059e+37
    %v4026 = vand.u32 %v4014, 2147483648
    %v4027 = vor.u32 1.1754944e-38, %v4026
    %v4028 = vsel %vm4025, %v4027, %v4023
    %v4029 = vmul.f32 1.0, %v4028
    %v4030 = vtanh.pop %v4010
    %v4031 = vmul.f32 %v4029, %v3976
    %4033 = vrot.lane.b32.xlu0 %v4030, 64
    %v4034 = vpop.permute.xlu0 %4033
    %v4036 = vmul.f32 %v4029, %v4034
    %4038 = vrot.lane.b32.xlu0 %v4036, 32
    %v4039 = vpop.permute.xlu0 %4038
    %v4041 = vadd.f32 %v4031, %v4039
    %v4042 = vtanh.pop %v4041
    %4044 = vrot.lane.b32.xlu0 %v4042, 64
    %v4045 = vpop.permute.xlu0 %4044
    %v4047 = vmul.f32 %v4029, %v4045
    %4049 = vrot.lane.b32.xlu0 %v4047, 32
    %v4050 = vpop.permute.xlu0 %4049
    %4052 = vst.msk [vmem:[%s3063] sm:$0xff] %vm191, %v4050
    %v4053 = vsel %vm191, %v4050, 0
    %4055 = vmatpush.msra.mxu0 0.0
    %4056 = vmatpush.msra.mxu0 0.0
    %4057 = vmatpush.msra.mxu0 0.0
    %4058 = vmatpush.msra.mxu0 0.0
    %4059 = vmatpush.msra.mxu0 0.0
    %4060 = vmatpush.msra.mxu0 0.0
    %4061 = vmatpush.msra.mxu0 0.0
    %4062 = vmatpush.msra.mxu0 0.0
    %4063 = vmatpush.msra.mxu0 0.0
    %4064 = vmatpush.msra.mxu0 0.0
    %4065 = vmatpush.msra.mxu0 0.0
    %4066 = vmatpush.msra.mxu0 0.0
    %4067 = vmatpush.msra.mxu0 %v3511
    %4068 = vmatpush.msra.mxu0 %v3510
    %4069 = vmatpush.msra.mxu0 %v3509
    %4070 = vmatpush.msra.mxu0 %v3508
    %4071 = vmatmul.f32.gmra.mxu0 %v4053
    %v4072 = vpop.f32.mrf.mxu0
    %v4073 = vadd.f32 0.0, %v4072
    %4074 = vdwg.mxu0
    %v4075 = vadd.f32 %v3587, %v4073
    %v4076 = vxor.u32 %v4075, 2147483648
    %v4077 = vmul.f32 %v4076, 1.442695
    %v4078 = vpow.pop %v4077
    %v4079 = vadd.f32 %v4078, 1.0
    %v4080 = vrcp.pop %v4079
    %v4081 = vmul.f32 %v4079, %v4080
    %v4082 = vsub.f32 1.0, %v4081
    %v4083 = vmul.f32 %v4080, %v4082
    %v4084 = vadd.f32 %v4080, %v4083
    %vm4085 = vweird.f32 %v4079
    %vm4086 = vweird.f32 %v4080
    %vm4087 = vmor %vm4085, %vm4086
    %v4088 = vsel %vm4087, %v4080, %v4084
    %v4089 = vand.u32 2147483647, %v4079
    %vm4090 = vcmp.eq.f32.partialorder %v4089, 8.507059e+37
    %v4091 = vand.u32 %v4079, 2147483648
    %v4092 = vor.u32 1.1754944e-38, %v4091
    %v4093 = vsel %vm4090, %v4092, %v4088
    %v4094 = vmul.f32 1.0, %v4093
    %v4095 = vtanh.pop %v4075
    %v4096 = vmul.f32 %v4094, %v4041
    %4098 = vrot.lane.b32.xlu0 %v4095, 64
    %v4099 = vpop.permute.xlu0 %4098
    %v4101 = vmul.f32 %v4094, %v4099
    %4103 = vrot.lane.b32.xlu0 %v4101, 32
    %v4104 = vpop.permute.xlu0 %4103
    %v4106 = vadd.f32 %v4096, %v4104
    %v4107 = vtanh.pop %v4106
    %4109 = vrot.lane.b32.xlu0 %v4107, 64
    %v4110 = vpop.permute.xlu0 %4109
    %v4112 = vmul.f32 %v4094, %v4110
    %4114 = vrot.lane.b32.xlu0 %v4112, 32
    %v4115 = vpop.permute.xlu0 %4114
    %4117 = vst.msk [vmem:[%s3477] sm:$0xff] %vm191, %v4115
    %s4118 = scalar_lea.vmem [#allocation11], 4
    %4119 = vst.msk [vmem:[%s4118] sm:$0xf] %vm2238, %v4115
    %4121 = vrot.lane.b32.xlu0 %v4106, 96
    %v4122 = vpop.permute.xlu0 %4121
    %s4124 = scalar_lea.vmem [#allocation13], 4
    %4125 = vst.msk [vmem:[%s4124] sm:$0xf] %vm2238, %v4122
    %v4126 = vld [vmem:[%s11] sm:$0xff]
    %v4127 = vld [vmem:[%s11 + $0x8] sm:$0xff]
    %v4128 = vld [vmem:[%s11 + $0x10] sm:$0xff]
    %v4129 = vld [vmem:[%s11 + $0x18] sm:$0xff]
    %v4130 = vld [vmem:[%s12] sm:$0xff]
    %v4131 = vld [vmem:[%s12 + $0x8] sm:$0xff]
    %v4132 = vld [vmem:[%s12 + $0x10] sm:$0xff]
    %v4133 = vld [vmem:[%s12 + $0x18] sm:$0xff]
    %v4134 = vld [vmem:[%s13] sm:$0x1]
    %v4135 = vld [vmem:[#allocation2] sm:$0xff]
    %v4136 = vld [vmem:[#allocation2 + $0x8] sm:$0xff]
    %v4137 = vld [vmem:[#allocation2 + $0x10] sm:$0xff]
    %v4138 = vld [vmem:[#allocation2 + $0x18] sm:$0xff]
    %v4139 = vld [vmem:[#allocation2 + $0x20] sm:$0xff]
    %v4140 = vld [vmem:[#allocation2 + $0x28] sm:$0xff]
    %v4141 = vld [vmem:[#allocation2 + $0x30] sm:$0xff]
    %v4142 = vld [vmem:[#allocation2 + $0x38] sm:$0xff]
    %v4144 = vperm.slane %v4134, 0
    %v4147 = vsel %vm191, %v4135, 0
    %v4150 = vsel %vm191, %v4136, 0
    %v4153 = vsel %vm191, %v4137, 0
    %v4156 = vsel %vm191, %v4138, 0
    %v4159 = vsel %vm191, %v4139, 0
    %v4162 = vsel %vm191, %v4140, 0
    %v4165 = vsel %vm191, %v4141, 0
    %v4168 = vsel %vm191, %v4142, 0
    %4170 = vmatpush.msra.mxu0 0.0
    %4171 = vmatpush.msra.mxu0 0.0
    %4172 = vmatpush.msra.mxu0 0.0
    %4173 = vmatpush.msra.mxu0 0.0
    %4174 = vmatpush.msra.mxu0 0.0
    %4175 = vmatpush.msra.mxu0 0.0
    %4176 = vmatpush.msra.mxu0 0.0
    %4177 = vmatpush.msra.mxu0 0.0
    %4178 = vmatpush.msra.mxu0 0.0
    %4179 = vmatpush.msra.mxu0 0.0
    %4180 = vmatpush.msra.mxu0 0.0
    %4181 = vmatpush.msra.mxu0 0.0
    %4182 = vmatpush.msra.mxu0 %v4129
    %4183 = vmatpush.msra.mxu0 %v4128
    %4184 = vmatpush.msra.mxu0 %v4127
    %4185 = vmatpush.msra.mxu0 %v4126
    %4186 = vmatmul.f32.gmra.mxu0 %v4147
    %v4187 = vpop.f32.mrf.mxu0
    %v4188 = vadd.f32 %v4144, %v4187
    %4189 = vmatmul.f32.gmra.mxu0 %v4150
    %v4190 = vpop.f32.mrf.mxu0
    %v4191 = vadd.f32 %v4144, %v4190
    %4192 = vmatmul.f32.gmra.mxu0 %v4153
    %v4193 = vpop.f32.mrf.mxu0
    %v4194 = vadd.f32 %v4144, %v4193
    %4195 = vmatmul.f32.gmra.mxu0 %v4156
    %v4196 = vpop.f32.mrf.mxu0
    %v4197 = vadd.f32 %v4144, %v4196
    %4198 = vmatmul.f32.gmra.mxu0 %v4159
    %v4199 = vpop.f32.mrf.mxu0
    %v4200 = vadd.f32 %v4144, %v4199
    %4201 = vmatmul.f32.gmra.mxu0 %v4162
    %v4202 = vpop.f32.mrf.mxu0
    %v4203 = vadd.f32 %v4144, %v4202
    %4204 = vmatmul.f32.gmra.mxu0 %v4165
    %v4205 = vpop.f32.mrf.mxu0
    %v4206 = vadd.f32 %v4144, %v4205
    %4207 = vmatmul.f32.gmra.mxu0 %v4168
    %v4208 = vpop.f32.mrf.mxu0
    %v4209 = vadd.f32 %v4144, %v4208
    %4210 = vdwg.mxu0
    %s4211 = scalar_lea.vmem %s1, 16
    %v4212 = vld [vmem:[%s4211] sm:$0xff]
    %s4213 = scalar_lea.vmem %s2, 16
    %v4214 = vld [vmem:[%s4213] sm:$0xff]
    %v4216 = vsel %vm191, %v4212, 0
    %4218 = vmatpush.msra.mxu0 0.0
    %4219 = vmatpush.msra.mxu0 0.0
    %4220 = vmatpush.msra.mxu0 0.0
    %4221 = vmatpush.msra.mxu0 0.0
    %4222 = vmatpush.msra.mxu0 0.0
    %4223 = vmatpush.msra.mxu0 0.0
    %4224 = vmatpush.msra.mxu0 0.0
    %4225 = vmatpush.msra.mxu0 0.0
    %4226 = vmatpush.msra.mxu0 0.0
    %4227 = vmatpush.msra.mxu0 0.0
    %4228 = vmatpush.msra.mxu0 0.0
    %4229 = vmatpush.msra.mxu0 0.0
    %4230 = vmatpush.msra.mxu0 %v4133
    %4231 = vmatpush.msra.mxu0 %v4132
    %4232 = vmatpush.msra.mxu0 %v4131
    %4233 = vmatpush.msra.mxu0 %v4130
    %4234 = vmatmul.f32.gmra.mxu0 %v4216
    %v4235 = vpop.f32.mrf.mxu0
    %v4236 = vadd.f32 0.0, %v4235
    %4237 = vdwg.mxu0
    %v4238 = vadd.f32 %v4188, %v4236
    %v4239 = vxor.u32 %v4238, 2147483648
    %v4240 = vmul.f32 %v4239, 1.442695
    %v4241 = vpow.pop %v4240
    %v4242 = vadd.f32 %v4241, 1.0
    %v4243 = vrcp.pop %v4242
    %v4244 = vmul.f32 %v4242, %v4243
    %v4245 = vsub.f32 1.0, %v4244
    %v4246 = vmul.f32 %v4243, %v4245
    %v4247 = vadd.f32 %v4243, %v4246
    %vm4248 = vweird.f32 %v4242
    %vm4249 = vweird.f32 %v4243
    %vm4250 = vmor %vm4248, %vm4249
    %v4251 = vsel %vm4250, %v4243, %v4247
    %v4252 = vand.u32 2147483647, %v4242
    %vm4253 = vcmp.eq.f32.partialorder %v4252, 8.507059e+37
    %v4254 = vand.u32 %v4242, 2147483648
    %v4255 = vor.u32 1.1754944e-38, %v4254
    %v4256 = vsel %vm4253, %v4255, %v4251
    %v4257 = vmul.f32 1.0, %v4256
    %v4258 = vtanh.pop %v4238
    %4260 = vrot.lane.b32.xlu0 %v4214, 32
    %v4261 = vpop.permute.xlu0 %4260
    %v4263 = vmul.f32 %v4257, %v4261
    %4265 = vrot.lane.b32.xlu0 %v4258, 64
    %v4266 = vpop.permute.xlu0 %4265
    %v4268 = vmul.f32 %v4257, %v4266
    %4270 = vrot.lane.b32.xlu0 %v4268, 32
    %v4271 = vpop.permute.xlu0 %4270
    %v4273 = vadd.f32 %v4263, %v4271
    %v4274 = vtanh.pop %v4273
    %4276 = vrot.lane.b32.xlu0 %v4274, 64
    %v4277 = vpop.permute.xlu0 %4276
    %v4279 = vmul.f32 %v4257, %v4277
    %4281 = vrot.lane.b32.xlu0 %v4279, 32
    %v4282 = vpop.permute.xlu0 %4281
    %4284 = vst.msk [vmem:[#allocation2] sm:$0xff] %vm191, %v4282
    %v4285 = vsel %vm191, %v4282, 0
    %4287 = vmatpush.msra.mxu0 0.0
    %4288 = vmatpush.msra.mxu0 0.0
    %4289 = vmatpush.msra.mxu0 0.0
    %4290 = vmatpush.msra.mxu0 0.0
    %4291 = vmatpush.msra.mxu0 0.0
    %4292 = vmatpush.msra.mxu0 0.0
    %4293 = vmatpush.msra.mxu0 0.0
    %4294 = vmatpush.msra.mxu0 0.0
    %4295 = vmatpush.msra.mxu0 0.0
    %4296 = vmatpush.msra.mxu0 0.0
    %4297 = vmatpush.msra.mxu0 0.0
    %4298 = vmatpush.msra.mxu0 0.0
    %4299 = vmatpush.msra.mxu0 %v4133
    %4300 = vmatpush.msra.mxu0 %v4132
    %4301 = vmatpush.msra.mxu0 %v4131
    %4302 = vmatpush.msra.mxu0 %v4130
    %4303 = vmatmul.f32.gmra.mxu0 %v4285
    %v4304 = vpop.f32.mrf.mxu0
    %v4305 = vadd.f32 0.0, %v4304
    %4306 = vdwg.mxu0
    %v4307 = vadd.f32 %v4191, %v4305
    %v4308 = vxor.u32 %v4307, 2147483648
    %v4309 = vmul.f32 %v4308, 1.442695
    %v4310 = vpow.pop %v4309
    %v4311 = vadd.f32 %v4310, 1.0
    %v4312 = vrcp.pop %v4311
    %v4313 = vmul.f32 %v4311, %v4312
    %v4314 = vsub.f32 1.0, %v4313
    %v4315 = vmul.f32 %v4312, %v4314
    %v4316 = vadd.f32 %v4312, %v4315
    %vm4317 = vweird.f32 %v4311
    %vm4318 = vweird.f32 %v4312
    %vm4319 = vmor %vm4317, %vm4318
    %v4320 = vsel %vm4319, %v4312, %v4316
    %v4321 = vand.u32 2147483647, %v4311
    %vm4322 = vcmp.eq.f32.partialorder %v4321, 8.507059e+37
    %v4323 = vand.u32 %v4311, 2147483648
    %v4324 = vor.u32 1.1754944e-38, %v4323
    %v4325 = vsel %vm4322, %v4324, %v4320
    %v4326 = vmul.f32 1.0, %v4325
    %v4327 = vtanh.pop %v4307
    %v4328 = vmul.f32 %v4326, %v4273
    %4330 = vrot.lane.b32.xlu0 %v4327, 64
    %v4331 = vpop.permute.xlu0 %4330
    %v4333 = vmul.f32 %v4326, %v4331
    %4335 = vrot.lane.b32.xlu0 %v4333, 32
    %v4336 = vpop.permute.xlu0 %4335
    %v4338 = vadd.f32 %v4328, %v4336
    %v4339 = vtanh.pop %v4338
    %4341 = vrot.lane.b32.xlu0 %v4339, 64
    %v4342 = vpop.permute.xlu0 %4341
    %v4344 = vmul.f32 %v4326, %v4342
    %4346 = vrot.lane.b32.xlu0 %v4344, 32
    %v4347 = vpop.permute.xlu0 %4346
    %4349 = vst.msk [vmem:[%s993] sm:$0xff] %vm191, %v4347
    %v4350 = vsel %vm191, %v4347, 0
    %4352 = vmatpush.msra.mxu0 0.0
    %4353 = vmatpush.msra.mxu0 0.0
    %4354 = vmatpush.msra.mxu0 0.0
    %4355 = vmatpush.msra.mxu0 0.0
    %4356 = vmatpush.msra.mxu0 0.0
    %4357 = vmatpush.msra.mxu0 0.0
    %4358 = vmatpush.msra.mxu0 0.0
    %4359 = vmatpush.msra.mxu0 0.0
    %4360 = vmatpush.msra.mxu0 0.0
    %4361 = vmatpush.msra.mxu0 0.0
    %4362 = vmatpush.msra.mxu0 0.0
    %4363 = vmatpush.msra.mxu0 0.0
    %4364 = vmatpush.msra.mxu0 %v4133
    %4365 = vmatpush.msra.mxu0 %v4132
    %4366 = vmatpush.msra.mxu0 %v4131
    %4367 = vmatpush.msra.mxu0 %v4130
    %4368 = vmatmul.f32.gmra.mxu0 %v4350
    %v4369 = vpop.f32.mrf.mxu0
    %v4370 = vadd.f32 0.0, %v4369
    %4371 = vdwg.mxu0
    %v4372 = vadd.f32 %v4194, %v4370
    %v4373 = vxor.u32 %v4372, 2147483648
    %v4374 = vmul.f32 %v4373, 1.442695
    %v4375 = vpow.pop %v4374
    %v4376 = vadd.f32 %v4375, 1.0
    %v4377 = vrcp.pop %v4376
    %v4378 = vmul.f32 %v4376, %v4377
    %v4379 = vsub.f32 1.0, %v4378
    %v4380 = vmul.f32 %v4377, %v4379
    %v4381 = vadd.f32 %v4377, %v4380
    %vm4382 = vweird.f32 %v4376
    %vm4383 = vweird.f32 %v4377
    %vm4384 = vmor %vm4382, %vm4383
    %v4385 = vsel %vm4384, %v4377, %v4381
    %v4386 = vand.u32 2147483647, %v4376
    %vm4387 = vcmp.eq.f32.partialorder %v4386, 8.507059e+37
    %v4388 = vand.u32 %v4376, 2147483648
    %v4389 = vor.u32 1.1754944e-38, %v4388
    %v4390 = vsel %vm4387, %v4389, %v4385
    %v4391 = vmul.f32 1.0, %v4390
    %v4392 = vtanh.pop %v4372
    %v4393 = vmul.f32 %v4391, %v4338
    %4395 = vrot.lane.b32.xlu0 %v4392, 64
    %v4396 = vpop.permute.xlu0 %4395
    %v4398 = vmul.f32 %v4391, %v4396
    %4400 = vrot.lane.b32.xlu0 %v4398, 32
    %v4401 = vpop.permute.xlu0 %4400
    %v4403 = vadd.f32 %v4393, %v4401
    %v4404 = vtanh.pop %v4403
    %4406 = vrot.lane.b32.xlu0 %v4404, 64
    %v4407 = vpop.permute.xlu0 %4406
    %v4409 = vmul.f32 %v4391, %v4407
    %4411 = vrot.lane.b32.xlu0 %v4409, 32
    %v4412 = vpop.permute.xlu0 %4411
    %4414 = vst.msk [vmem:[%s1407] sm:$0xff] %vm191, %v4412
    %v4415 = vsel %vm191, %v4412, 0
    %4417 = vmatpush.msra.mxu0 0.0
    %4418 = vmatpush.msra.mxu0 0.0
    %4419 = vmatpush.msra.mxu0 0.0
    %4420 = vmatpush.msra.mxu0 0.0
    %4421 = vmatpush.msra.mxu0 0.0
    %4422 = vmatpush.msra.mxu0 0.0
    %4423 = vmatpush.msra.mxu0 0.0
    %4424 = vmatpush.msra.mxu0 0.0
    %4425 = vmatpush.msra.mxu0 0.0
    %4426 = vmatpush.msra.mxu0 0.0
    %4427 = vmatpush.msra.mxu0 0.0
    %4428 = vmatpush.msra.mxu0 0.0
    %4429 = vmatpush.msra.mxu0 %v4133
    %4430 = vmatpush.msra.mxu0 %v4132
    %4431 = vmatpush.msra.mxu0 %v4131
    %4432 = vmatpush.msra.mxu0 %v4130
    %4433 = vmatmul.f32.gmra.mxu0 %v4415
    %v4434 = vpop.f32.mrf.mxu0
    %v4435 = vadd.f32 0.0, %v4434
    %4436 = vdwg.mxu0
    %v4437 = vadd.f32 %v4197, %v4435
    %v4438 = vxor.u32 %v4437, 2147483648
    %v4439 = vmul.f32 %v4438, 1.442695
    %v4440 = vpow.pop %v4439
    %v4441 = vadd.f32 %v4440, 1.0
    %v4442 = vrcp.pop %v4441
    %v4443 = vmul.f32 %v4441, %v4442
    %v4444 = vsub.f32 1.0, %v4443
    %v4445 = vmul.f32 %v4442, %v4444
    %v4446 = vadd.f32 %v4442, %v4445
    %vm4447 = vweird.f32 %v4441
    %vm4448 = vweird.f32 %v4442
    %vm4449 = vmor %vm4447, %vm4448
    %v4450 = vsel %vm4449, %v4442, %v4446
    %v4451 = vand.u32 2147483647, %v4441
    %vm4452 = vcmp.eq.f32.partialorder %v4451, 8.507059e+37
    %v4453 = vand.u32 %v4441, 2147483648
    %v4454 = vor.u32 1.1754944e-38, %v4453
    %v4455 = vsel %vm4452, %v4454, %v4450
    %v4456 = vmul.f32 1.0, %v4455
    %v4457 = vtanh.pop %v4437
    %v4458 = vmul.f32 %v4456, %v4403
    %4460 = vrot.lane.b32.xlu0 %v4457, 64
    %v4461 = vpop.permute.xlu0 %4460
    %v4463 = vmul.f32 %v4456, %v4461
    %4465 = vrot.lane.b32.xlu0 %v4463, 32
    %v4466 = vpop.permute.xlu0 %4465
    %v4468 = vadd.f32 %v4458, %v4466
    %v4469 = vtanh.pop %v4468
    %4471 = vrot.lane.b32.xlu0 %v4469, 64
    %v4472 = vpop.permute.xlu0 %4471
    %v4474 = vmul.f32 %v4456, %v4472
    %4476 = vrot.lane.b32.xlu0 %v4474, 32
    %v4477 = vpop.permute.xlu0 %4476
    %4479 = vst.msk [vmem:[%s1821] sm:$0xff] %vm191, %v4477
    %v4480 = vsel %vm191, %v4477, 0
    %4482 = vmatpush.msra.mxu0 0.0
    %4483 = vmatpush.msra.mxu0 0.0
    %4484 = vmatpush.msra.mxu0 0.0
    %4485 = vmatpush.msra.mxu0 0.0
    %4486 = vmatpush.msra.mxu0 0.0
    %4487 = vmatpush.msra.mxu0 0.0
    %4488 = vmatpush.msra.mxu0 0.0
    %4489 = vmatpush.msra.mxu0 0.0
    %4490 = vmatpush.msra.mxu0 0.0
    %4491 = vmatpush.msra.mxu0 0.0
    %4492 = vmatpush.msra.mxu0 0.0
    %4493 = vmatpush.msra.mxu0 0.0
    %4494 = vmatpush.msra.mxu0 %v4133
    %4495 = vmatpush.msra.mxu0 %v4132
    %4496 = vmatpush.msra.mxu0 %v4131
    %4497 = vmatpush.msra.mxu0 %v4130
    %4498 = vmatmul.f32.gmra.mxu0 %v4480
    %v4499 = vpop.f32.mrf.mxu0
    %v4500 = vadd.f32 0.0, %v4499
    %4501 = vdwg.mxu0
    %v4502 = vadd.f32 %v4200, %v4500
    %v4503 = vxor.u32 %v4502, 2147483648
    %v4504 = vmul.f32 %v4503, 1.442695
    %v4505 = vpow.pop %v4504
    %v4506 = vadd.f32 %v4505, 1.0
    %v4507 = vrcp.pop %v4506
    %v4508 = vmul.f32 %v4506, %v4507
    %v4509 = vsub.f32 1.0, %v4508
    %v4510 = vmul.f32 %v4507, %v4509
    %v4511 = vadd.f32 %v4507, %v4510
    %vm4512 = vweird.f32 %v4506
    %vm4513 = vweird.f32 %v4507
    %vm4514 = vmor %vm4512, %vm4513
    %v4515 = vsel %vm4514, %v4507, %v4511
    %v4516 = vand.u32 2147483647, %v4506
    %vm4517 = vcmp.eq.f32.partialorder %v4516, 8.507059e+37
    %v4518 = vand.u32 %v4506, 2147483648
    %v4519 = vor.u32 1.1754944e-38, %v4518
    %v4520 = vsel %vm4517, %v4519, %v4515
    %v4521 = vmul.f32 1.0, %v4520
    %v4522 = vtanh.pop %v4502
    %v4523 = vmul.f32 %v4521, %v4468
    %4525 = vrot.lane.b32.xlu0 %v4522, 64
    %v4526 = vpop.permute.xlu0 %4525
    %v4528 = vmul.f32 %v4521, %v4526
    %4530 = vrot.lane.b32.xlu0 %v4528, 32
    %v4531 = vpop.permute.xlu0 %4530
    %v4533 = vadd.f32 %v4523, %v4531
    %v4534 = vtanh.pop %v4533
    %4536 = vrot.lane.b32.xlu0 %v4534, 64
    %v4537 = vpop.permute.xlu0 %4536
    %v4539 = vmul.f32 %v4521, %v4537
    %4541 = vrot.lane.b32.xlu0 %v4539, 32
    %v4542 = vpop.permute.xlu0 %4541
    %4544 = vst.msk [vmem:[%s2235] sm:$0xff] %vm191, %v4542
    %v4545 = vsel %vm191, %v4542, 0
    %4547 = vmatpush.msra.mxu0 0.0
    %4548 = vmatpush.msra.mxu0 0.0
    %4549 = vmatpush.msra.mxu0 0.0
    %4550 = vmatpush.msra.mxu0 0.0
    %4551 = vmatpush.msra.mxu0 0.0
    %4552 = vmatpush.msra.mxu0 0.0
    %4553 = vmatpush.msra.mxu0 0.0
    %4554 = vmatpush.msra.mxu0 0.0
    %4555 = vmatpush.msra.mxu0 0.0
    %4556 = vmatpush.msra.mxu0 0.0
    %4557 = vmatpush.msra.mxu0 0.0
    %4558 = vmatpush.msra.mxu0 0.0
    %4559 = vmatpush.msra.mxu0 %v4133
    %4560 = vmatpush.msra.mxu0 %v4132
    %4561 = vmatpush.msra.mxu0 %v4131
    %4562 = vmatpush.msra.mxu0 %v4130
    %4563 = vmatmul.f32.gmra.mxu0 %v4545
    %v4564 = vpop.f32.mrf.mxu0
    %v4565 = vadd.f32 0.0, %v4564
    %4566 = vdwg.mxu0
    %v4567 = vadd.f32 %v4203, %v4565
    %v4568 = vxor.u32 %v4567, 2147483648
    %v4569 = vmul.f32 %v4568, 1.442695
    %v4570 = vpow.pop %v4569
    %v4571 = vadd.f32 %v4570, 1.0
    %v4572 = vrcp.pop %v4571
    %v4573 = vmul.f32 %v4571, %v4572
    %v4574 = vsub.f32 1.0, %v4573
    %v4575 = vmul.f32 %v4572, %v4574
    %v4576 = vadd.f32 %v4572, %v4575
    %vm4577 = vweird.f32 %v4571
    %vm4578 = vweird.f32 %v4572
    %vm4579 = vmor %vm4577, %vm4578
    %v4580 = vsel %vm4579, %v4572, %v4576
    %v4581 = vand.u32 2147483647, %v4571
    %vm4582 = vcmp.eq.f32.partialorder %v4581, 8.507059e+37
    %v4583 = vand.u32 %v4571, 2147483648
    %v4584 = vor.u32 1.1754944e-38, %v4583
    %v4585 = vsel %vm4582, %v4584, %v4580
    %v4586 = vmul.f32 1.0, %v4585
    %v4587 = vtanh.pop %v4567
    %v4588 = vmul.f32 %v4586, %v4533
    %4590 = vrot.lane.b32.xlu0 %v4587, 64
    %v4591 = vpop.permute.xlu0 %4590
    %v4593 = vmul.f32 %v4586, %v4591
    %4595 = vrot.lane.b32.xlu0 %v4593, 32
    %v4596 = vpop.permute.xlu0 %4595
    %v4598 = vadd.f32 %v4588, %v4596
    %v4599 = vtanh.pop %v4598
    %4601 = vrot.lane.b32.xlu0 %v4599, 64
    %v4602 = vpop.permute.xlu0 %4601
    %v4604 = vmul.f32 %v4586, %v4602
    %4606 = vrot.lane.b32.xlu0 %v4604, 32
    %v4607 = vpop.permute.xlu0 %4606
    %4609 = vst.msk [vmem:[%s2649] sm:$0xff] %vm191, %v4607
    %v4610 = vsel %vm191, %v4607, 0
    %4612 = vmatpush.msra.mxu0 0.0
    %4613 = vmatpush.msra.mxu0 0.0
    %4614 = vmatpush.msra.mxu0 0.0
    %4615 = vmatpush.msra.mxu0 0.0
    %4616 = vmatpush.msra.mxu0 0.0
    %4617 = vmatpush.msra.mxu0 0.0
    %4618 = vmatpush.msra.mxu0 0.0
    %4619 = vmatpush.msra.mxu0 0.0
    %4620 = vmatpush.msra.mxu0 0.0
    %4621 = vmatpush.msra.mxu0 0.0
    %4622 = vmatpush.msra.mxu0 0.0
    %4623 = vmatpush.msra.mxu0 0.0
    %4624 = vmatpush.msra.mxu0 %v4133
    %4625 = vmatpush.msra.mxu0 %v4132
    %4626 = vmatpush.msra.mxu0 %v4131
    %4627 = vmatpush.msra.mxu0 %v4130
    %4628 = vmatmul.f32.gmra.mxu0 %v4610
    %v4629 = vpop.f32.mrf.mxu0
    %v4630 = vadd.f32 0.0, %v4629
    %4631 = vdwg.mxu0
    %v4632 = vadd.f32 %v4206, %v4630
    %v4633 = vxor.u32 %v4632, 2147483648
    %v4634 = vmul.f32 %v4633, 1.442695
    %v4635 = vpow.pop %v4634
    %v4636 = vadd.f32 %v4635, 1.0
    %v4637 = vrcp.pop %v4636
    %v4638 = vmul.f32 %v4636, %v4637
    %v4639 = vsub.f32 1.0, %v4638
    %v4640 = vmul.f32 %v4637, %v4639
    %v4641 = vadd.f32 %v4637, %v4640
    %vm4642 = vweird.f32 %v4636
    %vm4643 = vweird.f32 %v4637
    %vm4644 = vmor %vm4642, %vm4643
    %v4645 = vsel %vm4644, %v4637, %v4641
    %v4646 = vand.u32 2147483647, %v4636
    %vm4647 = vcmp.eq.f32.partialorder %v4646, 8.507059e+37
    %v4648 = vand.u32 %v4636, 2147483648
    %v4649 = vor.u32 1.1754944e-38, %v4648
    %v4650 = vsel %vm4647, %v4649, %v4645
    %v4651 = vmul.f32 1.0, %v4650
    %v4652 = vtanh.pop %v4632
    %v4653 = vmul.f32 %v4651, %v4598
    %4655 = vrot.lane.b32.xlu0 %v4652, 64
    %v4656 = vpop.permute.xlu0 %4655
    %v4658 = vmul.f32 %v4651, %v4656
    %4660 = vrot.lane.b32.xlu0 %v4658, 32
    %v4661 = vpop.permute.xlu0 %4660
    %v4663 = vadd.f32 %v4653, %v4661
    %v4664 = vtanh.pop %v4663
    %4666 = vrot.lane.b32.xlu0 %v4664, 64
    %v4667 = vpop.permute.xlu0 %4666
    %v4669 = vmul.f32 %v4651, %v4667
    %4671 = vrot.lane.b32.xlu0 %v4669, 32
    %v4672 = vpop.permute.xlu0 %4671
    %4674 = vst.msk [vmem:[%s3063] sm:$0xff] %vm191, %v4672
    %v4675 = vsel %vm191, %v4672, 0
    %4677 = vmatpush.msra.mxu0 0.0
    %4678 = vmatpush.msra.mxu0 0.0
    %4679 = vmatpush.msra.mxu0 0.0
    %4680 = vmatpush.msra.mxu0 0.0
    %4681 = vmatpush.msra.mxu0 0.0
    %4682 = vmatpush.msra.mxu0 0.0
    %4683 = vmatpush.msra.mxu0 0.0
    %4684 = vmatpush.msra.mxu0 0.0
    %4685 = vmatpush.msra.mxu0 0.0
    %4686 = vmatpush.msra.mxu0 0.0
    %4687 = vmatpush.msra.mxu0 0.0
    %4688 = vmatpush.msra.mxu0 0.0
    %4689 = vmatpush.msra.mxu0 %v4133
    %4690 = vmatpush.msra.mxu0 %v4132
    %4691 = vmatpush.msra.mxu0 %v4131
    %4692 = vmatpush.msra.mxu0 %v4130
    %4693 = vmatmul.f32.gmra.mxu0 %v4675
    %v4694 = vpop.f32.mrf.mxu0
    %v4695 = vadd.f32 0.0, %v4694
    %4696 = vdwg.mxu0
    %v4697 = vadd.f32 %v4209, %v4695
    %v4698 = vxor.u32 %v4697, 2147483648
    %v4699 = vmul.f32 %v4698, 1.442695
    %v4700 = vpow.pop %v4699
    %v4701 = vadd.f32 %v4700, 1.0
    %v4702 = vrcp.pop %v4701
    %v4703 = vmul.f32 %v4701, %v4702
    %v4704 = vsub.f32 1.0, %v4703
    %v4705 = vmul.f32 %v4702, %v4704
    %v4706 = vadd.f32 %v4702, %v4705
    %vm4707 = vweird.f32 %v4701
    %vm4708 = vweird.f32 %v4702
    %vm4709 = vmor %vm4707, %vm4708
    %v4710 = vsel %vm4709, %v4702, %v4706
    %v4711 = vand.u32 2147483647, %v4701
    %vm4712 = vcmp.eq.f32.partialorder %v4711, 8.507059e+37
    %v4713 = vand.u32 %v4701, 2147483648
    %v4714 = vor.u32 1.1754944e-38, %v4713
    %v4715 = vsel %vm4712, %v4714, %v4710
    %v4716 = vmul.f32 1.0, %v4715
    %v4717 = vtanh.pop %v4697
    %v4718 = vmul.f32 %v4716, %v4663
    %4720 = vrot.lane.b32.xlu0 %v4717, 64
    %v4721 = vpop.permute.xlu0 %4720
    %v4723 = vmul.f32 %v4716, %v4721
    %4725 = vrot.lane.b32.xlu0 %v4723, 32
    %v4726 = vpop.permute.xlu0 %4725
    %v4728 = vadd.f32 %v4718, %v4726
    %v4729 = vtanh.pop %v4728
    %4731 = vrot.lane.b32.xlu0 %v4729, 64
    %v4732 = vpop.permute.xlu0 %4731
    %v4734 = vmul.f32 %v4716, %v4732
    %4736 = vrot.lane.b32.xlu0 %v4734, 32
    %v4737 = vpop.permute.xlu0 %4736
    %4739 = vst.msk [vmem:[%s3477] sm:$0xff] %vm191, %v4737
    %s4740 = scalar_lea.vmem [#allocation11], 8
    %4741 = vst.msk [vmem:[%s4740] sm:$0xf] %vm2238, %v4737
    %4743 = vrot.lane.b32.xlu0 %v4728, 96
    %v4744 = vpop.permute.xlu0 %4743
    %s4746 = scalar_lea.vmem [#allocation13], 8
    %4747 = vst.msk [vmem:[%s4746] sm:$0xf] %vm2238, %v4744
    %v4748 = vld [vmem:[%s14] sm:$0xff]
    %v4749 = vld [vmem:[%s14 + $0x8] sm:$0xff]
    %v4750 = vld [vmem:[%s14 + $0x10] sm:$0xff]
    %v4751 = vld [vmem:[%s14 + $0x18] sm:$0xff]
    %v4752 = vld [vmem:[#allocation9] sm:$0xff]
    %v4753 = vld [vmem:[#allocation9 + $0x8] sm:$0xff]
    %v4754 = vld [vmem:[#allocation9 + $0x10] sm:$0xff]
    %v4755 = vld [vmem:[#allocation9 + $0x18] sm:$0xff]
    %v4756 = vld [vmem:[%s16] sm:$0x1]
    %v4757 = vld [vmem:[#allocation2] sm:$0xff]
    %v4758 = vld [vmem:[#allocation2 + $0x8] sm:$0xff]
    %v4759 = vld [vmem:[#allocation2 + $0x10] sm:$0xff]
    %v4760 = vld [vmem:[#allocation2 + $0x18] sm:$0xff]
    %v4761 = vld [vmem:[#allocation2 + $0x20] sm:$0xff]
    %v4762 = vld [vmem:[#allocation2 + $0x28] sm:$0xff]
    %v4763 = vld [vmem:[#allocation2 + $0x30] sm:$0xff]
    %v4764 = vld [vmem:[#allocation2 + $0x38] sm:$0xff]
    %v4766 = vperm.slane %v4756, 0
    %v4769 = vsel %vm191, %v4757, 0
    %v4772 = vsel %vm191, %v4758, 0
    %v4775 = vsel %vm191, %v4759, 0
    %v4778 = vsel %vm191, %v4760, 0
    %v4781 = vsel %vm191, %v4761, 0
    %v4784 = vsel %vm191, %v4762, 0
    %v4787 = vsel %vm191, %v4763, 0
    %v4790 = vsel %vm191, %v4764, 0
    %4792 = vmatpush.msra.mxu0 0.0
    %4793 = vmatpush.msra.mxu0 0.0
    %4794 = vmatpush.msra.mxu0 0.0
    %4795 = vmatpush.msra.mxu0 0.0
    %4796 = vmatpush.msra.mxu0 0.0
    %4797 = vmatpush.msra.mxu0 0.0
    %4798 = vmatpush.msra.mxu0 0.0
    %4799 = vmatpush.msra.mxu0 0.0
    %4800 = vmatpush.msra.mxu0 0.0
    %4801 = vmatpush.msra.mxu0 0.0
    %4802 = vmatpush.msra.mxu0 0.0
    %4803 = vmatpush.msra.mxu0 0.0
    %4804 = vmatpush.msra.mxu0 %v4751
    %4805 = vmatpush.msra.mxu0 %v4750
    %4806 = vmatpush.msra.mxu0 %v4749
    %4807 = vmatpush.msra.mxu0 %v4748
    %4808 = vmatmul.f32.gmra.mxu0 %v4769
    %v4809 = vpop.f32.mrf.mxu0
    %v4810 = vadd.f32 %v4766, %v4809
    %4811 = vmatmul.f32.gmra.mxu0 %v4772
    %v4812 = vpop.f32.mrf.mxu0
    %v4813 = vadd.f32 %v4766, %v4812
    %4814 = vmatmul.f32.gmra.mxu0 %v4775
    %v4815 = vpop.f32.mrf.mxu0
    %v4816 = vadd.f32 %v4766, %v4815
    %4817 = vmatmul.f32.gmra.mxu0 %v4778
    %v4818 = vpop.f32.mrf.mxu0
    %v4819 = vadd.f32 %v4766, %v4818
    %4820 = vmatmul.f32.gmra.mxu0 %v4781
    %v4821 = vpop.f32.mrf.mxu0
    %v4822 = vadd.f32 %v4766, %v4821
    %4823 = vmatmul.f32.gmra.mxu0 %v4784
    %v4824 = vpop.f32.mrf.mxu0
    %v4825 = vadd.f32 %v4766, %v4824
    %4826 = vmatmul.f32.gmra.mxu0 %v4787
    %v4827 = vpop.f32.mrf.mxu0
    %v4828 = vadd.f32 %v4766, %v4827
    %4829 = vmatmul.f32.gmra.mxu0 %v4790
    %v4830 = vpop.f32.mrf.mxu0
    %v4831 = vadd.f32 %v4766, %v4830
    %4832 = vdwg.mxu0
    %s4833 = scalar_lea.vmem %s1, 24
    %v4834 = vld [vmem:[%s4833] sm:$0xff]
    %s4835 = scalar_lea.vmem %s2, 24
    %v4836 = vld [vmem:[%s4835] sm:$0xff]
    %v4838 = vsel %vm191, %v4834, 0
    %4840 = vmatpush.msra.mxu0 0.0
    %4841 = vmatpush.msra.mxu0 0.0
    %4842 = vmatpush.msra.mxu0 0.0
    %4843 = vmatpush.msra.mxu0 0.0
    %4844 = vmatpush.msra.mxu0 0.0
    %4845 = vmatpush.msra.mxu0 0.0
    %4846 = vmatpush.msra.mxu0 0.0
    %4847 = vmatpush.msra.mxu0 0.0
    %4848 = vmatpush.msra.mxu0 0.0
    %4849 = vmatpush.msra.mxu0 0.0
    %4850 = vmatpush.msra.mxu0 0.0
    %4851 = vmatpush.msra.mxu0 0.0
    %4852 = vmatpush.msra.mxu0 %v4755
    %4853 = vmatpush.msra.mxu0 %v4754
    %4854 = vmatpush.msra.mxu0 %v4753
    %4855 = vmatpush.msra.mxu0 %v4752
    %4856 = vmatmul.f32.gmra.mxu0 %v4838
    %v4857 = vpop.f32.mrf.mxu0
    %v4858 = vadd.f32 0.0, %v4857
    %4859 = vdwg.mxu0
    %v4860 = vadd.f32 %v4810, %v4858
    %v4861 = vxor.u32 %v4860, 2147483648
    %v4862 = vmul.f32 %v4861, 1.442695
    %v4863 = vpow.pop %v4862
    %v4864 = vadd.f32 %v4863, 1.0
    %v4865 = vrcp.pop %v4864
    %v4866 = vmul.f32 %v4864, %v4865
    %v4867 = vsub.f32 1.0, %v4866
    %v4868 = vmul.f32 %v4865, %v4867
    %v4869 = vadd.f32 %v4865, %v4868
    %vm4870 = vweird.f32 %v4864
    %vm4871 = vweird.f32 %v4865
    %vm4872 = vmor %vm4870, %vm4871
    %v4873 = vsel %vm4872, %v4865, %v4869
    %v4874 = vand.u32 2147483647, %v4864
    %vm4875 = vcmp.eq.f32.partialorder %v4874, 8.507059e+37
    %v4876 = vand.u32 %v4864, 2147483648
    %v4877 = vor.u32 1.1754944e-38, %v4876
    %v4878 = vsel %vm4875, %v4877, %v4873
    %v4879 = vmul.f32 1.0, %v4878
    %v4880 = vtanh.pop %v4860
    %4882 = vrot.lane.b32.xlu0 %v4836, 32
    %v4883 = vpop.permute.xlu0 %4882
    %v4885 = vmul.f32 %v4879, %v4883
    %4887 = vrot.lane.b32.xlu0 %v4880, 64
    %v4888 = vpop.permute.xlu0 %4887
    %v4890 = vmul.f32 %v4879, %v4888
    %4892 = vrot.lane.b32.xlu0 %v4890, 32
    %v4893 = vpop.permute.xlu0 %4892
    %v4895 = vadd.f32 %v4885, %v4893
    %v4896 = vtanh.pop %v4895
    %4898 = vrot.lane.b32.xlu0 %v4896, 64
    %v4899 = vpop.permute.xlu0 %4898
    %v4901 = vmul.f32 %v4879, %v4899
    %4903 = vrot.lane.b32.xlu0 %v4901, 32
    %v4904 = vpop.permute.xlu0 %4903
    %4906 = vst.msk [vmem:[#allocation2] sm:$0xff] %vm191, %v4904
    %v4907 = vsel %vm191, %v4904, 0
    %4909 = vmatpush.msra.mxu0 0.0
    %4910 = vmatpush.msra.mxu0 0.0
    %4911 = vmatpush.msra.mxu0 0.0
    %4912 = vmatpush.msra.mxu0 0.0
    %4913 = vmatpush.msra.mxu0 0.0
    %4914 = vmatpush.msra.mxu0 0.0
    %4915 = vmatpush.msra.mxu0 0.0
    %4916 = vmatpush.msra.mxu0 0.0
    %4917 = vmatpush.msra.mxu0 0.0
    %4918 = vmatpush.msra.mxu0 0.0
    %4919 = vmatpush.msra.mxu0 0.0
    %4920 = vmatpush.msra.mxu0 0.0
    %4921 = vmatpush.msra.mxu0 %v4755
    %4922 = vmatpush.msra.mxu0 %v4754
    %4923 = vmatpush.msra.mxu0 %v4753
    %4924 = vmatpush.msra.mxu0 %v4752
    %4925 = vmatmul.f32.gmra.mxu0 %v4907
    %v4926 = vpop.f32.mrf.mxu0
    %v4927 = vadd.f32 0.0, %v4926
    %4928 = vdwg.mxu0
    %v4929 = vadd.f32 %v4813, %v4927
    %v4930 = vxor.u32 %v4929, 2147483648
    %v4931 = vmul.f32 %v4930, 1.442695
    %v4932 = vpow.pop %v4931
    %v4933 = vadd.f32 %v4932, 1.0
    %v4934 = vrcp.pop %v4933
    %v4935 = vmul.f32 %v4933, %v4934
    %v4936 = vsub.f32 1.0, %v4935
    %v4937 = vmul.f32 %v4934, %v4936
    %v4938 = vadd.f32 %v4934, %v4937
    %vm4939 = vweird.f32 %v4933
    %vm4940 = vweird.f32 %v4934
    %vm4941 = vmor %vm4939, %vm4940
    %v4942 = vsel %vm4941, %v4934, %v4938
    %v4943 = vand.u32 2147483647, %v4933
    %vm4944 = vcmp.eq.f32.partialorder %v4943, 8.507059e+37
    %v4945 = vand.u32 %v4933, 2147483648
    %v4946 = vor.u32 1.1754944e-38, %v4945
    %v4947 = vsel %vm4944, %v4946, %v4942
    %v4948 = vmul.f32 1.0, %v4947
    %v4949 = vtanh.pop %v4929
    %v4950 = vmul.f32 %v4948, %v4895
    %4952 = vrot.lane.b32.xlu0 %v4949, 64
    %v4953 = vpop.permute.xlu0 %4952
    %v4955 = vmul.f32 %v4948, %v4953
    %4957 = vrot.lane.b32.xlu0 %v4955, 32
    %v4958 = vpop.permute.xlu0 %4957
    %v4960 = vadd.f32 %v4950, %v4958
    %v4961 = vtanh.pop %v4960
    %4963 = vrot.lane.b32.xlu0 %v4961, 64
    %v4964 = vpop.permute.xlu0 %4963
    %v4966 = vmul.f32 %v4948, %v4964
    %4968 = vrot.lane.b32.xlu0 %v4966, 32
    %v4969 = vpop.permute.xlu0 %4968
    %4971 = vst.msk [vmem:[%s993] sm:$0xff] %vm191, %v4969
    %v4972 = vsel %vm191, %v4969, 0
    %4974 = vmatpush.msra.mxu0 0.0
    %4975 = vmatpush.msra.mxu0 0.0
    %4976 = vmatpush.msra.mxu0 0.0
    %4977 = vmatpush.msra.mxu0 0.0
    %4978 = vmatpush.msra.mxu0 0.0
    %4979 = vmatpush.msra.mxu0 0.0
    %4980 = vmatpush.msra.mxu0 0.0
    %4981 = vmatpush.msra.mxu0 0.0
    %4982 = vmatpush.msra.mxu0 0.0
    %4983 = vmatpush.msra.mxu0 0.0
    %4984 = vmatpush.msra.mxu0 0.0
    %4985 = vmatpush.msra.mxu0 0.0
    %4986 = vmatpush.msra.mxu0 %v4755
    %4987 = vmatpush.msra.mxu0 %v4754
    %4988 = vmatpush.msra.mxu0 %v4753
    %4989 = vmatpush.msra.mxu0 %v4752
    %4990 = vmatmul.f32.gmra.mxu0 %v4972
    %v4991 = vpop.f32.mrf.mxu0
    %v4992 = vadd.f32 0.0, %v4991
    %4993 = vdwg.mxu0
    %v4994 = vadd.f32 %v4816, %v4992
    %v4995 = vxor.u32 %v4994, 2147483648
    %v4996 = vmul.f32 %v4995, 1.442695
    %v4997 = vpow.pop %v4996
    %v4998 = vadd.f32 %v4997, 1.0
    %v4999 = vrcp.pop %v4998
    %v5000 = vmul.f32 %v4998, %v4999
    %v5001 = vsub.f32 1.0, %v5000
    %v5002 = vmul.f32 %v4999, %v5001
    %v5003 = vadd.f32 %v4999, %v5002
    %vm5004 = vweird.f32 %v4998
    %vm5005 = vweird.f32 %v4999
    %vm5006 = vmor %vm5004, %vm5005
    %v5007 = vsel %vm5006, %v4999, %v5003
    %v5008 = vand.u32 2147483647, %v4998
    %vm5009 = vcmp.eq.f32.partialorder %v5008, 8.507059e+37
    %v5010 = vand.u32 %v4998, 2147483648
    %v5011 = vor.u32 1.1754944e-38, %v5010
    %v5012 = vsel %vm5009, %v5011, %v5007
    %v5013 = vmul.f32 1.0, %v5012
    %v5014 = vtanh.pop %v4994
    %v5015 = vmul.f32 %v5013, %v4960
    %5017 = vrot.lane.b32.xlu0 %v5014, 64
    %v5018 = vpop.permute.xlu0 %5017
    %v5020 = vmul.f32 %v5013, %v5018
    %5022 = vrot.lane.b32.xlu0 %v5020, 32
    %v5023 = vpop.permute.xlu0 %5022
    %v5025 = vadd.f32 %v5015, %v5023
    %v5026 = vtanh.pop %v5025
    %5028 = vrot.lane.b32.xlu0 %v5026, 64
    %v5029 = vpop.permute.xlu0 %5028
    %v5031 = vmul.f32 %v5013, %v5029
    %5033 = vrot.lane.b32.xlu0 %v5031, 32
    %v5034 = vpop.permute.xlu0 %5033
    %5036 = vst.msk [vmem:[%s1407] sm:$0xff] %vm191, %v5034
    %v5037 = vsel %vm191, %v5034, 0
    %5039 = vmatpush.msra.mxu0 0.0
    %5040 = vmatpush.msra.mxu0 0.0
    %5041 = vmatpush.msra.mxu0 0.0
    %5042 = vmatpush.msra.mxu0 0.0
    %5043 = vmatpush.msra.mxu0 0.0
    %5044 = vmatpush.msra.mxu0 0.0
    %5045 = vmatpush.msra.mxu0 0.0
    %5046 = vmatpush.msra.mxu0 0.0
    %5047 = vmatpush.msra.mxu0 0.0
    %5048 = vmatpush.msra.mxu0 0.0
    %5049 = vmatpush.msra.mxu0 0.0
    %5050 = vmatpush.msra.mxu0 0.0
    %5051 = vmatpush.msra.mxu0 %v4755
    %5052 = vmatpush.msra.mxu0 %v4754
    %5053 = vmatpush.msra.mxu0 %v4753
    %5054 = vmatpush.msra.mxu0 %v4752
    %5055 = vmatmul.f32.gmra.mxu0 %v5037
    %v5056 = vpop.f32.mrf.mxu0
    %v5057 = vadd.f32 0.0, %v5056
    %5058 = vdwg.mxu0
    %v5059 = vadd.f32 %v4819, %v5057
    %v5060 = vxor.u32 %v5059, 2147483648
    %v5061 = vmul.f32 %v5060, 1.442695
    %v5062 = vpow.pop %v5061
    %v5063 = vadd.f32 %v5062, 1.0
    %v5064 = vrcp.pop %v5063
    %v5065 = vmul.f32 %v5063, %v5064
    %v5066 = vsub.f32 1.0, %v5065
    %v5067 = vmul.f32 %v5064, %v5066
    %v5068 = vadd.f32 %v5064, %v5067
    %vm5069 = vweird.f32 %v5063
    %vm5070 = vweird.f32 %v5064
    %vm5071 = vmor %vm5069, %vm5070
    %v5072 = vsel %vm5071, %v5064, %v5068
    %v5073 = vand.u32 2147483647, %v5063
    %vm5074 = vcmp.eq.f32.partialorder %v5073, 8.507059e+37
    %v5075 = vand.u32 %v5063, 2147483648
    %v5076 = vor.u32 1.1754944e-38, %v5075
    %v5077 = vsel %vm5074, %v5076, %v5072
    %v5078 = vmul.f32 1.0, %v5077
    %v5079 = vtanh.pop %v5059
    %v5080 = vmul.f32 %v5078, %v5025
    %5082 = vrot.lane.b32.xlu0 %v5079, 64
    %v5083 = vpop.permute.xlu0 %5082
    %v5085 = vmul.f32 %v5078, %v5083
    %5087 = vrot.lane.b32.xlu0 %v5085, 32
    %v5088 = vpop.permute.xlu0 %5087
    %v5090 = vadd.f32 %v5080, %v5088
    %v5091 = vtanh.pop %v5090
    %5093 = vrot.lane.b32.xlu0 %v5091, 64
    %v5094 = vpop.permute.xlu0 %5093
    %v5096 = vmul.f32 %v5078, %v5094
    %5098 = vrot.lane.b32.xlu0 %v5096, 32
    %v5099 = vpop.permute.xlu0 %5098
    %5101 = vst.msk [vmem:[%s1821] sm:$0xff] %vm191, %v5099
    %v5102 = vsel %vm191, %v5099, 0
    %5104 = vmatpush.msra.mxu0 0.0
    %5105 = vmatpush.msra.mxu0 0.0
    %5106 = vmatpush.msra.mxu0 0.0
    %5107 = vmatpush.msra.mxu0 0.0
    %5108 = vmatpush.msra.mxu0 0.0
    %5109 = vmatpush.msra.mxu0 0.0
    %5110 = vmatpush.msra.mxu0 0.0
    %5111 = vmatpush.msra.mxu0 0.0
    %5112 = vmatpush.msra.mxu0 0.0
    %5113 = vmatpush.msra.mxu0 0.0
    %5114 = vmatpush.msra.mxu0 0.0
    %5115 = vmatpush.msra.mxu0 0.0
    %5116 = vmatpush.msra.mxu0 %v4755
    %5117 = vmatpush.msra.mxu0 %v4754
    %5118 = vmatpush.msra.mxu0 %v4753
    %5119 = vmatpush.msra.mxu0 %v4752
    %5120 = vmatmul.f32.gmra.mxu0 %v5102
    %v5121 = vpop.f32.mrf.mxu0
    %v5122 = vadd.f32 0.0, %v5121
    %5123 = vdwg.mxu0
    %v5124 = vadd.f32 %v4822, %v5122
    %v5125 = vxor.u32 %v5124, 2147483648
    %v5126 = vmul.f32 %v5125, 1.442695
    %v5127 = vpow.pop %v5126
    %v5128 = vadd.f32 %v5127, 1.0
    %v5129 = vrcp.pop %v5128
    %v5130 = vmul.f32 %v5128, %v5129
    %v5131 = vsub.f32 1.0, %v5130
    %v5132 = vmul.f32 %v5129, %v5131
    %v5133 = vadd.f32 %v5129, %v5132
    %vm5134 = vweird.f32 %v5128
    %vm5135 = vweird.f32 %v5129
    %vm5136 = vmor %vm5134, %vm5135
    %v5137 = vsel %vm5136, %v5129, %v5133
    %v5138 = vand.u32 2147483647, %v5128
    %vm5139 = vcmp.eq.f32.partialorder %v5138, 8.507059e+37
    %v5140 = vand.u32 %v5128, 2147483648
    %v5141 = vor.u32 1.1754944e-38, %v5140
    %v5142 = vsel %vm5139, %v5141, %v5137
    %v5143 = vmul.f32 1.0, %v5142
    %v5144 = vtanh.pop %v5124
    %v5145 = vmul.f32 %v5143, %v5090
    %5147 = vrot.lane.b32.xlu0 %v5144, 64
    %v5148 = vpop.permute.xlu0 %5147
    %v5150 = vmul.f32 %v5143, %v5148
    %5152 = vrot.lane.b32.xlu0 %v5150, 32
    %v5153 = vpop.permute.xlu0 %5152
    %v5155 = vadd.f32 %v5145, %v5153
    %v5156 = vtanh.pop %v5155
    %5158 = vrot.lane.b32.xlu0 %v5156, 64
    %v5159 = vpop.permute.xlu0 %5158
    %v5161 = vmul.f32 %v5143, %v5159
    %5163 = vrot.lane.b32.xlu0 %v5161, 32
    %v5164 = vpop.permute.xlu0 %5163
    %5166 = vst.msk [vmem:[%s2235] sm:$0xff] %vm191, %v5164
    %v5167 = vsel %vm191, %v5164, 0
    %5169 = vmatpush.msra.mxu0 0.0
    %5170 = vmatpush.msra.mxu0 0.0
    %5171 = vmatpush.msra.mxu0 0.0
    %5172 = vmatpush.msra.mxu0 0.0
    %5173 = vmatpush.msra.mxu0 0.0
    %5174 = vmatpush.msra.mxu0 0.0
    %5175 = vmatpush.msra.mxu0 0.0
    %5176 = vmatpush.msra.mxu0 0.0
    %5177 = vmatpush.msra.mxu0 0.0
    %5178 = vmatpush.msra.mxu0 0.0
    %5179 = vmatpush.msra.mxu0 0.0
    %5180 = vmatpush.msra.mxu0 0.0
    %5181 = vmatpush.msra.mxu0 %v4755
    %5182 = vmatpush.msra.mxu0 %v4754
    %5183 = vmatpush.msra.mxu0 %v4753
    %5184 = vmatpush.msra.mxu0 %v4752
    %5185 = vmatmul.f32.gmra.mxu0 %v5167
    %v5186 = vpop.f32.mrf.mxu0
    %v5187 = vadd.f32 0.0, %v5186
    %5188 = vdwg.mxu0
    %v5189 = vadd.f32 %v4825, %v5187
    %v5190 = vxor.u32 %v5189, 2147483648
    %v5191 = vmul.f32 %v5190, 1.442695
    %v5192 = vpow.pop %v5191
    %v5193 = vadd.f32 %v5192, 1.0
    %v5194 = vrcp.pop %v5193
    %v5195 = vmul.f32 %v5193, %v5194
    %v5196 = vsub.f32 1.0, %v5195
    %v5197 = vmul.f32 %v5194, %v5196
    %v5198 = vadd.f32 %v5194, %v5197
    %vm5199 = vweird.f32 %v5193
    %vm5200 = vweird.f32 %v5194
    %vm5201 = vmor %vm5199, %vm5200
    %v5202 = vsel %vm5201, %v5194, %v5198
    %v5203 = vand.u32 2147483647, %v5193
    %vm5204 = vcmp.eq.f32.partialorder %v5203, 8.507059e+37
    %v5205 = vand.u32 %v5193, 2147483648
    %v5206 = vor.u32 1.1754944e-38, %v5205
    %v5207 = vsel %vm5204, %v5206, %v5202
    %v5208 = vmul.f32 1.0, %v5207
    %v5209 = vtanh.pop %v5189
    %v5210 = vmul.f32 %v5208, %v5155
    %5212 = vrot.lane.b32.xlu0 %v5209, 64
    %v5213 = vpop.permute.xlu0 %5212
    %v5215 = vmul.f32 %v5208, %v5213
    %5217 = vrot.lane.b32.xlu0 %v5215, 32
    %v5218 = vpop.permute.xlu0 %5217
    %v5220 = vadd.f32 %v5210, %v5218
    %v5221 = vtanh.pop %v5220
    %5223 = vrot.lane.b32.xlu0 %v5221, 64
    %v5224 = vpop.permute.xlu0 %5223
    %v5226 = vmul.f32 %v5208, %v5224
    %5228 = vrot.lane.b32.xlu0 %v5226, 32
    %v5229 = vpop.permute.xlu0 %5228
    %5231 = vst.msk [vmem:[%s2649] sm:$0xff] %vm191, %v5229
    %v5232 = vsel %vm191, %v5229, 0
    %5234 = vmatpush.msra.mxu0 0.0
    %5235 = vmatpush.msra.mxu0 0.0
    %5236 = vmatpush.msra.mxu0 0.0
    %5237 = vmatpush.msra.mxu0 0.0
    %5238 = vmatpush.msra.mxu0 0.0
    %5239 = vmatpush.msra.mxu0 0.0
    %5240 = vmatpush.msra.mxu0 0.0
    %5241 = vmatpush.msra.mxu0 0.0
    %5242 = vmatpush.msra.mxu0 0.0
    %5243 = vmatpush.msra.mxu0 0.0
    %5244 = vmatpush.msra.mxu0 0.0
    %5245 = vmatpush.msra.mxu0 0.0
    %5246 = vmatpush.msra.mxu0 %v4755
    %5247 = vmatpush.msra.mxu0 %v4754
    %5248 = vmatpush.msra.mxu0 %v4753
    %5249 = vmatpush.msra.mxu0 %v4752
    %5250 = vmatmul.f32.gmra.mxu0 %v5232
    %v5251 = vpop.f32.mrf.mxu0
    %v5252 = vadd.f32 0.0, %v5251
    %5253 = vdwg.mxu0
    %v5254 = vadd.f32 %v4828, %v5252
    %v5255 = vxor.u32 %v5254, 2147483648
    %v5256 = vmul.f32 %v5255, 1.442695
    %v5257 = vpow.pop %v5256
    %v5258 = vadd.f32 %v5257, 1.0
    %v5259 = vrcp.pop %v5258
    %v5260 = vmul.f32 %v5258, %v5259
    %v5261 = vsub.f32 1.0, %v5260
    %v5262 = vmul.f32 %v5259, %v5261
    %v5263 = vadd.f32 %v5259, %v5262
    %vm5264 = vweird.f32 %v5258
    %vm5265 = vweird.f32 %v5259
    %vm5266 = vmor %vm5264, %vm5265
    %v5267 = vsel %vm5266, %v5259, %v5263
    %v5268 = vand.u32 2147483647, %v5258
    %vm5269 = vcmp.eq.f32.partialorder %v5268, 8.507059e+37
    %v5270 = vand.u32 %v5258, 2147483648
    %v5271 = vor.u32 1.1754944e-38, %v5270
    %v5272 = vsel %vm5269, %v5271, %v5267
    %v5273 = vmul.f32 1.0, %v5272
    %v5274 = vtanh.pop %v5254
    %v5275 = vmul.f32 %v5273, %v5220
    %5277 = vrot.lane.b32.xlu0 %v5274, 64
    %v5278 = vpop.permute.xlu0 %5277
    %v5280 = vmul.f32 %v5273, %v5278
    %5282 = vrot.lane.b32.xlu0 %v5280, 32
    %v5283 = vpop.permute.xlu0 %5282
    %v5285 = vadd.f32 %v5275, %v5283
    %v5286 = vtanh.pop %v5285
    %5288 = vrot.lane.b32.xlu0 %v5286, 64
    %v5289 = vpop.permute.xlu0 %5288
    %v5291 = vmul.f32 %v5273, %v5289
    %5293 = vrot.lane.b32.xlu0 %v5291, 32
    %v5294 = vpop.permute.xlu0 %5293
    %5296 = vst.msk [vmem:[%s3063] sm:$0xff] %vm191, %v5294
    %v5297 = vsel %vm191, %v5294, 0
    %5299 = vmatpush.msra.mxu0 0.0
    %5300 = vmatpush.msra.mxu0 0.0
    %5301 = vmatpush.msra.mxu0 0.0
    %5302 = vmatpush.msra.mxu0 0.0
    %5303 = vmatpush.msra.mxu0 0.0
    %5304 = vmatpush.msra.mxu0 0.0
    %5305 = vmatpush.msra.mxu0 0.0
    %5306 = vmatpush.msra.mxu0 0.0
    %5307 = vmatpush.msra.mxu0 0.0
    %5308 = vmatpush.msra.mxu0 0.0
    %5309 = vmatpush.msra.mxu0 0.0
    %5310 = vmatpush.msra.mxu0 0.0
    %5311 = vmatpush.msra.mxu0 %v4755
    %5312 = vmatpush.msra.mxu0 %v4754
    %5313 = vmatpush.msra.mxu0 %v4753
    %5314 = vmatpush.msra.mxu0 %v4752
    %5315 = vmatmul.f32.gmra.mxu0 %v5297
    %v5316 = vpop.f32.mrf.mxu0
    %v5317 = vadd.f32 0.0, %v5316
    %5318 = vdwg.mxu0
    %v5319 = vadd.f32 %v4831, %v5317
    %v5320 = vxor.u32 %v5319, 2147483648
    %v5321 = vmul.f32 %v5320, 1.442695
    %v5322 = vpow.pop %v5321
    %v5323 = vadd.f32 %v5322, 1.0
    %v5324 = vrcp.pop %v5323
    %v5325 = vmul.f32 %v5323, %v5324
    %v5326 = vsub.f32 1.0, %v5325
    %v5327 = vmul.f32 %v5324, %v5326
    %v5328 = vadd.f32 %v5324, %v5327
    %vm5329 = vweird.f32 %v5323
    %vm5330 = vweird.f32 %v5324
    %vm5331 = vmor %vm5329, %vm5330
    %v5332 = vsel %vm5331, %v5324, %v5328
    %v5333 = vand.u32 2147483647, %v5323
    %vm5334 = vcmp.eq.f32.partialorder %v5333, 8.507059e+37
    %v5335 = vand.u32 %v5323, 2147483648
    %v5336 = vor.u32 1.1754944e-38, %v5335
    %v5337 = vsel %vm5334, %v5336, %v5332
    %v5338 = vmul.f32 1.0, %v5337
    %v5339 = vtanh.pop %v5319
    %v5340 = vmul.f32 %v5338, %v5285
    %5342 = vrot.lane.b32.xlu0 %v5339, 64
    %v5343 = vpop.permute.xlu0 %5342
    %v5345 = vmul.f32 %v5338, %v5343
    %5347 = vrot.lane.b32.xlu0 %v5345, 32
    %v5348 = vpop.permute.xlu0 %5347
    %v5350 = vadd.f32 %v5340, %v5348
    %v5351 = vtanh.pop %v5350
    %5353 = vrot.lane.b32.xlu0 %v5351, 64
    %v5354 = vpop.permute.xlu0 %5353
    %v5356 = vmul.f32 %v5338, %v5354
    %5358 = vrot.lane.b32.xlu0 %v5356, 32
    %v5359 = vpop.permute.xlu0 %5358
    %5361 = vst.msk [vmem:[%s3477] sm:$0xff] %vm191, %v5359
    %s5362 = scalar_lea.vmem [#allocation11], 12
    %5363 = vst.msk [vmem:[%s5362] sm:$0xf] %vm2238, %v5359
    %5365 = vrot.lane.b32.xlu0 %v5350, 96
    %v5366 = vpop.permute.xlu0 %5365
    %s5368 = scalar_lea.vmem [#allocation13], 12
    %5369 = vst.msk [vmem:[%s5368] sm:$0xf] %vm2238, %v5366
    %v5370 = vld [vmem:[#allocation2] sm:$0xff]
    %v5371 = vsel %vm2238, %v5370, 0.0
    %5372 = vadd.xlane.f32.xlu0 %v5371
    %v5373 = vpop.xlane.xlu0 %5372
    %v5374 = vrot.slane %v5373, 4
    %v5375 = vadd.f32 %v5373, %v5374
    %v5376 = vrot.slane %v5375, 2
    %v5377 = vadd.f32 %v5375, %v5376
    %v5378 = vrot.slane %v5377, 1
    %v5379 = vadd.f32 %v5377, %v5378
    %s5380 = vtos %v5379
    %s5381 = smul.f32 %s5380, 0.0078125
    %v5382 = vstv %s5381
    %v5383 = vsub.f32 %v5370, %v5382
    %v5384 = vmul.f32 %v5383, %v5383
    %v5385 = vsel %vm2238, %v5384, 0.0
    %5386 = vadd.xlane.f32.xlu0 %v5385
    %v5387 = vpop.xlane.xlu0 %5386
    %v5388 = vrot.slane %v5387, 4
    %v5389 = vadd.f32 %v5387, %v5388
    %v5390 = vrot.slane %v5389, 2
    %v5391 = vadd.f32 %v5389, %v5390
    %v5392 = vrot.slane %v5391, 1
    %v5393 = vadd.f32 %v5391, %v5392
    %s5394 = vtos %v5393
    %s5395 = smul.f32 %s5394, 0.0078125
    %s5396 = sadd.f32 %s5395, 1e-05
    %v5397 = vstv %s5396
    %v5398 = vrsqrt.pop %v5397
    %v5399 = vmul.f32 %v5398, %v5397
    %v5400 = vmul.f32 %v5399, %v5398
    %v5401 = vmul.f32 0.5, %v5400
    %v5402 = vsub.f32 1.5, %v5401
    %v5403 = vmul.f32 %v5398, %v5402
    %vm5404 = vweird.f32 %v5397
    %vm5405 = vweird.f32 %v5398
    %vm5406 = vmor %vm5404, %vm5405
    %v5407 = vsel %vm5406, %v5398, %v5403
    %s5408 = vtos %v5407
    %v5409 = vstv %s5408
    %v5410 = vmul.f32 %v5383, %v5409
    %s5411 = sld [smem:[#allocation3]]
    %v5412 = vstv %s5411
    %v5413 = vmul.f32 %v5412, %v5410
    %s5414 = sld [smem:[#allocation7]]
    %v5415 = vstv %s5414
    %v5416 = vadd.f32 %v5413, %v5415
    %v5418 = vrot.slane %v5416, 1
    %v5419 = vrot.slane %v5416, 2
    %v5420 = vrot.slane %v5416, 3
    %5424 = vst.msk [vmem:[#allocation10] sm:$0x1] %vm996, %v5416
    %5425 = vst.msk [vmem:[#allocation10 + $0x8] sm:$0x1] %vm996, %v5418
    %5426 = vst.msk [vmem:[#allocation10 + $0x10] sm:$0x1] %vm996, %v5419
    %5427 = vst.msk [vmem:[#allocation10 + $0x18] sm:$0x1] %vm996, %v5420
    %v5428 = vld [vmem:[%s993] sm:$0xff]
    %v5429 = vsel %vm2238, %v5428, 0.0
    %5430 = vadd.xlane.f32.xlu0 %v5429
    %v5431 = vpop.xlane.xlu0 %5430
    %v5432 = vrot.slane %v5431, 4
    %v5433 = vadd.f32 %v5431, %v5432
    %v5434 = vrot.slane %v5433, 2
    %v5435 = vadd.f32 %v5433, %v5434
    %v5436 = vrot.slane %v5435, 1
    %v5437 = vadd.f32 %v5435, %v5436
    %s5438 = vtos %v5437
    %s5439 = smul.f32 %s5438, 0.0078125
    %v5440 = vstv %s5439
    %v5441 = vsub.f32 %v5428, %v5440
    %v5442 = vmul.f32 %v5441, %v5441
    %v5443 = vsel %vm2238, %v5442, 0.0
    %5444 = vadd.xlane.f32.xlu0 %v5443
    %v5445 = vpop.xlane.xlu0 %5444
    %v5446 = vrot.slane %v5445, 4
    %v5447 = vadd.f32 %v5445, %v5446
    %v5448 = vrot.slane %v5447, 2
    %v5449 = vadd.f32 %v5447, %v5448
    %v5450 = vrot.slane %v5449, 1
    %v5451 = vadd.f32 %v5449, %v5450
    %s5452 = vtos %v5451
    %s5453 = smul.f32 %s5452, 0.0078125
    %s5454 = sadd.f32 %s5453, 1e-05
    %v5455 = vstv %s5454
    %v5456 = vrsqrt.pop %v5455
    %v5457 = vmul.f32 %v5456, %v5455
    %v5458 = vmul.f32 %v5457, %v5456
    %v5459 = vmul.f32 0.5, %v5458
    %v5460 = vsub.f32 1.5, %v5459
    %v5461 = vmul.f32 %v5456, %v5460
    %vm5462 = vweird.f32 %v5455
    %vm5463 = vweird.f32 %v5456
    %vm5464 = vmor %vm5462, %vm5463
    %v5465 = vsel %vm5464, %v5456, %v5461
    %s5466 = vtos %v5465
    %v5467 = vstv %s5466
    %v5468 = vmul.f32 %v5441, %v5467
    %s5469 = sld [smem:[#allocation3 + $0x1]]
    %v5470 = vstv %s5469
    %v5471 = vmul.f32 %v5470, %v5468
    %s5472 = sld [smem:[#allocation7 + $0x1]]
    %v5473 = vstv %s5472
    %v5474 = vadd.f32 %v5471, %v5473
    %v5476 = vrot.slane %v5474, 1
    %v5477 = vrot.slane %v5474, 2
    %v5478 = vrot.slane %v5474, 3
    %5482 = vst.msk [vmem:[#allocation10 + $0x1] sm:$0x1] %vm996, %v5474
    %5483 = vst.msk [vmem:[#allocation10 + $0x9] sm:$0x1] %vm996, %v5476
    %5484 = vst.msk [vmem:[#allocation10 + $0x11] sm:$0x1] %vm996, %v5477
    %5485 = vst.msk [vmem:[#allocation10 + $0x19] sm:$0x1] %vm996, %v5478
    %v5486 = vld [vmem:[%s1407] sm:$0xff]
    %v5487 = vsel %vm2238, %v5486, 0.0
    %5488 = vadd.xlane.f32.xlu0 %v5487
    %v5489 = vpop.xlane.xlu0 %5488
    %v5490 = vrot.slane %v5489, 4
    %v5491 = vadd.f32 %v5489, %v5490
    %v5492 = vrot.slane %v5491, 2
    %v5493 = vadd.f32 %v5491, %v5492
    %v5494 = vrot.slane %v5493, 1
    %v5495 = vadd.f32 %v5493, %v5494
    %s5496 = vtos %v5495
    %s5497 = smul.f32 %s5496, 0.0078125
    %v5498 = vstv %s5497
    %v5499 = vsub.f32 %v5486, %v5498
    %v5500 = vmul.f32 %v5499, %v5499
    %v5501 = vsel %vm2238, %v5500, 0.0
    %5502 = vadd.xlane.f32.xlu0 %v5501
    %v5503 = vpop.xlane.xlu0 %5502
    %v5504 = vrot.slane %v5503, 4
    %v5505 = vadd.f32 %v5503, %v5504
    %v5506 = vrot.slane %v5505, 2
    %v5507 = vadd.f32 %v5505, %v5506
    %v5508 = vrot.slane %v5507, 1
    %v5509 = vadd.f32 %v5507, %v5508
    %s5510 = vtos %v5509
    %s5511 = smul.f32 %s5510, 0.0078125
    %s5512 = sadd.f32 %s5511, 1e-05
    %v5513 = vstv %s5512
    %v5514 = vrsqrt.pop %v5513
    %v5515 = vmul.f32 %v5514, %v5513
    %v5516 = vmul.f32 %v5515, %v5514
    %v5517 = vmul.f32 0.5, %v5516
    %v5518 = vsub.f32 1.5, %v5517
    %v5519 = vmul.f32 %v5514, %v5518
    %vm5520 = vweird.f32 %v5513
    %vm5521 = vweird.f32 %v5514
    %vm5522 = vmor %vm5520, %vm5521
    %v5523 = vsel %vm5522, %v5514, %v5519
    %s5524 = vtos %v5523
    %v5525 = vstv %s5524
    %v5526 = vmul.f32 %v5499, %v5525
    %s5527 = sld [smem:[#allocation3 + $0x2]]
    %v5528 = vstv %s5527
    %v5529 = vmul.f32 %v5528, %v5526
    %s5530 = sld [smem:[#allocation7 + $0x2]]
    %v5531 = vstv %s5530
    %v5532 = vadd.f32 %v5529, %v5531
    %v5534 = vrot.slane %v5532, 1
    %v5535 = vrot.slane %v5532, 2
    %v5536 = vrot.slane %v5532, 3
    %5540 = vst.msk [vmem:[#allocation10 + $0x2] sm:$0x1] %vm996, %v5532
    %5541 = vst.msk [vmem:[#allocation10 + $0xa] sm:$0x1] %vm996, %v5534
    %5542 = vst.msk [vmem:[#allocation10 + $0x12] sm:$0x1] %vm996, %v5535
    %5543 = vst.msk [vmem:[#allocation10 + $0x1a] sm:$0x1] %vm996, %v5536
    %v5544 = vld [vmem:[%s1821] sm:$0xff]
    %v5545 = vsel %vm2238, %v5544, 0.0
    %5546 = vadd.xlane.f32.xlu0 %v5545
    %v5547 = vpop.xlane.xlu0 %5546
    %v5548 = vrot.slane %v5547, 4
    %v5549 = vadd.f32 %v5547, %v5548
    %v5550 = vrot.slane %v5549, 2
    %v5551 = vadd.f32 %v5549, %v5550
    %v5552 = vrot.slane %v5551, 1
    %v5553 = vadd.f32 %v5551, %v5552
    %s5554 = vtos %v5553
    %s5555 = smul.f32 %s5554, 0.0078125
    %v5556 = vstv %s5555
    %v5557 = vsub.f32 %v5544, %v5556
    %v5558 = vmul.f32 %v5557, %v5557
    %v5559 = vsel %vm2238, %v5558, 0.0
    %5560 = vadd.xlane.f32.xlu0 %v5559
    %v5561 = vpop.xlane.xlu0 %5560
    %v5562 = vrot.slane %v5561, 4
    %v5563 = vadd.f32 %v5561, %v5562
    %v5564 = vrot.slane %v5563, 2
    %v5565 = vadd.f32 %v5563, %v5564
    %v5566 = vrot.slane %v5565, 1
    %v5567 = vadd.f32 %v5565, %v5566
    %s5568 = vtos %v5567
    %s5569 = smul.f32 %s5568, 0.0078125
    %s5570 = sadd.f32 %s5569, 1e-05
    %v5571 = vstv %s5570
    %v5572 = vrsqrt.pop %v5571
    %v5573 = vmul.f32 %v5572, %v5571
    %v5574 = vmul.f32 %v5573, %v5572
    %v5575 = vmul.f32 0.5, %v5574
    %v5576 = vsub.f32 1.5, %v5575
    %v5577 = vmul.f32 %v5572, %v5576
    %vm5578 = vweird.f32 %v5571
    %vm5579 = vweird.f32 %v5572
    %vm5580 = vmor %vm5578, %vm5579
    %v5581 = vsel %vm5580, %v5572, %v5577
    %s5582 = vtos %v5581
    %v5583 = vstv %s5582
    %v5584 = vmul.f32 %v5557, %v5583
    %s5585 = sld [smem:[#allocation3 + $0x3]]
    %v5586 = vstv %s5585
    %v5587 = vmul.f32 %v5586, %v5584
    %s5588 = sld [smem:[#allocation7 + $0x3]]
    %v5589 = vstv %s5588
    %v5590 = vadd.f32 %v5587, %v5589
    %v5592 = vrot.slane %v5590, 1
    %v5593 = vrot.slane %v5590, 2
    %v5594 = vrot.slane %v5590, 3
    %5598 = vst.msk [vmem:[#allocation10 + $0x3] sm:$0x1] %vm996, %v5590
    %5599 = vst.msk [vmem:[#allocation10 + $0xb] sm:$0x1] %vm996, %v5592
    %5600 = vst.msk [vmem:[#allocation10 + $0x13] sm:$0x1] %vm996, %v5593
    %5601 = vst.msk [vmem:[#allocation10 + $0x1b] sm:$0x1] %vm996, %v5594
    %v5602 = vld [vmem:[%s2235] sm:$0xff]
    %v5603 = vsel %vm2238, %v5602, 0.0
    %5604 = vadd.xlane.f32.xlu0 %v5603
    %v5605 = vpop.xlane.xlu0 %5604
    %v5606 = vrot.slane %v5605, 4
    %v5607 = vadd.f32 %v5605, %v5606
    %v5608 = vrot.slane %v5607, 2
    %v5609 = vadd.f32 %v5607, %v5608
    %v5610 = vrot.slane %v5609, 1
    %v5611 = vadd.f32 %v5609, %v5610
    %s5612 = vtos %v5611
    %s5613 = smul.f32 %s5612, 0.0078125
    %v5614 = vstv %s5613
    %v5615 = vsub.f32 %v5602, %v5614
    %v5616 = vmul.f32 %v5615, %v5615
    %v5617 = vsel %vm2238, %v5616, 0.0
    %5618 = vadd.xlane.f32.xlu0 %v5617
    %v5619 = vpop.xlane.xlu0 %5618
    %v5620 = vrot.slane %v5619, 4
    %v5621 = vadd.f32 %v5619, %v5620
    %v5622 = vrot.slane %v5621, 2
    %v5623 = vadd.f32 %v5621, %v5622
    %v5624 = vrot.slane %v5623, 1
    %v5625 = vadd.f32 %v5623, %v5624
    %s5626 = vtos %v5625
    %s5627 = smul.f32 %s5626, 0.0078125
    %s5628 = sadd.f32 %s5627, 1e-05
    %v5629 = vstv %s5628
    %v5630 = vrsqrt.pop %v5629
    %v5631 = vmul.f32 %v5630, %v5629
    %v5632 = vmul.f32 %v5631, %v5630
    %v5633 = vmul.f32 0.5, %v5632
    %v5634 = vsub.f32 1.5, %v5633
    %v5635 = vmul.f32 %v5630, %v5634
    %vm5636 = vweird.f32 %v5629
    %vm5637 = vweird.f32 %v5630
    %vm5638 = vmor %vm5636, %vm5637
    %v5639 = vsel %vm5638, %v5630, %v5635
    %s5640 = vtos %v5639
    %v5641 = vstv %s5640
    %v5642 = vmul.f32 %v5615, %v5641
    %s5643 = sld [smem:[#allocation3 + $0x4]]
    %v5644 = vstv %s5643
    %v5645 = vmul.f32 %v5644, %v5642
    %s5646 = sld [smem:[#allocation7 + $0x4]]
    %v5647 = vstv %s5646
    %v5648 = vadd.f32 %v5645, %v5647
    %v5650 = vrot.slane %v5648, 1
    %v5651 = vrot.slane %v5648, 2
    %v5652 = vrot.slane %v5648, 3
    %5656 = vst.msk [vmem:[#allocation10 + $0x4] sm:$0x1] %vm996, %v5648
    %5657 = vst.msk [vmem:[#allocation10 + $0xc] sm:$0x1] %vm996, %v5650
    %5658 = vst.msk [vmem:[#allocation10 + $0x14] sm:$0x1] %vm996, %v5651
    %5659 = vst.msk [vmem:[#allocation10 + $0x1c] sm:$0x1] %vm996, %v5652
    %v5660 = vld [vmem:[%s2649] sm:$0xff]
    %v5661 = vsel %vm2238, %v5660, 0.0
    %5662 = vadd.xlane.f32.xlu0 %v5661
    %v5663 = vpop.xlane.xlu0 %5662
    %v5664 = vrot.slane %v5663, 4
    %v5665 = vadd.f32 %v5663, %v5664
    %v5666 = vrot.slane %v5665, 2
    %v5667 = vadd.f32 %v5665, %v5666
    %v5668 = vrot.slane %v5667, 1
    %v5669 = vadd.f32 %v5667, %v5668
    %s5670 = vtos %v5669
    %s5671 = smul.f32 %s5670, 0.0078125
    %v5672 = vstv %s5671
    %v5673 = vsub.f32 %v5660, %v5672
    %v5674 = vmul.f32 %v5673, %v5673
    %v5675 = vsel %vm2238, %v5674, 0.0
    %5676 = vadd.xlane.f32.xlu0 %v5675
    %v5677 = vpop.xlane.xlu0 %5676
    %v5678 = vrot.slane %v5677, 4
    %v5679 = vadd.f32 %v5677, %v5678
    %v5680 = vrot.slane %v5679, 2
    %v5681 = vadd.f32 %v5679, %v5680
    %v5682 = vrot.slane %v5681, 1
    %v5683 = vadd.f32 %v5681, %v5682
    %s5684 = vtos %v5683
    %s5685 = smul.f32 %s5684, 0.0078125
    %s5686 = sadd.f32 %s5685, 1e-05
    %v5687 = vstv %s5686
    %v5688 = vrsqrt.pop %v5687
    %v5689 = vmul.f32 %v5688, %v5687
    %v5690 = vmul.f32 %v5689, %v5688
    %v5691 = vmul.f32 0.5, %v5690
    %v5692 = vsub.f32 1.5, %v5691
    %v5693 = vmul.f32 %v5688, %v5692
    %vm5694 = vweird.f32 %v5687
    %vm5695 = vweird.f32 %v5688
    %vm5696 = vmor %vm5694, %vm5695
    %v5697 = vsel %vm5696, %v5688, %v5693
    %s5698 = vtos %v5697
    %v5699 = vstv %s5698
    %v5700 = vmul.f32 %v5673, %v5699
    %s5701 = sld [smem:[#allocation3 + $0x5]]
    %v5702 = vstv %s5701
    %v5703 = vmul.f32 %v5702, %v5700
    %s5704 = sld [smem:[#allocation7 + $0x5]]
    %v5705 = vstv %s5704
    %v5706 = vadd.f32 %v5703, %v5705
    %v5708 = vrot.slane %v5706, 1
    %v5709 = vrot.slane %v5706, 2
    %v5710 = vrot.slane %v5706, 3
    %5714 = vst.msk [vmem:[#allocation10 + $0x5] sm:$0x1] %vm996, %v5706
    %5715 = vst.msk [vmem:[#allocation10 + $0xd] sm:$0x1] %vm996, %v5708
    %5716 = vst.msk [vmem:[#allocation10 + $0x15] sm:$0x1] %vm996, %v5709
    %5717 = vst.msk [vmem:[#allocation10 + $0x1d] sm:$0x1] %vm996, %v5710
    %v5718 = vld [vmem:[%s3063] sm:$0xff]
    %v5719 = vsel %vm2238, %v5718, 0.0
    %5720 = vadd.xlane.f32.xlu0 %v5719
    %v5721 = vpop.xlane.xlu0 %5720
    %v5722 = vrot.slane %v5721, 4
    %v5723 = vadd.f32 %v5721, %v5722
    %v5724 = vrot.slane %v5723, 2
    %v5725 = vadd.f32 %v5723, %v5724
    %v5726 = vrot.slane %v5725, 1
    %v5727 = vadd.f32 %v5725, %v5726
    %s5728 = vtos %v5727
    %s5729 = smul.f32 %s5728, 0.0078125
    %v5730 = vstv %s5729
    %v5731 = vsub.f32 %v5718, %v5730
    %v5732 = vmul.f32 %v5731, %v5731
    %v5733 = vsel %vm2238, %v5732, 0.0
    %5734 = vadd.xlane.f32.xlu0 %v5733
    %v5735 = vpop.xlane.xlu0 %5734
    %v5736 = vrot.slane %v5735, 4
    %v5737 = vadd.f32 %v5735, %v5736
    %v5738 = vrot.slane %v5737, 2
    %v5739 = vadd.f32 %v5737, %v5738
    %v5740 = vrot.slane %v5739, 1
    %v5741 = vadd.f32 %v5739, %v5740
    %s5742 = vtos %v5741
    %s5743 = smul.f32 %s5742, 0.0078125
    %s5744 = sadd.f32 %s5743, 1e-05
    %v5745 = vstv %s5744
    %v5746 = vrsqrt.pop %v5745
    %v5747 = vmul.f32 %v5746, %v5745
    %v5748 = vmul.f32 %v5747, %v5746
    %v5749 = vmul.f32 0.5, %v5748
    %v5750 = vsub.f32 1.5, %v5749
    %v5751 = vmul.f32 %v5746, %v5750
    %vm5752 = vweird.f32 %v5745
    %vm5753 = vweird.f32 %v5746
    %vm5754 = vmor %vm5752, %vm5753
    %v5755 = vsel %vm5754, %v5746, %v5751
    %s5756 = vtos %v5755
    %v5757 = vstv %s5756
    %v5758 = vmul.f32 %v5731, %v5757
    %s5759 = sld [smem:[#allocation3 + $0x6]]
    %v5760 = vstv %s5759
    %v5761 = vmul.f32 %v5760, %v5758
    %s5762 = sld [smem:[#allocation7 + $0x6]]
    %v5763 = vstv %s5762
    %v5764 = vadd.f32 %v5761, %v5763
    %v5766 = vrot.slane %v5764, 1
    %v5767 = vrot.slane %v5764, 2
    %v5768 = vrot.slane %v5764, 3
    %5772 = vst.msk [vmem:[#allocation10 + $0x6] sm:$0x1] %vm996, %v5764
    %5773 = vst.msk [vmem:[#allocation10 + $0xe] sm:$0x1] %vm996, %v5766
    %5774 = vst.msk [vmem:[#allocation10 + $0x16] sm:$0x1] %vm996, %v5767
    %5775 = vst.msk [vmem:[#allocation10 + $0x1e] sm:$0x1] %vm996, %v5768
    %v5776 = vld [vmem:[%s3477] sm:$0xff]
    %v5777 = vsel %vm2238, %v5776, 0.0
    %5778 = vadd.xlane.f32.xlu0 %v5777
    %v5779 = vpop.xlane.xlu0 %5778
    %v5780 = vrot.slane %v5779, 4
    %v5781 = vadd.f32 %v5779, %v5780
    %v5782 = vrot.slane %v5781, 2
    %v5783 = vadd.f32 %v5781, %v5782
    %v5784 = vrot.slane %v5783, 1
    %v5785 = vadd.f32 %v5783, %v5784
    %s5786 = vtos %v5785
    %s5787 = smul.f32 %s5786, 0.0078125
    %v5788 = vstv %s5787
    %v5789 = vsub.f32 %v5776, %v5788
    %v5790 = vmul.f32 %v5789, %v5789
    %v5791 = vsel %vm2238, %v5790, 0.0
    %5792 = vadd.xlane.f32.xlu0 %v5791
    %v5793 = vpop.xlane.xlu0 %5792
    %v5794 = vrot.slane %v5793, 4
    %v5795 = vadd.f32 %v5793, %v5794
    %v5796 = vrot.slane %v5795, 2
    %v5797 = vadd.f32 %v5795, %v5796
    %v5798 = vrot.slane %v5797, 1
    %v5799 = vadd.f32 %v5797, %v5798
    %s5800 = vtos %v5799
    %s5801 = smul.f32 %s5800, 0.0078125
    %s5802 = sadd.f32 %s5801, 1e-05
    %v5803 = vstv %s5802
    %v5804 = vrsqrt.pop %v5803
    %v5805 = vmul.f32 %v5804, %v5803
    %v5806 = vmul.f32 %v5805, %v5804
    %v5807 = vmul.f32 0.5, %v5806
    %v5808 = vsub.f32 1.5, %v5807
    %v5809 = vmul.f32 %v5804, %v5808
    %vm5810 = vweird.f32 %v5803
    %vm5811 = vweird.f32 %v5804
    %vm5812 = vmor %vm5810, %vm5811
    %v5813 = vsel %vm5812, %v5804, %v5809
    %s5814 = vtos %v5813
    %v5815 = vstv %s5814
    %v5816 = vmul.f32 %v5789, %v5815
    %s5817 = sld [smem:[#allocation3 + $0x7]]
    %v5818 = vstv %s5817
    %v5819 = vmul.f32 %v5818, %v5816
    %s5820 = sld [smem:[#allocation7 + $0x7]]
    %v5821 = vstv %s5820
    %v5822 = vadd.f32 %v5819, %v5821
    %v5824 = vrot.slane %v5822, 1
    %v5825 = vrot.slane %v5822, 2
    %v5826 = vrot.slane %v5822, 3
    %5830 = vst.msk [vmem:[#allocation10 + $0x7] sm:$0x1] %vm996, %v5822
    %5831 = vst.msk [vmem:[#allocation10 + $0xf] sm:$0x1] %vm996, %v5824
    %5832 = vst.msk [vmem:[#allocation10 + $0x17] sm:$0x1] %vm996, %v5825
    %5833 = vst.msk [vmem:[#allocation10 + $0x1f] sm:$0x1] %vm996, %v5826
    // Predicated region
    $region82: #{_forward_impl.1} parent=1 // pred_check
      _
    $region83: #{_forward_impl.1} parent=1 // pred_check_branch
      %5835 = sbr.rel (0) target = $region85
    $region84: #{_forward_impl.1} parent=1 // pred_region
      %5837 = vsyncadd [#allocation5], 0
      %s5838 = sshll.u32 [#allocation10], 4
      %s5839 = int_to_ptr.vmem [resolvable:$true] %s5838
      %s5840 = sshll.u32 %s17, 4
      %s5841 = int_to_ptr.hbm [resolvable:$true] %s5840
      %5846 = dma.vmem_to_hbm [thread:$0]  %s5839, 512, %s5841, [#allocation5], 128, 128, 8
    $region85: #{_forward_impl.1} parent=1 // pred_fallthru
      _
    // Predicated region
    $region86: #{_forward_impl.1} parent=1 // pred_check
      _
    $region87: #{_forward_impl.1} parent=1 // pred_check_branch
      %5848 = sbr.rel (0) target = $region89
    $region88: #{_forward_impl.1} parent=1 // pred_region
      %5850 = vsyncadd [#allocation12], 0
      %s5851 = sshll.u32 [#allocation11], 4
      %s5852 = int_to_ptr.vmem [resolvable:$true] %s5851
      %s5853 = sshll.u32 %s18, 4
      %s5854 = int_to_ptr.hbm [resolvable:$true] %s5853
      %5859 = dma.vmem_to_hbm [thread:$0]  %s5852, 256, %s5854, [#allocation12], 64, 64, 4
    $region89: #{_forward_impl.1} parent=1 // pred_fallthru
      _
    // Predicated region
    $region90: #{_forward_impl.1} parent=1 // pred_check
      _
    $region91: #{_forward_impl.1} parent=1 // pred_check_branch
      %5861 = sbr.rel (0) target = $region93
    $region92: #{_forward_impl.1} parent=1 // pred_region
      %5863 = vsyncadd [#allocation12], 0
      %s5864 = sshll.u32 [#allocation13], 4
      %s5865 = int_to_ptr.vmem [resolvable:$true] %s5864
      %s5866 = sshll.u32 %s19, 4
      %s5867 = int_to_ptr.hbm [resolvable:$true] %s5866
      %5872 = dma.vmem_to_hbm [thread:$0]  %s5865, 256, %s5867, [#allocation12], 64, 64, 4
    $region93: #{_forward_impl.1} parent=1 // pred_fallthru
      _
    // Predicated region
    $region94: #{_forward_impl.1} parent=1 // pred_check
      _
    $region95: #{_forward_impl.1} parent=1 // pred_check_branch
      %5874 = sbr.rel (0) target = $region97
    $region96: #{_forward_impl.1} parent=1 // pred_region
      %5876 = dma.done [#allocation5], 512
    $region97: #{_forward_impl.1} parent=1 // pred_fallthru
      _
    // Predicated region
    $region98: #{_forward_impl.1} parent=1 // pred_check
      _
    $region99: #{_forward_impl.1} parent=1 // pred_check_branch
      %5878 = sbr.rel (0) target = $region101
    $region100: #{_forward_impl.1} parent=1 // pred_region
      %5880 = dma.done [#allocation12], 256
    $region101: #{_forward_impl.1} parent=1 // pred_fallthru
      _
    // Predicated region
    $region102: #{_forward_impl.1} parent=1 // pred_check
      _
    $region103: #{_forward_impl.1} parent=1 // pred_check_branch
      %5882 = sbr.rel (0) target = $region105
    $region104: #{_forward_impl.1} parent=1 // pred_region
      %5884 = dma.done [#allocation12], 256
    $region105: #{_forward_impl.1} parent=1 // pred_fallthru
      _
    %5885 = vsyncpa [#allocation4], 1
    %5886 = vsyncpa [#allocation5], 1
    %5887 = vsyncpa [#allocation12], 1
    %5888 = vsyncpa [#allocation6], 1
    %5889 = vsyncpa [#allocation8], 1

</llo_original>
